<compile_context>
chip_gen: v7x
topology: tpu7x:2x2x1
jax: 0.10.0
libtpu: 0.0.40
codegen_flags: <defaults>
</compile_context>

<pallas_src>
import functools

import jax
import jax.numpy as jnp
from jax import lax
from jax.experimental import pallas as pl
from jax.experimental.pallas import tpu as pltpu  # noqa: F401  (kept for parity)

D_MODEL = 230
# TODO(synk): FFN inner dim (d_inner) is not exposed by the given config; use 2*d_model.
D_INNER = 2 * D_MODEL
D_PAD = 256          # d_model padded to a multiple of 128 (lane-dense)
D_INNER_PAD = 512    # d_inner padded to a multiple of 128
N_POSITION = 200
EPS = 1e-6


# ----------------------------- shared math ---------------------------------

def _layer_norm(x, gamma, beta):
    """PyTorch nn.LayerNorm(230, eps=1e-6) over the REAL 230 features.

    Two-moment form (E[x^2] - mu^2) with an explicit /230 divisor so it is
    also correct on 256-lane zero-padded activations (pad lanes contribute 0
    to both sums, and zero-padded gamma/beta keep pad lanes at exactly 0).
    """
    inv_d = 1.0 / float(D_MODEL)
    s1 = jnp.sum(x, axis=-1, keepdims=True)
    s2 = jnp.sum(x * x, axis=-1, keepdims=True)
    mu = s1 * inv_d
    var = s2 * inv_d - mu * mu
    return (x - mu) * lax.rsqrt(var + EPS) * gamma + beta


# ------------------------------- kernel ------------------------------------

def _encoder_kernel(n_blocks, n_head, d_k, d_v, batch, seq,
                    x_ref, pos_ref, ln0g_ref, ln0b_ref,
                    wqkv_ref, wo_ref, ln1g_ref, ln1b_ref,
                    w1_ref, b1_ref, w2_ref, b2_ref, ln2g_ref, ln2b_ref,
                    out_ref):
    """Whole encoder forward, fully fused; activation is (B*S, 256) in vregs."""
    f32 = jnp.float32
    bf16 = jnp.bfloat16

    # positional encoding + dropout(p=0.1 -> identity at inference)
    x = x_ref[...].astype(f32) + pos_ref[...]
    # outer LayerNorm of AttEncoder
    x = _layer_norm(x, ln0g_ref[...], ln0b_ref[...])

    q_off = 0
    k_off = n_head * d_k
    v_off = 2 * n_head * d_k
    nt_dims = (((1,), (1,)), ((), ()))  # contract last dims of both operands

    for blk in range(n_blocks):          # static unroll over encoder blocks
        # ---------------- multi-head self attention ----------------
        # Single fused QKV projection; 1/sqrt(d_k) already folded into Wq.
        qkv = jnp.dot(x.astype(bf16), wqkv_ref[blk],
                      preferred_element_type=f32)            # (B*S, 3*H*dk)

        # Scores for every (batch, head) pair; no explicit K transpose.
        scores = []
        for b in range(batch):
            r0 = b * seq
            for h in range(n_head):
                qh = qkv[r0:r0 + seq, q_off + h * d_k:q_off + (h + 1) * d_k]
                kh = qkv[r0:r0 + seq, k_off + h * d_k:k_off + (h + 1) * d_k]
                scores.append(lax.dot_general(qh, kh, nt_dims,
                                              preferred_element_type=f32))
        # One batched softmax across all (b, h) tiles: single max/exp/sum/recip.
        sc = jnp.concatenate(scores, axis=0)                  # (B*H*S, S)
        sc = sc - jnp.max(sc, axis=-1, keepdims=True)
        p = jnp.exp(sc)
        p = p * pl.reciprocal(jnp.sum(p, axis=-1, keepdims=True), approx=True)

        # Per-head PV matmul, accumulated directly against the per-head slice
        # of Wo (no head concatenation).
        proj_rows = []
        idx = 0
        for b in range(batch):
            r0 = b * seq
            acc = jnp.zeros((seq, x.shape[-1]), f32)
            for h in range(n_head):
                ph = p[idx * seq:(idx + 1) * seq, :]
                idx += 1
                vh = qkv[r0:r0 + seq, v_off + h * d_v:v_off + (h + 1) * d_v]
                oh = jnp.dot(ph, vh, preferred_element_type=f32)      # (S, dv)
                wo_h = wo_ref[blk, h * d_v:(h + 1) * d_v, :]          # (dv, Dp)
                acc = acc + jnp.dot(oh.astype(bf16), wo_h,
                                    preferred_element_type=f32)
            proj_rows.append(acc)
        proj = jnp.concatenate(proj_rows, axis=0)              # (B*S, Dp)

        # dropout identity; residual + post-LayerNorm
        x = _layer_norm(proj + x, ln1g_ref[blk], ln1b_ref[blk])

        # ---------------- position-wise FFN ----------------
        h1 = jnp.dot(x.astype(bf16), w1_ref[blk],
                     preferred_element_type=f32) + b1_ref[blk]
        h1 = jnp.maximum(h1, 0.0)                              # ReLU
        y = jnp.dot(h1.astype(bf16), w2_ref[blk],
                    preferred_element_type=f32) + b2_ref[blk]
        x = _layer_norm(y + x, ln2g_ref[blk], ln2b_ref[blk])

    out_ref[...] = x.astype(out_ref.dtype)


# --------------------------- pallas_call wrapper ---------------------------

def self_att_encoder_forward(embedding, prepped, *, n_blocks, n_head, d_k, d_v):
    """embedding: (B, S, 230) -> (B, S, 230). One fused pallas_call, no grid."""
    B, S, D = embedding.shape
    Dp = prepped["ln0_g"].shape[-1]

    # Lane-pad to 256 and fold the batch into the row dimension.
    x2d = jnp.pad(embedding, ((0, 0), (0, 0), (0, Dp - D))).reshape(B * S, Dp)
    pos = jnp.tile(prepped["pos_table"][:S], (B, 1))           # (B*S, Dp)

    weight_names = ("ln0_g", "ln0_b", "wqkv", "wo", "ln1_g", "ln1_b",
                    "w1", "b1", "w2", "b2", "ln2_g", "ln2_b")
    weights = [prepped[k] for k in weight_names]

    kernel = functools.partial(_encoder_kernel, n_blocks, n_head, d_k, d_v, B, S)

    # No grid: every operand is a whole-array VMEM block, kernel runs once
    # (total resident footprint ~1.5 MB, far under VMEM on every generation).
    # TODO(synk): if this encoder runs inside a larger per-step model, prefetch
    # the bf16 weight stack across pallas_calls (P10) to hide the weight DMA.
    out = pl.pallas_call(
        kernel,
        out_shape=jax.ShapeDtypeStruct((B * S, Dp), embedding.dtype),
    )(x2d, pos, *weights)

    return out.reshape(B, S, Dp)[:, :, :D]


# ------------------------------ parameter init ------------------------------

def sinusoid_pos_table(n_position, d_model):
    pos = jnp.arange(n_position, dtype=jnp.float32)[:, None]
    i = jnp.arange(d_model, dtype=jnp.float32)[None, :]
    angle = pos / jnp.power(10000.0, 2.0 * jnp.floor(i / 2.0) / d_model)
    even = (jnp.arange(d_model) % 2 == 0)[None, :]
    return jnp.where(even, jnp.sin(angle), jnp.cos(angle))     # (n_position, d_model)


def init_params(key, *, n_blocks, n_head, d_k, d_v,
                d_model=D_MODEL, d_inner=D_INNER, n_position=N_POSITION):
    # TODO(synk): Q/K/V/O projections follow the usual bias-free transformer
    # attention; if the original AttEncoder uses biased nn.Linear projections,
    # add bias terms here.
    params = {
        "pos_table": sinusoid_pos_table(n_position, d_model),
        "ln0_g": jnp.ones((1, d_model), jnp.float32),
        "ln0_b": jnp.zeros((1, d_model), jnp.float32),
        "blocks": [],
    }
    scale = 0.02
    for _ in range(n_blocks):
        key, *ks = jax.random.split(key, 7)
        blk = {
            "wq": scale * jax.random.normal(ks[0], (d_model, n_head * d_k), jnp.float32),
            "wk": scale * jax.random.normal(ks[1], (d_model, n_head * d_k), jnp.float32),
            "wv": scale * jax.random.normal(ks[2], (d_model, n_head * d_v), jnp.float32),
            "wo": scale * jax.random.normal(ks[3], (n_head * d_v, d_model), jnp.float32),
            "ln1_g": jnp.ones((1, d_model), jnp.float32),
            "ln1_b": jnp.zeros((1, d_model), jnp.float32),
            "w1": scale * jax.random.normal(ks[4], (d_model, d_inner), jnp.float32),
            "b1": jnp.zeros((1, d_inner), jnp.float32),
            "w2": scale * jax.random.normal(ks[5], (d_inner, d_model), jnp.float32),
            "b2": jnp.zeros((1, d_model), jnp.float32),
            "ln2_g": jnp.ones((1, d_model), jnp.float32),
            "ln2_b": jnp.zeros((1, d_model), jnp.float32),
        }
        params["blocks"].append(blk)
    return params


def prepare_params(params, *, n_head, d_k, d_v,
                   d_model=D_MODEL, d_pad=D_PAD, d_inner_pad=D_INNER_PAD):
    """One-time prep: zero-pad feature dims to 256/512, stack per-block weights
    along a leading n_blocks axis, concatenate Wq|Wk|Wv into one QKV weight,
    fold 1/sqrt(d_k) into Wq, and store matmul weights as bf16."""
    scale = 1.0 / (float(d_k) ** 0.5)
    blks = params["blocks"]

    def pad_to(a, rows, cols):
        return jnp.pad(a, ((0, rows - a.shape[0]), (0, cols - a.shape[1])))

    def stack_vec(name, cols):        # (1, X) LN params / biases, kept f32
        return jnp.stack([pad_to(b[name], 1, cols) for b in blks], axis=0)

    wqkv = jnp.stack([
        pad_to(jnp.concatenate([b["wq"] * scale, b["wk"], b["wv"]], axis=1),
               d_pad, 3 * n_head * d_k).astype(jnp.bfloat16)
        for b in blks], axis=0)                                 # (nb, 256, 3*H*dk)
    wo = jnp.stack([pad_to(b["wo"], n_head * d_v, d_pad).astype(jnp.bfloat16)
                    for b in blks], axis=0)                     # (nb, H*dv, 256)
    w1 = jnp.stack([pad_to(b["w1"], d_pad, d_inner_pad).astype(jnp.bfloat16)
                    for b in blks], axis=0)                     # (nb, 256, 512)
    w2 = jnp.stack([pad_to(b["w2"], d_inner_pad, d_pad).astype(jnp.bfloat16)
                    for b in blks], axis=0)                     # (nb, 512, 256)

    return {
        "pos_table": jnp.pad(params["pos_table"], ((0, 0), (0, d_pad - d_model))),
        "ln0_g": pad_to(params["ln0_g"], 1, d_pad),
        "ln0_b": pad_to(params["ln0_b"], 1, d_pad),
        "wqkv": wqkv,
        "wo": wo,
        "ln1_g": stack_vec("ln1_g", d_pad), "ln1_b": stack_vec("ln1_b", d_pad),
        "w1": w1, "b1": stack_vec("b1", d_inner_pad),
        "w2": w2, "b2": stack_vec("b2", d_pad),
        "ln2_g": stack_vec("ln2_g", d_pad), "ln2_b": stack_vec("ln2_b", d_pad),
    }


# --------------------------- pure-JAX reference -----------------------------

def _reference_forward(embedding, params, *, n_head, d_k, d_v):
    B, S, D = embedding.shape
    x = embedding + params["pos_table"][:S][None, :, :]
    x = _layer_norm(x, params["ln0_g"], params["ln0_b"])
    for blk in params["blocks"]:
        q = x @ blk["wq"]
        k = x @ blk["wk"]
        v = x @ blk["wv"]
        qh = q.reshape(B, S, n_head, d_k).transpose(0, 2, 1, 3)
        kh = k.reshape(B, S, n_head, d_k).transpose(0, 2, 1, 3)
        vh = v.reshape(B, S, n_head, d_v).transpose(0, 2, 1, 3)
        s = jnp.einsum("bhqd,bhkd->bhqk", qh, kh) / (float(d_k) ** 0.5)
        p = jax.nn.softmax(s, axis=-1)
        o = jnp.einsum("bhqk,bhkd->bhqd", p, vh)
        o = o.transpose(0, 2, 1, 3).reshape(B, S, n_head * d_v)
        x = _layer_norm(o @ blk["wo"] + x, blk["ln1_g"], blk["ln1_b"])
        h = jax.nn.relu(x @ blk["w1"] + blk["b1"])
        y = h @ blk["w2"] + blk["b2"]
        x = _layer_norm(y + x, blk["ln2_g"], blk["ln2_b"])
    return x


# ---------------------------------- main ------------------------------------

if __name__ == "__main__":
    # config: attn_n_blocks=2, n_attn_heads=4, encoder_output_dim=16 (=> d_k=d_v=16)
    n_blocks, n_head, d_k, d_v = 2, 4, 16, 16
    B, S = 2, 8

    key = jax.random.PRNGKey(0)
    kx, kp = jax.random.split(key)
    embedding = jax.random.normal(kx, (B, S, D_MODEL), dtype=jnp.float32)
    params = init_params(kp, n_blocks=n_blocks, n_head=n_head, d_k=d_k, d_v=d_v)
    prepped = prepare_params(params, n_head=n_head, d_k=d_k, d_v=d_v)

    out = self_att_encoder_forward(embedding, prepped,
                                   n_blocks=n_blocks, n_head=n_head, d_k=d_k, d_v=d_v)
    out = jax.block_until_ready(out)

    assert out.shape == (B, S, D_MODEL)
    assert bool(jnp.all(jnp.isfinite(out)))

    ref = _reference_forward(embedding, params, n_head=n_head, d_k=d_k, d_v=d_v)
    max_err = float(jnp.max(jnp.abs(out - ref)))
    # bf16 matmul weights/operands (matching TPU default matmul precision) plus
    # the approx softmax reciprocal give ~1e-3-level deviations vs the f32 ref.
    assert max_err < 2e-2, f"max abs error vs reference: {max_err}"

    print("KERNEL_OK")
</pallas_src>

<mosaic_0001>
module attributes {stable_mosaic.version = 11 : i64} {
  func.func @_encoder_kernel(%arg0: memref<16x256xf32, #tpu.memory_space<vmem>>, %arg1: memref<16x256xf32, #tpu.memory_space<vmem>>, %arg2: memref<1x256xf32, #tpu.memory_space<vmem>>, %arg3: memref<1x256xf32, #tpu.memory_space<vmem>>, %arg4: memref<2x256x192xbf16, #tpu.memory_space<vmem>>, %arg5: memref<2x64x256xbf16, #tpu.memory_space<vmem>>, %arg6: memref<2x1x256xf32, #tpu.memory_space<vmem>>, %arg7: memref<2x1x256xf32, #tpu.memory_space<vmem>>, %arg8: memref<2x256x512xbf16, #tpu.memory_space<vmem>>, %arg9: memref<2x1x512xf32, #tpu.memory_space<vmem>>, %arg10: memref<2x512x256xbf16, #tpu.memory_space<vmem>>, %arg11: memref<2x1x256xf32, #tpu.memory_space<vmem>>, %arg12: memref<2x1x256xf32, #tpu.memory_space<vmem>>, %arg13: memref<2x1x256xf32, #tpu.memory_space<vmem>>, %arg14: memref<16x256xf32, #tpu.memory_space<vmem>>) attributes {dimension_semantics = [], scalar_prefetch = 0 : i64, scratch_operands = 0 : i64, tpu.core_type = #tpu.core_type<tc>} {
    %c0 = arith.constant 0 : index
    %c0_0 = arith.constant 0 : index
    %0 = vector.load %arg0[%c0, %c0_0] : memref<16x256xf32, #tpu.memory_space<vmem>>, vector<16x256xf32>
    %c0_1 = arith.constant 0 : index
    %c0_2 = arith.constant 0 : index
    %1 = vector.load %arg1[%c0_1, %c0_2] : memref<16x256xf32, #tpu.memory_space<vmem>>, vector<16x256xf32>
    %2 = arith.addf %0, %1 : vector<16x256xf32>
    %c0_3 = arith.constant 0 : index
    %c0_4 = arith.constant 0 : index
    %3 = vector.load %arg2[%c0_3, %c0_4] : memref<1x256xf32, #tpu.memory_space<vmem>>, vector<1x256xf32>
    %c0_5 = arith.constant 0 : index
    %c0_6 = arith.constant 0 : index
    %4 = vector.load %arg3[%c0_5, %c0_6] : memref<1x256xf32, #tpu.memory_space<vmem>>, vector<1x256xf32>
    %cst = arith.constant dense<0.000000e+00> : vector<16xf32>
    %5 = vector.multi_reduction <add>, %2, %cst [1] : vector<16x256xf32> to vector<16xf32>
    %6 = vector.shape_cast %5 : vector<16xf32> to vector<16x1xf32>
    %7 = arith.mulf %2, %2 : vector<16x256xf32>
    %cst_7 = arith.constant dense<0.000000e+00> : vector<16xf32>
    %8 = vector.multi_reduction <add>, %7, %cst_7 [1] : vector<16x256xf32> to vector<16xf32>
    %9 = vector.shape_cast %8 : vector<16xf32> to vector<16x1xf32>
    %cst_8 = arith.constant 0.00434782589 : f32
    %10 = vector.broadcast %cst_8 : f32 to vector<16x1xf32>
    %11 = arith.mulf %6, %10 : vector<16x1xf32>
    %cst_9 = arith.constant 0.00434782589 : f32
    %12 = vector.broadcast %cst_9 : f32 to vector<16x1xf32>
    %13 = arith.mulf %9, %12 : vector<16x1xf32>
    %14 = arith.mulf %11, %11 : vector<16x1xf32>
    %15 = arith.subf %13, %14 : vector<16x1xf32>
    %16 = vector.broadcast %11 : vector<16x1xf32> to vector<16x256xf32>
    %17 = arith.subf %2, %16 : vector<16x256xf32>
    %cst_10 = arith.constant 9.99999997E-7 : f32
    %18 = vector.broadcast %cst_10 : f32 to vector<16x1xf32>
    %19 = arith.addf %15, %18 : vector<16x1xf32>
    %20 = math.rsqrt %19 : vector<16x1xf32>
    %21 = vector.broadcast %20 : vector<16x1xf32> to vector<16x256xf32>
    %22 = arith.mulf %17, %21 : vector<16x256xf32>
    %23 = vector.broadcast %3 : vector<1x256xf32> to vector<16x256xf32>
    %24 = arith.mulf %22, %23 : vector<16x256xf32>
    %25 = vector.broadcast %4 : vector<1x256xf32> to vector<16x256xf32>
    %26 = arith.addf %24, %25 : vector<16x256xf32>
    %27 = arith.truncf %26 : vector<16x256xf32> to vector<16x256xbf16>
    %c0_11 = arith.constant 0 : index
    %c0_12 = arith.constant 0 : index
    %c0_13 = arith.constant 0 : index
    %28 = vector.load %arg4[%c0_11, %c0_12, %c0_13] : memref<2x256x192xbf16, #tpu.memory_space<vmem>>, vector<1x256x192xbf16>
    %29 = vector.shape_cast %28 : vector<1x256x192xbf16> to vector<256x192xbf16>
    %cst_14 = arith.constant dense<0.000000e+00> : vector<16x192xf32>
    %30 = tpu.matmul %27, %29, %cst_14 {dimension_numbers = #tpu.dot_dimension_numbers<[1], [0], [0], [1], [0, 0, 1, 1], [], []>} : vector<16x256xbf16>, vector<256x192xbf16>, vector<16x192xf32> -> vector<16x192xf32>
    %31 = vector.extract_strided_slice %30 {offsets = [0, 0], sizes = [8, 16], strides = [1, 1]} : vector<16x192xf32> to vector<8x16xf32>
    %32 = vector.extract_strided_slice %30 {offsets = [0, 64], sizes = [8, 16], strides = [1, 1]} : vector<16x192xf32> to vector<8x16xf32>
    %cst_15 = arith.constant dense<0.000000e+00> : vector<8x8xf32>
    %33 = tpu.matmul %31, %32, %cst_15 {dimension_numbers = #tpu.dot_dimension_numbers<[1], [1], [0], [0], [0, 0, 1, 0], [], []>} : vector<8x16xf32>, vector<8x16xf32>, vector<8x8xf32> -> vector<8x8xf32>
    %34 = vector.extract_strided_slice %30 {offsets = [0, 16], sizes = [8, 16], strides = [1, 1]} : vector<16x192xf32> to vector<8x16xf32>
    %35 = vector.extract_strided_slice %30 {offsets = [0, 80], sizes = [8, 16], strides = [1, 1]} : vector<16x192xf32> to vector<8x16xf32>
    %cst_16 = arith.constant dense<0.000000e+00> : vector<8x8xf32>
    %36 = tpu.matmul %34, %35, %cst_16 {dimension_numbers = #tpu.dot_dimension_numbers<[1], [1], [0], [0], [0, 0, 1, 0], [], []>} : vector<8x16xf32>, vector<8x16xf32>, vector<8x8xf32> -> vector<8x8xf32>
    %37 = vector.extract_strided_slice %30 {offsets = [0, 32], sizes = [8, 16], strides = [1, 1]} : vector<16x192xf32> to vector<8x16xf32>
    %38 = vector.extract_strided_slice %30 {offsets = [0, 96], sizes = [8, 16], strides = [1, 1]} : vector<16x192xf32> to vector<8x16xf32>
    %cst_17 = arith.constant dense<0.000000e+00> : vector<8x8xf32>
    %39 = tpu.matmul %37, %38, %cst_17 {dimension_numbers = #tpu.dot_dimension_numbers<[1], [1], [0], [0], [0, 0, 1, 0], [], []>} : vector<8x16xf32>, vector<8x16xf32>, vector<8x8xf32> -> vector<8x8xf32>
    %40 = vector.extract_strided_slice %30 {offsets = [0, 48], sizes = [8, 16], strides = [1, 1]} : vector<16x192xf32> to vector<8x16xf32>
    %41 = vector.extract_strided_slice %30 {offsets = [0, 112], sizes = [8, 16], strides = [1, 1]} : vector<16x192xf32> to vector<8x16xf32>
    %cst_18 = arith.constant dense<0.000000e+00> : vector<8x8xf32>
    %42 = tpu.matmul %40, %41, %cst_18 {dimension_numbers = #tpu.dot_dimension_numbers<[1], [1], [0], [0], [0, 0, 1, 0], [], []>} : vector<8x16xf32>, vector<8x16xf32>, vector<8x8xf32> -> vector<8x8xf32>
    %43 = vector.extract_strided_slice %30 {offsets = [8, 0], sizes = [8, 16], strides = [1, 1]} : vector<16x192xf32> to vector<8x16xf32>
    %44 = vector.extract_strided_slice %30 {offsets = [8, 64], sizes = [8, 16], strides = [1, 1]} : vector<16x192xf32> to vector<8x16xf32>
    %cst_19 = arith.constant dense<0.000000e+00> : vector<8x8xf32>
    %45 = tpu.matmul %43, %44, %cst_19 {dimension_numbers = #tpu.dot_dimension_numbers<[1], [1], [0], [0], [0, 0, 1, 0], [], []>} : vector<8x16xf32>, vector<8x16xf32>, vector<8x8xf32> -> vector<8x8xf32>
    %46 = vector.extract_strided_slice %30 {offsets = [8, 16], sizes = [8, 16], strides = [1, 1]} : vector<16x192xf32> to vector<8x16xf32>
    %47 = vector.extract_strided_slice %30 {offsets = [8, 80], sizes = [8, 16], strides = [1, 1]} : vector<16x192xf32> to vector<8x16xf32>
    %cst_20 = arith.constant dense<0.000000e+00> : vector<8x8xf32>
    %48 = tpu.matmul %46, %47, %cst_20 {dimension_numbers = #tpu.dot_dimension_numbers<[1], [1], [0], [0], [0, 0, 1, 0], [], []>} : vector<8x16xf32>, vector<8x16xf32>, vector<8x8xf32> -> vector<8x8xf32>
    %49 = vector.extract_strided_slice %30 {offsets = [8, 32], sizes = [8, 16], strides = [1, 1]} : vector<16x192xf32> to vector<8x16xf32>
    %50 = vector.extract_strided_slice %30 {offsets = [8, 96], sizes = [8, 16], strides = [1, 1]} : vector<16x192xf32> to vector<8x16xf32>
    %cst_21 = arith.constant dense<0.000000e+00> : vector<8x8xf32>
    %51 = tpu.matmul %49, %50, %cst_21 {dimension_numbers = #tpu.dot_dimension_numbers<[1], [1], [0], [0], [0, 0, 1, 0], [], []>} : vector<8x16xf32>, vector<8x16xf32>, vector<8x8xf32> -> vector<8x8xf32>
    %52 = vector.extract_strided_slice %30 {offsets = [8, 48], sizes = [8, 16], strides = [1, 1]} : vector<16x192xf32> to vector<8x16xf32>
    %53 = vector.extract_strided_slice %30 {offsets = [8, 112], sizes = [8, 16], strides = [1, 1]} : vector<16x192xf32> to vector<8x16xf32>
    %cst_22 = arith.constant dense<0.000000e+00> : vector<8x8xf32>
    %54 = tpu.matmul %52, %53, %cst_22 {dimension_numbers = #tpu.dot_dimension_numbers<[1], [1], [0], [0], [0, 0, 1, 0], [], []>} : vector<8x16xf32>, vector<8x16xf32>, vector<8x8xf32> -> vector<8x8xf32>
    %55 = tpu.concatenate %33, %36, %39, %42, %45, %48, %51, %54 in 0 : vector<8x8xf32>, vector<8x8xf32>, vector<8x8xf32>, vector<8x8xf32>, vector<8x8xf32>, vector<8x8xf32>, vector<8x8xf32>, vector<8x8xf32> -> vector<64x8xf32>
    %cst_23 = arith.constant dense<0xFF800000> : vector<64xf32>
    %56 = vector.multi_reduction <maximumf>, %55, %cst_23 [1] : vector<64x8xf32> to vector<64xf32>
    %57 = vector.shape_cast %56 : vector<64xf32> to vector<64x1xf32>
    %58 = vector.broadcast %57 : vector<64x1xf32> to vector<64x8xf32>
    %59 = arith.subf %55, %58 : vector<64x8xf32>
    %60 = math.exp %59 : vector<64x8xf32>
    %cst_24 = arith.constant dense<0.000000e+00> : vector<64xf32>
    %61 = vector.multi_reduction <add>, %60, %cst_24 [1] : vector<64x8xf32> to vector<64xf32>
    %62 = vector.shape_cast %61 : vector<64xf32> to vector<64x1xf32>
    %63 = tpu.reciprocal %62 {approx = true} : vector<64x1xf32> -> vector<64x1xf32>
    %64 = vector.broadcast %63 : vector<64x1xf32> to vector<64x8xf32>
    %65 = arith.mulf %60, %64 : vector<64x8xf32>
    %cst_25 = arith.constant 0.000000e+00 : f32
    %66 = vector.broadcast %cst_25 : f32 to vector<8x256xf32>
    %67 = vector.extract_strided_slice %65 {offsets = [0, 0], sizes = [8, 8], strides = [1, 1]} : vector<64x8xf32> to vector<8x8xf32>
    %68 = vector.extract_strided_slice %30 {offsets = [0, 128], sizes = [8, 16], strides = [1, 1]} : vector<16x192xf32> to vector<8x16xf32>
    %cst_26 = arith.constant dense<0.000000e+00> : vector<8x16xf32>
    %69 = tpu.matmul %67, %68, %cst_26 {dimension_numbers = #tpu.dot_dimension_numbers<[1], [0], [0], [1], [0, 0, 1, 1], [], []>} : vector<8x8xf32>, vector<8x16xf32>, vector<8x16xf32> -> vector<8x16xf32>
    %c0_27 = arith.constant 0 : index
    %c0_28 = arith.constant 0 : index
    %c0_29 = arith.constant 0 : index
    %70 = vector.load %arg5[%c0_27, %c0_28, %c0_29] : memref<2x64x256xbf16, #tpu.memory_space<vmem>>, vector<1x16x256xbf16>
    %71 = vector.shape_cast %70 : vector<1x16x256xbf16> to vector<16x256xbf16>
    %72 = arith.truncf %69 : vector<8x16xf32> to vector<8x16xbf16>
    %cst_30 = arith.constant dense<0.000000e+00> : vector<8x256xf32>
    %73 = tpu.matmul %72, %71, %cst_30 {dimension_numbers = #tpu.dot_dimension_numbers<[1], [0], [0], [1], [0, 0, 1, 1], [], []>} : vector<8x16xbf16>, vector<16x256xbf16>, vector<8x256xf32> -> vector<8x256xf32>
    %74 = arith.addf %66, %73 : vector<8x256xf32>
    %75 = vector.extract_strided_slice %65 {offsets = [8, 0], sizes = [8, 8], strides = [1, 1]} : vector<64x8xf32> to vector<8x8xf32>
    %76 = vector.extract_strided_slice %30 {offsets = [0, 144], sizes = [8, 16], strides = [1, 1]} : vector<16x192xf32> to vector<8x16xf32>
    %cst_31 = arith.constant dense<0.000000e+00> : vector<8x16xf32>
    %77 = tpu.matmul %75, %76, %cst_31 {dimension_numbers = #tpu.dot_dimension_numbers<[1], [0], [0], [1], [0, 0, 1, 1], [], []>} : vector<8x8xf32>, vector<8x16xf32>, vector<8x16xf32> -> vector<8x16xf32>
    %c0_32 = arith.constant 0 : index
    %c16 = arith.constant 16 : index
    %c0_33 = arith.constant 0 : index
    %78 = vector.load %arg5[%c0_32, %c16, %c0_33] : memref<2x64x256xbf16, #tpu.memory_space<vmem>>, vector<1x16x256xbf16>
    %79 = vector.shape_cast %78 : vector<1x16x256xbf16> to vector<16x256xbf16>
    %80 = arith.truncf %77 : vector<8x16xf32> to vector<8x16xbf16>
    %cst_34 = arith.constant dense<0.000000e+00> : vector<8x256xf32>
    %81 = tpu.matmul %80, %79, %cst_34 {dimension_numbers = #tpu.dot_dimension_numbers<[1], [0], [0], [1], [0, 0, 1, 1], [], []>} : vector<8x16xbf16>, vector<16x256xbf16>, vector<8x256xf32> -> vector<8x256xf32>
    %82 = arith.addf %74, %81 : vector<8x256xf32>
    %83 = vector.extract_strided_slice %65 {offsets = [16, 0], sizes = [8, 8], strides = [1, 1]} : vector<64x8xf32> to vector<8x8xf32>
    %84 = vector.extract_strided_slice %30 {offsets = [0, 160], sizes = [8, 16], strides = [1, 1]} : vector<16x192xf32> to vector<8x16xf32>
    %cst_35 = arith.constant dense<0.000000e+00> : vector<8x16xf32>
    %85 = tpu.matmul %83, %84, %cst_35 {dimension_numbers = #tpu.dot_dimension_numbers<[1], [0], [0], [1], [0, 0, 1, 1], [], []>} : vector<8x8xf32>, vector<8x16xf32>, vector<8x16xf32> -> vector<8x16xf32>
    %c0_36 = arith.constant 0 : index
    %c32 = arith.constant 32 : index
    %c0_37 = arith.constant 0 : index
    %86 = vector.load %arg5[%c0_36, %c32, %c0_37] : memref<2x64x256xbf16, #tpu.memory_space<vmem>>, vector<1x16x256xbf16>
    %87 = vector.shape_cast %86 : vector<1x16x256xbf16> to vector<16x256xbf16>
    %88 = arith.truncf %85 : vector<8x16xf32> to vector<8x16xbf16>
    %cst_38 = arith.constant dense<0.000000e+00> : vector<8x256xf32>
    %89 = tpu.matmul %88, %87, %cst_38 {dimension_numbers = #tpu.dot_dimension_numbers<[1], [0], [0], [1], [0, 0, 1, 1], [], []>} : vector<8x16xbf16>, vector<16x256xbf16>, vector<8x256xf32> -> vector<8x256xf32>
    %90 = arith.addf %82, %89 : vector<8x256xf32>
    %91 = vector.extract_strided_slice %65 {offsets = [24, 0], sizes = [8, 8], strides = [1, 1]} : vector<64x8xf32> to vector<8x8xf32>
    %92 = vector.extract_strided_slice %30 {offsets = [0, 176], sizes = [8, 16], strides = [1, 1]} : vector<16x192xf32> to vector<8x16xf32>
    %cst_39 = arith.constant dense<0.000000e+00> : vector<8x16xf32>
    %93 = tpu.matmul %91, %92, %cst_39 {dimension_numbers = #tpu.dot_dimension_numbers<[1], [0], [0], [1], [0, 0, 1, 1], [], []>} : vector<8x8xf32>, vector<8x16xf32>, vector<8x16xf32> -> vector<8x16xf32>
    %c0_40 = arith.constant 0 : index
    %c48 = arith.constant 48 : index
    %c0_41 = arith.constant 0 : index
    %94 = vector.load %arg5[%c0_40, %c48, %c0_41] : memref<2x64x256xbf16, #tpu.memory_space<vmem>>, vector<1x16x256xbf16>
    %95 = vector.shape_cast %94 : vector<1x16x256xbf16> to vector<16x256xbf16>
    %96 = arith.truncf %93 : vector<8x16xf32> to vector<8x16xbf16>
    %cst_42 = arith.constant dense<0.000000e+00> : vector<8x256xf32>
    %97 = tpu.matmul %96, %95, %cst_42 {dimension_numbers = #tpu.dot_dimension_numbers<[1], [0], [0], [1], [0, 0, 1, 1], [], []>} : vector<8x16xbf16>, vector<16x256xbf16>, vector<8x256xf32> -> vector<8x256xf32>
    %98 = arith.addf %90, %97 : vector<8x256xf32>
    %cst_43 = arith.constant 0.000000e+00 : f32
    %99 = vector.broadcast %cst_43 : f32 to vector<8x256xf32>
    %100 = vector.extract_strided_slice %65 {offsets = [32, 0], sizes = [8, 8], strides = [1, 1]} : vector<64x8xf32> to vector<8x8xf32>
    %101 = vector.extract_strided_slice %30 {offsets = [8, 128], sizes = [8, 16], strides = [1, 1]} : vector<16x192xf32> to vector<8x16xf32>
    %cst_44 = arith.constant dense<0.000000e+00> : vector<8x16xf32>
    %102 = tpu.matmul %100, %101, %cst_44 {dimension_numbers = #tpu.dot_dimension_numbers<[1], [0], [0], [1], [0, 0, 1, 1], [], []>} : vector<8x8xf32>, vector<8x16xf32>, vector<8x16xf32> -> vector<8x16xf32>
    %c0_45 = arith.constant 0 : index
    %c0_46 = arith.constant 0 : index
    %c0_47 = arith.constant 0 : index
    %103 = vector.load %arg5[%c0_45, %c0_46, %c0_47] : memref<2x64x256xbf16, #tpu.memory_space<vmem>>, vector<1x16x256xbf16>
    %104 = vector.shape_cast %103 : vector<1x16x256xbf16> to vector<16x256xbf16>
    %105 = arith.truncf %102 : vector<8x16xf32> to vector<8x16xbf16>
    %cst_48 = arith.constant dense<0.000000e+00> : vector<8x256xf32>
    %106 = tpu.matmul %105, %104, %cst_48 {dimension_numbers = #tpu.dot_dimension_numbers<[1], [0], [0], [1], [0, 0, 1, 1], [], []>} : vector<8x16xbf16>, vector<16x256xbf16>, vector<8x256xf32> -> vector<8x256xf32>
    %107 = arith.addf %99, %106 : vector<8x256xf32>
    %108 = vector.extract_strided_slice %65 {offsets = [40, 0], sizes = [8, 8], strides = [1, 1]} : vector<64x8xf32> to vector<8x8xf32>
    %109 = vector.extract_strided_slice %30 {offsets = [8, 144], sizes = [8, 16], strides = [1, 1]} : vector<16x192xf32> to vector<8x16xf32>
    %cst_49 = arith.constant dense<0.000000e+00> : vector<8x16xf32>
    %110 = tpu.matmul %108, %109, %cst_49 {dimension_numbers = #tpu.dot_dimension_numbers<[1], [0], [0], [1], [0, 0, 1, 1], [], []>} : vector<8x8xf32>, vector<8x16xf32>, vector<8x16xf32> -> vector<8x16xf32>
    %c0_50 = arith.constant 0 : index
    %c16_51 = arith.constant 16 : index
    %c0_52 = arith.constant 0 : index
    %111 = vector.load %arg5[%c0_50, %c16_51, %c0_52] : memref<2x64x256xbf16, #tpu.memory_space<vmem>>, vector<1x16x256xbf16>
    %112 = vector.shape_cast %111 : vector<1x16x256xbf16> to vector<16x256xbf16>
    %113 = arith.truncf %110 : vector<8x16xf32> to vector<8x16xbf16>
    %cst_53 = arith.constant dense<0.000000e+00> : vector<8x256xf32>
    %114 = tpu.matmul %113, %112, %cst_53 {dimension_numbers = #tpu.dot_dimension_numbers<[1], [0], [0], [1], [0, 0, 1, 1], [], []>} : vector<8x16xbf16>, vector<16x256xbf16>, vector<8x256xf32> -> vector<8x256xf32>
    %115 = arith.addf %107, %114 : vector<8x256xf32>
    %116 = vector.extract_strided_slice %65 {offsets = [48, 0], sizes = [8, 8], strides = [1, 1]} : vector<64x8xf32> to vector<8x8xf32>
    %117 = vector.extract_strided_slice %30 {offsets = [8, 160], sizes = [8, 16], strides = [1, 1]} : vector<16x192xf32> to vector<8x16xf32>
    %cst_54 = arith.constant dense<0.000000e+00> : vector<8x16xf32>
    %118 = tpu.matmul %116, %117, %cst_54 {dimension_numbers = #tpu.dot_dimension_numbers<[1], [0], [0], [1], [0, 0, 1, 1], [], []>} : vector<8x8xf32>, vector<8x16xf32>, vector<8x16xf32> -> vector<8x16xf32>
    %c0_55 = arith.constant 0 : index
    %c32_56 = arith.constant 32 : index
    %c0_57 = arith.constant 0 : index
    %119 = vector.load %arg5[%c0_55, %c32_56, %c0_57] : memref<2x64x256xbf16, #tpu.memory_space<vmem>>, vector<1x16x256xbf16>
    %120 = vector.shape_cast %119 : vector<1x16x256xbf16> to vector<16x256xbf16>
    %121 = arith.truncf %118 : vector<8x16xf32> to vector<8x16xbf16>
    %cst_58 = arith.constant dense<0.000000e+00> : vector<8x256xf32>
    %122 = tpu.matmul %121, %120, %cst_58 {dimension_numbers = #tpu.dot_dimension_numbers<[1], [0], [0], [1], [0, 0, 1, 1], [], []>} : vector<8x16xbf16>, vector<16x256xbf16>, vector<8x256xf32> -> vector<8x256xf32>
    %123 = arith.addf %115, %122 : vector<8x256xf32>
    %124 = vector.extract_strided_slice %65 {offsets = [56, 0], sizes = [8, 8], strides = [1, 1]} : vector<64x8xf32> to vector<8x8xf32>
    %125 = vector.extract_strided_slice %30 {offsets = [8, 176], sizes = [8, 16], strides = [1, 1]} : vector<16x192xf32> to vector<8x16xf32>
    %cst_59 = arith.constant dense<0.000000e+00> : vector<8x16xf32>
    %126 = tpu.matmul %124, %125, %cst_59 {dimension_numbers = #tpu.dot_dimension_numbers<[1], [0], [0], [1], [0, 0, 1, 1], [], []>} : vector<8x8xf32>, vector<8x16xf32>, vector<8x16xf32> -> vector<8x16xf32>
    %c0_60 = arith.constant 0 : index
    %c48_61 = arith.constant 48 : index
    %c0_62 = arith.constant 0 : index
    %127 = vector.load %arg5[%c0_60, %c48_61, %c0_62] : memref<2x64x256xbf16, #tpu.memory_space<vmem>>, vector<1x16x256xbf16>
    %128 = vector.shape_cast %127 : vector<1x16x256xbf16> to vector<16x256xbf16>
    %129 = arith.truncf %126 : vector<8x16xf32> to vector<8x16xbf16>
    %cst_63 = arith.constant dense<0.000000e+00> : vector<8x256xf32>
    %130 = tpu.matmul %129, %128, %cst_63 {dimension_numbers = #tpu.dot_dimension_numbers<[1], [0], [0], [1], [0, 0, 1, 1], [], []>} : vector<8x16xbf16>, vector<16x256xbf16>, vector<8x256xf32> -> vector<8x256xf32>
    %131 = arith.addf %123, %130 : vector<8x256xf32>
    %132 = tpu.concatenate %98, %131 in 0 : vector<8x256xf32>, vector<8x256xf32> -> vector<16x256xf32>
    %133 = arith.addf %132, %26 : vector<16x256xf32>
    %c0_64 = arith.constant 0 : index
    %c0_65 = arith.constant 0 : index
    %c0_66 = arith.constant 0 : index
    %134 = vector.load %arg6[%c0_64, %c0_65, %c0_66] : memref<2x1x256xf32, #tpu.memory_space<vmem>>, vector<1x1x256xf32>
    %135 = vector.shape_cast %134 : vector<1x1x256xf32> to vector<1x256xf32>
    %c0_67 = arith.constant 0 : index
    %c0_68 = arith.constant 0 : index
    %c0_69 = arith.constant 0 : index
    %136 = vector.load %arg7[%c0_67, %c0_68, %c0_69] : memref<2x1x256xf32, #tpu.memory_space<vmem>>, vector<1x1x256xf32>
    %137 = vector.shape_cast %136 : vector<1x1x256xf32> to vector<1x256xf32>
    %cst_70 = arith.constant dense<0.000000e+00> : vector<16xf32>
    %138 = vector.multi_reduction <add>, %133, %cst_70 [1] : vector<16x256xf32> to vector<16xf32>
    %139 = vector.shape_cast %138 : vector<16xf32> to vector<16x1xf32>
    %140 = arith.mulf %133, %133 : vector<16x256xf32>
    %cst_71 = arith.constant dense<0.000000e+00> : vector<16xf32>
    %141 = vector.multi_reduction <add>, %140, %cst_71 [1] : vector<16x256xf32> to vector<16xf32>
    %142 = vector.shape_cast %141 : vector<16xf32> to vector<16x1xf32>
    %cst_72 = arith.constant 0.00434782589 : f32
    %143 = vector.broadcast %cst_72 : f32 to vector<16x1xf32>
    %144 = arith.mulf %139, %143 : vector<16x1xf32>
    %cst_73 = arith.constant 0.00434782589 : f32
    %145 = vector.broadcast %cst_73 : f32 to vector<16x1xf32>
    %146 = arith.mulf %142, %145 : vector<16x1xf32>
    %147 = arith.mulf %144, %144 : vector<16x1xf32>
    %148 = arith.subf %146, %147 : vector<16x1xf32>
    %149 = vector.broadcast %144 : vector<16x1xf32> to vector<16x256xf32>
    %150 = arith.subf %133, %149 : vector<16x256xf32>
    %cst_74 = arith.constant 9.99999997E-7 : f32
    %151 = vector.broadcast %cst_74 : f32 to vector<16x1xf32>
    %152 = arith.addf %148, %151 : vector<16x1xf32>
    %153 = math.rsqrt %152 : vector<16x1xf32>
    %154 = vector.broadcast %153 : vector<16x1xf32> to vector<16x256xf32>
    %155 = arith.mulf %150, %154 : vector<16x256xf32>
    %156 = vector.broadcast %135 : vector<1x256xf32> to vector<16x256xf32>
    %157 = arith.mulf %155, %156 : vector<16x256xf32>
    %158 = vector.broadcast %137 : vector<1x256xf32> to vector<16x256xf32>
    %159 = arith.addf %157, %158 : vector<16x256xf32>
    %160 = arith.truncf %159 : vector<16x256xf32> to vector<16x256xbf16>
    %c0_75 = arith.constant 0 : index
    %c0_76 = arith.constant 0 : index
    %c0_77 = arith.constant 0 : index
    %161 = vector.load %arg8[%c0_75, %c0_76, %c0_77] : memref<2x256x512xbf16, #tpu.memory_space<vmem>>, vector<1x256x512xbf16>
    %162 = vector.shape_cast %161 : vector<1x256x512xbf16> to vector<256x512xbf16>
    %cst_78 = arith.constant dense<0.000000e+00> : vector<16x512xf32>
    %163 = tpu.matmul %160, %162, %cst_78 {dimension_numbers = #tpu.dot_dimension_numbers<[1], [0], [0], [1], [0, 0, 1, 1], [], []>} : vector<16x256xbf16>, vector<256x512xbf16>, vector<16x512xf32> -> vector<16x512xf32>
    %c0_79 = arith.constant 0 : index
    %c0_80 = arith.constant 0 : index
    %c0_81 = arith.constant 0 : index
    %164 = vector.load %arg9[%c0_79, %c0_80, %c0_81] : memref<2x1x512xf32, #tpu.memory_space<vmem>>, vector<1x1x512xf32>
    %165 = vector.shape_cast %164 : vector<1x1x512xf32> to vector<1x512xf32>
    %166 = vector.broadcast %165 : vector<1x512xf32> to vector<16x512xf32>
    %167 = arith.addf %163, %166 : vector<16x512xf32>
    %cst_82 = arith.constant 0.000000e+00 : f32
    %168 = vector.broadcast %cst_82 : f32 to vector<16x512xf32>
    %169 = arith.maximumf %167, %168 : vector<16x512xf32>
    %170 = arith.truncf %169 : vector<16x512xf32> to vector<16x512xbf16>
    %c0_83 = arith.constant 0 : index
    %c0_84 = arith.constant 0 : index
    %c0_85 = arith.constant 0 : index
    %171 = vector.load %arg10[%c0_83, %c0_84, %c0_85] : memref<2x512x256xbf16, #tpu.memory_space<vmem>>, vector<1x512x256xbf16>
    %172 = vector.shape_cast %171 : vector<1x512x256xbf16> to vector<512x256xbf16>
    %cst_86 = arith.constant dense<0.000000e+00> : vector<16x256xf32>
    %173 = tpu.matmul %170, %172, %cst_86 {dimension_numbers = #tpu.dot_dimension_numbers<[1], [0], [0], [1], [0, 0, 1, 1], [], []>} : vector<16x512xbf16>, vector<512x256xbf16>, vector<16x256xf32> -> vector<16x256xf32>
    %c0_87 = arith.constant 0 : index
    %c0_88 = arith.constant 0 : index
    %c0_89 = arith.constant 0 : index
    %174 = vector.load %arg11[%c0_87, %c0_88, %c0_89] : memref<2x1x256xf32, #tpu.memory_space<vmem>>, vector<1x1x256xf32>
    %175 = vector.shape_cast %174 : vector<1x1x256xf32> to vector<1x256xf32>
    %176 = vector.broadcast %175 : vector<1x256xf32> to vector<16x256xf32>
    %177 = arith.addf %173, %176 : vector<16x256xf32>
    %178 = arith.addf %177, %159 : vector<16x256xf32>
    %c0_90 = arith.constant 0 : index
    %c0_91 = arith.constant 0 : index
    %c0_92 = arith.constant 0 : index
    %179 = vector.load %arg12[%c0_90, %c0_91, %c0_92] : memref<2x1x256xf32, #tpu.memory_space<vmem>>, vector<1x1x256xf32>
    %180 = vector.shape_cast %179 : vector<1x1x256xf32> to vector<1x256xf32>
    %c0_93 = arith.constant 0 : index
    %c0_94 = arith.constant 0 : index
    %c0_95 = arith.constant 0 : index
    %181 = vector.load %arg13[%c0_93, %c0_94, %c0_95] : memref<2x1x256xf32, #tpu.memory_space<vmem>>, vector<1x1x256xf32>
    %182 = vector.shape_cast %181 : vector<1x1x256xf32> to vector<1x256xf32>
    %cst_96 = arith.constant dense<0.000000e+00> : vector<16xf32>
    %183 = vector.multi_reduction <add>, %178, %cst_96 [1] : vector<16x256xf32> to vector<16xf32>
    %184 = vector.shape_cast %183 : vector<16xf32> to vector<16x1xf32>
    %185 = arith.mulf %178, %178 : vector<16x256xf32>
    %cst_97 = arith.constant dense<0.000000e+00> : vector<16xf32>
    %186 = vector.multi_reduction <add>, %185, %cst_97 [1] : vector<16x256xf32> to vector<16xf32>
    %187 = vector.shape_cast %186 : vector<16xf32> to vector<16x1xf32>
    %cst_98 = arith.constant 0.00434782589 : f32
    %188 = vector.broadcast %cst_98 : f32 to vector<16x1xf32>
    %189 = arith.mulf %184, %188 : vector<16x1xf32>
    %cst_99 = arith.constant 0.00434782589 : f32
    %190 = vector.broadcast %cst_99 : f32 to vector<16x1xf32>
    %191 = arith.mulf %187, %190 : vector<16x1xf32>
    %192 = arith.mulf %189, %189 : vector<16x1xf32>
    %193 = arith.subf %191, %192 : vector<16x1xf32>
    %194 = vector.broadcast %189 : vector<16x1xf32> to vector<16x256xf32>
    %195 = arith.subf %178, %194 : vector<16x256xf32>
    %cst_100 = arith.constant 9.99999997E-7 : f32
    %196 = vector.broadcast %cst_100 : f32 to vector<16x1xf32>
    %197 = arith.addf %193, %196 : vector<16x1xf32>
    %198 = math.rsqrt %197 : vector<16x1xf32>
    %199 = vector.broadcast %198 : vector<16x1xf32> to vector<16x256xf32>
    %200 = arith.mulf %195, %199 : vector<16x256xf32>
    %201 = vector.broadcast %180 : vector<1x256xf32> to vector<16x256xf32>
    %202 = arith.mulf %200, %201 : vector<16x256xf32>
    %203 = vector.broadcast %182 : vector<1x256xf32> to vector<16x256xf32>
    %204 = arith.addf %202, %203 : vector<16x256xf32>
    %205 = arith.truncf %204 : vector<16x256xf32> to vector<16x256xbf16>
    %c1 = arith.constant 1 : index
    %c0_101 = arith.constant 0 : index
    %c0_102 = arith.constant 0 : index
    %206 = vector.load %arg4[%c1, %c0_101, %c0_102] : memref<2x256x192xbf16, #tpu.memory_space<vmem>>, vector<1x256x192xbf16>
    %207 = vector.shape_cast %206 : vector<1x256x192xbf16> to vector<256x192xbf16>
    %cst_103 = arith.constant dense<0.000000e+00> : vector<16x192xf32>
    %208 = tpu.matmul %205, %207, %cst_103 {dimension_numbers = #tpu.dot_dimension_numbers<[1], [0], [0], [1], [0, 0, 1, 1], [], []>} : vector<16x256xbf16>, vector<256x192xbf16>, vector<16x192xf32> -> vector<16x192xf32>
    %209 = vector.extract_strided_slice %208 {offsets = [0, 0], sizes = [8, 16], strides = [1, 1]} : vector<16x192xf32> to vector<8x16xf32>
    %210 = vector.extract_strided_slice %208 {offsets = [0, 64], sizes = [8, 16], strides = [1, 1]} : vector<16x192xf32> to vector<8x16xf32>
    %cst_104 = arith.constant dense<0.000000e+00> : vector<8x8xf32>
    %211 = tpu.matmul %209, %210, %cst_104 {dimension_numbers = #tpu.dot_dimension_numbers<[1], [1], [0], [0], [0, 0, 1, 0], [], []>} : vector<8x16xf32>, vector<8x16xf32>, vector<8x8xf32> -> vector<8x8xf32>
    %212 = vector.extract_strided_slice %208 {offsets = [0, 16], sizes = [8, 16], strides = [1, 1]} : vector<16x192xf32> to vector<8x16xf32>
    %213 = vector.extract_strided_slice %208 {offsets = [0, 80], sizes = [8, 16], strides = [1, 1]} : vector<16x192xf32> to vector<8x16xf32>
    %cst_105 = arith.constant dense<0.000000e+00> : vector<8x8xf32>
    %214 = tpu.matmul %212, %213, %cst_105 {dimension_numbers = #tpu.dot_dimension_numbers<[1], [1], [0], [0], [0, 0, 1, 0], [], []>} : vector<8x16xf32>, vector<8x16xf32>, vector<8x8xf32> -> vector<8x8xf32>
    %215 = vector.extract_strided_slice %208 {offsets = [0, 32], sizes = [8, 16], strides = [1, 1]} : vector<16x192xf32> to vector<8x16xf32>
    %216 = vector.extract_strided_slice %208 {offsets = [0, 96], sizes = [8, 16], strides = [1, 1]} : vector<16x192xf32> to vector<8x16xf32>
    %cst_106 = arith.constant dense<0.000000e+00> : vector<8x8xf32>
    %217 = tpu.matmul %215, %216, %cst_106 {dimension_numbers = #tpu.dot_dimension_numbers<[1], [1], [0], [0], [0, 0, 1, 0], [], []>} : vector<8x16xf32>, vector<8x16xf32>, vector<8x8xf32> -> vector<8x8xf32>
    %218 = vector.extract_strided_slice %208 {offsets = [0, 48], sizes = [8, 16], strides = [1, 1]} : vector<16x192xf32> to vector<8x16xf32>
    %219 = vector.extract_strided_slice %208 {offsets = [0, 112], sizes = [8, 16], strides = [1, 1]} : vector<16x192xf32> to vector<8x16xf32>
    %cst_107 = arith.constant dense<0.000000e+00> : vector<8x8xf32>
    %220 = tpu.matmul %218, %219, %cst_107 {dimension_numbers = #tpu.dot_dimension_numbers<[1], [1], [0], [0], [0, 0, 1, 0], [], []>} : vector<8x16xf32>, vector<8x16xf32>, vector<8x8xf32> -> vector<8x8xf32>
    %221 = vector.extract_strided_slice %208 {offsets = [8, 0], sizes = [8, 16], strides = [1, 1]} : vector<16x192xf32> to vector<8x16xf32>
    %222 = vector.extract_strided_slice %208 {offsets = [8, 64], sizes = [8, 16], strides = [1, 1]} : vector<16x192xf32> to vector<8x16xf32>
    %cst_108 = arith.constant dense<0.000000e+00> : vector<8x8xf32>
    %223 = tpu.matmul %221, %222, %cst_108 {dimension_numbers = #tpu.dot_dimension_numbers<[1], [1], [0], [0], [0, 0, 1, 0], [], []>} : vector<8x16xf32>, vector<8x16xf32>, vector<8x8xf32> -> vector<8x8xf32>
    %224 = vector.extract_strided_slice %208 {offsets = [8, 16], sizes = [8, 16], strides = [1, 1]} : vector<16x192xf32> to vector<8x16xf32>
    %225 = vector.extract_strided_slice %208 {offsets = [8, 80], sizes = [8, 16], strides = [1, 1]} : vector<16x192xf32> to vector<8x16xf32>
    %cst_109 = arith.constant dense<0.000000e+00> : vector<8x8xf32>
    %226 = tpu.matmul %224, %225, %cst_109 {dimension_numbers = #tpu.dot_dimension_numbers<[1], [1], [0], [0], [0, 0, 1, 0], [], []>} : vector<8x16xf32>, vector<8x16xf32>, vector<8x8xf32> -> vector<8x8xf32>
    %227 = vector.extract_strided_slice %208 {offsets = [8, 32], sizes = [8, 16], strides = [1, 1]} : vector<16x192xf32> to vector<8x16xf32>
    %228 = vector.extract_strided_slice %208 {offsets = [8, 96], sizes = [8, 16], strides = [1, 1]} : vector<16x192xf32> to vector<8x16xf32>
    %cst_110 = arith.constant dense<0.000000e+00> : vector<8x8xf32>
    %229 = tpu.matmul %227, %228, %cst_110 {dimension_numbers = #tpu.dot_dimension_numbers<[1], [1], [0], [0], [0, 0, 1, 0], [], []>} : vector<8x16xf32>, vector<8x16xf32>, vector<8x8xf32> -> vector<8x8xf32>
    %230 = vector.extract_strided_slice %208 {offsets = [8, 48], sizes = [8, 16], strides = [1, 1]} : vector<16x192xf32> to vector<8x16xf32>
    %231 = vector.extract_strided_slice %208 {offsets = [8, 112], sizes = [8, 16], strides = [1, 1]} : vector<16x192xf32> to vector<8x16xf32>
    %cst_111 = arith.constant dense<0.000000e+00> : vector<8x8xf32>
    %232 = tpu.matmul %230, %231, %cst_111 {dimension_numbers = #tpu.dot_dimension_numbers<[1], [1], [0], [0], [0, 0, 1, 0], [], []>} : vector<8x16xf32>, vector<8x16xf32>, vector<8x8xf32> -> vector<8x8xf32>
    %233 = tpu.concatenate %211, %214, %217, %220, %223, %226, %229, %232 in 0 : vector<8x8xf32>, vector<8x8xf32>, vector<8x8xf32>, vector<8x8xf32>, vector<8x8xf32>, vector<8x8xf32>, vector<8x8xf32>, vector<8x8xf32> -> vector<64x8xf32>
    %cst_112 = arith.constant dense<0xFF800000> : vector<64xf32>
    %234 = vector.multi_reduction <maximumf>, %233, %cst_112 [1] : vector<64x8xf32> to vector<64xf32>
    %235 = vector.shape_cast %234 : vector<64xf32> to vector<64x1xf32>
    %236 = vector.broadcast %235 : vector<64x1xf32> to vector<64x8xf32>
    %237 = arith.subf %233, %236 : vector<64x8xf32>
    %238 = math.exp %237 : vector<64x8xf32>
    %cst_113 = arith.constant dense<0.000000e+00> : vector<64xf32>
    %239 = vector.multi_reduction <add>, %238, %cst_113 [1] : vector<64x8xf32> to vector<64xf32>
    %240 = vector.shape_cast %239 : vector<64xf32> to vector<64x1xf32>
    %241 = tpu.reciprocal %240 {approx = true} : vector<64x1xf32> -> vector<64x1xf32>
    %242 = vector.broadcast %241 : vector<64x1xf32> to vector<64x8xf32>
    %243 = arith.mulf %238, %242 : vector<64x8xf32>
    %cst_114 = arith.constant 0.000000e+00 : f32
    %244 = vector.broadcast %cst_114 : f32 to vector<8x256xf32>
    %245 = vector.extract_strided_slice %243 {offsets = [0, 0], sizes = [8, 8], strides = [1, 1]} : vector<64x8xf32> to vector<8x8xf32>
    %246 = vector.extract_strided_slice %208 {offsets = [0, 128], sizes = [8, 16], strides = [1, 1]} : vector<16x192xf32> to vector<8x16xf32>
    %cst_115 = arith.constant dense<0.000000e+00> : vector<8x16xf32>
    %247 = tpu.matmul %245, %246, %cst_115 {dimension_numbers = #tpu.dot_dimension_numbers<[1], [0], [0], [1], [0, 0, 1, 1], [], []>} : vector<8x8xf32>, vector<8x16xf32>, vector<8x16xf32> -> vector<8x16xf32>
    %c1_116 = arith.constant 1 : index
    %c0_117 = arith.constant 0 : index
    %c0_118 = arith.constant 0 : index
    %248 = vector.load %arg5[%c1_116, %c0_117, %c0_118] : memref<2x64x256xbf16, #tpu.memory_space<vmem>>, vector<1x16x256xbf16>
    %249 = vector.shape_cast %248 : vector<1x16x256xbf16> to vector<16x256xbf16>
    %250 = arith.truncf %247 : vector<8x16xf32> to vector<8x16xbf16>
    %cst_119 = arith.constant dense<0.000000e+00> : vector<8x256xf32>
    %251 = tpu.matmul %250, %249, %cst_119 {dimension_numbers = #tpu.dot_dimension_numbers<[1], [0], [0], [1], [0, 0, 1, 1], [], []>} : vector<8x16xbf16>, vector<16x256xbf16>, vector<8x256xf32> -> vector<8x256xf32>
    %252 = arith.addf %244, %251 : vector<8x256xf32>
    %253 = vector.extract_strided_slice %243 {offsets = [8, 0], sizes = [8, 8], strides = [1, 1]} : vector<64x8xf32> to vector<8x8xf32>
    %254 = vector.extract_strided_slice %208 {offsets = [0, 144], sizes = [8, 16], strides = [1, 1]} : vector<16x192xf32> to vector<8x16xf32>
    %cst_120 = arith.constant dense<0.000000e+00> : vector<8x16xf32>
    %255 = tpu.matmul %253, %254, %cst_120 {dimension_numbers = #tpu.dot_dimension_numbers<[1], [0], [0], [1], [0, 0, 1, 1], [], []>} : vector<8x8xf32>, vector<8x16xf32>, vector<8x16xf32> -> vector<8x16xf32>
    %c1_121 = arith.constant 1 : index
    %c16_122 = arith.constant 16 : index
    %c0_123 = arith.constant 0 : index
    %256 = vector.load %arg5[%c1_121, %c16_122, %c0_123] : memref<2x64x256xbf16, #tpu.memory_space<vmem>>, vector<1x16x256xbf16>
    %257 = vector.shape_cast %256 : vector<1x16x256xbf16> to vector<16x256xbf16>
    %258 = arith.truncf %255 : vector<8x16xf32> to vector<8x16xbf16>
    %cst_124 = arith.constant dense<0.000000e+00> : vector<8x256xf32>
    %259 = tpu.matmul %258, %257, %cst_124 {dimension_numbers = #tpu.dot_dimension_numbers<[1], [0], [0], [1], [0, 0, 1, 1], [], []>} : vector<8x16xbf16>, vector<16x256xbf16>, vector<8x256xf32> -> vector<8x256xf32>
    %260 = arith.addf %252, %259 : vector<8x256xf32>
    %261 = vector.extract_strided_slice %243 {offsets = [16, 0], sizes = [8, 8], strides = [1, 1]} : vector<64x8xf32> to vector<8x8xf32>
    %262 = vector.extract_strided_slice %208 {offsets = [0, 160], sizes = [8, 16], strides = [1, 1]} : vector<16x192xf32> to vector<8x16xf32>
    %cst_125 = arith.constant dense<0.000000e+00> : vector<8x16xf32>
    %263 = tpu.matmul %261, %262, %cst_125 {dimension_numbers = #tpu.dot_dimension_numbers<[1], [0], [0], [1], [0, 0, 1, 1], [], []>} : vector<8x8xf32>, vector<8x16xf32>, vector<8x16xf32> -> vector<8x16xf32>
    %c1_126 = arith.constant 1 : index
    %c32_127 = arith.constant 32 : index
    %c0_128 = arith.constant 0 : index
    %264 = vector.load %arg5[%c1_126, %c32_127, %c0_128] : memref<2x64x256xbf16, #tpu.memory_space<vmem>>, vector<1x16x256xbf16>
    %265 = vector.shape_cast %264 : vector<1x16x256xbf16> to vector<16x256xbf16>
    %266 = arith.truncf %263 : vector<8x16xf32> to vector<8x16xbf16>
    %cst_129 = arith.constant dense<0.000000e+00> : vector<8x256xf32>
    %267 = tpu.matmul %266, %265, %cst_129 {dimension_numbers = #tpu.dot_dimension_numbers<[1], [0], [0], [1], [0, 0, 1, 1], [], []>} : vector<8x16xbf16>, vector<16x256xbf16>, vector<8x256xf32> -> vector<8x256xf32>
    %268 = arith.addf %260, %267 : vector<8x256xf32>
    %269 = vector.extract_strided_slice %243 {offsets = [24, 0], sizes = [8, 8], strides = [1, 1]} : vector<64x8xf32> to vector<8x8xf32>
    %270 = vector.extract_strided_slice %208 {offsets = [0, 176], sizes = [8, 16], strides = [1, 1]} : vector<16x192xf32> to vector<8x16xf32>
    %cst_130 = arith.constant dense<0.000000e+00> : vector<8x16xf32>
    %271 = tpu.matmul %269, %270, %cst_130 {dimension_numbers = #tpu.dot_dimension_numbers<[1], [0], [0], [1], [0, 0, 1, 1], [], []>} : vector<8x8xf32>, vector<8x16xf32>, vector<8x16xf32> -> vector<8x16xf32>
    %c1_131 = arith.constant 1 : index
    %c48_132 = arith.constant 48 : index
    %c0_133 = arith.constant 0 : index
    %272 = vector.load %arg5[%c1_131, %c48_132, %c0_133] : memref<2x64x256xbf16, #tpu.memory_space<vmem>>, vector<1x16x256xbf16>
    %273 = vector.shape_cast %272 : vector<1x16x256xbf16> to vector<16x256xbf16>
    %274 = arith.truncf %271 : vector<8x16xf32> to vector<8x16xbf16>
    %cst_134 = arith.constant dense<0.000000e+00> : vector<8x256xf32>
    %275 = tpu.matmul %274, %273, %cst_134 {dimension_numbers = #tpu.dot_dimension_numbers<[1], [0], [0], [1], [0, 0, 1, 1], [], []>} : vector<8x16xbf16>, vector<16x256xbf16>, vector<8x256xf32> -> vector<8x256xf32>
    %276 = arith.addf %268, %275 : vector<8x256xf32>
    %cst_135 = arith.constant 0.000000e+00 : f32
    %277 = vector.broadcast %cst_135 : f32 to vector<8x256xf32>
    %278 = vector.extract_strided_slice %243 {offsets = [32, 0], sizes = [8, 8], strides = [1, 1]} : vector<64x8xf32> to vector<8x8xf32>
    %279 = vector.extract_strided_slice %208 {offsets = [8, 128], sizes = [8, 16], strides = [1, 1]} : vector<16x192xf32> to vector<8x16xf32>
    %cst_136 = arith.constant dense<0.000000e+00> : vector<8x16xf32>
    %280 = tpu.matmul %278, %279, %cst_136 {dimension_numbers = #tpu.dot_dimension_numbers<[1], [0], [0], [1], [0, 0, 1, 1], [], []>} : vector<8x8xf32>, vector<8x16xf32>, vector<8x16xf32> -> vector<8x16xf32>
    %c1_137 = arith.constant 1 : index
    %c0_138 = arith.constant 0 : index
    %c0_139 = arith.constant 0 : index
    %281 = vector.load %arg5[%c1_137, %c0_138, %c0_139] : memref<2x64x256xbf16, #tpu.memory_space<vmem>>, vector<1x16x256xbf16>
    %282 = vector.shape_cast %281 : vector<1x16x256xbf16> to vector<16x256xbf16>
    %283 = arith.truncf %280 : vector<8x16xf32> to vector<8x16xbf16>
    %cst_140 = arith.constant dense<0.000000e+00> : vector<8x256xf32>
    %284 = tpu.matmul %283, %282, %cst_140 {dimension_numbers = #tpu.dot_dimension_numbers<[1], [0], [0], [1], [0, 0, 1, 1], [], []>} : vector<8x16xbf16>, vector<16x256xbf16>, vector<8x256xf32> -> vector<8x256xf32>
    %285 = arith.addf %277, %284 : vector<8x256xf32>
    %286 = vector.extract_strided_slice %243 {offsets = [40, 0], sizes = [8, 8], strides = [1, 1]} : vector<64x8xf32> to vector<8x8xf32>
    %287 = vector.extract_strided_slice %208 {offsets = [8, 144], sizes = [8, 16], strides = [1, 1]} : vector<16x192xf32> to vector<8x16xf32>
    %cst_141 = arith.constant dense<0.000000e+00> : vector<8x16xf32>
    %288 = tpu.matmul %286, %287, %cst_141 {dimension_numbers = #tpu.dot_dimension_numbers<[1], [0], [0], [1], [0, 0, 1, 1], [], []>} : vector<8x8xf32>, vector<8x16xf32>, vector<8x16xf32> -> vector<8x16xf32>
    %c1_142 = arith.constant 1 : index
    %c16_143 = arith.constant 16 : index
    %c0_144 = arith.constant 0 : index
    %289 = vector.load %arg5[%c1_142, %c16_143, %c0_144] : memref<2x64x256xbf16, #tpu.memory_space<vmem>>, vector<1x16x256xbf16>
    %290 = vector.shape_cast %289 : vector<1x16x256xbf16> to vector<16x256xbf16>
    %291 = arith.truncf %288 : vector<8x16xf32> to vector<8x16xbf16>
    %cst_145 = arith.constant dense<0.000000e+00> : vector<8x256xf32>
    %292 = tpu.matmul %291, %290, %cst_145 {dimension_numbers = #tpu.dot_dimension_numbers<[1], [0], [0], [1], [0, 0, 1, 1], [], []>} : vector<8x16xbf16>, vector<16x256xbf16>, vector<8x256xf32> -> vector<8x256xf32>
    %293 = arith.addf %285, %292 : vector<8x256xf32>
    %294 = vector.extract_strided_slice %243 {offsets = [48, 0], sizes = [8, 8], strides = [1, 1]} : vector<64x8xf32> to vector<8x8xf32>
    %295 = vector.extract_strided_slice %208 {offsets = [8, 160], sizes = [8, 16], strides = [1, 1]} : vector<16x192xf32> to vector<8x16xf32>
    %cst_146 = arith.constant dense<0.000000e+00> : vector<8x16xf32>
    %296 = tpu.matmul %294, %295, %cst_146 {dimension_numbers = #tpu.dot_dimension_numbers<[1], [0], [0], [1], [0, 0, 1, 1], [], []>} : vector<8x8xf32>, vector<8x16xf32>, vector<8x16xf32> -> vector<8x16xf32>
    %c1_147 = arith.constant 1 : index
    %c32_148 = arith.constant 32 : index
    %c0_149 = arith.constant 0 : index
    %297 = vector.load %arg5[%c1_147, %c32_148, %c0_149] : memref<2x64x256xbf16, #tpu.memory_space<vmem>>, vector<1x16x256xbf16>
    %298 = vector.shape_cast %297 : vector<1x16x256xbf16> to vector<16x256xbf16>
    %299 = arith.truncf %296 : vector<8x16xf32> to vector<8x16xbf16>
    %cst_150 = arith.constant dense<0.000000e+00> : vector<8x256xf32>
    %300 = tpu.matmul %299, %298, %cst_150 {dimension_numbers = #tpu.dot_dimension_numbers<[1], [0], [0], [1], [0, 0, 1, 1], [], []>} : vector<8x16xbf16>, vector<16x256xbf16>, vector<8x256xf32> -> vector<8x256xf32>
    %301 = arith.addf %293, %300 : vector<8x256xf32>
    %302 = vector.extract_strided_slice %243 {offsets = [56, 0], sizes = [8, 8], strides = [1, 1]} : vector<64x8xf32> to vector<8x8xf32>
    %303 = vector.extract_strided_slice %208 {offsets = [8, 176], sizes = [8, 16], strides = [1, 1]} : vector<16x192xf32> to vector<8x16xf32>
    %cst_151 = arith.constant dense<0.000000e+00> : vector<8x16xf32>
    %304 = tpu.matmul %302, %303, %cst_151 {dimension_numbers = #tpu.dot_dimension_numbers<[1], [0], [0], [1], [0, 0, 1, 1], [], []>} : vector<8x8xf32>, vector<8x16xf32>, vector<8x16xf32> -> vector<8x16xf32>
    %c1_152 = arith.constant 1 : index
    %c48_153 = arith.constant 48 : index
    %c0_154 = arith.constant 0 : index
    %305 = vector.load %arg5[%c1_152, %c48_153, %c0_154] : memref<2x64x256xbf16, #tpu.memory_space<vmem>>, vector<1x16x256xbf16>
    %306 = vector.shape_cast %305 : vector<1x16x256xbf16> to vector<16x256xbf16>
    %307 = arith.truncf %304 : vector<8x16xf32> to vector<8x16xbf16>
    %cst_155 = arith.constant dense<0.000000e+00> : vector<8x256xf32>
    %308 = tpu.matmul %307, %306, %cst_155 {dimension_numbers = #tpu.dot_dimension_numbers<[1], [0], [0], [1], [0, 0, 1, 1], [], []>} : vector<8x16xbf16>, vector<16x256xbf16>, vector<8x256xf32> -> vector<8x256xf32>
    %309 = arith.addf %301, %308 : vector<8x256xf32>
    %310 = tpu.concatenate %276, %309 in 0 : vector<8x256xf32>, vector<8x256xf32> -> vector<16x256xf32>
    %311 = arith.addf %310, %204 : vector<16x256xf32>
    %c1_156 = arith.constant 1 : index
    %c0_157 = arith.constant 0 : index
    %c0_158 = arith.constant 0 : index
    %312 = vector.load %arg6[%c1_156, %c0_157, %c0_158] : memref<2x1x256xf32, #tpu.memory_space<vmem>>, vector<1x1x256xf32>
    %313 = vector.shape_cast %312 : vector<1x1x256xf32> to vector<1x256xf32>
    %c1_159 = arith.constant 1 : index
    %c0_160 = arith.constant 0 : index
    %c0_161 = arith.constant 0 : index
    %314 = vector.load %arg7[%c1_159, %c0_160, %c0_161] : memref<2x1x256xf32, #tpu.memory_space<vmem>>, vector<1x1x256xf32>
    %315 = vector.shape_cast %314 : vector<1x1x256xf32> to vector<1x256xf32>
    %cst_162 = arith.constant dense<0.000000e+00> : vector<16xf32>
    %316 = vector.multi_reduction <add>, %311, %cst_162 [1] : vector<16x256xf32> to vector<16xf32>
    %317 = vector.shape_cast %316 : vector<16xf32> to vector<16x1xf32>
    %318 = arith.mulf %311, %311 : vector<16x256xf32>
    %cst_163 = arith.constant dense<0.000000e+00> : vector<16xf32>
    %319 = vector.multi_reduction <add>, %318, %cst_163 [1] : vector<16x256xf32> to vector<16xf32>
    %320 = vector.shape_cast %319 : vector<16xf32> to vector<16x1xf32>
    %cst_164 = arith.constant 0.00434782589 : f32
    %321 = vector.broadcast %cst_164 : f32 to vector<16x1xf32>
    %322 = arith.mulf %317, %321 : vector<16x1xf32>
    %cst_165 = arith.constant 0.00434782589 : f32
    %323 = vector.broadcast %cst_165 : f32 to vector<16x1xf32>
    %324 = arith.mulf %320, %323 : vector<16x1xf32>
    %325 = arith.mulf %322, %322 : vector<16x1xf32>
    %326 = arith.subf %324, %325 : vector<16x1xf32>
    %327 = vector.broadcast %322 : vector<16x1xf32> to vector<16x256xf32>
    %328 = arith.subf %311, %327 : vector<16x256xf32>
    %cst_166 = arith.constant 9.99999997E-7 : f32
    %329 = vector.broadcast %cst_166 : f32 to vector<16x1xf32>
    %330 = arith.addf %326, %329 : vector<16x1xf32>
    %331 = math.rsqrt %330 : vector<16x1xf32>
    %332 = vector.broadcast %331 : vector<16x1xf32> to vector<16x256xf32>
    %333 = arith.mulf %328, %332 : vector<16x256xf32>
    %334 = vector.broadcast %313 : vector<1x256xf32> to vector<16x256xf32>
    %335 = arith.mulf %333, %334 : vector<16x256xf32>
    %336 = vector.broadcast %315 : vector<1x256xf32> to vector<16x256xf32>
    %337 = arith.addf %335, %336 : vector<16x256xf32>
    %338 = arith.truncf %337 : vector<16x256xf32> to vector<16x256xbf16>
    %c1_167 = arith.constant 1 : index
    %c0_168 = arith.constant 0 : index
    %c0_169 = arith.constant 0 : index
    %339 = vector.load %arg8[%c1_167, %c0_168, %c0_169] : memref<2x256x512xbf16, #tpu.memory_space<vmem>>, vector<1x256x512xbf16>
    %340 = vector.shape_cast %339 : vector<1x256x512xbf16> to vector<256x512xbf16>
    %cst_170 = arith.constant dense<0.000000e+00> : vector<16x512xf32>
    %341 = tpu.matmul %338, %340, %cst_170 {dimension_numbers = #tpu.dot_dimension_numbers<[1], [0], [0], [1], [0, 0, 1, 1], [], []>} : vector<16x256xbf16>, vector<256x512xbf16>, vector<16x512xf32> -> vector<16x512xf32>
    %c1_171 = arith.constant 1 : index
    %c0_172 = arith.constant 0 : index
    %c0_173 = arith.constant 0 : index
    %342 = vector.load %arg9[%c1_171, %c0_172, %c0_173] : memref<2x1x512xf32, #tpu.memory_space<vmem>>, vector<1x1x512xf32>
    %343 = vector.shape_cast %342 : vector<1x1x512xf32> to vector<1x512xf32>
    %344 = vector.broadcast %343 : vector<1x512xf32> to vector<16x512xf32>
    %345 = arith.addf %341, %344 : vector<16x512xf32>
    %cst_174 = arith.constant 0.000000e+00 : f32
    %346 = vector.broadcast %cst_174 : f32 to vector<16x512xf32>
    %347 = arith.maximumf %345, %346 : vector<16x512xf32>
    %348 = arith.truncf %347 : vector<16x512xf32> to vector<16x512xbf16>
    %c1_175 = arith.constant 1 : index
    %c0_176 = arith.constant 0 : index
    %c0_177 = arith.constant 0 : index
    %349 = vector.load %arg10[%c1_175, %c0_176, %c0_177] : memref<2x512x256xbf16, #tpu.memory_space<vmem>>, vector<1x512x256xbf16>
    %350 = vector.shape_cast %349 : vector<1x512x256xbf16> to vector<512x256xbf16>
    %cst_178 = arith.constant dense<0.000000e+00> : vector<16x256xf32>
    %351 = tpu.matmul %348, %350, %cst_178 {dimension_numbers = #tpu.dot_dimension_numbers<[1], [0], [0], [1], [0, 0, 1, 1], [], []>} : vector<16x512xbf16>, vector<512x256xbf16>, vector<16x256xf32> -> vector<16x256xf32>
    %c1_179 = arith.constant 1 : index
    %c0_180 = arith.constant 0 : index
    %c0_181 = arith.constant 0 : index
    %352 = vector.load %arg11[%c1_179, %c0_180, %c0_181] : memref<2x1x256xf32, #tpu.memory_space<vmem>>, vector<1x1x256xf32>
    %353 = vector.shape_cast %352 : vector<1x1x256xf32> to vector<1x256xf32>
    %354 = vector.broadcast %353 : vector<1x256xf32> to vector<16x256xf32>
    %355 = arith.addf %351, %354 : vector<16x256xf32>
    %356 = arith.addf %355, %337 : vector<16x256xf32>
    %c1_182 = arith.constant 1 : index
    %c0_183 = arith.constant 0 : index
    %c0_184 = arith.constant 0 : index
    %357 = vector.load %arg12[%c1_182, %c0_183, %c0_184] : memref<2x1x256xf32, #tpu.memory_space<vmem>>, vector<1x1x256xf32>
    %358 = vector.shape_cast %357 : vector<1x1x256xf32> to vector<1x256xf32>
    %c1_185 = arith.constant 1 : index
    %c0_186 = arith.constant 0 : index
    %c0_187 = arith.constant 0 : index
    %359 = vector.load %arg13[%c1_185, %c0_186, %c0_187] : memref<2x1x256xf32, #tpu.memory_space<vmem>>, vector<1x1x256xf32>
    %360 = vector.shape_cast %359 : vector<1x1x256xf32> to vector<1x256xf32>
    %cst_188 = arith.constant dense<0.000000e+00> : vector<16xf32>
    %361 = vector.multi_reduction <add>, %356, %cst_188 [1] : vector<16x256xf32> to vector<16xf32>
    %362 = vector.shape_cast %361 : vector<16xf32> to vector<16x1xf32>
    %363 = arith.mulf %356, %356 : vector<16x256xf32>
    %cst_189 = arith.constant dense<0.000000e+00> : vector<16xf32>
    %364 = vector.multi_reduction <add>, %363, %cst_189 [1] : vector<16x256xf32> to vector<16xf32>
    %365 = vector.shape_cast %364 : vector<16xf32> to vector<16x1xf32>
    %cst_190 = arith.constant 0.00434782589 : f32
    %366 = vector.broadcast %cst_190 : f32 to vector<16x1xf32>
    %367 = arith.mulf %362, %366 : vector<16x1xf32>
    %cst_191 = arith.constant 0.00434782589 : f32
    %368 = vector.broadcast %cst_191 : f32 to vector<16x1xf32>
    %369 = arith.mulf %365, %368 : vector<16x1xf32>
    %370 = arith.mulf %367, %367 : vector<16x1xf32>
    %371 = arith.subf %369, %370 : vector<16x1xf32>
    %372 = vector.broadcast %367 : vector<16x1xf32> to vector<16x256xf32>
    %373 = arith.subf %356, %372 : vector<16x256xf32>
    %cst_192 = arith.constant 9.99999997E-7 : f32
    %374 = vector.broadcast %cst_192 : f32 to vector<16x1xf32>
    %375 = arith.addf %371, %374 : vector<16x1xf32>
    %376 = math.rsqrt %375 : vector<16x1xf32>
    %377 = vector.broadcast %376 : vector<16x1xf32> to vector<16x256xf32>
    %378 = arith.mulf %373, %377 : vector<16x256xf32>
    %379 = vector.broadcast %358 : vector<1x256xf32> to vector<16x256xf32>
    %380 = arith.mulf %378, %379 : vector<16x256xf32>
    %381 = vector.broadcast %360 : vector<1x256xf32> to vector<16x256xf32>
    %382 = arith.addf %380, %381 : vector<16x256xf32>
    %c0_193 = arith.constant 0 : index
    %c0_194 = arith.constant 0 : index
    %383 = vector.load %arg14[%c0_193, %c0_194] : memref<16x256xf32, #tpu.memory_space<vmem>>, vector<16x256xf32>
    tpu.vector_store %arg14[%c0_193, %c0_194], %382 {strides = array<i32>} : memref<16x256xf32, #tpu.memory_space<vmem>>, vector<16x256xf32>,
    return
  }
}

</mosaic_0001>

<llo_original>
// kernel: tpu_custom_call.1
$region0: #{tpu_custom_call.1}
  #allocation0 [shape = 'u32[]', space=smem, size = 0x4, offset = 0x4, fixed_abs, tag = 'smem constant byte address 0x4 - core index']
  #allocation1 [shape = 'u32[144,128]{1,0:T(1,128)}', space=vmem, size = 0x12000, scoped, tag = 'internal scratch']
  %s0 = inlined_call_operand.vmem [shape: f32[16,256], index: 0, kind: input, shape index: {}]
  %s1 = inlined_call_operand.vmem [shape: f32[16,256], index: 1, kind: input, shape index: {}]
  %s2 = inlined_call_operand.vmem [shape: f32[1,256], index: 2, kind: input, shape index: {}]
  %s3 = inlined_call_operand.vmem [shape: f32[1,256], index: 3, kind: input, shape index: {}]
  %s4 = inlined_call_operand.vmem [shape: bf16[2,256,192], index: 4, kind: input, shape index: {}]
  %s5 = inlined_call_operand.vmem [shape: bf16[2,64,256], index: 5, kind: input, shape index: {}]
  %s6 = inlined_call_operand.vmem [shape: f32[2,1,256], index: 6, kind: input, shape index: {}]
  %s7 = inlined_call_operand.vmem [shape: f32[2,1,256], index: 7, kind: input, shape index: {}]
  %s8 = inlined_call_operand.hbm [shape: bf16[2,256,512], index: 8, kind: input, shape index: {}]
  %s9 = inlined_call_operand.vmem [shape: f32[2,1,512], index: 9, kind: input, shape index: {}]
  %s10 = inlined_call_operand.hbm [shape: bf16[2,512,256], index: 10, kind: input, shape index: {}]
  %s11 = inlined_call_operand.vmem [shape: f32[2,1,256], index: 11, kind: input, shape index: {}]
  %s12 = inlined_call_operand.vmem [shape: f32[2,1,256], index: 12, kind: input, shape index: {}]
  %s13 = inlined_call_operand.vmem [shape: f32[2,1,256], index: 13, kind: input, shape index: {}]
  %s14 = inlined_call_operand.hbm [shape: f32[16,256], index: 14, kind: output, shape index: {}]
  %s15 = sld [smem:[#allocation0]]
  $region74: #{tpu_custom_call.1} parent=0
    _
  %s17 = ssub.s32 1, %s15
  %s18 = scalar_select 0, %s17, %s15
  $region1: #{tpu_custom_call.1} parent=0
    #allocation2 [shape = 'u8[524288]{0}', space=vmem, size = 0x80000, scoped, tag = 'input window, operand 8, single buffered']
    #allocation3 [shape = 's32[1]{0}', space=sflag, size = 0x4, scoped, tag = 'scoped memory for tpu_custom_call.1']
    #allocation4 [shape = 's32[1]{0}', space=sflag, size = 0x4, scoped, tag = 'scoped memory for tpu_custom_call.1']
    #allocation5 [shape = 'u8[524288]{0}', space=vmem, size = 0x80000, scoped, tag = 'input window, operand 10, single buffered']
    #allocation6 [shape = 's32[1]{0}', space=sflag, size = 0x4, scoped, tag = 'scoped memory for tpu_custom_call.1']
    #allocation7 [shape = 'u8[16384]{0}', space=vmem, size = 0x4000, scoped, tag = 'output window, operand 0, single buffered']
    %19 = vsyncpa [#allocation3], 0
    %20 = vsyncpa [#allocation6], 0
    %21 = vsyncpa [#allocation4], 0
    // Predicated region
    $region2: #{tpu_custom_call.1} parent=1 // pred_check
      _
    $region3: #{tpu_custom_call.1} parent=1 // pred_check_branch
      %23 = sbr.rel (0) target = $region5
    $region4: #{tpu_custom_call.1} parent=1 // pred_region
      _
    $region5: #{tpu_custom_call.1} parent=1 // pred_fallthru
      _
    // Predicated region
    $region6: #{tpu_custom_call.1} parent=1 // pred_check
      _
    $region7: #{tpu_custom_call.1} parent=1 // pred_check_branch
      %25 = sbr.rel (0) target = $region9
    $region8: #{tpu_custom_call.1} parent=1 // pred_region
      _
    $region9: #{tpu_custom_call.1} parent=1 // pred_fallthru
      _
    // Predicated region
    $region10: #{tpu_custom_call.1} parent=1 // pred_check
      _
    $region11: #{tpu_custom_call.1} parent=1 // pred_check_branch
      %27 = sbr.rel (0) target = $region13
    $region12: #{tpu_custom_call.1} parent=1 // pred_region
      _
    $region13: #{tpu_custom_call.1} parent=1 // pred_fallthru
      _
    // Predicated region
    $region14: #{tpu_custom_call.1} parent=1 // pred_check
      _
    $region15: #{tpu_custom_call.1} parent=1 // pred_check_branch
      %29 = sbr.rel (0) target = $region17
    $region16: #{tpu_custom_call.1} parent=1 // pred_region
      _
    $region17: #{tpu_custom_call.1} parent=1 // pred_fallthru
      _
    // Predicated region
    $region18: #{tpu_custom_call.1} parent=1 // pred_check
      _
    $region19: #{tpu_custom_call.1} parent=1 // pred_check_branch
      %31 = sbr.rel (0) target = $region21
    $region20: #{tpu_custom_call.1} parent=1 // pred_region
      _
    $region21: #{tpu_custom_call.1} parent=1 // pred_fallthru
      _
    // Predicated region
    $region22: #{tpu_custom_call.1} parent=1 // pred_check
      _
    $region23: #{tpu_custom_call.1} parent=1 // pred_check_branch
      %33 = sbr.rel (0) target = $region25
    $region24: #{tpu_custom_call.1} parent=1 // pred_region
      _
    $region25: #{tpu_custom_call.1} parent=1 // pred_fallthru
      _
    // Predicated region
    $region26: #{tpu_custom_call.1} parent=1 // pred_check
      _
    $region27: #{tpu_custom_call.1} parent=1 // pred_check_branch
      %35 = sbr.rel (0) target = $region29
    $region28: #{tpu_custom_call.1} parent=1 // pred_region
      _
    $region29: #{tpu_custom_call.1} parent=1 // pred_fallthru
      _
    // Predicated region
    $region30: #{tpu_custom_call.1} parent=1 // pred_check
      _
    $region31: #{tpu_custom_call.1} parent=1 // pred_check_branch
      %37 = sbr.rel (0) target = $region33
    $region32: #{tpu_custom_call.1} parent=1 // pred_region
      _
    $region33: #{tpu_custom_call.1} parent=1 // pred_fallthru
      _
    // Predicated region
    $region34: #{tpu_custom_call.1} parent=1 // pred_check
      _
    $region35: #{tpu_custom_call.1} parent=1 // pred_check_branch
      %39 = sbr.rel (0) target = $region37
    $region36: #{tpu_custom_call.1} parent=1 // pred_region
      %s41 = ssub.s32 16384, 16384
      %42 = vsyncadd [#allocation3], %s41
      %s43 = sshll.u32 [#allocation2], 4
      %s44 = int_to_ptr.vmem [resolvable:$true] %s43
      %49 = dma.hbm_to_vmem [thread:$0]  %s8, 16384, %s44, [#allocation3], 256, 256, 16
    $region37: #{tpu_custom_call.1} parent=1 // pred_fallthru
      _
    // Predicated region
    $region38: #{tpu_custom_call.1} parent=1 // pred_check
      _
    $region39: #{tpu_custom_call.1} parent=1 // pred_check_branch
      %51 = sbr.rel (0) target = $region41
    $region40: #{tpu_custom_call.1} parent=1 // pred_region
      _
    $region41: #{tpu_custom_call.1} parent=1 // pred_fallthru
      _
    // Predicated region
    $region42: #{tpu_custom_call.1} parent=1 // pred_check
      _
    $region43: #{tpu_custom_call.1} parent=1 // pred_check_branch
      %53 = sbr.rel (0) target = $region45
    $region44: #{tpu_custom_call.1} parent=1 // pred_region
      %s55 = ssub.s32 16384, 16384
      %56 = vsyncadd [#allocation6], %s55
      %s57 = sshll.u32 [#allocation5], 4
      %s58 = int_to_ptr.vmem [resolvable:$true] %s57
      %63 = dma.hbm_to_vmem [thread:$0]  %s10, 16384, %s58, [#allocation6], 128, 128, 8
    $region45: #{tpu_custom_call.1} parent=1 // pred_fallthru
      _
    // Predicated region
    $region46: #{tpu_custom_call.1} parent=1 // pred_check
      _
    $region47: #{tpu_custom_call.1} parent=1 // pred_check_branch
      %65 = sbr.rel (0) target = $region49
    $region48: #{tpu_custom_call.1} parent=1 // pred_region
      _
    $region49: #{tpu_custom_call.1} parent=1 // pred_fallthru
      _
    // Predicated region
    $region50: #{tpu_custom_call.1} parent=1 // pred_check
      _
    $region51: #{tpu_custom_call.1} parent=1 // pred_check_branch
      %67 = sbr.rel (0) target = $region53
    $region52: #{tpu_custom_call.1} parent=1 // pred_region
      _
    $region53: #{tpu_custom_call.1} parent=1 // pred_fallthru
      _
    // Predicated region
    $region54: #{tpu_custom_call.1} parent=1 // pred_check
      _
    $region55: #{tpu_custom_call.1} parent=1 // pred_check_branch
      %69 = sbr.rel (0) target = $region57
    $region56: #{tpu_custom_call.1} parent=1 // pred_region
      _
    $region57: #{tpu_custom_call.1} parent=1 // pred_fallthru
      _
    // Predicated region
    $region58: #{tpu_custom_call.1} parent=1 // pred_check
      _
    $region59: #{tpu_custom_call.1} parent=1 // pred_check_branch
      %71 = sbr.rel (0) target = $region61
    $region60: #{tpu_custom_call.1} parent=1 // pred_region
      %72 = dma.done [#allocation3], 16384
    $region61: #{tpu_custom_call.1} parent=1 // pred_fallthru
      _
    // Predicated region
    $region62: #{tpu_custom_call.1} parent=1 // pred_check
      _
    $region63: #{tpu_custom_call.1} parent=1 // pred_check_branch
      %74 = sbr.rel (0) target = $region65
    $region64: #{tpu_custom_call.1} parent=1 // pred_region
      %75 = dma.done [#allocation6], 16384
    $region65: #{tpu_custom_call.1} parent=1 // pred_fallthru
      _
    %v77 = vld [vmem:[%s0] sm:$0xff]
    %v78 = vld [vmem:[%s0 + $0x8] sm:$0xff]
    %v79 = vld [vmem:[%s0 + $0x10] sm:$0xff]
    %v80 = vld [vmem:[%s0 + $0x18] sm:$0xff]
    %v81 = vld [vmem:[%s1] sm:$0xff]
    %v82 = vld [vmem:[%s1 + $0x8] sm:$0xff]
    %v83 = vld [vmem:[%s1 + $0x10] sm:$0xff]
    %v84 = vld [vmem:[%s1 + $0x18] sm:$0xff]
    %v85 = vadd.f32 %v77, %v81
    %v86 = vadd.f32 %v78, %v82
    %v87 = vadd.f32 %v79, %v83
    %v88 = vadd.f32 %v80, %v84
    %v89 = vld [vmem:[%s2] sm:$0x3]
    %v90 = vld [vmem:[%s3] sm:$0x3]
    %v91 = vadd.f32 %v85, %v86
    %92 = vadd.xlane.f32.xlu0 %v91
    %v93 = vpop.xlane.xlu0 %92
    %v94 = vadd.f32 %v87, %v88
    %95 = vadd.xlane.f32.xlu0 %v94
    %v96 = vpop.xlane.xlu0 %95
    %v97 = vmul.f32 %v85, %v85
    %v98 = vmul.f32 %v86, %v86
    %v99 = vmul.f32 %v87, %v87
    %v100 = vmul.f32 %v88, %v88
    %v101 = vadd.f32 %v97, %v98
    %102 = vadd.xlane.f32.xlu0 %v101
    %v103 = vpop.xlane.xlu0 %102
    %v104 = vadd.f32 %v99, %v100
    %105 = vadd.xlane.f32.xlu0 %v104
    %v106 = vpop.xlane.xlu0 %105
    %v107 = vmul.f32 %v93, 0.004347826
    %v108 = vmul.f32 %v96, 0.004347826
    %v109 = vmul.f32 %v103, 0.004347826
    %v110 = vmul.f32 %v106, 0.004347826
    %v111 = vmul.f32 %v107, %v107
    %v112 = vmul.f32 %v108, %v108
    %v113 = vsub.f32 %v109, %v111
    %v114 = vsub.f32 %v110, %v112
    %v115 = vsub.f32 %v85, %v107
    %v116 = vsub.f32 %v86, %v107
    %v117 = vsub.f32 %v87, %v108
    %v118 = vsub.f32 %v88, %v108
    %v119 = vadd.f32 %v113, 1e-06
    %v120 = vadd.f32 %v114, 1e-06
    %v121 = vrsqrt.pop %v119
    %v122 = vrsqrt.pop %v120
    %v123 = vmul.f32 %v115, %v121
    %v124 = vmul.f32 %v116, %v121
    %v125 = vmul.f32 %v117, %v122
    %v126 = vmul.f32 %v118, %v122
    %v128 = vlaneseq
    %v129 = vshrl.u32 %v128, 7
    %v130 = vsub.s32 0, %v129
    %v131 = vrot.slane %v89, %v130
    %v132 = vlaneseq
    %v133 = vshrl.u32 %v132, 7
    %v134 = vsub.s32 1, %v133
    %v135 = vrot.slane %v89, %v134
    %v138 = vmul.f32 %v123, %v131
    %v139 = vmul.f32 %v124, %v135
    %v140 = vmul.f32 %v125, %v131
    %v141 = vmul.f32 %v126, %v135
    %v143 = vlaneseq
    %v144 = vshrl.u32 %v143, 7
    %v145 = vsub.s32 0, %v144
    %v146 = vrot.slane %v90, %v145
    %v147 = vlaneseq
    %v148 = vshrl.u32 %v147, 7
    %v149 = vsub.s32 1, %v148
    %v150 = vrot.slane %v90, %v149
    %v153 = vadd.f32 %v138, %v146
    %v154 = vadd.f32 %v139, %v150
    %v155 = vadd.f32 %v140, %v146
    %v156 = vadd.f32 %v141, %v150
    %v157 = vpack.c.bf16 %v155, %v153
    %v158 = vpack.c.bf16 %v156, %v154
    %v159 = vld [vmem:[%s4] sm:$0xff]
    %v160 = vld [vmem:[%s4 + $0x8] sm:$0xff]
    %v161 = vld [vmem:[%s4 + $0x10] sm:$0xff]
    %v162 = vld [vmem:[%s4 + $0x18] sm:$0xff]
    %v163 = vld [vmem:[%s4 + $0x20] sm:$0xff]
    %v164 = vld [vmem:[%s4 + $0x28] sm:$0xff]
    %v165 = vld [vmem:[%s4 + $0x30] sm:$0xff]
    %v166 = vld [vmem:[%s4 + $0x38] sm:$0xff]
    %v167 = vld [vmem:[%s4 + $0x40] sm:$0xff]
    %v168 = vld [vmem:[%s4 + $0x48] sm:$0xff]
    %v169 = vld [vmem:[%s4 + $0x50] sm:$0xff]
    %v170 = vld [vmem:[%s4 + $0x58] sm:$0xff]
    %v171 = vld [vmem:[%s4 + $0x60] sm:$0xff]
    %v172 = vld [vmem:[%s4 + $0x68] sm:$0xff]
    %v173 = vld [vmem:[%s4 + $0x70] sm:$0xff]
    %v174 = vld [vmem:[%s4 + $0x78] sm:$0xff]
    %v175 = vld [vmem:[%s4 + $0x80] sm:$0xff]
    %v176 = vld [vmem:[%s4 + $0x88] sm:$0xff]
    %v177 = vld [vmem:[%s4 + $0x90] sm:$0xff]
    %v178 = vld [vmem:[%s4 + $0x98] sm:$0xff]
    %v179 = vld [vmem:[%s4 + $0xa0] sm:$0xff]
    %v180 = vld [vmem:[%s4 + $0xa8] sm:$0xff]
    %v181 = vld [vmem:[%s4 + $0xb0] sm:$0xff]
    %v182 = vld [vmem:[%s4 + $0xb8] sm:$0xff]
    %v183 = vld [vmem:[%s4 + $0xc0] sm:$0xff]
    %v184 = vld [vmem:[%s4 + $0xc8] sm:$0xff]
    %v185 = vld [vmem:[%s4 + $0xd0] sm:$0xff]
    %v186 = vld [vmem:[%s4 + $0xd8] sm:$0xff]
    %v187 = vld [vmem:[%s4 + $0xe0] sm:$0xff]
    %v188 = vld [vmem:[%s4 + $0xe8] sm:$0xff]
    %v189 = vld [vmem:[%s4 + $0xf0] sm:$0xff]
    %v190 = vld [vmem:[%s4 + $0xf8] sm:$0xff]
    %v223 = vunpack.c.l.b16 %v159
    %v224 = vunpack.c.h.b16 %v159
    %v225 = vunpack.c.l.b16 %v160
    %v226 = vunpack.c.h.b16 %v160
    %v227 = vunpack.c.l.b16 %v161
    %v228 = vunpack.c.h.b16 %v161
    %v229 = vunpack.c.l.b16 %v162
    %v230 = vunpack.c.h.b16 %v162
    %v231 = vunpack.c.l.b16 %v163
    %v232 = vunpack.c.h.b16 %v163
    %v233 = vunpack.c.l.b16 %v164
    %v234 = vunpack.c.h.b16 %v164
    %v235 = vunpack.c.l.b16 %v165
    %v236 = vunpack.c.h.b16 %v165
    %v237 = vunpack.c.l.b16 %v166
    %v238 = vunpack.c.h.b16 %v166
    %v239 = vunpack.c.l.b16 %v167
    %v240 = vunpack.c.h.b16 %v167
    %v241 = vunpack.c.l.b16 %v168
    %v242 = vunpack.c.h.b16 %v168
    %v243 = vunpack.c.l.b16 %v169
    %v244 = vunpack.c.h.b16 %v169
    %v245 = vunpack.c.l.b16 %v170
    %v246 = vunpack.c.h.b16 %v170
    %v247 = vunpack.c.l.b16 %v171
    %v248 = vunpack.c.h.b16 %v171
    %v249 = vunpack.c.l.b16 %v172
    %v250 = vunpack.c.h.b16 %v172
    %v251 = vunpack.c.l.b16 %v173
    %v252 = vunpack.c.h.b16 %v173
    %v253 = vunpack.c.l.b16 %v174
    %v254 = vunpack.c.h.b16 %v174
    %v255 = vunpack.c.l.b16 %v175
    %v256 = vunpack.c.h.b16 %v175
    %v257 = vunpack.c.l.b16 %v176
    %v258 = vunpack.c.h.b16 %v176
    %v259 = vunpack.c.l.b16 %v177
    %v260 = vunpack.c.h.b16 %v177
    %v261 = vunpack.c.l.b16 %v178
    %v262 = vunpack.c.h.b16 %v178
    %v263 = vunpack.c.l.b16 %v179
    %v264 = vunpack.c.h.b16 %v179
    %v265 = vunpack.c.l.b16 %v180
    %v266 = vunpack.c.h.b16 %v180
    %v267 = vunpack.c.l.b16 %v181
    %v268 = vunpack.c.h.b16 %v181
    %v269 = vunpack.c.l.b16 %v182
    %v270 = vunpack.c.h.b16 %v182
    %v271 = vunpack.c.l.b16 %v183
    %v272 = vunpack.c.h.b16 %v183
    %v273 = vunpack.c.l.b16 %v184
    %v274 = vunpack.c.h.b16 %v184
    %v275 = vunpack.c.l.b16 %v185
    %v276 = vunpack.c.h.b16 %v185
    %v277 = vunpack.c.l.b16 %v186
    %v278 = vunpack.c.h.b16 %v186
    %v279 = vunpack.c.l.b16 %v187
    %v280 = vunpack.c.h.b16 %v187
    %v281 = vunpack.c.l.b16 %v188
    %v282 = vunpack.c.h.b16 %v188
    %v283 = vunpack.c.l.b16 %v189
    %v284 = vunpack.c.h.b16 %v189
    %v285 = vunpack.c.l.b16 %v190
    %v286 = vunpack.c.h.b16 %v190
    %v287 = vpack.c.b16 %v225, %v223
    %v288 = vpack.c.b16 %v226, %v224
    %v289 = vpack.c.b16 %v229, %v227
    %v290 = vpack.c.b16 %v230, %v228
    %v291 = vpack.c.b16 %v233, %v231
    %v292 = vpack.c.b16 %v234, %v232
    %v293 = vpack.c.b16 %v237, %v235
    %v294 = vpack.c.b16 %v238, %v236
    %v295 = vpack.c.b16 %v241, %v239
    %v296 = vpack.c.b16 %v242, %v240
    %v297 = vpack.c.b16 %v245, %v243
    %v298 = vpack.c.b16 %v246, %v244
    %v299 = vpack.c.b16 %v249, %v247
    %v300 = vpack.c.b16 %v250, %v248
    %v301 = vpack.c.b16 %v253, %v251
    %v302 = vpack.c.b16 %v254, %v252
    %v303 = vpack.c.b16 %v257, %v255
    %v304 = vpack.c.b16 %v258, %v256
    %v305 = vpack.c.b16 %v261, %v259
    %v306 = vpack.c.b16 %v262, %v260
    %v307 = vpack.c.b16 %v265, %v263
    %v308 = vpack.c.b16 %v266, %v264
    %v309 = vpack.c.b16 %v269, %v267
    %v310 = vpack.c.b16 %v270, %v268
    %v311 = vpack.c.b16 %v273, %v271
    %v312 = vpack.c.b16 %v274, %v272
    %v313 = vpack.c.b16 %v277, %v275
    %v314 = vpack.c.b16 %v278, %v276
    %v315 = vpack.c.b16 %v281, %v279
    %v316 = vpack.c.b16 %v282, %v280
    %v317 = vpack.c.b16 %v285, %v283
    %v318 = vpack.c.b16 %v286, %v284
    %351 = vmatprep.subr.bf16.mxu0 %v288
    %352 = vmatpush1.bf16.msra.mxu0 %v287
    %353 = vmatprep.subr.bf16.mxu0 %v290
    %354 = vmatpush1.bf16.msra.mxu0 %v289
    %355 = vmatprep.subr.bf16.mxu0 %v292
    %356 = vmatpush1.bf16.msra.mxu0 %v291
    %357 = vmatprep.subr.bf16.mxu0 %v294
    %358 = vmatpush1.bf16.msra.mxu0 %v293
    %359 = vmatprep.subr.bf16.mxu0 %v296
    %360 = vmatpush1.bf16.msra.mxu0 %v295
    %361 = vmatprep.subr.bf16.mxu0 %v298
    %362 = vmatpush1.bf16.msra.mxu0 %v297
    %363 = vmatprep.subr.bf16.mxu0 %v300
    %364 = vmatpush1.bf16.msra.mxu0 %v299
    %365 = vmatprep.subr.bf16.mxu0 %v302
    %366 = vmatpush1.bf16.msra.mxu0 %v301
    %367 = vmatprep.subr.bf16.mxu0 %v304
    %368 = vmatpush1.bf16.msra.mxu0 %v303
    %369 = vmatprep.subr.bf16.mxu0 %v306
    %370 = vmatpush1.bf16.msra.mxu0 %v305
    %371 = vmatprep.subr.bf16.mxu0 %v308
    %372 = vmatpush1.bf16.msra.mxu0 %v307
    %373 = vmatprep.subr.bf16.mxu0 %v310
    %374 = vmatpush1.bf16.msra.mxu0 %v309
    %375 = vmatprep.subr.bf16.mxu0 %v312
    %376 = vmatpush1.bf16.msra.mxu0 %v311
    %377 = vmatprep.subr.bf16.mxu0 %v314
    %378 = vmatpush1.bf16.msra.mxu0 %v313
    %379 = vmatprep.subr.bf16.mxu0 %v316
    %380 = vmatpush1.bf16.msra.mxu0 %v315
    %381 = vmatprep.subr.bf16.mxu0 %v318
    %382 = vmatpush1.bf16.msra.mxu0 %v317
    %383 = vmatprep.mubr.bf16.mxu0 %v158
    %384 = vmatmul.mubr.bf16.gmra.mrb[0].mxu0 %v157
    %v385 = vpop.f32.mrb[0].mxu0
    %v386 = vadd.f32 0.0, %v385
    %v387 = vpop.f32.mrb[0].mxu0
    %v388 = vadd.f32 0.0, %v387
    %v389 = vpop.f32.mrb[0].mxu0
    %v390 = vadd.f32 0.0, %v389
    %v391 = vpop.f32.mrb[0].mxu0
    %v392 = vadd.f32 0.0, %v391
    %393 = vdwg.mxu0
    %395 = vrot.lane.b32.xlu0 %v386, 64
    %v396 = vpop.permute.xlu0 %395
    %vm397 = vcmask 130048
    %v398 = vsel %vm397, %v386, 0
    %v400 = vsel %vm397, %v396, 0
    %402 = vmatprep.subr.mxu0 0.0
    %403 = vmatpush1.xpose.msra.mxu0 %v400
    %404 = vmatprep.subr.mxu0 0.0
    %405 = vmatpush1.xpose.msra.mxu0 0.0
    %406 = vmatprep.subr.mxu0 0.0
    %407 = vmatpush1.xpose.msra.mxu0 0.0
    %408 = vmatprep.subr.mxu0 0.0
    %409 = vmatpush1.xpose.msra.mxu0 0.0
    %410 = vmatprep.subr.mxu0 0.0
    %411 = vmatpush1.xpose.msra.mxu0 0.0
    %412 = vmatprep.subr.mxu0 0.0
    %413 = vmatpush1.xpose.msra.mxu0 0.0
    %414 = vmatprep.subr.mxu0 0.0
    %415 = vmatpush1.xpose.msra.mxu0 0.0
    %416 = vmatprep.subr.mxu0 0.0
    %417 = vmatpush1.xpose.msra.mxu0 0.0
    %418 = vmatprep.subr.mxu0 0.0
    %419 = vmatpush1.xpose.msra.mxu0 0.0
    %420 = vmatprep.subr.mxu0 0.0
    %421 = vmatpush1.xpose.msra.mxu0 0.0
    %422 = vmatprep.subr.mxu0 0.0
    %423 = vmatpush1.xpose.msra.mxu0 0.0
    %424 = vmatprep.subr.mxu0 0.0
    %425 = vmatpush1.xpose.msra.mxu0 0.0
    %426 = vmatprep.subr.mxu0 0.0
    %427 = vmatpush1.xpose.msra.mxu0 0.0
    %428 = vmatprep.subr.mxu0 0.0
    %429 = vmatpush1.xpose.msra.mxu0 0.0
    %430 = vmatprep.subr.mxu0 0.0
    %431 = vmatpush1.xpose.msra.mxu0 0.0
    %432 = vmatprep.subr.mxu0 0.0
    %433 = vmatpush1.xpose.msra.mxu0 0.0
    %434 = vmatprep.subr.mxu0 0.0
    %435 = vmatpush1.xpose.msra.mxu0 0.0
    %436 = vmatprep.subr.mxu0 0.0
    %437 = vmatpush1.xpose.msra.mxu0 0.0
    %438 = vmatprep.subr.mxu0 0.0
    %439 = vmatpush1.xpose.msra.mxu0 0.0
    %440 = vmatprep.subr.mxu0 0.0
    %441 = vmatpush1.xpose.msra.mxu0 0.0
    %442 = vmatprep.subr.mxu0 0.0
    %443 = vmatpush1.xpose.msra.mxu0 0.0
    %444 = vmatprep.subr.mxu0 0.0
    %445 = vmatpush1.xpose.msra.mxu0 0.0
    %446 = vmatprep.subr.mxu0 0.0
    %447 = vmatpush1.xpose.msra.mxu0 0.0
    %448 = vmatprep.subr.mxu0 0.0
    %449 = vmatpush1.xpose.msra.mxu0 0.0
    %450 = vmatprep.subr.mxu0 0.0
    %451 = vmatpush1.xpose.msra.mxu0 0.0
    %452 = vmatprep.subr.mxu0 0.0
    %453 = vmatpush1.xpose.msra.mxu0 0.0
    %454 = vmatprep.subr.mxu0 0.0
    %455 = vmatpush1.xpose.msra.mxu0 0.0
    %456 = vmatprep.subr.mxu0 0.0
    %457 = vmatpush1.xpose.msra.mxu0 0.0
    %458 = vmatprep.subr.mxu0 0.0
    %459 = vmatpush1.xpose.msra.mxu0 0.0
    %460 = vmatprep.subr.mxu0 0.0
    %461 = vmatpush1.xpose.msra.mxu0 0.0
    %462 = vmatprep.subr.mxu0 0.0
    %463 = vmatpush1.xpose.msra.mxu0 0.0
    %464 = vmatprep.subr.mxu0 0.0
    %465 = vmatpush1.xpose.msra.mxu0 0.0
    %466 = vmatprep.mubr.f32.mxu0 0.0
    %467 = vmatmul.mubr.f32.gmra.mrb[0].mxu0 %v398
    %v468 = vpop.f32.mrb[0].mxu0
    %v469 = vadd.f32 0.0, %v468
    %v470 = vpop.f32.mrb[0].mxu0
    %471 = vdwg.mxu0
    %472 = vrot.lane.b32.xlu0 %v386, 112
    %v473 = vpop.permute.xlu0 %472
    %474 = vrot.lane.b32.xlu0 %v386, 48
    %v475 = vpop.permute.xlu0 %474
    %v476 = vsel %vm397, %v473, 0
    %v478 = vsel %vm397, %v475, 0
    %480 = vmatprep.subr.mxu0 0.0
    %481 = vmatpush1.xpose.msra.mxu0 %v478
    %482 = vmatprep.subr.mxu0 0.0
    %483 = vmatpush1.xpose.msra.mxu0 0.0
    %484 = vmatprep.subr.mxu0 0.0
    %485 = vmatpush1.xpose.msra.mxu0 0.0
    %486 = vmatprep.subr.mxu0 0.0
    %487 = vmatpush1.xpose.msra.mxu0 0.0
    %488 = vmatprep.subr.mxu0 0.0
    %489 = vmatpush1.xpose.msra.mxu0 0.0
    %490 = vmatprep.subr.mxu0 0.0
    %491 = vmatpush1.xpose.msra.mxu0 0.0
    %492 = vmatprep.subr.mxu0 0.0
    %493 = vmatpush1.xpose.msra.mxu0 0.0
    %494 = vmatprep.subr.mxu0 0.0
    %495 = vmatpush1.xpose.msra.mxu0 0.0
    %496 = vmatprep.subr.mxu0 0.0
    %497 = vmatpush1.xpose.msra.mxu0 0.0
    %498 = vmatprep.subr.mxu0 0.0
    %499 = vmatpush1.xpose.msra.mxu0 0.0
    %500 = vmatprep.subr.mxu0 0.0
    %501 = vmatpush1.xpose.msra.mxu0 0.0
    %502 = vmatprep.subr.mxu0 0.0
    %503 = vmatpush1.xpose.msra.mxu0 0.0
    %504 = vmatprep.subr.mxu0 0.0
    %505 = vmatpush1.xpose.msra.mxu0 0.0
    %506 = vmatprep.subr.mxu0 0.0
    %507 = vmatpush1.xpose.msra.mxu0 0.0
    %508 = vmatprep.subr.mxu0 0.0
    %509 = vmatpush1.xpose.msra.mxu0 0.0
    %510 = vmatprep.subr.mxu0 0.0
    %511 = vmatpush1.xpose.msra.mxu0 0.0
    %512 = vmatprep.subr.mxu0 0.0
    %513 = vmatpush1.xpose.msra.mxu0 0.0
    %514 = vmatprep.subr.mxu0 0.0
    %515 = vmatpush1.xpose.msra.mxu0 0.0
    %516 = vmatprep.subr.mxu0 0.0
    %517 = vmatpush1.xpose.msra.mxu0 0.0
    %518 = vmatprep.subr.mxu0 0.0
    %519 = vmatpush1.xpose.msra.mxu0 0.0
    %520 = vmatprep.subr.mxu0 0.0
    %521 = vmatpush1.xpose.msra.mxu0 0.0
    %522 = vmatprep.subr.mxu0 0.0
    %523 = vmatpush1.xpose.msra.mxu0 0.0
    %524 = vmatprep.subr.mxu0 0.0
    %525 = vmatpush1.xpose.msra.mxu0 0.0
    %526 = vmatprep.subr.mxu0 0.0
    %527 = vmatpush1.xpose.msra.mxu0 0.0
    %528 = vmatprep.subr.mxu0 0.0
    %529 = vmatpush1.xpose.msra.mxu0 0.0
    %530 = vmatprep.subr.mxu0 0.0
    %531 = vmatpush1.xpose.msra.mxu0 0.0
    %532 = vmatprep.subr.mxu0 0.0
    %533 = vmatpush1.xpose.msra.mxu0 0.0
    %534 = vmatprep.subr.mxu0 0.0
    %535 = vmatpush1.xpose.msra.mxu0 0.0
    %536 = vmatprep.subr.mxu0 0.0
    %537 = vmatpush1.xpose.msra.mxu0 0.0
    %538 = vmatprep.subr.mxu0 0.0
    %539 = vmatpush1.xpose.msra.mxu0 0.0
    %540 = vmatprep.subr.mxu0 0.0
    %541 = vmatpush1.xpose.msra.mxu0 0.0
    %542 = vmatprep.subr.mxu0 0.0
    %543 = vmatpush1.xpose.msra.mxu0 0.0
    %544 = vmatprep.mubr.f32.mxu0 0.0
    %545 = vmatmul.mubr.f32.gmra.mrb[0].mxu0 %v476
    %v546 = vpop.f32.mrb[0].mxu0
    %v547 = vadd.f32 0.0, %v546
    %v548 = vpop.f32.mrb[0].mxu0
    %549 = vdwg.mxu0
    %550 = vrot.lane.b32.xlu0 %v386, 96
    %v551 = vpop.permute.xlu0 %550
    %552 = vrot.lane.b32.xlu0 %v386, 32
    %v553 = vpop.permute.xlu0 %552
    %v554 = vsel %vm397, %v551, 0
    %v556 = vsel %vm397, %v553, 0
    %558 = vmatprep.subr.mxu0 0.0
    %559 = vmatpush1.xpose.msra.mxu0 %v556
    %560 = vmatprep.subr.mxu0 0.0
    %561 = vmatpush1.xpose.msra.mxu0 0.0
    %562 = vmatprep.subr.mxu0 0.0
    %563 = vmatpush1.xpose.msra.mxu0 0.0
    %564 = vmatprep.subr.mxu0 0.0
    %565 = vmatpush1.xpose.msra.mxu0 0.0
    %566 = vmatprep.subr.mxu0 0.0
    %567 = vmatpush1.xpose.msra.mxu0 0.0
    %568 = vmatprep.subr.mxu0 0.0
    %569 = vmatpush1.xpose.msra.mxu0 0.0
    %570 = vmatprep.subr.mxu0 0.0
    %571 = vmatpush1.xpose.msra.mxu0 0.0
    %572 = vmatprep.subr.mxu0 0.0
    %573 = vmatpush1.xpose.msra.mxu0 0.0
    %574 = vmatprep.subr.mxu0 0.0
    %575 = vmatpush1.xpose.msra.mxu0 0.0
    %576 = vmatprep.subr.mxu0 0.0
    %577 = vmatpush1.xpose.msra.mxu0 0.0
    %578 = vmatprep.subr.mxu0 0.0
    %579 = vmatpush1.xpose.msra.mxu0 0.0
    %580 = vmatprep.subr.mxu0 0.0
    %581 = vmatpush1.xpose.msra.mxu0 0.0
    %582 = vmatprep.subr.mxu0 0.0
    %583 = vmatpush1.xpose.msra.mxu0 0.0
    %584 = vmatprep.subr.mxu0 0.0
    %585 = vmatpush1.xpose.msra.mxu0 0.0
    %586 = vmatprep.subr.mxu0 0.0
    %587 = vmatpush1.xpose.msra.mxu0 0.0
    %588 = vmatprep.subr.mxu0 0.0
    %589 = vmatpush1.xpose.msra.mxu0 0.0
    %590 = vmatprep.subr.mxu0 0.0
    %591 = vmatpush1.xpose.msra.mxu0 0.0
    %592 = vmatprep.subr.mxu0 0.0
    %593 = vmatpush1.xpose.msra.mxu0 0.0
    %594 = vmatprep.subr.mxu0 0.0
    %595 = vmatpush1.xpose.msra.mxu0 0.0
    %596 = vmatprep.subr.mxu0 0.0
    %597 = vmatpush1.xpose.msra.mxu0 0.0
    %598 = vmatprep.subr.mxu0 0.0
    %599 = vmatpush1.xpose.msra.mxu0 0.0
    %600 = vmatprep.subr.mxu0 0.0
    %601 = vmatpush1.xpose.msra.mxu0 0.0
    %602 = vmatprep.subr.mxu0 0.0
    %603 = vmatpush1.xpose.msra.mxu0 0.0
    %604 = vmatprep.subr.mxu0 0.0
    %605 = vmatpush1.xpose.msra.mxu0 0.0
    %606 = vmatprep.subr.mxu0 0.0
    %607 = vmatpush1.xpose.msra.mxu0 0.0
    %608 = vmatprep.subr.mxu0 0.0
    %609 = vmatpush1.xpose.msra.mxu0 0.0
    %610 = vmatprep.subr.mxu0 0.0
    %611 = vmatpush1.xpose.msra.mxu0 0.0
    %612 = vmatprep.subr.mxu0 0.0
    %613 = vmatpush1.xpose.msra.mxu0 0.0
    %614 = vmatprep.subr.mxu0 0.0
    %615 = vmatpush1.xpose.msra.mxu0 0.0
    %616 = vmatprep.subr.mxu0 0.0
    %617 = vmatpush1.xpose.msra.mxu0 0.0
    %618 = vmatprep.subr.mxu0 0.0
    %619 = vmatpush1.xpose.msra.mxu0 0.0
    %620 = vmatprep.subr.mxu0 0.0
    %621 = vmatpush1.xpose.msra.mxu0 0.0
    %622 = vmatprep.mubr.f32.mxu0 0.0
    %623 = vmatmul.mubr.f32.gmra.mrb[0].mxu0 %v554
    %v624 = vpop.f32.mrb[0].mxu0
    %v625 = vadd.f32 0.0, %v624
    %v626 = vpop.f32.mrb[0].mxu0
    %627 = vdwg.mxu0
    %628 = vrot.lane.b32.xlu0 %v386, 80
    %v629 = vpop.permute.xlu0 %628
    %630 = vrot.lane.b32.xlu0 %v386, 16
    %v631 = vpop.permute.xlu0 %630
    %v632 = vsel %vm397, %v629, 0
    %v634 = vsel %vm397, %v631, 0
    %636 = vmatprep.subr.mxu0 0.0
    %637 = vmatpush1.xpose.msra.mxu0 %v634
    %638 = vmatprep.subr.mxu0 0.0
    %639 = vmatpush1.xpose.msra.mxu0 0.0
    %640 = vmatprep.subr.mxu0 0.0
    %641 = vmatpush1.xpose.msra.mxu0 0.0
    %642 = vmatprep.subr.mxu0 0.0
    %643 = vmatpush1.xpose.msra.mxu0 0.0
    %644 = vmatprep.subr.mxu0 0.0
    %645 = vmatpush1.xpose.msra.mxu0 0.0
    %646 = vmatprep.subr.mxu0 0.0
    %647 = vmatpush1.xpose.msra.mxu0 0.0
    %648 = vmatprep.subr.mxu0 0.0
    %649 = vmatpush1.xpose.msra.mxu0 0.0
    %650 = vmatprep.subr.mxu0 0.0
    %651 = vmatpush1.xpose.msra.mxu0 0.0
    %652 = vmatprep.subr.mxu0 0.0
    %653 = vmatpush1.xpose.msra.mxu0 0.0
    %654 = vmatprep.subr.mxu0 0.0
    %655 = vmatpush1.xpose.msra.mxu0 0.0
    %656 = vmatprep.subr.mxu0 0.0
    %657 = vmatpush1.xpose.msra.mxu0 0.0
    %658 = vmatprep.subr.mxu0 0.0
    %659 = vmatpush1.xpose.msra.mxu0 0.0
    %660 = vmatprep.subr.mxu0 0.0
    %661 = vmatpush1.xpose.msra.mxu0 0.0
    %662 = vmatprep.subr.mxu0 0.0
    %663 = vmatpush1.xpose.msra.mxu0 0.0
    %664 = vmatprep.subr.mxu0 0.0
    %665 = vmatpush1.xpose.msra.mxu0 0.0
    %666 = vmatprep.subr.mxu0 0.0
    %667 = vmatpush1.xpose.msra.mxu0 0.0
    %668 = vmatprep.subr.mxu0 0.0
    %669 = vmatpush1.xpose.msra.mxu0 0.0
    %670 = vmatprep.subr.mxu0 0.0
    %671 = vmatpush1.xpose.msra.mxu0 0.0
    %672 = vmatprep.subr.mxu0 0.0
    %673 = vmatpush1.xpose.msra.mxu0 0.0
    %674 = vmatprep.subr.mxu0 0.0
    %675 = vmatpush1.xpose.msra.mxu0 0.0
    %676 = vmatprep.subr.mxu0 0.0
    %677 = vmatpush1.xpose.msra.mxu0 0.0
    %678 = vmatprep.subr.mxu0 0.0
    %679 = vmatpush1.xpose.msra.mxu0 0.0
    %680 = vmatprep.subr.mxu0 0.0
    %681 = vmatpush1.xpose.msra.mxu0 0.0
    %682 = vmatprep.subr.mxu0 0.0
    %683 = vmatpush1.xpose.msra.mxu0 0.0
    %684 = vmatprep.subr.mxu0 0.0
    %685 = vmatpush1.xpose.msra.mxu0 0.0
    %686 = vmatprep.subr.mxu0 0.0
    %687 = vmatpush1.xpose.msra.mxu0 0.0
    %688 = vmatprep.subr.mxu0 0.0
    %689 = vmatpush1.xpose.msra.mxu0 0.0
    %690 = vmatprep.subr.mxu0 0.0
    %691 = vmatpush1.xpose.msra.mxu0 0.0
    %692 = vmatprep.subr.mxu0 0.0
    %693 = vmatpush1.xpose.msra.mxu0 0.0
    %694 = vmatprep.subr.mxu0 0.0
    %695 = vmatpush1.xpose.msra.mxu0 0.0
    %696 = vmatprep.subr.mxu0 0.0
    %697 = vmatpush1.xpose.msra.mxu0 0.0
    %698 = vmatprep.subr.mxu0 0.0
    %699 = vmatpush1.xpose.msra.mxu0 0.0
    %700 = vmatprep.mubr.f32.mxu0 0.0
    %701 = vmatmul.mubr.f32.gmra.mrb[0].mxu0 %v632
    %v702 = vpop.f32.mrb[0].mxu0
    %v703 = vadd.f32 0.0, %v702
    %v704 = vpop.f32.mrb[0].mxu0
    %705 = vdwg.mxu0
    %707 = vrot.lane.b32.xlu0 %v390, 64
    %v708 = vpop.permute.xlu0 %707
    %v709 = vsel %vm397, %v390, 0
    %v711 = vsel %vm397, %v708, 0
    %713 = vmatprep.subr.mxu0 0.0
    %714 = vmatpush1.xpose.msra.mxu0 %v711
    %715 = vmatprep.subr.mxu0 0.0
    %716 = vmatpush1.xpose.msra.mxu0 0.0
    %717 = vmatprep.subr.mxu0 0.0
    %718 = vmatpush1.xpose.msra.mxu0 0.0
    %719 = vmatprep.subr.mxu0 0.0
    %720 = vmatpush1.xpose.msra.mxu0 0.0
    %721 = vmatprep.subr.mxu0 0.0
    %722 = vmatpush1.xpose.msra.mxu0 0.0
    %723 = vmatprep.subr.mxu0 0.0
    %724 = vmatpush1.xpose.msra.mxu0 0.0
    %725 = vmatprep.subr.mxu0 0.0
    %726 = vmatpush1.xpose.msra.mxu0 0.0
    %727 = vmatprep.subr.mxu0 0.0
    %728 = vmatpush1.xpose.msra.mxu0 0.0
    %729 = vmatprep.subr.mxu0 0.0
    %730 = vmatpush1.xpose.msra.mxu0 0.0
    %731 = vmatprep.subr.mxu0 0.0
    %732 = vmatpush1.xpose.msra.mxu0 0.0
    %733 = vmatprep.subr.mxu0 0.0
    %734 = vmatpush1.xpose.msra.mxu0 0.0
    %735 = vmatprep.subr.mxu0 0.0
    %736 = vmatpush1.xpose.msra.mxu0 0.0
    %737 = vmatprep.subr.mxu0 0.0
    %738 = vmatpush1.xpose.msra.mxu0 0.0
    %739 = vmatprep.subr.mxu0 0.0
    %740 = vmatpush1.xpose.msra.mxu0 0.0
    %741 = vmatprep.subr.mxu0 0.0
    %742 = vmatpush1.xpose.msra.mxu0 0.0
    %743 = vmatprep.subr.mxu0 0.0
    %744 = vmatpush1.xpose.msra.mxu0 0.0
    %745 = vmatprep.subr.mxu0 0.0
    %746 = vmatpush1.xpose.msra.mxu0 0.0
    %747 = vmatprep.subr.mxu0 0.0
    %748 = vmatpush1.xpose.msra.mxu0 0.0
    %749 = vmatprep.subr.mxu0 0.0
    %750 = vmatpush1.xpose.msra.mxu0 0.0
    %751 = vmatprep.subr.mxu0 0.0
    %752 = vmatpush1.xpose.msra.mxu0 0.0
    %753 = vmatprep.subr.mxu0 0.0
    %754 = vmatpush1.xpose.msra.mxu0 0.0
    %755 = vmatprep.subr.mxu0 0.0
    %756 = vmatpush1.xpose.msra.mxu0 0.0
    %757 = vmatprep.subr.mxu0 0.0
    %758 = vmatpush1.xpose.msra.mxu0 0.0
    %759 = vmatprep.subr.mxu0 0.0
    %760 = vmatpush1.xpose.msra.mxu0 0.0
    %761 = vmatprep.subr.mxu0 0.0
    %762 = vmatpush1.xpose.msra.mxu0 0.0
    %763 = vmatprep.subr.mxu0 0.0
    %764 = vmatpush1.xpose.msra.mxu0 0.0
    %765 = vmatprep.subr.mxu0 0.0
    %766 = vmatpush1.xpose.msra.mxu0 0.0
    %767 = vmatprep.subr.mxu0 0.0
    %768 = vmatpush1.xpose.msra.mxu0 0.0
    %769 = vmatprep.subr.mxu0 0.0
    %770 = vmatpush1.xpose.msra.mxu0 0.0
    %771 = vmatprep.subr.mxu0 0.0
    %772 = vmatpush1.xpose.msra.mxu0 0.0
    %773 = vmatprep.subr.mxu0 0.0
    %774 = vmatpush1.xpose.msra.mxu0 0.0
    %775 = vmatprep.subr.mxu0 0.0
    %776 = vmatpush1.xpose.msra.mxu0 0.0
    %777 = vmatprep.mubr.f32.mxu0 0.0
    %778 = vmatmul.mubr.f32.gmra.mrb[0].mxu0 %v709
    %v779 = vpop.f32.mrb[0].mxu0
    %v780 = vadd.f32 0.0, %v779
    %v781 = vpop.f32.mrb[0].mxu0
    %782 = vdwg.mxu0
    %783 = vrot.lane.b32.xlu0 %v390, 112
    %v784 = vpop.permute.xlu0 %783
    %785 = vrot.lane.b32.xlu0 %v390, 48
    %v786 = vpop.permute.xlu0 %785
    %v787 = vsel %vm397, %v784, 0
    %v789 = vsel %vm397, %v786, 0
    %791 = vmatprep.subr.mxu0 0.0
    %792 = vmatpush1.xpose.msra.mxu0 %v789
    %793 = vmatprep.subr.mxu0 0.0
    %794 = vmatpush1.xpose.msra.mxu0 0.0
    %795 = vmatprep.subr.mxu0 0.0
    %796 = vmatpush1.xpose.msra.mxu0 0.0
    %797 = vmatprep.subr.mxu0 0.0
    %798 = vmatpush1.xpose.msra.mxu0 0.0
    %799 = vmatprep.subr.mxu0 0.0
    %800 = vmatpush1.xpose.msra.mxu0 0.0
    %801 = vmatprep.subr.mxu0 0.0
    %802 = vmatpush1.xpose.msra.mxu0 0.0
    %803 = vmatprep.subr.mxu0 0.0
    %804 = vmatpush1.xpose.msra.mxu0 0.0
    %805 = vmatprep.subr.mxu0 0.0
    %806 = vmatpush1.xpose.msra.mxu0 0.0
    %807 = vmatprep.subr.mxu0 0.0
    %808 = vmatpush1.xpose.msra.mxu0 0.0
    %809 = vmatprep.subr.mxu0 0.0
    %810 = vmatpush1.xpose.msra.mxu0 0.0
    %811 = vmatprep.subr.mxu0 0.0
    %812 = vmatpush1.xpose.msra.mxu0 0.0
    %813 = vmatprep.subr.mxu0 0.0
    %814 = vmatpush1.xpose.msra.mxu0 0.0
    %815 = vmatprep.subr.mxu0 0.0
    %816 = vmatpush1.xpose.msra.mxu0 0.0
    %817 = vmatprep.subr.mxu0 0.0
    %818 = vmatpush1.xpose.msra.mxu0 0.0
    %819 = vmatprep.subr.mxu0 0.0
    %820 = vmatpush1.xpose.msra.mxu0 0.0
    %821 = vmatprep.subr.mxu0 0.0
    %822 = vmatpush1.xpose.msra.mxu0 0.0
    %823 = vmatprep.subr.mxu0 0.0
    %824 = vmatpush1.xpose.msra.mxu0 0.0
    %825 = vmatprep.subr.mxu0 0.0
    %826 = vmatpush1.xpose.msra.mxu0 0.0
    %827 = vmatprep.subr.mxu0 0.0
    %828 = vmatpush1.xpose.msra.mxu0 0.0
    %829 = vmatprep.subr.mxu0 0.0
    %830 = vmatpush1.xpose.msra.mxu0 0.0
    %831 = vmatprep.subr.mxu0 0.0
    %832 = vmatpush1.xpose.msra.mxu0 0.0
    %833 = vmatprep.subr.mxu0 0.0
    %834 = vmatpush1.xpose.msra.mxu0 0.0
    %835 = vmatprep.subr.mxu0 0.0
    %836 = vmatpush1.xpose.msra.mxu0 0.0
    %837 = vmatprep.subr.mxu0 0.0
    %838 = vmatpush1.xpose.msra.mxu0 0.0
    %839 = vmatprep.subr.mxu0 0.0
    %840 = vmatpush1.xpose.msra.mxu0 0.0
    %841 = vmatprep.subr.mxu0 0.0
    %842 = vmatpush1.xpose.msra.mxu0 0.0
    %843 = vmatprep.subr.mxu0 0.0
    %844 = vmatpush1.xpose.msra.mxu0 0.0
    %845 = vmatprep.subr.mxu0 0.0
    %846 = vmatpush1.xpose.msra.mxu0 0.0
    %847 = vmatprep.subr.mxu0 0.0
    %848 = vmatpush1.xpose.msra.mxu0 0.0
    %849 = vmatprep.subr.mxu0 0.0
    %850 = vmatpush1.xpose.msra.mxu0 0.0
    %851 = vmatprep.subr.mxu0 0.0
    %852 = vmatpush1.xpose.msra.mxu0 0.0
    %853 = vmatprep.subr.mxu0 0.0
    %854 = vmatpush1.xpose.msra.mxu0 0.0
    %855 = vmatprep.mubr.f32.mxu0 0.0
    %856 = vmatmul.mubr.f32.gmra.mrb[0].mxu0 %v787
    %v857 = vpop.f32.mrb[0].mxu0
    %v858 = vadd.f32 0.0, %v857
    %v859 = vpop.f32.mrb[0].mxu0
    %860 = vdwg.mxu0
    %861 = vrot.lane.b32.xlu0 %v390, 96
    %v862 = vpop.permute.xlu0 %861
    %863 = vrot.lane.b32.xlu0 %v390, 32
    %v864 = vpop.permute.xlu0 %863
    %v865 = vsel %vm397, %v862, 0
    %v867 = vsel %vm397, %v864, 0
    %869 = vmatprep.subr.mxu0 0.0
    %870 = vmatpush1.xpose.msra.mxu0 %v867
    %871 = vmatprep.subr.mxu0 0.0
    %872 = vmatpush1.xpose.msra.mxu0 0.0
    %873 = vmatprep.subr.mxu0 0.0
    %874 = vmatpush1.xpose.msra.mxu0 0.0
    %875 = vmatprep.subr.mxu0 0.0
    %876 = vmatpush1.xpose.msra.mxu0 0.0
    %877 = vmatprep.subr.mxu0 0.0
    %878 = vmatpush1.xpose.msra.mxu0 0.0
    %879 = vmatprep.subr.mxu0 0.0
    %880 = vmatpush1.xpose.msra.mxu0 0.0
    %881 = vmatprep.subr.mxu0 0.0
    %882 = vmatpush1.xpose.msra.mxu0 0.0
    %883 = vmatprep.subr.mxu0 0.0
    %884 = vmatpush1.xpose.msra.mxu0 0.0
    %885 = vmatprep.subr.mxu0 0.0
    %886 = vmatpush1.xpose.msra.mxu0 0.0
    %887 = vmatprep.subr.mxu0 0.0
    %888 = vmatpush1.xpose.msra.mxu0 0.0
    %889 = vmatprep.subr.mxu0 0.0
    %890 = vmatpush1.xpose.msra.mxu0 0.0
    %891 = vmatprep.subr.mxu0 0.0
    %892 = vmatpush1.xpose.msra.mxu0 0.0
    %893 = vmatprep.subr.mxu0 0.0
    %894 = vmatpush1.xpose.msra.mxu0 0.0
    %895 = vmatprep.subr.mxu0 0.0
    %896 = vmatpush1.xpose.msra.mxu0 0.0
    %897 = vmatprep.subr.mxu0 0.0
    %898 = vmatpush1.xpose.msra.mxu0 0.0
    %899 = vmatprep.subr.mxu0 0.0
    %900 = vmatpush1.xpose.msra.mxu0 0.0
    %901 = vmatprep.subr.mxu0 0.0
    %902 = vmatpush1.xpose.msra.mxu0 0.0
    %903 = vmatprep.subr.mxu0 0.0
    %904 = vmatpush1.xpose.msra.mxu0 0.0
    %905 = vmatprep.subr.mxu0 0.0
    %906 = vmatpush1.xpose.msra.mxu0 0.0
    %907 = vmatprep.subr.mxu0 0.0
    %908 = vmatpush1.xpose.msra.mxu0 0.0
    %909 = vmatprep.subr.mxu0 0.0
    %910 = vmatpush1.xpose.msra.mxu0 0.0
    %911 = vmatprep.subr.mxu0 0.0
    %912 = vmatpush1.xpose.msra.mxu0 0.0
    %913 = vmatprep.subr.mxu0 0.0
    %914 = vmatpush1.xpose.msra.mxu0 0.0
    %915 = vmatprep.subr.mxu0 0.0
    %916 = vmatpush1.xpose.msra.mxu0 0.0
    %917 = vmatprep.subr.mxu0 0.0
    %918 = vmatpush1.xpose.msra.mxu0 0.0
    %919 = vmatprep.subr.mxu0 0.0
    %920 = vmatpush1.xpose.msra.mxu0 0.0
    %921 = vmatprep.subr.mxu0 0.0
    %922 = vmatpush1.xpose.msra.mxu0 0.0
    %923 = vmatprep.subr.mxu0 0.0
    %924 = vmatpush1.xpose.msra.mxu0 0.0
    %925 = vmatprep.subr.mxu0 0.0
    %926 = vmatpush1.xpose.msra.mxu0 0.0
    %927 = vmatprep.subr.mxu0 0.0
    %928 = vmatpush1.xpose.msra.mxu0 0.0
    %929 = vmatprep.subr.mxu0 0.0
    %930 = vmatpush1.xpose.msra.mxu0 0.0
    %931 = vmatprep.subr.mxu0 0.0
    %932 = vmatpush1.xpose.msra.mxu0 0.0
    %933 = vmatprep.mubr.f32.mxu0 0.0
    %934 = vmatmul.mubr.f32.gmra.mrb[0].mxu0 %v865
    %v935 = vpop.f32.mrb[0].mxu0
    %v936 = vadd.f32 0.0, %v935
    %v937 = vpop.f32.mrb[0].mxu0
    %938 = vdwg.mxu0
    %939 = vrot.lane.b32.xlu0 %v390, 80
    %v940 = vpop.permute.xlu0 %939
    %941 = vrot.lane.b32.xlu0 %v390, 16
    %v942 = vpop.permute.xlu0 %941
    %v943 = vsel %vm397, %v940, 0
    %v945 = vsel %vm397, %v942, 0
    %947 = vmatprep.subr.mxu0 0.0
    %948 = vmatpush1.xpose.msra.mxu0 %v945
    %949 = vmatprep.subr.mxu0 0.0
    %950 = vmatpush1.xpose.msra.mxu0 0.0
    %951 = vmatprep.subr.mxu0 0.0
    %952 = vmatpush1.xpose.msra.mxu0 0.0
    %953 = vmatprep.subr.mxu0 0.0
    %954 = vmatpush1.xpose.msra.mxu0 0.0
    %955 = vmatprep.subr.mxu0 0.0
    %956 = vmatpush1.xpose.msra.mxu0 0.0
    %957 = vmatprep.subr.mxu0 0.0
    %958 = vmatpush1.xpose.msra.mxu0 0.0
    %959 = vmatprep.subr.mxu0 0.0
    %960 = vmatpush1.xpose.msra.mxu0 0.0
    %961 = vmatprep.subr.mxu0 0.0
    %962 = vmatpush1.xpose.msra.mxu0 0.0
    %963 = vmatprep.subr.mxu0 0.0
    %964 = vmatpush1.xpose.msra.mxu0 0.0
    %965 = vmatprep.subr.mxu0 0.0
    %966 = vmatpush1.xpose.msra.mxu0 0.0
    %967 = vmatprep.subr.mxu0 0.0
    %968 = vmatpush1.xpose.msra.mxu0 0.0
    %969 = vmatprep.subr.mxu0 0.0
    %970 = vmatpush1.xpose.msra.mxu0 0.0
    %971 = vmatprep.subr.mxu0 0.0
    %972 = vmatpush1.xpose.msra.mxu0 0.0
    %973 = vmatprep.subr.mxu0 0.0
    %974 = vmatpush1.xpose.msra.mxu0 0.0
    %975 = vmatprep.subr.mxu0 0.0
    %976 = vmatpush1.xpose.msra.mxu0 0.0
    %977 = vmatprep.subr.mxu0 0.0
    %978 = vmatpush1.xpose.msra.mxu0 0.0
    %979 = vmatprep.subr.mxu0 0.0
    %980 = vmatpush1.xpose.msra.mxu0 0.0
    %981 = vmatprep.subr.mxu0 0.0
    %982 = vmatpush1.xpose.msra.mxu0 0.0
    %983 = vmatprep.subr.mxu0 0.0
    %984 = vmatpush1.xpose.msra.mxu0 0.0
    %985 = vmatprep.subr.mxu0 0.0
    %986 = vmatpush1.xpose.msra.mxu0 0.0
    %987 = vmatprep.subr.mxu0 0.0
    %988 = vmatpush1.xpose.msra.mxu0 0.0
    %989 = vmatprep.subr.mxu0 0.0
    %990 = vmatpush1.xpose.msra.mxu0 0.0
    %991 = vmatprep.subr.mxu0 0.0
    %992 = vmatpush1.xpose.msra.mxu0 0.0
    %993 = vmatprep.subr.mxu0 0.0
    %994 = vmatpush1.xpose.msra.mxu0 0.0
    %995 = vmatprep.subr.mxu0 0.0
    %996 = vmatpush1.xpose.msra.mxu0 0.0
    %997 = vmatprep.subr.mxu0 0.0
    %998 = vmatpush1.xpose.msra.mxu0 0.0
    %999 = vmatprep.subr.mxu0 0.0
    %1000 = vmatpush1.xpose.msra.mxu0 0.0
    %1001 = vmatprep.subr.mxu0 0.0
    %1002 = vmatpush1.xpose.msra.mxu0 0.0
    %1003 = vmatprep.subr.mxu0 0.0
    %1004 = vmatpush1.xpose.msra.mxu0 0.0
    %1005 = vmatprep.subr.mxu0 0.0
    %1006 = vmatpush1.xpose.msra.mxu0 0.0
    %1007 = vmatprep.subr.mxu0 0.0
    %1008 = vmatpush1.xpose.msra.mxu0 0.0
    %1009 = vmatprep.subr.mxu0 0.0
    %1010 = vmatpush1.xpose.msra.mxu0 0.0
    %1011 = vmatprep.mubr.f32.mxu0 0.0
    %1012 = vmatmul.mubr.f32.gmra.mrb[0].mxu0 %v943
    %v1013 = vpop.f32.mrb[0].mxu0
    %v1014 = vadd.f32 0.0, %v1013
    %v1015 = vpop.f32.mrb[0].mxu0
    %1016 = vdwg.mxu0
    %vm1017 = vcmask 64512
    %v1018 = vsel %vm1017, %v469, -inf
    %1019 = vmax.xlane.f32.xlu0 %v1018
    %v1020 = vpop.xlane.xlu0 %1019
    %v1021 = vsel %vm1017, %v547, -inf
    %1022 = vmax.xlane.f32.xlu0 %v1021
    %v1023 = vpop.xlane.xlu0 %1022
    %v1024 = vsel %vm1017, %v625, -inf
    %1025 = vmax.xlane.f32.xlu0 %v1024
    %v1026 = vpop.xlane.xlu0 %1025
    %v1027 = vsel %vm1017, %v703, -inf
    %1028 = vmax.xlane.f32.xlu0 %v1027
    %v1029 = vpop.xlane.xlu0 %1028
    %v1030 = vsel %vm1017, %v780, -inf
    %1031 = vmax.xlane.f32.xlu0 %v1030
    %v1032 = vpop.xlane.xlu0 %1031
    %v1033 = vsel %vm1017, %v858, -inf
    %1034 = vmax.xlane.f32.xlu0 %v1033
    %v1035 = vpop.xlane.xlu0 %1034
    %v1036 = vsel %vm1017, %v936, -inf
    %1037 = vmax.xlane.f32.xlu0 %v1036
    %v1038 = vpop.xlane.xlu0 %1037
    %v1039 = vsel %vm1017, %v1014, -inf
    %1040 = vmax.xlane.f32.xlu0 %v1039
    %v1041 = vpop.xlane.xlu0 %1040
    %v1042 = vsub.f32 %v469, %v1020
    %v1043 = vsub.f32 %v547, %v1023
    %v1044 = vsub.f32 %v625, %v1026
    %v1045 = vsub.f32 %v703, %v1029
    %v1046 = vsub.f32 %v780, %v1032
    %v1047 = vsub.f32 %v858, %v1035
    %v1048 = vsub.f32 %v936, %v1038
    %v1049 = vsub.f32 %v1014, %v1041
    %v1050 = vmul.f32 %v1042, 1.442695
    %v1051 = vpow.pop %v1050
    %v1052 = vmul.f32 %v1043, 1.442695
    %v1053 = vpow.pop %v1052
    %v1054 = vmul.f32 %v1044, 1.442695
    %v1055 = vpow.pop %v1054
    %v1056 = vmul.f32 %v1045, 1.442695
    %v1057 = vpow.pop %v1056
    %v1058 = vmul.f32 %v1046, 1.442695
    %v1059 = vpow.pop %v1058
    %v1060 = vmul.f32 %v1047, 1.442695
    %v1061 = vpow.pop %v1060
    %v1062 = vmul.f32 %v1048, 1.442695
    %v1063 = vpow.pop %v1062
    %v1064 = vmul.f32 %v1049, 1.442695
    %v1065 = vpow.pop %v1064
    %v1066 = vsel %vm1017, %v1051, 0.0
    %1067 = vadd.xlane.f32.xlu0 %v1066
    %v1068 = vpop.xlane.xlu0 %1067
    %v1069 = vsel %vm1017, %v1053, 0.0
    %1070 = vadd.xlane.f32.xlu0 %v1069
    %v1071 = vpop.xlane.xlu0 %1070
    %v1072 = vsel %vm1017, %v1055, 0.0
    %1073 = vadd.xlane.f32.xlu0 %v1072
    %v1074 = vpop.xlane.xlu0 %1073
    %v1075 = vsel %vm1017, %v1057, 0.0
    %1076 = vadd.xlane.f32.xlu0 %v1075
    %v1077 = vpop.xlane.xlu0 %1076
    %v1078 = vsel %vm1017, %v1059, 0.0
    %1079 = vadd.xlane.f32.xlu0 %v1078
    %v1080 = vpop.xlane.xlu0 %1079
    %v1081 = vsel %vm1017, %v1061, 0.0
    %1082 = vadd.xlane.f32.xlu0 %v1081
    %v1083 = vpop.xlane.xlu0 %1082
    %v1084 = vsel %vm1017, %v1063, 0.0
    %1085 = vadd.xlane.f32.xlu0 %v1084
    %v1086 = vpop.xlane.xlu0 %1085
    %v1087 = vsel %vm1017, %v1065, 0.0
    %1088 = vadd.xlane.f32.xlu0 %v1087
    %v1089 = vpop.xlane.xlu0 %1088
    %v1090 = vrcp.pop %v1068
    %v1091 = vrcp.pop %v1071
    %v1092 = vrcp.pop %v1074
    %v1093 = vrcp.pop %v1077
    %v1094 = vrcp.pop %v1080
    %v1095 = vrcp.pop %v1083
    %v1096 = vrcp.pop %v1086
    %v1097 = vrcp.pop %v1089
    %v1098 = vmul.f32 %v1051, %v1090
    %v1099 = vmul.f32 %v1053, %v1091
    %v1100 = vmul.f32 %v1055, %v1092
    %v1101 = vmul.f32 %v1057, %v1093
    %v1102 = vmul.f32 %v1059, %v1094
    %v1103 = vmul.f32 %v1061, %v1095
    %v1104 = vmul.f32 %v1063, %v1096
    %v1105 = vmul.f32 %v1065, %v1097
    %v1107 = vsel %vm1017, %v1098, 0
    %1109 = vmatprep.subr.mxu0 0.0
    %1110 = vmatpush1.msra.mxu0 %v388
    %1111 = vmatprep.subr.mxu0 0.0
    %1112 = vmatpush1.msra.mxu0 0.0
    %1113 = vmatprep.subr.mxu0 0.0
    %1114 = vmatpush1.msra.mxu0 0.0
    %1115 = vmatprep.subr.mxu0 0.0
    %1116 = vmatpush1.msra.mxu0 0.0
    %1117 = vmatprep.subr.mxu0 0.0
    %1118 = vmatpush1.msra.mxu0 0.0
    %1119 = vmatprep.subr.mxu0 0.0
    %1120 = vmatpush1.msra.mxu0 0.0
    %1121 = vmatprep.subr.mxu0 0.0
    %1122 = vmatpush1.msra.mxu0 0.0
    %1123 = vmatprep.subr.mxu0 0.0
    %1124 = vmatpush1.msra.mxu0 0.0
    %1125 = vmatprep.subr.mxu0 0.0
    %1126 = vmatpush1.msra.mxu0 0.0
    %1127 = vmatprep.subr.mxu0 0.0
    %1128 = vmatpush1.msra.mxu0 0.0
    %1129 = vmatprep.subr.mxu0 0.0
    %1130 = vmatpush1.msra.mxu0 0.0
    %1131 = vmatprep.subr.mxu0 0.0
    %1132 = vmatpush1.msra.mxu0 0.0
    %1133 = vmatprep.subr.mxu0 0.0
    %1134 = vmatpush1.msra.mxu0 0.0
    %1135 = vmatprep.subr.mxu0 0.0
    %1136 = vmatpush1.msra.mxu0 0.0
    %1137 = vmatprep.subr.mxu0 0.0
    %1138 = vmatpush1.msra.mxu0 0.0
    %1139 = vmatprep.subr.mxu0 0.0
    %1140 = vmatpush1.msra.mxu0 0.0
    %1141 = vmatprep.subr.mxu0 0.0
    %1142 = vmatpush1.msra.mxu0 0.0
    %1143 = vmatprep.subr.mxu0 0.0
    %1144 = vmatpush1.msra.mxu0 0.0
    %1145 = vmatprep.subr.mxu0 0.0
    %1146 = vmatpush1.msra.mxu0 0.0
    %1147 = vmatprep.subr.mxu0 0.0
    %1148 = vmatpush1.msra.mxu0 0.0
    %1149 = vmatprep.subr.mxu0 0.0
    %1150 = vmatpush1.msra.mxu0 0.0
    %1151 = vmatprep.subr.mxu0 0.0
    %1152 = vmatpush1.msra.mxu0 0.0
    %1153 = vmatprep.subr.mxu0 0.0
    %1154 = vmatpush1.msra.mxu0 0.0
    %1155 = vmatprep.subr.mxu0 0.0
    %1156 = vmatpush1.msra.mxu0 0.0
    %1157 = vmatprep.subr.mxu0 0.0
    %1158 = vmatpush1.msra.mxu0 0.0
    %1159 = vmatprep.subr.mxu0 0.0
    %1160 = vmatpush1.msra.mxu0 0.0
    %1161 = vmatprep.subr.mxu0 0.0
    %1162 = vmatpush1.msra.mxu0 0.0
    %1163 = vmatprep.subr.mxu0 0.0
    %1164 = vmatpush1.msra.mxu0 0.0
    %1165 = vmatprep.subr.mxu0 0.0
    %1166 = vmatpush1.msra.mxu0 0.0
    %1167 = vmatprep.subr.mxu0 0.0
    %1168 = vmatpush1.msra.mxu0 0.0
    %1169 = vmatprep.subr.mxu0 0.0
    %1170 = vmatpush1.msra.mxu0 0.0
    %1171 = vmatprep.subr.mxu0 0.0
    %1172 = vmatpush1.msra.mxu0 0.0
    %1173 = vmatprep.mubr.f32.mxu0 0.0
    %1174 = vmatmul.mubr.f32.gmra.mrb[0].mxu0 %v1107
    %v1175 = vpop.f32.mrb[0].mxu0
    %v1176 = vadd.f32 0.0, %v1175
    %v1177 = vpop.f32.mrb[0].mxu0
    %1178 = vdwg.mxu0
    %v1179 = vld [vmem:[%s5] sm:$0xff]
    %v1180 = vld [vmem:[%s5 + $0x8] sm:$0xff]
    %v1181 = vpack.c.bf16 %v1176, %v1176
    %1183 = vrot.lane.b32.xlu0 %v388, 112
    %v1184 = vpop.permute.xlu0 %1183
    %v1187 = vsel %vm1017, %v1099, 0
    %1189 = vmatprep.subr.mxu0 0.0
    %1190 = vmatpush1.msra.mxu0 %v1184
    %1191 = vmatprep.subr.mxu0 0.0
    %1192 = vmatpush1.msra.mxu0 0.0
    %1193 = vmatprep.subr.mxu0 0.0
    %1194 = vmatpush1.msra.mxu0 0.0
    %1195 = vmatprep.subr.mxu0 0.0
    %1196 = vmatpush1.msra.mxu0 0.0
    %1197 = vmatprep.subr.mxu0 0.0
    %1198 = vmatpush1.msra.mxu0 0.0
    %1199 = vmatprep.subr.mxu0 0.0
    %1200 = vmatpush1.msra.mxu0 0.0
    %1201 = vmatprep.subr.mxu0 0.0
    %1202 = vmatpush1.msra.mxu0 0.0
    %1203 = vmatprep.subr.mxu0 0.0
    %1204 = vmatpush1.msra.mxu0 0.0
    %1205 = vmatprep.subr.mxu0 0.0
    %1206 = vmatpush1.msra.mxu0 0.0
    %1207 = vmatprep.subr.mxu0 0.0
    %1208 = vmatpush1.msra.mxu0 0.0
    %1209 = vmatprep.subr.mxu0 0.0
    %1210 = vmatpush1.msra.mxu0 0.0
    %1211 = vmatprep.subr.mxu0 0.0
    %1212 = vmatpush1.msra.mxu0 0.0
    %1213 = vmatprep.subr.mxu0 0.0
    %1214 = vmatpush1.msra.mxu0 0.0
    %1215 = vmatprep.subr.mxu0 0.0
    %1216 = vmatpush1.msra.mxu0 0.0
    %1217 = vmatprep.subr.mxu0 0.0
    %1218 = vmatpush1.msra.mxu0 0.0
    %1219 = vmatprep.subr.mxu0 0.0
    %1220 = vmatpush1.msra.mxu0 0.0
    %1221 = vmatprep.subr.mxu0 0.0
    %1222 = vmatpush1.msra.mxu0 0.0
    %1223 = vmatprep.subr.mxu0 0.0
    %1224 = vmatpush1.msra.mxu0 0.0
    %1225 = vmatprep.subr.mxu0 0.0
    %1226 = vmatpush1.msra.mxu0 0.0
    %1227 = vmatprep.subr.mxu0 0.0
    %1228 = vmatpush1.msra.mxu0 0.0
    %1229 = vmatprep.subr.mxu0 0.0
    %1230 = vmatpush1.msra.mxu0 0.0
    %1231 = vmatprep.subr.mxu0 0.0
    %1232 = vmatpush1.msra.mxu0 0.0
    %1233 = vmatprep.subr.mxu0 0.0
    %1234 = vmatpush1.msra.mxu0 0.0
    %1235 = vmatprep.subr.mxu0 0.0
    %1236 = vmatpush1.msra.mxu0 0.0
    %1237 = vmatprep.subr.mxu0 0.0
    %1238 = vmatpush1.msra.mxu0 0.0
    %1239 = vmatprep.subr.mxu0 0.0
    %1240 = vmatpush1.msra.mxu0 0.0
    %1241 = vmatprep.subr.mxu0 0.0
    %1242 = vmatpush1.msra.mxu0 0.0
    %1243 = vmatprep.subr.mxu0 0.0
    %1244 = vmatpush1.msra.mxu0 0.0
    %1245 = vmatprep.subr.mxu0 0.0
    %1246 = vmatpush1.msra.mxu0 0.0
    %1247 = vmatprep.subr.mxu0 0.0
    %1248 = vmatpush1.msra.mxu0 0.0
    %1249 = vmatprep.subr.mxu0 0.0
    %1250 = vmatpush1.msra.mxu0 0.0
    %1251 = vmatprep.subr.mxu0 0.0
    %1252 = vmatpush1.msra.mxu0 0.0
    %1253 = vmatprep.mubr.f32.mxu0 0.0
    %1254 = vmatmul.mubr.f32.gmra.mrb[0].mxu0 %v1187
    %v1255 = vpop.f32.mrb[0].mxu0
    %v1256 = vadd.f32 0.0, %v1255
    %v1257 = vpop.f32.mrb[0].mxu0
    %1258 = vdwg.mxu0
    %v1259 = vld [vmem:[%s5 + $0x10] sm:$0xff]
    %v1260 = vld [vmem:[%s5 + $0x18] sm:$0xff]
    %v1261 = vpack.c.bf16 %v1256, %v1256
    %v1264 = vunpack.c.l.b16 %v1259
    %v1265 = vunpack.c.h.b16 %v1259
    %v1266 = vunpack.c.l.b16 %v1260
    %v1267 = vunpack.c.h.b16 %v1260
    %v1268 = vpack.c.b16 %v1266, %v1264
    %v1269 = vpack.c.b16 %v1267, %v1265
    %v1273 = vsel %vm397, %v1261, 0
    %1275 = vmatprep.subr.bf16.mxu0 %v1269
    %1276 = vmatpush1.bf16.msra.mxu0 %v1268
    %1277 = vmatprep.subr.bf16.mxu0 0
    %1278 = vmatpush1.bf16.msra.mxu0 0
    %1279 = vmatprep.subr.bf16.mxu0 0
    %1280 = vmatpush1.bf16.msra.mxu0 0
    %1281 = vmatprep.subr.bf16.mxu0 0
    %1282 = vmatpush1.bf16.msra.mxu0 0
    %1283 = vmatprep.subr.bf16.mxu0 0
    %1284 = vmatpush1.bf16.msra.mxu0 0
    %1285 = vmatprep.subr.bf16.mxu0 0
    %1286 = vmatpush1.bf16.msra.mxu0 0
    %1287 = vmatprep.subr.bf16.mxu0 0
    %1288 = vmatpush1.bf16.msra.mxu0 0
    %1289 = vmatprep.subr.bf16.mxu0 0
    %1290 = vmatpush1.bf16.msra.mxu0 0
    %1291 = vmatprep.subr.bf16.mxu0 0
    %1292 = vmatpush1.bf16.msra.mxu0 0
    %1293 = vmatprep.subr.bf16.mxu0 0
    %1294 = vmatpush1.bf16.msra.mxu0 0
    %1295 = vmatprep.subr.bf16.mxu0 0
    %1296 = vmatpush1.bf16.msra.mxu0 0
    %1297 = vmatprep.subr.bf16.mxu0 0
    %1298 = vmatpush1.bf16.msra.mxu0 0
    %1299 = vmatprep.subr.bf16.mxu0 0
    %1300 = vmatpush1.bf16.msra.mxu0 0
    %1301 = vmatprep.subr.bf16.mxu0 0
    %1302 = vmatpush1.bf16.msra.mxu0 0
    %1303 = vmatprep.subr.bf16.mxu0 0
    %1304 = vmatpush1.bf16.msra.mxu0 0
    %1305 = vmatprep.subr.bf16.mxu0 0
    %1306 = vmatpush1.bf16.msra.mxu0 0
    %1307 = vmatprep.mubr.bf16.mxu0 0
    %1308 = vmatmul.mubr.bf16.gmra.mrb[0].mxu0 %v1273
    %v1309 = vpop.f32.mrb[0].mxu0
    %v1310 = vadd.f32 0.0, %v1309
    %v1311 = vpop.f32.mrb[0].mxu0
    %v1312 = vadd.f32 0.0, %v1311
    %v1313 = vpop.f32.mrb[0].mxu0
    %v1314 = vpop.f32.mrb[0].mxu0
    %1315 = vdwg.mxu0
    %v1318 = vunpack.c.l.b16 %v1179
    %v1319 = vunpack.c.h.b16 %v1179
    %v1320 = vunpack.c.l.b16 %v1180
    %v1321 = vunpack.c.h.b16 %v1180
    %v1322 = vpack.c.b16 %v1320, %v1318
    %v1323 = vpack.c.b16 %v1321, %v1319
    %v1327 = vsel %vm397, %v1181, 0
    %1329 = vmatprep.subr.bf16.mxu0 %v1323
    %1330 = vmatpush1.bf16.msra.mxu0 %v1322
    %1331 = vmatprep.subr.bf16.mxu0 0
    %1332 = vmatpush1.bf16.msra.mxu0 0
    %1333 = vmatprep.subr.bf16.mxu0 0
    %1334 = vmatpush1.bf16.msra.mxu0 0
    %1335 = vmatprep.subr.bf16.mxu0 0
    %1336 = vmatpush1.bf16.msra.mxu0 0
    %1337 = vmatprep.subr.bf16.mxu0 0
    %1338 = vmatpush1.bf16.msra.mxu0 0
    %1339 = vmatprep.subr.bf16.mxu0 0
    %1340 = vmatpush1.bf16.msra.mxu0 0
    %1341 = vmatprep.subr.bf16.mxu0 0
    %1342 = vmatpush1.bf16.msra.mxu0 0
    %1343 = vmatprep.subr.bf16.mxu0 0
    %1344 = vmatpush1.bf16.msra.mxu0 0
    %1345 = vmatprep.subr.bf16.mxu0 0
    %1346 = vmatpush1.bf16.msra.mxu0 0
    %1347 = vmatprep.subr.bf16.mxu0 0
    %1348 = vmatpush1.bf16.msra.mxu0 0
    %1349 = vmatprep.subr.bf16.mxu0 0
    %1350 = vmatpush1.bf16.msra.mxu0 0
    %1351 = vmatprep.subr.bf16.mxu0 0
    %1352 = vmatpush1.bf16.msra.mxu0 0
    %1353 = vmatprep.subr.bf16.mxu0 0
    %1354 = vmatpush1.bf16.msra.mxu0 0
    %1355 = vmatprep.subr.bf16.mxu0 0
    %1356 = vmatpush1.bf16.msra.mxu0 0
    %1357 = vmatprep.subr.bf16.mxu0 0
    %1358 = vmatpush1.bf16.msra.mxu0 0
    %1359 = vmatprep.subr.bf16.mxu0 0
    %1360 = vmatpush1.bf16.msra.mxu0 0
    %1361 = vmatprep.mubr.bf16.mxu0 0
    %1362 = vmatmul.mubr.bf16.gmra.mrb[0].mxu0 %v1327
    %v1363 = vpop.f32.mrb[0].mxu0
    %v1364 = vadd.f32 %v1310, %v1363
    %v1365 = vpop.f32.mrb[0].mxu0
    %v1366 = vadd.f32 %v1312, %v1365
    %v1367 = vpop.f32.mrb[0].mxu0
    %v1368 = vpop.f32.mrb[0].mxu0
    %1369 = vdwg.mxu0
    %1370 = vrot.lane.b32.xlu0 %v388, 96
    %v1371 = vpop.permute.xlu0 %1370
    %v1374 = vsel %vm1017, %v1100, 0
    %1376 = vmatprep.subr.mxu0 0.0
    %1377 = vmatpush1.msra.mxu0 %v1371
    %1378 = vmatprep.subr.mxu0 0.0
    %1379 = vmatpush1.msra.mxu0 0.0
    %1380 = vmatprep.subr.mxu0 0.0
    %1381 = vmatpush1.msra.mxu0 0.0
    %1382 = vmatprep.subr.mxu0 0.0
    %1383 = vmatpush1.msra.mxu0 0.0
    %1384 = vmatprep.subr.mxu0 0.0
    %1385 = vmatpush1.msra.mxu0 0.0
    %1386 = vmatprep.subr.mxu0 0.0
    %1387 = vmatpush1.msra.mxu0 0.0
    %1388 = vmatprep.subr.mxu0 0.0
    %1389 = vmatpush1.msra.mxu0 0.0
    %1390 = vmatprep.subr.mxu0 0.0
    %1391 = vmatpush1.msra.mxu0 0.0
    %1392 = vmatprep.subr.mxu0 0.0
    %1393 = vmatpush1.msra.mxu0 0.0
    %1394 = vmatprep.subr.mxu0 0.0
    %1395 = vmatpush1.msra.mxu0 0.0
    %1396 = vmatprep.subr.mxu0 0.0
    %1397 = vmatpush1.msra.mxu0 0.0
    %1398 = vmatprep.subr.mxu0 0.0
    %1399 = vmatpush1.msra.mxu0 0.0
    %1400 = vmatprep.subr.mxu0 0.0
    %1401 = vmatpush1.msra.mxu0 0.0
    %1402 = vmatprep.subr.mxu0 0.0
    %1403 = vmatpush1.msra.mxu0 0.0
    %1404 = vmatprep.subr.mxu0 0.0
    %1405 = vmatpush1.msra.mxu0 0.0
    %1406 = vmatprep.subr.mxu0 0.0
    %1407 = vmatpush1.msra.mxu0 0.0
    %1408 = vmatprep.subr.mxu0 0.0
    %1409 = vmatpush1.msra.mxu0 0.0
    %1410 = vmatprep.subr.mxu0 0.0
    %1411 = vmatpush1.msra.mxu0 0.0
    %1412 = vmatprep.subr.mxu0 0.0
    %1413 = vmatpush1.msra.mxu0 0.0
    %1414 = vmatprep.subr.mxu0 0.0
    %1415 = vmatpush1.msra.mxu0 0.0
    %1416 = vmatprep.subr.mxu0 0.0
    %1417 = vmatpush1.msra.mxu0 0.0
    %1418 = vmatprep.subr.mxu0 0.0
    %1419 = vmatpush1.msra.mxu0 0.0
    %1420 = vmatprep.subr.mxu0 0.0
    %1421 = vmatpush1.msra.mxu0 0.0
    %1422 = vmatprep.subr.mxu0 0.0
    %1423 = vmatpush1.msra.mxu0 0.0
    %1424 = vmatprep.subr.mxu0 0.0
    %1425 = vmatpush1.msra.mxu0 0.0
    %1426 = vmatprep.subr.mxu0 0.0
    %1427 = vmatpush1.msra.mxu0 0.0
    %1428 = vmatprep.subr.mxu0 0.0
    %1429 = vmatpush1.msra.mxu0 0.0
    %1430 = vmatprep.subr.mxu0 0.0
    %1431 = vmatpush1.msra.mxu0 0.0
    %1432 = vmatprep.subr.mxu0 0.0
    %1433 = vmatpush1.msra.mxu0 0.0
    %1434 = vmatprep.subr.mxu0 0.0
    %1435 = vmatpush1.msra.mxu0 0.0
    %1436 = vmatprep.subr.mxu0 0.0
    %1437 = vmatpush1.msra.mxu0 0.0
    %1438 = vmatprep.subr.mxu0 0.0
    %1439 = vmatpush1.msra.mxu0 0.0
    %1440 = vmatprep.mubr.f32.mxu0 0.0
    %1441 = vmatmul.mubr.f32.gmra.mrb[0].mxu0 %v1374
    %v1442 = vpop.f32.mrb[0].mxu0
    %v1443 = vadd.f32 0.0, %v1442
    %v1444 = vpop.f32.mrb[0].mxu0
    %1445 = vdwg.mxu0
    %v1446 = vld [vmem:[%s5 + $0x20] sm:$0xff]
    %v1447 = vld [vmem:[%s5 + $0x28] sm:$0xff]
    %v1448 = vpack.c.bf16 %v1443, %v1443
    %v1451 = vunpack.c.l.b16 %v1446
    %v1452 = vunpack.c.h.b16 %v1446
    %v1453 = vunpack.c.l.b16 %v1447
    %v1454 = vunpack.c.h.b16 %v1447
    %v1455 = vpack.c.b16 %v1453, %v1451
    %v1456 = vpack.c.b16 %v1454, %v1452
    %v1460 = vsel %vm397, %v1448, 0
    %1462 = vmatprep.subr.bf16.mxu0 %v1456
    %1463 = vmatpush1.bf16.msra.mxu0 %v1455
    %1464 = vmatprep.subr.bf16.mxu0 0
    %1465 = vmatpush1.bf16.msra.mxu0 0
    %1466 = vmatprep.subr.bf16.mxu0 0
    %1467 = vmatpush1.bf16.msra.mxu0 0
    %1468 = vmatprep.subr.bf16.mxu0 0
    %1469 = vmatpush1.bf16.msra.mxu0 0
    %1470 = vmatprep.subr.bf16.mxu0 0
    %1471 = vmatpush1.bf16.msra.mxu0 0
    %1472 = vmatprep.subr.bf16.mxu0 0
    %1473 = vmatpush1.bf16.msra.mxu0 0
    %1474 = vmatprep.subr.bf16.mxu0 0
    %1475 = vmatpush1.bf16.msra.mxu0 0
    %1476 = vmatprep.subr.bf16.mxu0 0
    %1477 = vmatpush1.bf16.msra.mxu0 0
    %1478 = vmatprep.subr.bf16.mxu0 0
    %1479 = vmatpush1.bf16.msra.mxu0 0
    %1480 = vmatprep.subr.bf16.mxu0 0
    %1481 = vmatpush1.bf16.msra.mxu0 0
    %1482 = vmatprep.subr.bf16.mxu0 0
    %1483 = vmatpush1.bf16.msra.mxu0 0
    %1484 = vmatprep.subr.bf16.mxu0 0
    %1485 = vmatpush1.bf16.msra.mxu0 0
    %1486 = vmatprep.subr.bf16.mxu0 0
    %1487 = vmatpush1.bf16.msra.mxu0 0
    %1488 = vmatprep.subr.bf16.mxu0 0
    %1489 = vmatpush1.bf16.msra.mxu0 0
    %1490 = vmatprep.subr.bf16.mxu0 0
    %1491 = vmatpush1.bf16.msra.mxu0 0
    %1492 = vmatprep.subr.bf16.mxu0 0
    %1493 = vmatpush1.bf16.msra.mxu0 0
    %1494 = vmatprep.mubr.bf16.mxu0 0
    %1495 = vmatmul.mubr.bf16.gmra.mrb[0].mxu0 %v1460
    %v1496 = vpop.f32.mrb[0].mxu0
    %v1497 = vadd.f32 0.0, %v1496
    %v1498 = vpop.f32.mrb[0].mxu0
    %v1499 = vadd.f32 0.0, %v1498
    %v1500 = vpop.f32.mrb[0].mxu0
    %v1501 = vpop.f32.mrb[0].mxu0
    %1502 = vdwg.mxu0
    %v1503 = vadd.f32 %v1364, %v1497
    %v1504 = vadd.f32 %v1366, %v1499
    %1505 = vrot.lane.b32.xlu0 %v388, 80
    %v1506 = vpop.permute.xlu0 %1505
    %v1509 = vsel %vm1017, %v1101, 0
    %1511 = vmatprep.subr.mxu0 0.0
    %1512 = vmatpush1.msra.mxu0 %v1506
    %1513 = vmatprep.subr.mxu0 0.0
    %1514 = vmatpush1.msra.mxu0 0.0
    %1515 = vmatprep.subr.mxu0 0.0
    %1516 = vmatpush1.msra.mxu0 0.0
    %1517 = vmatprep.subr.mxu0 0.0
    %1518 = vmatpush1.msra.mxu0 0.0
    %1519 = vmatprep.subr.mxu0 0.0
    %1520 = vmatpush1.msra.mxu0 0.0
    %1521 = vmatprep.subr.mxu0 0.0
    %1522 = vmatpush1.msra.mxu0 0.0
    %1523 = vmatprep.subr.mxu0 0.0
    %1524 = vmatpush1.msra.mxu0 0.0
    %1525 = vmatprep.subr.mxu0 0.0
    %1526 = vmatpush1.msra.mxu0 0.0
    %1527 = vmatprep.subr.mxu0 0.0
    %1528 = vmatpush1.msra.mxu0 0.0
    %1529 = vmatprep.subr.mxu0 0.0
    %1530 = vmatpush1.msra.mxu0 0.0
    %1531 = vmatprep.subr.mxu0 0.0
    %1532 = vmatpush1.msra.mxu0 0.0
    %1533 = vmatprep.subr.mxu0 0.0
    %1534 = vmatpush1.msra.mxu0 0.0
    %1535 = vmatprep.subr.mxu0 0.0
    %1536 = vmatpush1.msra.mxu0 0.0
    %1537 = vmatprep.subr.mxu0 0.0
    %1538 = vmatpush1.msra.mxu0 0.0
    %1539 = vmatprep.subr.mxu0 0.0
    %1540 = vmatpush1.msra.mxu0 0.0
    %1541 = vmatprep.subr.mxu0 0.0
    %1542 = vmatpush1.msra.mxu0 0.0
    %1543 = vmatprep.subr.mxu0 0.0
    %1544 = vmatpush1.msra.mxu0 0.0
    %1545 = vmatprep.subr.mxu0 0.0
    %1546 = vmatpush1.msra.mxu0 0.0
    %1547 = vmatprep.subr.mxu0 0.0
    %1548 = vmatpush1.msra.mxu0 0.0
    %1549 = vmatprep.subr.mxu0 0.0
    %1550 = vmatpush1.msra.mxu0 0.0
    %1551 = vmatprep.subr.mxu0 0.0
    %1552 = vmatpush1.msra.mxu0 0.0
    %1553 = vmatprep.subr.mxu0 0.0
    %1554 = vmatpush1.msra.mxu0 0.0
    %1555 = vmatprep.subr.mxu0 0.0
    %1556 = vmatpush1.msra.mxu0 0.0
    %1557 = vmatprep.subr.mxu0 0.0
    %1558 = vmatpush1.msra.mxu0 0.0
    %1559 = vmatprep.subr.mxu0 0.0
    %1560 = vmatpush1.msra.mxu0 0.0
    %1561 = vmatprep.subr.mxu0 0.0
    %1562 = vmatpush1.msra.mxu0 0.0
    %1563 = vmatprep.subr.mxu0 0.0
    %1564 = vmatpush1.msra.mxu0 0.0
    %1565 = vmatprep.subr.mxu0 0.0
    %1566 = vmatpush1.msra.mxu0 0.0
    %1567 = vmatprep.subr.mxu0 0.0
    %1568 = vmatpush1.msra.mxu0 0.0
    %1569 = vmatprep.subr.mxu0 0.0
    %1570 = vmatpush1.msra.mxu0 0.0
    %1571 = vmatprep.subr.mxu0 0.0
    %1572 = vmatpush1.msra.mxu0 0.0
    %1573 = vmatprep.subr.mxu0 0.0
    %1574 = vmatpush1.msra.mxu0 0.0
    %1575 = vmatprep.mubr.f32.mxu0 0.0
    %1576 = vmatmul.mubr.f32.gmra.mrb[0].mxu0 %v1509
    %v1577 = vpop.f32.mrb[0].mxu0
    %v1578 = vadd.f32 0.0, %v1577
    %v1579 = vpop.f32.mrb[0].mxu0
    %1580 = vdwg.mxu0
    %v1581 = vld [vmem:[%s5 + $0x30] sm:$0xff]
    %v1582 = vld [vmem:[%s5 + $0x38] sm:$0xff]
    %v1583 = vpack.c.bf16 %v1578, %v1578
    %v1586 = vunpack.c.l.b16 %v1581
    %v1587 = vunpack.c.h.b16 %v1581
    %v1588 = vunpack.c.l.b16 %v1582
    %v1589 = vunpack.c.h.b16 %v1582
    %v1590 = vpack.c.b16 %v1588, %v1586
    %v1591 = vpack.c.b16 %v1589, %v1587
    %v1595 = vsel %vm397, %v1583, 0
    %1597 = vmatprep.subr.bf16.mxu0 %v1591
    %1598 = vmatpush1.bf16.msra.mxu0 %v1590
    %1599 = vmatprep.subr.bf16.mxu0 0
    %1600 = vmatpush1.bf16.msra.mxu0 0
    %1601 = vmatprep.subr.bf16.mxu0 0
    %1602 = vmatpush1.bf16.msra.mxu0 0
    %1603 = vmatprep.subr.bf16.mxu0 0
    %1604 = vmatpush1.bf16.msra.mxu0 0
    %1605 = vmatprep.subr.bf16.mxu0 0
    %1606 = vmatpush1.bf16.msra.mxu0 0
    %1607 = vmatprep.subr.bf16.mxu0 0
    %1608 = vmatpush1.bf16.msra.mxu0 0
    %1609 = vmatprep.subr.bf16.mxu0 0
    %1610 = vmatpush1.bf16.msra.mxu0 0
    %1611 = vmatprep.subr.bf16.mxu0 0
    %1612 = vmatpush1.bf16.msra.mxu0 0
    %1613 = vmatprep.subr.bf16.mxu0 0
    %1614 = vmatpush1.bf16.msra.mxu0 0
    %1615 = vmatprep.subr.bf16.mxu0 0
    %1616 = vmatpush1.bf16.msra.mxu0 0
    %1617 = vmatprep.subr.bf16.mxu0 0
    %1618 = vmatpush1.bf16.msra.mxu0 0
    %1619 = vmatprep.subr.bf16.mxu0 0
    %1620 = vmatpush1.bf16.msra.mxu0 0
    %1621 = vmatprep.subr.bf16.mxu0 0
    %1622 = vmatpush1.bf16.msra.mxu0 0
    %1623 = vmatprep.subr.bf16.mxu0 0
    %1624 = vmatpush1.bf16.msra.mxu0 0
    %1625 = vmatprep.subr.bf16.mxu0 0
    %1626 = vmatpush1.bf16.msra.mxu0 0
    %1627 = vmatprep.subr.bf16.mxu0 0
    %1628 = vmatpush1.bf16.msra.mxu0 0
    %1629 = vmatprep.mubr.bf16.mxu0 0
    %1630 = vmatmul.mubr.bf16.gmra.mrb[0].mxu0 %v1595
    %v1631 = vpop.f32.mrb[0].mxu0
    %v1632 = vadd.f32 0.0, %v1631
    %v1633 = vpop.f32.mrb[0].mxu0
    %v1634 = vadd.f32 0.0, %v1633
    %v1635 = vpop.f32.mrb[0].mxu0
    %v1636 = vpop.f32.mrb[0].mxu0
    %1637 = vdwg.mxu0
    %v1638 = vadd.f32 %v1503, %v1632
    %v1639 = vadd.f32 %v1504, %v1634
    %v1641 = vsel %vm1017, %v1102, 0
    %1643 = vmatprep.subr.mxu0 0.0
    %1644 = vmatpush1.msra.mxu0 %v392
    %1645 = vmatprep.subr.mxu0 0.0
    %1646 = vmatpush1.msra.mxu0 0.0
    %1647 = vmatprep.subr.mxu0 0.0
    %1648 = vmatpush1.msra.mxu0 0.0
    %1649 = vmatprep.subr.mxu0 0.0
    %1650 = vmatpush1.msra.mxu0 0.0
    %1651 = vmatprep.subr.mxu0 0.0
    %1652 = vmatpush1.msra.mxu0 0.0
    %1653 = vmatprep.subr.mxu0 0.0
    %1654 = vmatpush1.msra.mxu0 0.0
    %1655 = vmatprep.subr.mxu0 0.0
    %1656 = vmatpush1.msra.mxu0 0.0
    %1657 = vmatprep.subr.mxu0 0.0
    %1658 = vmatpush1.msra.mxu0 0.0
    %1659 = vmatprep.subr.mxu0 0.0
    %1660 = vmatpush1.msra.mxu0 0.0
    %1661 = vmatprep.subr.mxu0 0.0
    %1662 = vmatpush1.msra.mxu0 0.0
    %1663 = vmatprep.subr.mxu0 0.0
    %1664 = vmatpush1.msra.mxu0 0.0
    %1665 = vmatprep.subr.mxu0 0.0
    %1666 = vmatpush1.msra.mxu0 0.0
    %1667 = vmatprep.subr.mxu0 0.0
    %1668 = vmatpush1.msra.mxu0 0.0
    %1669 = vmatprep.subr.mxu0 0.0
    %1670 = vmatpush1.msra.mxu0 0.0
    %1671 = vmatprep.subr.mxu0 0.0
    %1672 = vmatpush1.msra.mxu0 0.0
    %1673 = vmatprep.subr.mxu0 0.0
    %1674 = vmatpush1.msra.mxu0 0.0
    %1675 = vmatprep.subr.mxu0 0.0
    %1676 = vmatpush1.msra.mxu0 0.0
    %1677 = vmatprep.subr.mxu0 0.0
    %1678 = vmatpush1.msra.mxu0 0.0
    %1679 = vmatprep.subr.mxu0 0.0
    %1680 = vmatpush1.msra.mxu0 0.0
    %1681 = vmatprep.subr.mxu0 0.0
    %1682 = vmatpush1.msra.mxu0 0.0
    %1683 = vmatprep.subr.mxu0 0.0
    %1684 = vmatpush1.msra.mxu0 0.0
    %1685 = vmatprep.subr.mxu0 0.0
    %1686 = vmatpush1.msra.mxu0 0.0
    %1687 = vmatprep.subr.mxu0 0.0
    %1688 = vmatpush1.msra.mxu0 0.0
    %1689 = vmatprep.subr.mxu0 0.0
    %1690 = vmatpush1.msra.mxu0 0.0
    %1691 = vmatprep.subr.mxu0 0.0
    %1692 = vmatpush1.msra.mxu0 0.0
    %1693 = vmatprep.subr.mxu0 0.0
    %1694 = vmatpush1.msra.mxu0 0.0
    %1695 = vmatprep.subr.mxu0 0.0
    %1696 = vmatpush1.msra.mxu0 0.0
    %1697 = vmatprep.subr.mxu0 0.0
    %1698 = vmatpush1.msra.mxu0 0.0
    %1699 = vmatprep.subr.mxu0 0.0
    %1700 = vmatpush1.msra.mxu0 0.0
    %1701 = vmatprep.subr.mxu0 0.0
    %1702 = vmatpush1.msra.mxu0 0.0
    %1703 = vmatprep.subr.mxu0 0.0
    %1704 = vmatpush1.msra.mxu0 0.0
    %1705 = vmatprep.subr.mxu0 0.0
    %1706 = vmatpush1.msra.mxu0 0.0
    %1707 = vmatprep.mubr.f32.mxu0 0.0
    %1708 = vmatmul.mubr.f32.gmra.mrb[0].mxu0 %v1641
    %v1709 = vpop.f32.mrb[0].mxu0
    %v1710 = vadd.f32 0.0, %v1709
    %v1711 = vpop.f32.mrb[0].mxu0
    %1712 = vdwg.mxu0
    %v1713 = vpack.c.bf16 %v1710, %v1710
    %1715 = vrot.lane.b32.xlu0 %v392, 112
    %v1716 = vpop.permute.xlu0 %1715
    %v1719 = vsel %vm1017, %v1103, 0
    %1721 = vmatprep.subr.mxu0 0.0
    %1722 = vmatpush1.msra.mxu0 %v1716
    %1723 = vmatprep.subr.mxu0 0.0
    %1724 = vmatpush1.msra.mxu0 0.0
    %1725 = vmatprep.subr.mxu0 0.0
    %1726 = vmatpush1.msra.mxu0 0.0
    %1727 = vmatprep.subr.mxu0 0.0
    %1728 = vmatpush1.msra.mxu0 0.0
    %1729 = vmatprep.subr.mxu0 0.0
    %1730 = vmatpush1.msra.mxu0 0.0
    %1731 = vmatprep.subr.mxu0 0.0
    %1732 = vmatpush1.msra.mxu0 0.0
    %1733 = vmatprep.subr.mxu0 0.0
    %1734 = vmatpush1.msra.mxu0 0.0
    %1735 = vmatprep.subr.mxu0 0.0
    %1736 = vmatpush1.msra.mxu0 0.0
    %1737 = vmatprep.subr.mxu0 0.0
    %1738 = vmatpush1.msra.mxu0 0.0
    %1739 = vmatprep.subr.mxu0 0.0
    %1740 = vmatpush1.msra.mxu0 0.0
    %1741 = vmatprep.subr.mxu0 0.0
    %1742 = vmatpush1.msra.mxu0 0.0
    %1743 = vmatprep.subr.mxu0 0.0
    %1744 = vmatpush1.msra.mxu0 0.0
    %1745 = vmatprep.subr.mxu0 0.0
    %1746 = vmatpush1.msra.mxu0 0.0
    %1747 = vmatprep.subr.mxu0 0.0
    %1748 = vmatpush1.msra.mxu0 0.0
    %1749 = vmatprep.subr.mxu0 0.0
    %1750 = vmatpush1.msra.mxu0 0.0
    %1751 = vmatprep.subr.mxu0 0.0
    %1752 = vmatpush1.msra.mxu0 0.0
    %1753 = vmatprep.subr.mxu0 0.0
    %1754 = vmatpush1.msra.mxu0 0.0
    %1755 = vmatprep.subr.mxu0 0.0
    %1756 = vmatpush1.msra.mxu0 0.0
    %1757 = vmatprep.subr.mxu0 0.0
    %1758 = vmatpush1.msra.mxu0 0.0
    %1759 = vmatprep.subr.mxu0 0.0
    %1760 = vmatpush1.msra.mxu0 0.0
    %1761 = vmatprep.subr.mxu0 0.0
    %1762 = vmatpush1.msra.mxu0 0.0
    %1763 = vmatprep.subr.mxu0 0.0
    %1764 = vmatpush1.msra.mxu0 0.0
    %1765 = vmatprep.subr.mxu0 0.0
    %1766 = vmatpush1.msra.mxu0 0.0
    %1767 = vmatprep.subr.mxu0 0.0
    %1768 = vmatpush1.msra.mxu0 0.0
    %1769 = vmatprep.subr.mxu0 0.0
    %1770 = vmatpush1.msra.mxu0 0.0
    %1771 = vmatprep.subr.mxu0 0.0
    %1772 = vmatpush1.msra.mxu0 0.0
    %1773 = vmatprep.subr.mxu0 0.0
    %1774 = vmatpush1.msra.mxu0 0.0
    %1775 = vmatprep.subr.mxu0 0.0
    %1776 = vmatpush1.msra.mxu0 0.0
    %1777 = vmatprep.subr.mxu0 0.0
    %1778 = vmatpush1.msra.mxu0 0.0
    %1779 = vmatprep.subr.mxu0 0.0
    %1780 = vmatpush1.msra.mxu0 0.0
    %1781 = vmatprep.subr.mxu0 0.0
    %1782 = vmatpush1.msra.mxu0 0.0
    %1783 = vmatprep.subr.mxu0 0.0
    %1784 = vmatpush1.msra.mxu0 0.0
    %1785 = vmatprep.mubr.f32.mxu0 0.0
    %1786 = vmatmul.mubr.f32.gmra.mrb[0].mxu0 %v1719
    %v1787 = vpop.f32.mrb[0].mxu0
    %v1788 = vadd.f32 0.0, %v1787
    %v1789 = vpop.f32.mrb[0].mxu0
    %1790 = vdwg.mxu0
    %v1791 = vpack.c.bf16 %v1788, %v1788
    %v1793 = vsel %vm397, %v1791, 0
    %1795 = vmatprep.subr.bf16.mxu0 %v1269
    %1796 = vmatpush1.bf16.msra.mxu0 %v1268
    %1797 = vmatprep.subr.bf16.mxu0 0
    %1798 = vmatpush1.bf16.msra.mxu0 0
    %1799 = vmatprep.subr.bf16.mxu0 0
    %1800 = vmatpush1.bf16.msra.mxu0 0
    %1801 = vmatprep.subr.bf16.mxu0 0
    %1802 = vmatpush1.bf16.msra.mxu0 0
    %1803 = vmatprep.subr.bf16.mxu0 0
    %1804 = vmatpush1.bf16.msra.mxu0 0
    %1805 = vmatprep.subr.bf16.mxu0 0
    %1806 = vmatpush1.bf16.msra.mxu0 0
    %1807 = vmatprep.subr.bf16.mxu0 0
    %1808 = vmatpush1.bf16.msra.mxu0 0
    %1809 = vmatprep.subr.bf16.mxu0 0
    %1810 = vmatpush1.bf16.msra.mxu0 0
    %1811 = vmatprep.subr.bf16.mxu0 0
    %1812 = vmatpush1.bf16.msra.mxu0 0
    %1813 = vmatprep.subr.bf16.mxu0 0
    %1814 = vmatpush1.bf16.msra.mxu0 0
    %1815 = vmatprep.subr.bf16.mxu0 0
    %1816 = vmatpush1.bf16.msra.mxu0 0
    %1817 = vmatprep.subr.bf16.mxu0 0
    %1818 = vmatpush1.bf16.msra.mxu0 0
    %1819 = vmatprep.subr.bf16.mxu0 0
    %1820 = vmatpush1.bf16.msra.mxu0 0
    %1821 = vmatprep.subr.bf16.mxu0 0
    %1822 = vmatpush1.bf16.msra.mxu0 0
    %1823 = vmatprep.subr.bf16.mxu0 0
    %1824 = vmatpush1.bf16.msra.mxu0 0
    %1825 = vmatprep.subr.bf16.mxu0 0
    %1826 = vmatpush1.bf16.msra.mxu0 0
    %1827 = vmatprep.mubr.bf16.mxu0 0
    %1828 = vmatmul.mubr.bf16.gmra.mrb[0].mxu0 %v1793
    %v1829 = vpop.f32.mrb[0].mxu0
    %v1830 = vadd.f32 0.0, %v1829
    %v1831 = vpop.f32.mrb[0].mxu0
    %v1832 = vadd.f32 0.0, %v1831
    %v1833 = vpop.f32.mrb[0].mxu0
    %v1834 = vpop.f32.mrb[0].mxu0
    %1835 = vdwg.mxu0
    %v1837 = vsel %vm397, %v1713, 0
    %1839 = vmatprep.subr.bf16.mxu0 %v1323
    %1840 = vmatpush1.bf16.msra.mxu0 %v1322
    %1841 = vmatprep.subr.bf16.mxu0 0
    %1842 = vmatpush1.bf16.msra.mxu0 0
    %1843 = vmatprep.subr.bf16.mxu0 0
    %1844 = vmatpush1.bf16.msra.mxu0 0
    %1845 = vmatprep.subr.bf16.mxu0 0
    %1846 = vmatpush1.bf16.msra.mxu0 0
    %1847 = vmatprep.subr.bf16.mxu0 0
    %1848 = vmatpush1.bf16.msra.mxu0 0
    %1849 = vmatprep.subr.bf16.mxu0 0
    %1850 = vmatpush1.bf16.msra.mxu0 0
    %1851 = vmatprep.subr.bf16.mxu0 0
    %1852 = vmatpush1.bf16.msra.mxu0 0
    %1853 = vmatprep.subr.bf16.mxu0 0
    %1854 = vmatpush1.bf16.msra.mxu0 0
    %1855 = vmatprep.subr.bf16.mxu0 0
    %1856 = vmatpush1.bf16.msra.mxu0 0
    %1857 = vmatprep.subr.bf16.mxu0 0
    %1858 = vmatpush1.bf16.msra.mxu0 0
    %1859 = vmatprep.subr.bf16.mxu0 0
    %1860 = vmatpush1.bf16.msra.mxu0 0
    %1861 = vmatprep.subr.bf16.mxu0 0
    %1862 = vmatpush1.bf16.msra.mxu0 0
    %1863 = vmatprep.subr.bf16.mxu0 0
    %1864 = vmatpush1.bf16.msra.mxu0 0
    %1865 = vmatprep.subr.bf16.mxu0 0
    %1866 = vmatpush1.bf16.msra.mxu0 0
    %1867 = vmatprep.subr.bf16.mxu0 0
    %1868 = vmatpush1.bf16.msra.mxu0 0
    %1869 = vmatprep.subr.bf16.mxu0 0
    %1870 = vmatpush1.bf16.msra.mxu0 0
    %1871 = vmatprep.mubr.bf16.mxu0 0
    %1872 = vmatmul.mubr.bf16.gmra.mrb[0].mxu0 %v1837
    %v1873 = vpop.f32.mrb[0].mxu0
    %v1874 = vadd.f32 %v1830, %v1873
    %v1875 = vpop.f32.mrb[0].mxu0
    %v1876 = vadd.f32 %v1832, %v1875
    %v1877 = vpop.f32.mrb[0].mxu0
    %v1878 = vpop.f32.mrb[0].mxu0
    %1879 = vdwg.mxu0
    %1880 = vrot.lane.b32.xlu0 %v392, 96
    %v1881 = vpop.permute.xlu0 %1880
    %v1884 = vsel %vm1017, %v1104, 0
    %1886 = vmatprep.subr.mxu0 0.0
    %1887 = vmatpush1.msra.mxu0 %v1881
    %1888 = vmatprep.subr.mxu0 0.0
    %1889 = vmatpush1.msra.mxu0 0.0
    %1890 = vmatprep.subr.mxu0 0.0
    %1891 = vmatpush1.msra.mxu0 0.0
    %1892 = vmatprep.subr.mxu0 0.0
    %1893 = vmatpush1.msra.mxu0 0.0
    %1894 = vmatprep.subr.mxu0 0.0
    %1895 = vmatpush1.msra.mxu0 0.0
    %1896 = vmatprep.subr.mxu0 0.0
    %1897 = vmatpush1.msra.mxu0 0.0
    %1898 = vmatprep.subr.mxu0 0.0
    %1899 = vmatpush1.msra.mxu0 0.0
    %1900 = vmatprep.subr.mxu0 0.0
    %1901 = vmatpush1.msra.mxu0 0.0
    %1902 = vmatprep.subr.mxu0 0.0
    %1903 = vmatpush1.msra.mxu0 0.0
    %1904 = vmatprep.subr.mxu0 0.0
    %1905 = vmatpush1.msra.mxu0 0.0
    %1906 = vmatprep.subr.mxu0 0.0
    %1907 = vmatpush1.msra.mxu0 0.0
    %1908 = vmatprep.subr.mxu0 0.0
    %1909 = vmatpush1.msra.mxu0 0.0
    %1910 = vmatprep.subr.mxu0 0.0
    %1911 = vmatpush1.msra.mxu0 0.0
    %1912 = vmatprep.subr.mxu0 0.0
    %1913 = vmatpush1.msra.mxu0 0.0
    %1914 = vmatprep.subr.mxu0 0.0
    %1915 = vmatpush1.msra.mxu0 0.0
    %1916 = vmatprep.subr.mxu0 0.0
    %1917 = vmatpush1.msra.mxu0 0.0
    %1918 = vmatprep.subr.mxu0 0.0
    %1919 = vmatpush1.msra.mxu0 0.0
    %1920 = vmatprep.subr.mxu0 0.0
    %1921 = vmatpush1.msra.mxu0 0.0
    %1922 = vmatprep.subr.mxu0 0.0
    %1923 = vmatpush1.msra.mxu0 0.0
    %1924 = vmatprep.subr.mxu0 0.0
    %1925 = vmatpush1.msra.mxu0 0.0
    %1926 = vmatprep.subr.mxu0 0.0
    %1927 = vmatpush1.msra.mxu0 0.0
    %1928 = vmatprep.subr.mxu0 0.0
    %1929 = vmatpush1.msra.mxu0 0.0
    %1930 = vmatprep.subr.mxu0 0.0
    %1931 = vmatpush1.msra.mxu0 0.0
    %1932 = vmatprep.subr.mxu0 0.0
    %1933 = vmatpush1.msra.mxu0 0.0
    %1934 = vmatprep.subr.mxu0 0.0
    %1935 = vmatpush1.msra.mxu0 0.0
    %1936 = vmatprep.subr.mxu0 0.0
    %1937 = vmatpush1.msra.mxu0 0.0
    %1938 = vmatprep.subr.mxu0 0.0
    %1939 = vmatpush1.msra.mxu0 0.0
    %1940 = vmatprep.subr.mxu0 0.0
    %1941 = vmatpush1.msra.mxu0 0.0
    %1942 = vmatprep.subr.mxu0 0.0
    %1943 = vmatpush1.msra.mxu0 0.0
    %1944 = vmatprep.subr.mxu0 0.0
    %1945 = vmatpush1.msra.mxu0 0.0
    %1946 = vmatprep.subr.mxu0 0.0
    %1947 = vmatpush1.msra.mxu0 0.0
    %1948 = vmatprep.subr.mxu0 0.0
    %1949 = vmatpush1.msra.mxu0 0.0
    %1950 = vmatprep.mubr.f32.mxu0 0.0
    %1951 = vmatmul.mubr.f32.gmra.mrb[0].mxu0 %v1884
    %v1952 = vpop.f32.mrb[0].mxu0
    %v1953 = vadd.f32 0.0, %v1952
    %v1954 = vpop.f32.mrb[0].mxu0
    %1955 = vdwg.mxu0
    %v1956 = vpack.c.bf16 %v1953, %v1953
    %v1958 = vsel %vm397, %v1956, 0
    %1960 = vmatprep.subr.bf16.mxu0 %v1456
    %1961 = vmatpush1.bf16.msra.mxu0 %v1455
    %1962 = vmatprep.subr.bf16.mxu0 0
    %1963 = vmatpush1.bf16.msra.mxu0 0
    %1964 = vmatprep.subr.bf16.mxu0 0
    %1965 = vmatpush1.bf16.msra.mxu0 0
    %1966 = vmatprep.subr.bf16.mxu0 0
    %1967 = vmatpush1.bf16.msra.mxu0 0
    %1968 = vmatprep.subr.bf16.mxu0 0
    %1969 = vmatpush1.bf16.msra.mxu0 0
    %1970 = vmatprep.subr.bf16.mxu0 0
    %1971 = vmatpush1.bf16.msra.mxu0 0
    %1972 = vmatprep.subr.bf16.mxu0 0
    %1973 = vmatpush1.bf16.msra.mxu0 0
    %1974 = vmatprep.subr.bf16.mxu0 0
    %1975 = vmatpush1.bf16.msra.mxu0 0
    %1976 = vmatprep.subr.bf16.mxu0 0
    %1977 = vmatpush1.bf16.msra.mxu0 0
    %1978 = vmatprep.subr.bf16.mxu0 0
    %1979 = vmatpush1.bf16.msra.mxu0 0
    %1980 = vmatprep.subr.bf16.mxu0 0
    %1981 = vmatpush1.bf16.msra.mxu0 0
    %1982 = vmatprep.subr.bf16.mxu0 0
    %1983 = vmatpush1.bf16.msra.mxu0 0
    %1984 = vmatprep.subr.bf16.mxu0 0
    %1985 = vmatpush1.bf16.msra.mxu0 0
    %1986 = vmatprep.subr.bf16.mxu0 0
    %1987 = vmatpush1.bf16.msra.mxu0 0
    %1988 = vmatprep.subr.bf16.mxu0 0
    %1989 = vmatpush1.bf16.msra.mxu0 0
    %1990 = vmatprep.subr.bf16.mxu0 0
    %1991 = vmatpush1.bf16.msra.mxu0 0
    %1992 = vmatprep.mubr.bf16.mxu0 0
    %1993 = vmatmul.mubr.bf16.gmra.mrb[0].mxu0 %v1958
    %v1994 = vpop.f32.mrb[0].mxu0
    %v1995 = vadd.f32 0.0, %v1994
    %v1996 = vpop.f32.mrb[0].mxu0
    %v1997 = vadd.f32 0.0, %v1996
    %v1998 = vpop.f32.mrb[0].mxu0
    %v1999 = vpop.f32.mrb[0].mxu0
    %2000 = vdwg.mxu0
    %v2001 = vadd.f32 %v1874, %v1995
    %v2002 = vadd.f32 %v1876, %v1997
    %2003 = vrot.lane.b32.xlu0 %v392, 80
    %v2004 = vpop.permute.xlu0 %2003
    %v2007 = vsel %vm1017, %v1105, 0
    %2009 = vmatprep.subr.mxu0 0.0
    %2010 = vmatpush1.msra.mxu0 %v2004
    %2011 = vmatprep.subr.mxu0 0.0
    %2012 = vmatpush1.msra.mxu0 0.0
    %2013 = vmatprep.subr.mxu0 0.0
    %2014 = vmatpush1.msra.mxu0 0.0
    %2015 = vmatprep.subr.mxu0 0.0
    %2016 = vmatpush1.msra.mxu0 0.0
    %2017 = vmatprep.subr.mxu0 0.0
    %2018 = vmatpush1.msra.mxu0 0.0
    %2019 = vmatprep.subr.mxu0 0.0
    %2020 = vmatpush1.msra.mxu0 0.0
    %2021 = vmatprep.subr.mxu0 0.0
    %2022 = vmatpush1.msra.mxu0 0.0
    %2023 = vmatprep.subr.mxu0 0.0
    %2024 = vmatpush1.msra.mxu0 0.0
    %2025 = vmatprep.subr.mxu0 0.0
    %2026 = vmatpush1.msra.mxu0 0.0
    %2027 = vmatprep.subr.mxu0 0.0
    %2028 = vmatpush1.msra.mxu0 0.0
    %2029 = vmatprep.subr.mxu0 0.0
    %2030 = vmatpush1.msra.mxu0 0.0
    %2031 = vmatprep.subr.mxu0 0.0
    %2032 = vmatpush1.msra.mxu0 0.0
    %2033 = vmatprep.subr.mxu0 0.0
    %2034 = vmatpush1.msra.mxu0 0.0
    %2035 = vmatprep.subr.mxu0 0.0
    %2036 = vmatpush1.msra.mxu0 0.0
    %2037 = vmatprep.subr.mxu0 0.0
    %2038 = vmatpush1.msra.mxu0 0.0
    %2039 = vmatprep.subr.mxu0 0.0
    %2040 = vmatpush1.msra.mxu0 0.0
    %2041 = vmatprep.subr.mxu0 0.0
    %2042 = vmatpush1.msra.mxu0 0.0
    %2043 = vmatprep.subr.mxu0 0.0
    %2044 = vmatpush1.msra.mxu0 0.0
    %2045 = vmatprep.subr.mxu0 0.0
    %2046 = vmatpush1.msra.mxu0 0.0
    %2047 = vmatprep.subr.mxu0 0.0
    %2048 = vmatpush1.msra.mxu0 0.0
    %2049 = vmatprep.subr.mxu0 0.0
    %2050 = vmatpush1.msra.mxu0 0.0
    %2051 = vmatprep.subr.mxu0 0.0
    %2052 = vmatpush1.msra.mxu0 0.0
    %2053 = vmatprep.subr.mxu0 0.0
    %2054 = vmatpush1.msra.mxu0 0.0
    %2055 = vmatprep.subr.mxu0 0.0
    %2056 = vmatpush1.msra.mxu0 0.0
    %2057 = vmatprep.subr.mxu0 0.0
    %2058 = vmatpush1.msra.mxu0 0.0
    %2059 = vmatprep.subr.mxu0 0.0
    %2060 = vmatpush1.msra.mxu0 0.0
    %2061 = vmatprep.subr.mxu0 0.0
    %2062 = vmatpush1.msra.mxu0 0.0
    %2063 = vmatprep.subr.mxu0 0.0
    %2064 = vmatpush1.msra.mxu0 0.0
    %2065 = vmatprep.subr.mxu0 0.0
    %2066 = vmatpush1.msra.mxu0 0.0
    %2067 = vmatprep.subr.mxu0 0.0
    %2068 = vmatpush1.msra.mxu0 0.0
    %2069 = vmatprep.subr.mxu0 0.0
    %2070 = vmatpush1.msra.mxu0 0.0
    %2071 = vmatprep.subr.mxu0 0.0
    %2072 = vmatpush1.msra.mxu0 0.0
    %2073 = vmatprep.mubr.f32.mxu0 0.0
    %2074 = vmatmul.mubr.f32.gmra.mrb[0].mxu0 %v2007
    %v2075 = vpop.f32.mrb[0].mxu0
    %v2076 = vadd.f32 0.0, %v2075
    %v2077 = vpop.f32.mrb[0].mxu0
    %2078 = vdwg.mxu0
    %v2079 = vpack.c.bf16 %v2076, %v2076
    %v2081 = vsel %vm397, %v2079, 0
    %2083 = vmatprep.subr.bf16.mxu0 %v1591
    %2084 = vmatpush1.bf16.msra.mxu0 %v1590
    %2085 = vmatprep.subr.bf16.mxu0 0
    %2086 = vmatpush1.bf16.msra.mxu0 0
    %2087 = vmatprep.subr.bf16.mxu0 0
    %2088 = vmatpush1.bf16.msra.mxu0 0
    %2089 = vmatprep.subr.bf16.mxu0 0
    %2090 = vmatpush1.bf16.msra.mxu0 0
    %2091 = vmatprep.subr.bf16.mxu0 0
    %2092 = vmatpush1.bf16.msra.mxu0 0
    %2093 = vmatprep.subr.bf16.mxu0 0
    %2094 = vmatpush1.bf16.msra.mxu0 0
    %2095 = vmatprep.subr.bf16.mxu0 0
    %2096 = vmatpush1.bf16.msra.mxu0 0
    %2097 = vmatprep.subr.bf16.mxu0 0
    %2098 = vmatpush1.bf16.msra.mxu0 0
    %2099 = vmatprep.subr.bf16.mxu0 0
    %2100 = vmatpush1.bf16.msra.mxu0 0
    %2101 = vmatprep.subr.bf16.mxu0 0
    %2102 = vmatpush1.bf16.msra.mxu0 0
    %2103 = vmatprep.subr.bf16.mxu0 0
    %2104 = vmatpush1.bf16.msra.mxu0 0
    %2105 = vmatprep.subr.bf16.mxu0 0
    %2106 = vmatpush1.bf16.msra.mxu0 0
    %2107 = vmatprep.subr.bf16.mxu0 0
    %2108 = vmatpush1.bf16.msra.mxu0 0
    %2109 = vmatprep.subr.bf16.mxu0 0
    %2110 = vmatpush1.bf16.msra.mxu0 0
    %2111 = vmatprep.subr.bf16.mxu0 0
    %2112 = vmatpush1.bf16.msra.mxu0 0
    %2113 = vmatprep.subr.bf16.mxu0 0
    %2114 = vmatpush1.bf16.msra.mxu0 0
    %2115 = vmatprep.mubr.bf16.mxu0 0
    %2116 = vmatmul.mubr.bf16.gmra.mrb[0].mxu0 %v2081
    %v2117 = vpop.f32.mrb[0].mxu0
    %v2118 = vadd.f32 0.0, %v2117
    %v2119 = vpop.f32.mrb[0].mxu0
    %v2120 = vadd.f32 0.0, %v2119
    %v2121 = vpop.f32.mrb[0].mxu0
    %v2122 = vpop.f32.mrb[0].mxu0
    %2123 = vdwg.mxu0
    %v2124 = vadd.f32 %v2001, %v2118
    %v2125 = vadd.f32 %v2002, %v2120
    %v2126 = vadd.f32 %v1638, %v153
    %v2127 = vadd.f32 %v1639, %v154
    %v2128 = vadd.f32 %v2124, %v155
    %v2129 = vadd.f32 %v2125, %v156
    %v2130 = vld [vmem:[%s6] sm:$0x3]
    %v2131 = vld [vmem:[%s7] sm:$0x3]
    %v2132 = vadd.f32 %v2126, %v2127
    %2133 = vadd.xlane.f32.xlu0 %v2132
    %v2134 = vpop.xlane.xlu0 %2133
    %v2135 = vadd.f32 %v2128, %v2129
    %2136 = vadd.xlane.f32.xlu0 %v2135
    %v2137 = vpop.xlane.xlu0 %2136
    %v2138 = vmul.f32 %v2126, %v2126
    %v2139 = vmul.f32 %v2127, %v2127
    %v2140 = vmul.f32 %v2128, %v2128
    %v2141 = vmul.f32 %v2129, %v2129
    %v2142 = vadd.f32 %v2138, %v2139
    %2143 = vadd.xlane.f32.xlu0 %v2142
    %v2144 = vpop.xlane.xlu0 %2143
    %v2145 = vadd.f32 %v2140, %v2141
    %2146 = vadd.xlane.f32.xlu0 %v2145
    %v2147 = vpop.xlane.xlu0 %2146
    %v2148 = vmul.f32 %v2134, 0.004347826
    %v2149 = vmul.f32 %v2137, 0.004347826
    %v2150 = vmul.f32 %v2144, 0.004347826
    %v2151 = vmul.f32 %v2147, 0.004347826
    %v2152 = vmul.f32 %v2148, %v2148
    %v2153 = vmul.f32 %v2149, %v2149
    %v2154 = vsub.f32 %v2150, %v2152
    %v2155 = vsub.f32 %v2151, %v2153
    %v2156 = vsub.f32 %v2126, %v2148
    %v2157 = vsub.f32 %v2127, %v2148
    %v2158 = vsub.f32 %v2128, %v2149
    %v2159 = vsub.f32 %v2129, %v2149
    %v2160 = vadd.f32 %v2154, 1e-06
    %v2161 = vadd.f32 %v2155, 1e-06
    %v2162 = vrsqrt.pop %v2160
    %v2163 = vrsqrt.pop %v2161
    %v2164 = vmul.f32 %v2156, %v2162
    %v2165 = vmul.f32 %v2157, %v2162
    %v2166 = vmul.f32 %v2158, %v2163
    %v2167 = vmul.f32 %v2159, %v2163
    %v2169 = vlaneseq
    %v2170 = vshrl.u32 %v2169, 7
    %v2171 = vsub.s32 0, %v2170
    %v2172 = vrot.slane %v2130, %v2171
    %v2173 = vlaneseq
    %v2174 = vshrl.u32 %v2173, 7
    %v2175 = vsub.s32 1, %v2174
    %v2176 = vrot.slane %v2130, %v2175
    %v2179 = vmul.f32 %v2164, %v2172
    %v2180 = vmul.f32 %v2165, %v2176
    %v2181 = vmul.f32 %v2166, %v2172
    %v2182 = vmul.f32 %v2167, %v2176
    %v2184 = vlaneseq
    %v2185 = vshrl.u32 %v2184, 7
    %v2186 = vsub.s32 0, %v2185
    %v2187 = vrot.slane %v2131, %v2186
    %v2188 = vlaneseq
    %v2189 = vshrl.u32 %v2188, 7
    %v2190 = vsub.s32 1, %v2189
    %v2191 = vrot.slane %v2131, %v2190
    %v2194 = vadd.f32 %v2179, %v2187
    %v2195 = vadd.f32 %v2180, %v2191
    %v2196 = vadd.f32 %v2181, %v2187
    %v2197 = vadd.f32 %v2182, %v2191
    %v2198 = vpack.c.bf16 %v2196, %v2194
    %v2199 = vpack.c.bf16 %v2197, %v2195
    %v2200 = vld [vmem:[#allocation2] sm:$0xff]
    %v2201 = vld [vmem:[#allocation2 + $0x8] sm:$0xff]
    %v2202 = vld [vmem:[#allocation2 + $0x10] sm:$0xff]
    %v2203 = vld [vmem:[#allocation2 + $0x18] sm:$0xff]
    %v2204 = vld [vmem:[#allocation2 + $0x20] sm:$0xff]
    %v2205 = vld [vmem:[#allocation2 + $0x28] sm:$0xff]
    %v2206 = vld [vmem:[#allocation2 + $0x30] sm:$0xff]
    %v2207 = vld [vmem:[#allocation2 + $0x38] sm:$0xff]
    %v2208 = vld [vmem:[#allocation2 + $0x40] sm:$0xff]
    %v2209 = vld [vmem:[#allocation2 + $0x48] sm:$0xff]
    %v2210 = vld [vmem:[#allocation2 + $0x50] sm:$0xff]
    %v2211 = vld [vmem:[#allocation2 + $0x58] sm:$0xff]
    %v2212 = vld [vmem:[#allocation2 + $0x60] sm:$0xff]
    %v2213 = vld [vmem:[#allocation2 + $0x68] sm:$0xff]
    %v2214 = vld [vmem:[#allocation2 + $0x70] sm:$0xff]
    %v2215 = vld [vmem:[#allocation2 + $0x78] sm:$0xff]
    %v2216 = vld [vmem:[#allocation2 + $0x80] sm:$0xff]
    %v2217 = vld [vmem:[#allocation2 + $0x88] sm:$0xff]
    %v2218 = vld [vmem:[#allocation2 + $0x90] sm:$0xff]
    %v2219 = vld [vmem:[#allocation2 + $0x98] sm:$0xff]
    %v2220 = vld [vmem:[#allocation2 + $0xa0] sm:$0xff]
    %v2221 = vld [vmem:[#allocation2 + $0xa8] sm:$0xff]
    %v2222 = vld [vmem:[#allocation2 + $0xb0] sm:$0xff]
    %v2223 = vld [vmem:[#allocation2 + $0xb8] sm:$0xff]
    %v2224 = vld [vmem:[#allocation2 + $0xc0] sm:$0xff]
    %v2225 = vld [vmem:[#allocation2 + $0xc8] sm:$0xff]
    %v2226 = vld [vmem:[#allocation2 + $0xd0] sm:$0xff]
    %v2227 = vld [vmem:[#allocation2 + $0xd8] sm:$0xff]
    %v2228 = vld [vmem:[#allocation2 + $0xe0] sm:$0xff]
    %v2229 = vld [vmem:[#allocation2 + $0xe8] sm:$0xff]
    %v2230 = vld [vmem:[#allocation2 + $0xf0] sm:$0xff]
    %v2231 = vld [vmem:[#allocation2 + $0xf8] sm:$0xff]
    %v2232 = vld [vmem:[#allocation2 + $0x100] sm:$0xff]
    %v2233 = vld [vmem:[#allocation2 + $0x108] sm:$0xff]
    %v2234 = vld [vmem:[#allocation2 + $0x110] sm:$0xff]
    %v2235 = vld [vmem:[#allocation2 + $0x118] sm:$0xff]
    %v2236 = vld [vmem:[#allocation2 + $0x120] sm:$0xff]
    %v2237 = vld [vmem:[#allocation2 + $0x128] sm:$0xff]
    %v2238 = vld [vmem:[#allocation2 + $0x130] sm:$0xff]
    %v2239 = vld [vmem:[#allocation2 + $0x138] sm:$0xff]
    %v2240 = vld [vmem:[#allocation2 + $0x140] sm:$0xff]
    %v2241 = vld [vmem:[#allocation2 + $0x148] sm:$0xff]
    %v2242 = vld [vmem:[#allocation2 + $0x150] sm:$0xff]
    %v2243 = vld [vmem:[#allocation2 + $0x158] sm:$0xff]
    %v2244 = vld [vmem:[#allocation2 + $0x160] sm:$0xff]
    %v2245 = vld [vmem:[#allocation2 + $0x168] sm:$0xff]
    %v2246 = vld [vmem:[#allocation2 + $0x170] sm:$0xff]
    %v2247 = vld [vmem:[#allocation2 + $0x178] sm:$0xff]
    %v2248 = vld [vmem:[#allocation2 + $0x180] sm:$0xff]
    %v2249 = vld [vmem:[#allocation2 + $0x188] sm:$0xff]
    %v2250 = vld [vmem:[#allocation2 + $0x190] sm:$0xff]
    %v2251 = vld [vmem:[#allocation2 + $0x198] sm:$0xff]
    %v2252 = vld [vmem:[#allocation2 + $0x1a0] sm:$0xff]
    %v2253 = vld [vmem:[#allocation2 + $0x1a8] sm:$0xff]
    %v2254 = vld [vmem:[#allocation2 + $0x1b0] sm:$0xff]
    %v2255 = vld [vmem:[#allocation2 + $0x1b8] sm:$0xff]
    %v2256 = vld [vmem:[#allocation2 + $0x1c0] sm:$0xff]
    %v2257 = vld [vmem:[#allocation2 + $0x1c8] sm:$0xff]
    %v2258 = vld [vmem:[#allocation2 + $0x1d0] sm:$0xff]
    %v2259 = vld [vmem:[#allocation2 + $0x1d8] sm:$0xff]
    %v2260 = vld [vmem:[#allocation2 + $0x1e0] sm:$0xff]
    %v2261 = vld [vmem:[#allocation2 + $0x1e8] sm:$0xff]
    %v2262 = vld [vmem:[#allocation2 + $0x1f0] sm:$0xff]
    %v2263 = vld [vmem:[#allocation2 + $0x1f8] sm:$0xff]
    %v2264 = vld [vmem:[%s9] sm:$0xf]
    %v2266 = vlaneseq
    %v2267 = vshrl.u32 %v2266, 7
    %v2268 = vsub.s32 0, %v2267
    %v2269 = vrot.slane %v2264, %v2268
    %v2270 = vlaneseq
    %v2271 = vshrl.u32 %v2270, 7
    %v2272 = vsub.s32 1, %v2271
    %v2273 = vrot.slane %v2264, %v2272
    %v2274 = vlaneseq
    %v2275 = vshrl.u32 %v2274, 7
    %v2276 = vsub.s32 2, %v2275
    %v2277 = vrot.slane %v2264, %v2276
    %v2278 = vlaneseq
    %v2279 = vshrl.u32 %v2278, 7
    %v2280 = vsub.s32 3, %v2279
    %v2281 = vrot.slane %v2264, %v2280
    %v2350 = vunpack.c.l.b16 %v2200
    %v2351 = vunpack.c.h.b16 %v2200
    %v2352 = vunpack.c.l.b16 %v2201
    %v2353 = vunpack.c.h.b16 %v2201
    %v2354 = vunpack.c.l.b16 %v2202
    %v2355 = vunpack.c.h.b16 %v2202
    %v2356 = vunpack.c.l.b16 %v2203
    %v2357 = vunpack.c.h.b16 %v2203
    %v2358 = vunpack.c.l.b16 %v2204
    %v2359 = vunpack.c.h.b16 %v2204
    %v2360 = vunpack.c.l.b16 %v2205
    %v2361 = vunpack.c.h.b16 %v2205
    %v2362 = vunpack.c.l.b16 %v2206
    %v2363 = vunpack.c.h.b16 %v2206
    %v2364 = vunpack.c.l.b16 %v2207
    %v2365 = vunpack.c.h.b16 %v2207
    %v2366 = vunpack.c.l.b16 %v2208
    %v2367 = vunpack.c.h.b16 %v2208
    %v2368 = vunpack.c.l.b16 %v2209
    %v2369 = vunpack.c.h.b16 %v2209
    %v2370 = vunpack.c.l.b16 %v2210
    %v2371 = vunpack.c.h.b16 %v2210
    %v2372 = vunpack.c.l.b16 %v2211
    %v2373 = vunpack.c.h.b16 %v2211
    %v2374 = vunpack.c.l.b16 %v2212
    %v2375 = vunpack.c.h.b16 %v2212
    %v2376 = vunpack.c.l.b16 %v2213
    %v2377 = vunpack.c.h.b16 %v2213
    %v2378 = vunpack.c.l.b16 %v2214
    %v2379 = vunpack.c.h.b16 %v2214
    %v2380 = vunpack.c.l.b16 %v2215
    %v2381 = vunpack.c.h.b16 %v2215
    %v2382 = vunpack.c.l.b16 %v2216
    %v2383 = vunpack.c.h.b16 %v2216
    %v2384 = vunpack.c.l.b16 %v2217
    %v2385 = vunpack.c.h.b16 %v2217
    %v2386 = vunpack.c.l.b16 %v2218
    %v2387 = vunpack.c.h.b16 %v2218
    %v2388 = vunpack.c.l.b16 %v2219
    %v2389 = vunpack.c.h.b16 %v2219
    %v2390 = vunpack.c.l.b16 %v2220
    %v2391 = vunpack.c.h.b16 %v2220
    %v2392 = vunpack.c.l.b16 %v2221
    %v2393 = vunpack.c.h.b16 %v2221
    %v2394 = vunpack.c.l.b16 %v2222
    %v2395 = vunpack.c.h.b16 %v2222
    %v2396 = vunpack.c.l.b16 %v2223
    %v2397 = vunpack.c.h.b16 %v2223
    %v2398 = vunpack.c.l.b16 %v2224
    %v2399 = vunpack.c.h.b16 %v2224
    %v2400 = vunpack.c.l.b16 %v2225
    %v2401 = vunpack.c.h.b16 %v2225
    %v2402 = vunpack.c.l.b16 %v2226
    %v2403 = vunpack.c.h.b16 %v2226
    %v2404 = vunpack.c.l.b16 %v2227
    %v2405 = vunpack.c.h.b16 %v2227
    %v2406 = vunpack.c.l.b16 %v2228
    %v2407 = vunpack.c.h.b16 %v2228
    %v2408 = vunpack.c.l.b16 %v2229
    %v2409 = vunpack.c.h.b16 %v2229
    %v2410 = vunpack.c.l.b16 %v2230
    %v2411 = vunpack.c.h.b16 %v2230
    %v2412 = vunpack.c.l.b16 %v2231
    %v2413 = vunpack.c.h.b16 %v2231
    %v2414 = vunpack.c.l.b16 %v2232
    %v2415 = vunpack.c.h.b16 %v2232
    %v2416 = vunpack.c.l.b16 %v2233
    %v2417 = vunpack.c.h.b16 %v2233
    %v2418 = vunpack.c.l.b16 %v2234
    %v2419 = vunpack.c.h.b16 %v2234
    %v2420 = vunpack.c.l.b16 %v2235
    %v2421 = vunpack.c.h.b16 %v2235
    %v2422 = vunpack.c.l.b16 %v2236
    %v2423 = vunpack.c.h.b16 %v2236
    %v2424 = vunpack.c.l.b16 %v2237
    %v2425 = vunpack.c.h.b16 %v2237
    %v2426 = vunpack.c.l.b16 %v2238
    %v2427 = vunpack.c.h.b16 %v2238
    %v2428 = vunpack.c.l.b16 %v2239
    %v2429 = vunpack.c.h.b16 %v2239
    %v2430 = vunpack.c.l.b16 %v2240
    %v2431 = vunpack.c.h.b16 %v2240
    %v2432 = vunpack.c.l.b16 %v2241
    %v2433 = vunpack.c.h.b16 %v2241
    %v2434 = vunpack.c.l.b16 %v2242
    %v2435 = vunpack.c.h.b16 %v2242
    %v2436 = vunpack.c.l.b16 %v2243
    %v2437 = vunpack.c.h.b16 %v2243
    %v2438 = vunpack.c.l.b16 %v2244
    %v2439 = vunpack.c.h.b16 %v2244
    %v2440 = vunpack.c.l.b16 %v2245
    %v2441 = vunpack.c.h.b16 %v2245
    %v2442 = vunpack.c.l.b16 %v2246
    %v2443 = vunpack.c.h.b16 %v2246
    %v2444 = vunpack.c.l.b16 %v2247
    %v2445 = vunpack.c.h.b16 %v2247
    %v2446 = vunpack.c.l.b16 %v2248
    %v2447 = vunpack.c.h.b16 %v2248
    %v2448 = vunpack.c.l.b16 %v2249
    %v2449 = vunpack.c.h.b16 %v2249
    %v2450 = vunpack.c.l.b16 %v2250
    %v2451 = vunpack.c.h.b16 %v2250
    %v2452 = vunpack.c.l.b16 %v2251
    %v2453 = vunpack.c.h.b16 %v2251
    %v2454 = vunpack.c.l.b16 %v2252
    %v2455 = vunpack.c.h.b16 %v2252
    %v2456 = vunpack.c.l.b16 %v2253
    %v2457 = vunpack.c.h.b16 %v2253
    %v2458 = vunpack.c.l.b16 %v2254
    %v2459 = vunpack.c.h.b16 %v2254
    %v2460 = vunpack.c.l.b16 %v2255
    %v2461 = vunpack.c.h.b16 %v2255
    %v2462 = vunpack.c.l.b16 %v2256
    %v2463 = vunpack.c.h.b16 %v2256
    %v2464 = vunpack.c.l.b16 %v2257
    %v2465 = vunpack.c.h.b16 %v2257
    %v2466 = vunpack.c.l.b16 %v2258
    %v2467 = vunpack.c.h.b16 %v2258
    %v2468 = vunpack.c.l.b16 %v2259
    %v2469 = vunpack.c.h.b16 %v2259
    %v2470 = vunpack.c.l.b16 %v2260
    %v2471 = vunpack.c.h.b16 %v2260
    %v2472 = vunpack.c.l.b16 %v2261
    %v2473 = vunpack.c.h.b16 %v2261
    %v2474 = vunpack.c.l.b16 %v2262
    %v2475 = vunpack.c.h.b16 %v2262
    %v2476 = vunpack.c.l.b16 %v2263
    %v2477 = vunpack.c.h.b16 %v2263
    %v2478 = vpack.c.b16 %v2354, %v2350
    %v2479 = vpack.c.b16 %v2355, %v2351
    %v2480 = vpack.c.b16 %v2356, %v2352
    %v2481 = vpack.c.b16 %v2357, %v2353
    %v2482 = vpack.c.b16 %v2362, %v2358
    %v2483 = vpack.c.b16 %v2363, %v2359
    %v2484 = vpack.c.b16 %v2364, %v2360
    %v2485 = vpack.c.b16 %v2365, %v2361
    %v2486 = vpack.c.b16 %v2370, %v2366
    %v2487 = vpack.c.b16 %v2371, %v2367
    %v2488 = vpack.c.b16 %v2372, %v2368
    %v2489 = vpack.c.b16 %v2373, %v2369
    %v2490 = vpack.c.b16 %v2378, %v2374
    %v2491 = vpack.c.b16 %v2379, %v2375
    %v2492 = vpack.c.b16 %v2380, %v2376
    %v2493 = vpack.c.b16 %v2381, %v2377
    %v2494 = vpack.c.b16 %v2386, %v2382
    %v2495 = vpack.c.b16 %v2387, %v2383
    %v2496 = vpack.c.b16 %v2388, %v2384
    %v2497 = vpack.c.b16 %v2389, %v2385
    %v2498 = vpack.c.b16 %v2394, %v2390
    %v2499 = vpack.c.b16 %v2395, %v2391
    %v2500 = vpack.c.b16 %v2396, %v2392
    %v2501 = vpack.c.b16 %v2397, %v2393
    %v2502 = vpack.c.b16 %v2402, %v2398
    %v2503 = vpack.c.b16 %v2403, %v2399
    %v2504 = vpack.c.b16 %v2404, %v2400
    %v2505 = vpack.c.b16 %v2405, %v2401
    %v2506 = vpack.c.b16 %v2410, %v2406
    %v2507 = vpack.c.b16 %v2411, %v2407
    %v2508 = vpack.c.b16 %v2412, %v2408
    %v2509 = vpack.c.b16 %v2413, %v2409
    %v2510 = vpack.c.b16 %v2418, %v2414
    %v2511 = vpack.c.b16 %v2419, %v2415
    %v2512 = vpack.c.b16 %v2420, %v2416
    %v2513 = vpack.c.b16 %v2421, %v2417
    %v2514 = vpack.c.b16 %v2426, %v2422
    %v2515 = vpack.c.b16 %v2427, %v2423
    %v2516 = vpack.c.b16 %v2428, %v2424
    %v2517 = vpack.c.b16 %v2429, %v2425
    %v2518 = vpack.c.b16 %v2434, %v2430
    %v2519 = vpack.c.b16 %v2435, %v2431
    %v2520 = vpack.c.b16 %v2436, %v2432
    %v2521 = vpack.c.b16 %v2437, %v2433
    %v2522 = vpack.c.b16 %v2442, %v2438
    %v2523 = vpack.c.b16 %v2443, %v2439
    %v2524 = vpack.c.b16 %v2444, %v2440
    %v2525 = vpack.c.b16 %v2445, %v2441
    %v2526 = vpack.c.b16 %v2450, %v2446
    %v2527 = vpack.c.b16 %v2451, %v2447
    %v2528 = vpack.c.b16 %v2452, %v2448
    %v2529 = vpack.c.b16 %v2453, %v2449
    %v2530 = vpack.c.b16 %v2458, %v2454
    %v2531 = vpack.c.b16 %v2459, %v2455
    %v2532 = vpack.c.b16 %v2460, %v2456
    %v2533 = vpack.c.b16 %v2461, %v2457
    %v2534 = vpack.c.b16 %v2466, %v2462
    %v2535 = vpack.c.b16 %v2467, %v2463
    %v2536 = vpack.c.b16 %v2468, %v2464
    %v2537 = vpack.c.b16 %v2469, %v2465
    %v2538 = vpack.c.b16 %v2474, %v2470
    %v2539 = vpack.c.b16 %v2475, %v2471
    %v2540 = vpack.c.b16 %v2476, %v2472
    %v2541 = vpack.c.b16 %v2477, %v2473
    %2606 = vmatprep.subr.bf16.mxu0 %v2479
    %2607 = vmatpush1.bf16.msra.mxu0 %v2478
    %2608 = vmatprep.subr.bf16.mxu0 %v2483
    %2609 = vmatpush1.bf16.msra.mxu0 %v2482
    %2610 = vmatprep.subr.bf16.mxu0 %v2487
    %2611 = vmatpush1.bf16.msra.mxu0 %v2486
    %2612 = vmatprep.subr.bf16.mxu0 %v2491
    %2613 = vmatpush1.bf16.msra.mxu0 %v2490
    %2614 = vmatprep.subr.bf16.mxu0 %v2495
    %2615 = vmatpush1.bf16.msra.mxu0 %v2494
    %2616 = vmatprep.subr.bf16.mxu0 %v2499
    %2617 = vmatpush1.bf16.msra.mxu0 %v2498
    %2618 = vmatprep.subr.bf16.mxu0 %v2503
    %2619 = vmatpush1.bf16.msra.mxu0 %v2502
    %2620 = vmatprep.subr.bf16.mxu0 %v2507
    %2621 = vmatpush1.bf16.msra.mxu0 %v2506
    %2622 = vmatprep.subr.bf16.mxu0 %v2511
    %2623 = vmatpush1.bf16.msra.mxu0 %v2510
    %2624 = vmatprep.subr.bf16.mxu0 %v2515
    %2625 = vmatpush1.bf16.msra.mxu0 %v2514
    %2626 = vmatprep.subr.bf16.mxu0 %v2519
    %2627 = vmatpush1.bf16.msra.mxu0 %v2518
    %2628 = vmatprep.subr.bf16.mxu0 %v2523
    %2629 = vmatpush1.bf16.msra.mxu0 %v2522
    %2630 = vmatprep.subr.bf16.mxu0 %v2527
    %2631 = vmatpush1.bf16.msra.mxu0 %v2526
    %2632 = vmatprep.subr.bf16.mxu0 %v2531
    %2633 = vmatpush1.bf16.msra.mxu0 %v2530
    %2634 = vmatprep.subr.bf16.mxu0 %v2535
    %2635 = vmatpush1.bf16.msra.mxu0 %v2534
    %2636 = vmatprep.subr.bf16.mxu0 %v2539
    %2637 = vmatpush1.bf16.msra.mxu0 %v2538
    %2638 = vmatprep.mubr.bf16.mxu0 %v2199
    %2639 = vmatmul.mubr.bf16.gmra.mrb[0].mxu0 %v2198
    %v2640 = vpop.f32.mrb[0].mxu0
    %v2641 = vadd.f32 %v2269, %v2640
    %v2642 = vpop.f32.mrb[0].mxu0
    %v2643 = vadd.f32 %v2273, %v2642
    %v2644 = vpop.f32.mrb[0].mxu0
    %v2645 = vadd.f32 %v2269, %v2644
    %v2646 = vpop.f32.mrb[0].mxu0
    %v2647 = vadd.f32 %v2273, %v2646
    %2648 = vdwg.mxu0
    %2649 = vmatprep.subr.bf16.mxu0 %v2481
    %2650 = vmatpush1.bf16.msra.mxu0 %v2480
    %2651 = vmatprep.subr.bf16.mxu0 %v2485
    %2652 = vmatpush1.bf16.msra.mxu0 %v2484
    %2653 = vmatprep.subr.bf16.mxu0 %v2489
    %2654 = vmatpush1.bf16.msra.mxu0 %v2488
    %2655 = vmatprep.subr.bf16.mxu0 %v2493
    %2656 = vmatpush1.bf16.msra.mxu0 %v2492
    %2657 = vmatprep.subr.bf16.mxu0 %v2497
    %2658 = vmatpush1.bf16.msra.mxu0 %v2496
    %2659 = vmatprep.subr.bf16.mxu0 %v2501
    %2660 = vmatpush1.bf16.msra.mxu0 %v2500
    %2661 = vmatprep.subr.bf16.mxu0 %v2505
    %2662 = vmatpush1.bf16.msra.mxu0 %v2504
    %2663 = vmatprep.subr.bf16.mxu0 %v2509
    %2664 = vmatpush1.bf16.msra.mxu0 %v2508
    %2665 = vmatprep.subr.bf16.mxu0 %v2513
    %2666 = vmatpush1.bf16.msra.mxu0 %v2512
    %2667 = vmatprep.subr.bf16.mxu0 %v2517
    %2668 = vmatpush1.bf16.msra.mxu0 %v2516
    %2669 = vmatprep.subr.bf16.mxu0 %v2521
    %2670 = vmatpush1.bf16.msra.mxu0 %v2520
    %2671 = vmatprep.subr.bf16.mxu0 %v2525
    %2672 = vmatpush1.bf16.msra.mxu0 %v2524
    %2673 = vmatprep.subr.bf16.mxu0 %v2529
    %2674 = vmatpush1.bf16.msra.mxu0 %v2528
    %2675 = vmatprep.subr.bf16.mxu0 %v2533
    %2676 = vmatpush1.bf16.msra.mxu0 %v2532
    %2677 = vmatprep.subr.bf16.mxu0 %v2537
    %2678 = vmatpush1.bf16.msra.mxu0 %v2536
    %2679 = vmatprep.subr.bf16.mxu0 %v2541
    %2680 = vmatpush1.bf16.msra.mxu0 %v2540
    %2681 = vmatprep.mubr.bf16.mxu0 %v2199
    %2682 = vmatmul.mubr.bf16.gmra.mrb[0].mxu0 %v2198
    %v2683 = vpop.f32.mrb[0].mxu0
    %v2684 = vadd.f32 %v2277, %v2683
    %v2685 = vpop.f32.mrb[0].mxu0
    %v2686 = vadd.f32 %v2281, %v2685
    %v2687 = vpop.f32.mrb[0].mxu0
    %v2688 = vadd.f32 %v2277, %v2687
    %v2689 = vpop.f32.mrb[0].mxu0
    %v2690 = vadd.f32 %v2281, %v2689
    %2691 = vdwg.mxu0
    %v2692 = vmax.f32 %v2641, 0.0
    %v2693 = vmax.f32 %v2643, 0.0
    %v2694 = vmax.f32 %v2684, 0.0
    %v2695 = vmax.f32 %v2686, 0.0
    %v2696 = vmax.f32 %v2645, 0.0
    %v2697 = vmax.f32 %v2647, 0.0
    %v2698 = vmax.f32 %v2688, 0.0
    %v2699 = vmax.f32 %v2690, 0.0
    %v2700 = vpack.c.bf16 %v2696, %v2692
    %v2701 = vpack.c.bf16 %v2697, %v2693
    %v2702 = vpack.c.bf16 %v2698, %v2694
    %v2703 = vpack.c.bf16 %v2699, %v2695
    %v2704 = vld [vmem:[#allocation5] sm:$0xff]
    %v2705 = vld [vmem:[#allocation5 + $0x8] sm:$0xff]
    %v2706 = vld [vmem:[#allocation5 + $0x10] sm:$0xff]
    %v2707 = vld [vmem:[#allocation5 + $0x18] sm:$0xff]
    %v2708 = vld [vmem:[#allocation5 + $0x20] sm:$0xff]
    %v2709 = vld [vmem:[#allocation5 + $0x28] sm:$0xff]
    %v2710 = vld [vmem:[#allocation5 + $0x30] sm:$0xff]
    %v2711 = vld [vmem:[#allocation5 + $0x38] sm:$0xff]
    %v2712 = vld [vmem:[#allocation5 + $0x40] sm:$0xff]
    %v2713 = vld [vmem:[#allocation5 + $0x48] sm:$0xff]
    %v2714 = vld [vmem:[#allocation5 + $0x50] sm:$0xff]
    %v2715 = vld [vmem:[#allocation5 + $0x58] sm:$0xff]
    %v2716 = vld [vmem:[#allocation5 + $0x60] sm:$0xff]
    %v2717 = vld [vmem:[#allocation5 + $0x68] sm:$0xff]
    %v2718 = vld [vmem:[#allocation5 + $0x70] sm:$0xff]
    %v2719 = vld [vmem:[#allocation5 + $0x78] sm:$0xff]
    %v2720 = vld [vmem:[#allocation5 + $0x80] sm:$0xff]
    %v2721 = vld [vmem:[#allocation5 + $0x88] sm:$0xff]
    %v2722 = vld [vmem:[#allocation5 + $0x90] sm:$0xff]
    %v2723 = vld [vmem:[#allocation5 + $0x98] sm:$0xff]
    %v2724 = vld [vmem:[#allocation5 + $0xa0] sm:$0xff]
    %v2725 = vld [vmem:[#allocation5 + $0xa8] sm:$0xff]
    %v2726 = vld [vmem:[#allocation5 + $0xb0] sm:$0xff]
    %v2727 = vld [vmem:[#allocation5 + $0xb8] sm:$0xff]
    %v2728 = vld [vmem:[#allocation5 + $0xc0] sm:$0xff]
    %v2729 = vld [vmem:[#allocation5 + $0xc8] sm:$0xff]
    %v2730 = vld [vmem:[#allocation5 + $0xd0] sm:$0xff]
    %v2731 = vld [vmem:[#allocation5 + $0xd8] sm:$0xff]
    %v2732 = vld [vmem:[#allocation5 + $0xe0] sm:$0xff]
    %v2733 = vld [vmem:[#allocation5 + $0xe8] sm:$0xff]
    %v2734 = vld [vmem:[#allocation5 + $0xf0] sm:$0xff]
    %v2735 = vld [vmem:[#allocation5 + $0xf8] sm:$0xff]
    %v2736 = vld [vmem:[#allocation5 + $0x100] sm:$0xff]
    %v2737 = vld [vmem:[#allocation5 + $0x108] sm:$0xff]
    %v2738 = vld [vmem:[#allocation5 + $0x110] sm:$0xff]
    %v2739 = vld [vmem:[#allocation5 + $0x118] sm:$0xff]
    %v2740 = vld [vmem:[#allocation5 + $0x120] sm:$0xff]
    %v2741 = vld [vmem:[#allocation5 + $0x128] sm:$0xff]
    %v2742 = vld [vmem:[#allocation5 + $0x130] sm:$0xff]
    %v2743 = vld [vmem:[#allocation5 + $0x138] sm:$0xff]
    %v2744 = vld [vmem:[#allocation5 + $0x140] sm:$0xff]
    %v2745 = vld [vmem:[#allocation5 + $0x148] sm:$0xff]
    %v2746 = vld [vmem:[#allocation5 + $0x150] sm:$0xff]
    %v2747 = vld [vmem:[#allocation5 + $0x158] sm:$0xff]
    %v2748 = vld [vmem:[#allocation5 + $0x160] sm:$0xff]
    %v2749 = vld [vmem:[#allocation5 + $0x168] sm:$0xff]
    %v2750 = vld [vmem:[#allocation5 + $0x170] sm:$0xff]
    %v2751 = vld [vmem:[#allocation5 + $0x178] sm:$0xff]
    %v2752 = vld [vmem:[#allocation5 + $0x180] sm:$0xff]
    %v2753 = vld [vmem:[#allocation5 + $0x188] sm:$0xff]
    %v2754 = vld [vmem:[#allocation5 + $0x190] sm:$0xff]
    %v2755 = vld [vmem:[#allocation5 + $0x198] sm:$0xff]
    %v2756 = vld [vmem:[#allocation5 + $0x1a0] sm:$0xff]
    %v2757 = vld [vmem:[#allocation5 + $0x1a8] sm:$0xff]
    %v2758 = vld [vmem:[#allocation5 + $0x1b0] sm:$0xff]
    %v2759 = vld [vmem:[#allocation5 + $0x1b8] sm:$0xff]
    %v2760 = vld [vmem:[#allocation5 + $0x1c0] sm:$0xff]
    %v2761 = vld [vmem:[#allocation5 + $0x1c8] sm:$0xff]
    %v2762 = vld [vmem:[#allocation5 + $0x1d0] sm:$0xff]
    %v2763 = vld [vmem:[#allocation5 + $0x1d8] sm:$0xff]
    %v2764 = vld [vmem:[#allocation5 + $0x1e0] sm:$0xff]
    %v2765 = vld [vmem:[#allocation5 + $0x1e8] sm:$0xff]
    %v2766 = vld [vmem:[#allocation5 + $0x1f0] sm:$0xff]
    %v2767 = vld [vmem:[#allocation5 + $0x1f8] sm:$0xff]
    %v2768 = vld [vmem:[%s11] sm:$0x3]
    %v2770 = vlaneseq
    %v2771 = vshrl.u32 %v2770, 7
    %v2772 = vsub.s32 0, %v2771
    %v2773 = vrot.slane %v2768, %v2772
    %v2774 = vlaneseq
    %v2775 = vshrl.u32 %v2774, 7
    %v2776 = vsub.s32 1, %v2775
    %v2777 = vrot.slane %v2768, %v2776
    %v2844 = vunpack.c.l.b16 %v2704
    %v2845 = vunpack.c.h.b16 %v2704
    %v2846 = vunpack.c.l.b16 %v2705
    %v2847 = vunpack.c.h.b16 %v2705
    %v2848 = vunpack.c.l.b16 %v2706
    %v2849 = vunpack.c.h.b16 %v2706
    %v2850 = vunpack.c.l.b16 %v2707
    %v2851 = vunpack.c.h.b16 %v2707
    %v2852 = vunpack.c.l.b16 %v2708
    %v2853 = vunpack.c.h.b16 %v2708
    %v2854 = vunpack.c.l.b16 %v2709
    %v2855 = vunpack.c.h.b16 %v2709
    %v2856 = vunpack.c.l.b16 %v2710
    %v2857 = vunpack.c.h.b16 %v2710
    %v2858 = vunpack.c.l.b16 %v2711
    %v2859 = vunpack.c.h.b16 %v2711
    %v2860 = vunpack.c.l.b16 %v2712
    %v2861 = vunpack.c.h.b16 %v2712
    %v2862 = vunpack.c.l.b16 %v2713
    %v2863 = vunpack.c.h.b16 %v2713
    %v2864 = vunpack.c.l.b16 %v2714
    %v2865 = vunpack.c.h.b16 %v2714
    %v2866 = vunpack.c.l.b16 %v2715
    %v2867 = vunpack.c.h.b16 %v2715
    %v2868 = vunpack.c.l.b16 %v2716
    %v2869 = vunpack.c.h.b16 %v2716
    %v2870 = vunpack.c.l.b16 %v2717
    %v2871 = vunpack.c.h.b16 %v2717
    %v2872 = vunpack.c.l.b16 %v2718
    %v2873 = vunpack.c.h.b16 %v2718
    %v2874 = vunpack.c.l.b16 %v2719
    %v2875 = vunpack.c.h.b16 %v2719
    %v2876 = vunpack.c.l.b16 %v2720
    %v2877 = vunpack.c.h.b16 %v2720
    %v2878 = vunpack.c.l.b16 %v2721
    %v2879 = vunpack.c.h.b16 %v2721
    %v2880 = vunpack.c.l.b16 %v2722
    %v2881 = vunpack.c.h.b16 %v2722
    %v2882 = vunpack.c.l.b16 %v2723
    %v2883 = vunpack.c.h.b16 %v2723
    %v2884 = vunpack.c.l.b16 %v2724
    %v2885 = vunpack.c.h.b16 %v2724
    %v2886 = vunpack.c.l.b16 %v2725
    %v2887 = vunpack.c.h.b16 %v2725
    %v2888 = vunpack.c.l.b16 %v2726
    %v2889 = vunpack.c.h.b16 %v2726
    %v2890 = vunpack.c.l.b16 %v2727
    %v2891 = vunpack.c.h.b16 %v2727
    %v2892 = vunpack.c.l.b16 %v2728
    %v2893 = vunpack.c.h.b16 %v2728
    %v2894 = vunpack.c.l.b16 %v2729
    %v2895 = vunpack.c.h.b16 %v2729
    %v2896 = vunpack.c.l.b16 %v2730
    %v2897 = vunpack.c.h.b16 %v2730
    %v2898 = vunpack.c.l.b16 %v2731
    %v2899 = vunpack.c.h.b16 %v2731
    %v2900 = vunpack.c.l.b16 %v2732
    %v2901 = vunpack.c.h.b16 %v2732
    %v2902 = vunpack.c.l.b16 %v2733
    %v2903 = vunpack.c.h.b16 %v2733
    %v2904 = vunpack.c.l.b16 %v2734
    %v2905 = vunpack.c.h.b16 %v2734
    %v2906 = vunpack.c.l.b16 %v2735
    %v2907 = vunpack.c.h.b16 %v2735
    %v2908 = vunpack.c.l.b16 %v2736
    %v2909 = vunpack.c.h.b16 %v2736
    %v2910 = vunpack.c.l.b16 %v2737
    %v2911 = vunpack.c.h.b16 %v2737
    %v2912 = vunpack.c.l.b16 %v2738
    %v2913 = vunpack.c.h.b16 %v2738
    %v2914 = vunpack.c.l.b16 %v2739
    %v2915 = vunpack.c.h.b16 %v2739
    %v2916 = vunpack.c.l.b16 %v2740
    %v2917 = vunpack.c.h.b16 %v2740
    %v2918 = vunpack.c.l.b16 %v2741
    %v2919 = vunpack.c.h.b16 %v2741
    %v2920 = vunpack.c.l.b16 %v2742
    %v2921 = vunpack.c.h.b16 %v2742
    %v2922 = vunpack.c.l.b16 %v2743
    %v2923 = vunpack.c.h.b16 %v2743
    %v2924 = vunpack.c.l.b16 %v2744
    %v2925 = vunpack.c.h.b16 %v2744
    %v2926 = vunpack.c.l.b16 %v2745
    %v2927 = vunpack.c.h.b16 %v2745
    %v2928 = vunpack.c.l.b16 %v2746
    %v2929 = vunpack.c.h.b16 %v2746
    %v2930 = vunpack.c.l.b16 %v2747
    %v2931 = vunpack.c.h.b16 %v2747
    %v2932 = vunpack.c.l.b16 %v2748
    %v2933 = vunpack.c.h.b16 %v2748
    %v2934 = vunpack.c.l.b16 %v2749
    %v2935 = vunpack.c.h.b16 %v2749
    %v2936 = vunpack.c.l.b16 %v2750
    %v2937 = vunpack.c.h.b16 %v2750
    %v2938 = vunpack.c.l.b16 %v2751
    %v2939 = vunpack.c.h.b16 %v2751
    %v2940 = vunpack.c.l.b16 %v2752
    %v2941 = vunpack.c.h.b16 %v2752
    %v2942 = vunpack.c.l.b16 %v2753
    %v2943 = vunpack.c.h.b16 %v2753
    %v2944 = vunpack.c.l.b16 %v2754
    %v2945 = vunpack.c.h.b16 %v2754
    %v2946 = vunpack.c.l.b16 %v2755
    %v2947 = vunpack.c.h.b16 %v2755
    %v2948 = vunpack.c.l.b16 %v2756
    %v2949 = vunpack.c.h.b16 %v2756
    %v2950 = vunpack.c.l.b16 %v2757
    %v2951 = vunpack.c.h.b16 %v2757
    %v2952 = vunpack.c.l.b16 %v2758
    %v2953 = vunpack.c.h.b16 %v2758
    %v2954 = vunpack.c.l.b16 %v2759
    %v2955 = vunpack.c.h.b16 %v2759
    %v2956 = vunpack.c.l.b16 %v2760
    %v2957 = vunpack.c.h.b16 %v2760
    %v2958 = vunpack.c.l.b16 %v2761
    %v2959 = vunpack.c.h.b16 %v2761
    %v2960 = vunpack.c.l.b16 %v2762
    %v2961 = vunpack.c.h.b16 %v2762
    %v2962 = vunpack.c.l.b16 %v2763
    %v2963 = vunpack.c.h.b16 %v2763
    %v2964 = vunpack.c.l.b16 %v2764
    %v2965 = vunpack.c.h.b16 %v2764
    %v2966 = vunpack.c.l.b16 %v2765
    %v2967 = vunpack.c.h.b16 %v2765
    %v2968 = vunpack.c.l.b16 %v2766
    %v2969 = vunpack.c.h.b16 %v2766
    %v2970 = vunpack.c.l.b16 %v2767
    %v2971 = vunpack.c.h.b16 %v2767
    %v2972 = vpack.c.b16 %v2846, %v2844
    %v2973 = vpack.c.b16 %v2847, %v2845
    %v2974 = vpack.c.b16 %v2850, %v2848
    %v2975 = vpack.c.b16 %v2851, %v2849
    %v2976 = vpack.c.b16 %v2854, %v2852
    %v2977 = vpack.c.b16 %v2855, %v2853
    %v2978 = vpack.c.b16 %v2858, %v2856
    %v2979 = vpack.c.b16 %v2859, %v2857
    %v2980 = vpack.c.b16 %v2862, %v2860
    %v2981 = vpack.c.b16 %v2863, %v2861
    %v2982 = vpack.c.b16 %v2866, %v2864
    %v2983 = vpack.c.b16 %v2867, %v2865
    %v2984 = vpack.c.b16 %v2870, %v2868
    %v2985 = vpack.c.b16 %v2871, %v2869
    %v2986 = vpack.c.b16 %v2874, %v2872
    %v2987 = vpack.c.b16 %v2875, %v2873
    %v2988 = vpack.c.b16 %v2878, %v2876
    %v2989 = vpack.c.b16 %v2879, %v2877
    %v2990 = vpack.c.b16 %v2882, %v2880
    %v2991 = vpack.c.b16 %v2883, %v2881
    %v2992 = vpack.c.b16 %v2886, %v2884
    %v2993 = vpack.c.b16 %v2887, %v2885
    %v2994 = vpack.c.b16 %v2890, %v2888
    %v2995 = vpack.c.b16 %v2891, %v2889
    %v2996 = vpack.c.b16 %v2894, %v2892
    %v2997 = vpack.c.b16 %v2895, %v2893
    %v2998 = vpack.c.b16 %v2898, %v2896
    %v2999 = vpack.c.b16 %v2899, %v2897
    %v3000 = vpack.c.b16 %v2902, %v2900
    %v3001 = vpack.c.b16 %v2903, %v2901
    %v3002 = vpack.c.b16 %v2906, %v2904
    %v3003 = vpack.c.b16 %v2907, %v2905
    %v3004 = vpack.c.b16 %v2910, %v2908
    %v3005 = vpack.c.b16 %v2911, %v2909
    %v3006 = vpack.c.b16 %v2914, %v2912
    %v3007 = vpack.c.b16 %v2915, %v2913
    %v3008 = vpack.c.b16 %v2918, %v2916
    %v3009 = vpack.c.b16 %v2919, %v2917
    %v3010 = vpack.c.b16 %v2922, %v2920
    %v3011 = vpack.c.b16 %v2923, %v2921
    %v3012 = vpack.c.b16 %v2926, %v2924
    %v3013 = vpack.c.b16 %v2927, %v2925
    %v3014 = vpack.c.b16 %v2930, %v2928
    %v3015 = vpack.c.b16 %v2931, %v2929
    %v3016 = vpack.c.b16 %v2934, %v2932
    %v3017 = vpack.c.b16 %v2935, %v2933
    %v3018 = vpack.c.b16 %v2938, %v2936
    %v3019 = vpack.c.b16 %v2939, %v2937
    %v3020 = vpack.c.b16 %v2942, %v2940
    %v3021 = vpack.c.b16 %v2943, %v2941
    %v3022 = vpack.c.b16 %v2946, %v2944
    %v3023 = vpack.c.b16 %v2947, %v2945
    %v3024 = vpack.c.b16 %v2950, %v2948
    %v3025 = vpack.c.b16 %v2951, %v2949
    %v3026 = vpack.c.b16 %v2954, %v2952
    %v3027 = vpack.c.b16 %v2955, %v2953
    %v3028 = vpack.c.b16 %v2958, %v2956
    %v3029 = vpack.c.b16 %v2959, %v2957
    %v3030 = vpack.c.b16 %v2962, %v2960
    %v3031 = vpack.c.b16 %v2963, %v2961
    %v3032 = vpack.c.b16 %v2966, %v2964
    %v3033 = vpack.c.b16 %v2967, %v2965
    %v3034 = vpack.c.b16 %v2970, %v2968
    %v3035 = vpack.c.b16 %v2971, %v2969
    %3100 = vmatprep.subr.bf16.mxu0 %v2973
    %3101 = vmatpush1.bf16.msra.mxu0 %v2972
    %3102 = vmatprep.subr.bf16.mxu0 %v2975
    %3103 = vmatpush1.bf16.msra.mxu0 %v2974
    %3104 = vmatprep.subr.bf16.mxu0 %v2977
    %3105 = vmatpush1.bf16.msra.mxu0 %v2976
    %3106 = vmatprep.subr.bf16.mxu0 %v2979
    %3107 = vmatpush1.bf16.msra.mxu0 %v2978
    %3108 = vmatprep.subr.bf16.mxu0 %v2981
    %3109 = vmatpush1.bf16.msra.mxu0 %v2980
    %3110 = vmatprep.subr.bf16.mxu0 %v2983
    %3111 = vmatpush1.bf16.msra.mxu0 %v2982
    %3112 = vmatprep.subr.bf16.mxu0 %v2985
    %3113 = vmatpush1.bf16.msra.mxu0 %v2984
    %3114 = vmatprep.subr.bf16.mxu0 %v2987
    %3115 = vmatpush1.bf16.msra.mxu0 %v2986
    %3116 = vmatprep.subr.bf16.mxu0 %v2989
    %3117 = vmatpush1.bf16.msra.mxu0 %v2988
    %3118 = vmatprep.subr.bf16.mxu0 %v2991
    %3119 = vmatpush1.bf16.msra.mxu0 %v2990
    %3120 = vmatprep.subr.bf16.mxu0 %v2993
    %3121 = vmatpush1.bf16.msra.mxu0 %v2992
    %3122 = vmatprep.subr.bf16.mxu0 %v2995
    %3123 = vmatpush1.bf16.msra.mxu0 %v2994
    %3124 = vmatprep.subr.bf16.mxu0 %v2997
    %3125 = vmatpush1.bf16.msra.mxu0 %v2996
    %3126 = vmatprep.subr.bf16.mxu0 %v2999
    %3127 = vmatpush1.bf16.msra.mxu0 %v2998
    %3128 = vmatprep.subr.bf16.mxu0 %v3001
    %3129 = vmatpush1.bf16.msra.mxu0 %v3000
    %3130 = vmatprep.subr.bf16.mxu0 %v3003
    %3131 = vmatpush1.bf16.msra.mxu0 %v3002
    %3132 = vmatprep.mubr.bf16.mxu0 %v2701
    %3133 = vmatmul.mubr.bf16.gmra.mrb[0].mxu0 %v2700
    %v3134 = vpop.f32.mrb[0].mxu0
    %v3135 = vadd.f32 %v2773, %v3134
    %v3136 = vpop.f32.mrb[0].mxu0
    %v3137 = vadd.f32 %v2777, %v3136
    %v3138 = vpop.f32.mrb[0].mxu0
    %v3139 = vadd.f32 %v2773, %v3138
    %v3140 = vpop.f32.mrb[0].mxu0
    %v3141 = vadd.f32 %v2777, %v3140
    %3142 = vdwg.mxu0
    %3143 = vmatprep.subr.bf16.mxu0 %v3005
    %3144 = vmatpush1.bf16.msra.mxu0 %v3004
    %3145 = vmatprep.subr.bf16.mxu0 %v3007
    %3146 = vmatpush1.bf16.msra.mxu0 %v3006
    %3147 = vmatprep.subr.bf16.mxu0 %v3009
    %3148 = vmatpush1.bf16.msra.mxu0 %v3008
    %3149 = vmatprep.subr.bf16.mxu0 %v3011
    %3150 = vmatpush1.bf16.msra.mxu0 %v3010
    %3151 = vmatprep.subr.bf16.mxu0 %v3013
    %3152 = vmatpush1.bf16.msra.mxu0 %v3012
    %3153 = vmatprep.subr.bf16.mxu0 %v3015
    %3154 = vmatpush1.bf16.msra.mxu0 %v3014
    %3155 = vmatprep.subr.bf16.mxu0 %v3017
    %3156 = vmatpush1.bf16.msra.mxu0 %v3016
    %3157 = vmatprep.subr.bf16.mxu0 %v3019
    %3158 = vmatpush1.bf16.msra.mxu0 %v3018
    %3159 = vmatprep.subr.bf16.mxu0 %v3021
    %3160 = vmatpush1.bf16.msra.mxu0 %v3020
    %3161 = vmatprep.subr.bf16.mxu0 %v3023
    %3162 = vmatpush1.bf16.msra.mxu0 %v3022
    %3163 = vmatprep.subr.bf16.mxu0 %v3025
    %3164 = vmatpush1.bf16.msra.mxu0 %v3024
    %3165 = vmatprep.subr.bf16.mxu0 %v3027
    %3166 = vmatpush1.bf16.msra.mxu0 %v3026
    %3167 = vmatprep.subr.bf16.mxu0 %v3029
    %3168 = vmatpush1.bf16.msra.mxu0 %v3028
    %3169 = vmatprep.subr.bf16.mxu0 %v3031
    %3170 = vmatpush1.bf16.msra.mxu0 %v3030
    %3171 = vmatprep.subr.bf16.mxu0 %v3033
    %3172 = vmatpush1.bf16.msra.mxu0 %v3032
    %3173 = vmatprep.subr.bf16.mxu0 %v3035
    %3174 = vmatpush1.bf16.msra.mxu0 %v3034
    %3175 = vmatprep.mubr.bf16.mxu0 %v2703
    %3176 = vmatmul.mubr.bf16.gmra.mrb[0].mxu0 %v2702
    %v3177 = vpop.f32.mrb[0].mxu0
    %v3178 = vadd.f32 %v3135, %v3177
    %v3179 = vpop.f32.mrb[0].mxu0
    %v3180 = vadd.f32 %v3137, %v3179
    %v3181 = vpop.f32.mrb[0].mxu0
    %v3182 = vadd.f32 %v3139, %v3181
    %v3183 = vpop.f32.mrb[0].mxu0
    %v3184 = vadd.f32 %v3141, %v3183
    %3185 = vdwg.mxu0
    %v3186 = vadd.f32 %v3178, %v2194
    %v3187 = vadd.f32 %v3180, %v2195
    %v3188 = vadd.f32 %v3182, %v2196
    %v3189 = vadd.f32 %v3184, %v2197
    %v3190 = vld [vmem:[%s12] sm:$0x3]
    %v3191 = vld [vmem:[%s13] sm:$0x3]
    %v3192 = vadd.f32 %v3186, %v3187
    %3193 = vadd.xlane.f32.xlu0 %v3192
    %v3194 = vpop.xlane.xlu0 %3193
    %v3195 = vadd.f32 %v3188, %v3189
    %3196 = vadd.xlane.f32.xlu0 %v3195
    %v3197 = vpop.xlane.xlu0 %3196
    %v3198 = vmul.f32 %v3186, %v3186
    %v3199 = vmul.f32 %v3187, %v3187
    %v3200 = vmul.f32 %v3188, %v3188
    %v3201 = vmul.f32 %v3189, %v3189
    %v3202 = vadd.f32 %v3198, %v3199
    %3203 = vadd.xlane.f32.xlu0 %v3202
    %v3204 = vpop.xlane.xlu0 %3203
    %v3205 = vadd.f32 %v3200, %v3201
    %3206 = vadd.xlane.f32.xlu0 %v3205
    %v3207 = vpop.xlane.xlu0 %3206
    %v3208 = vmul.f32 %v3194, 0.004347826
    %v3209 = vmul.f32 %v3197, 0.004347826
    %v3210 = vmul.f32 %v3204, 0.004347826
    %v3211 = vmul.f32 %v3207, 0.004347826
    %v3212 = vmul.f32 %v3208, %v3208
    %v3213 = vmul.f32 %v3209, %v3209
    %v3214 = vsub.f32 %v3210, %v3212
    %v3215 = vsub.f32 %v3211, %v3213
    %v3216 = vsub.f32 %v3186, %v3208
    %v3217 = vsub.f32 %v3187, %v3208
    %v3218 = vsub.f32 %v3188, %v3209
    %v3219 = vsub.f32 %v3189, %v3209
    %v3220 = vadd.f32 %v3214, 1e-06
    %v3221 = vadd.f32 %v3215, 1e-06
    %v3222 = vrsqrt.pop %v3220
    %v3223 = vrsqrt.pop %v3221
    %v3224 = vmul.f32 %v3216, %v3222
    %v3225 = vmul.f32 %v3217, %v3222
    %v3226 = vmul.f32 %v3218, %v3223
    %v3227 = vmul.f32 %v3219, %v3223
    %v3229 = vlaneseq
    %v3230 = vshrl.u32 %v3229, 7
    %v3231 = vsub.s32 0, %v3230
    %v3232 = vrot.slane %v3190, %v3231
    %v3233 = vlaneseq
    %v3234 = vshrl.u32 %v3233, 7
    %v3235 = vsub.s32 1, %v3234
    %v3236 = vrot.slane %v3190, %v3235
    %v3239 = vmul.f32 %v3224, %v3232
    %v3240 = vmul.f32 %v3225, %v3236
    %v3241 = vmul.f32 %v3226, %v3232
    %v3242 = vmul.f32 %v3227, %v3236
    %v3244 = vlaneseq
    %v3245 = vshrl.u32 %v3244, 7
    %v3246 = vsub.s32 0, %v3245
    %v3247 = vrot.slane %v3191, %v3246
    %v3248 = vlaneseq
    %v3249 = vshrl.u32 %v3248, 7
    %v3250 = vsub.s32 1, %v3249
    %v3251 = vrot.slane %v3191, %v3250
    %v3254 = vadd.f32 %v3239, %v3247
    %v3255 = vadd.f32 %v3240, %v3251
    %v3256 = vadd.f32 %v3241, %v3247
    %v3257 = vadd.f32 %v3242, %v3251
    %v3258 = vpack.c.bf16 %v3256, %v3254
    %v3259 = vpack.c.bf16 %v3257, %v3255
    %s3260 = scalar_lea.vmem %s4, 256
    %v3261 = vld [vmem:[%s3260] sm:$0xff]
    %v3262 = vld [vmem:[%s3260 + $0x8] sm:$0xff]
    %v3263 = vld [vmem:[%s3260 + $0x10] sm:$0xff]
    %v3264 = vld [vmem:[%s3260 + $0x18] sm:$0xff]
    %v3265 = vld [vmem:[%s3260 + $0x20] sm:$0xff]
    %v3266 = vld [vmem:[%s3260 + $0x28] sm:$0xff]
    %v3267 = vld [vmem:[%s3260 + $0x30] sm:$0xff]
    %v3268 = vld [vmem:[%s3260 + $0x38] sm:$0xff]
    %v3269 = vld [vmem:[%s3260 + $0x40] sm:$0xff]
    %v3270 = vld [vmem:[%s3260 + $0x48] sm:$0xff]
    %v3271 = vld [vmem:[%s3260 + $0x50] sm:$0xff]
    %v3272 = vld [vmem:[%s3260 + $0x58] sm:$0xff]
    %v3273 = vld [vmem:[%s3260 + $0x60] sm:$0xff]
    %v3274 = vld [vmem:[%s3260 + $0x68] sm:$0xff]
    %v3275 = vld [vmem:[%s3260 + $0x70] sm:$0xff]
    %v3276 = vld [vmem:[%s3260 + $0x78] sm:$0xff]
    %v3277 = vld [vmem:[%s3260 + $0x80] sm:$0xff]
    %v3278 = vld [vmem:[%s3260 + $0x88] sm:$0xff]
    %v3279 = vld [vmem:[%s3260 + $0x90] sm:$0xff]
    %v3280 = vld [vmem:[%s3260 + $0x98] sm:$0xff]
    %v3281 = vld [vmem:[%s3260 + $0xa0] sm:$0xff]
    %v3282 = vld [vmem:[%s3260 + $0xa8] sm:$0xff]
    %v3283 = vld [vmem:[%s3260 + $0xb0] sm:$0xff]
    %v3284 = vld [vmem:[%s3260 + $0xb8] sm:$0xff]
    %v3285 = vld [vmem:[%s3260 + $0xc0] sm:$0xff]
    %v3286 = vld [vmem:[%s3260 + $0xc8] sm:$0xff]
    %v3287 = vld [vmem:[%s3260 + $0xd0] sm:$0xff]
    %v3288 = vld [vmem:[%s3260 + $0xd8] sm:$0xff]
    %v3289 = vld [vmem:[%s3260 + $0xe0] sm:$0xff]
    %v3290 = vld [vmem:[%s3260 + $0xe8] sm:$0xff]
    %v3291 = vld [vmem:[%s3260 + $0xf0] sm:$0xff]
    %v3292 = vld [vmem:[%s3260 + $0xf8] sm:$0xff]
    %v3325 = vunpack.c.l.b16 %v3261
    %v3326 = vunpack.c.h.b16 %v3261
    %v3327 = vunpack.c.l.b16 %v3262
    %v3328 = vunpack.c.h.b16 %v3262
    %v3329 = vunpack.c.l.b16 %v3263
    %v3330 = vunpack.c.h.b16 %v3263
    %v3331 = vunpack.c.l.b16 %v3264
    %v3332 = vunpack.c.h.b16 %v3264
    %v3333 = vunpack.c.l.b16 %v3265
    %v3334 = vunpack.c.h.b16 %v3265
    %v3335 = vunpack.c.l.b16 %v3266
    %v3336 = vunpack.c.h.b16 %v3266
    %v3337 = vunpack.c.l.b16 %v3267
    %v3338 = vunpack.c.h.b16 %v3267
    %v3339 = vunpack.c.l.b16 %v3268
    %v3340 = vunpack.c.h.b16 %v3268
    %v3341 = vunpack.c.l.b16 %v3269
    %v3342 = vunpack.c.h.b16 %v3269
    %v3343 = vunpack.c.l.b16 %v3270
    %v3344 = vunpack.c.h.b16 %v3270
    %v3345 = vunpack.c.l.b16 %v3271
    %v3346 = vunpack.c.h.b16 %v3271
    %v3347 = vunpack.c.l.b16 %v3272
    %v3348 = vunpack.c.h.b16 %v3272
    %v3349 = vunpack.c.l.b16 %v3273
    %v3350 = vunpack.c.h.b16 %v3273
    %v3351 = vunpack.c.l.b16 %v3274
    %v3352 = vunpack.c.h.b16 %v3274
    %v3353 = vunpack.c.l.b16 %v3275
    %v3354 = vunpack.c.h.b16 %v3275
    %v3355 = vunpack.c.l.b16 %v3276
    %v3356 = vunpack.c.h.b16 %v3276
    %v3357 = vunpack.c.l.b16 %v3277
    %v3358 = vunpack.c.h.b16 %v3277
    %v3359 = vunpack.c.l.b16 %v3278
    %v3360 = vunpack.c.h.b16 %v3278
    %v3361 = vunpack.c.l.b16 %v3279
    %v3362 = vunpack.c.h.b16 %v3279
    %v3363 = vunpack.c.l.b16 %v3280
    %v3364 = vunpack.c.h.b16 %v3280
    %v3365 = vunpack.c.l.b16 %v3281
    %v3366 = vunpack.c.h.b16 %v3281
    %v3367 = vunpack.c.l.b16 %v3282
    %v3368 = vunpack.c.h.b16 %v3282
    %v3369 = vunpack.c.l.b16 %v3283
    %v3370 = vunpack.c.h.b16 %v3283
    %v3371 = vunpack.c.l.b16 %v3284
    %v3372 = vunpack.c.h.b16 %v3284
    %v3373 = vunpack.c.l.b16 %v3285
    %v3374 = vunpack.c.h.b16 %v3285
    %v3375 = vunpack.c.l.b16 %v3286
    %v3376 = vunpack.c.h.b16 %v3286
    %v3377 = vunpack.c.l.b16 %v3287
    %v3378 = vunpack.c.h.b16 %v3287
    %v3379 = vunpack.c.l.b16 %v3288
    %v3380 = vunpack.c.h.b16 %v3288
    %v3381 = vunpack.c.l.b16 %v3289
    %v3382 = vunpack.c.h.b16 %v3289
    %v3383 = vunpack.c.l.b16 %v3290
    %v3384 = vunpack.c.h.b16 %v3290
    %v3385 = vunpack.c.l.b16 %v3291
    %v3386 = vunpack.c.h.b16 %v3291
    %v3387 = vunpack.c.l.b16 %v3292
    %v3388 = vunpack.c.h.b16 %v3292
    %v3389 = vpack.c.b16 %v3327, %v3325
    %v3390 = vpack.c.b16 %v3328, %v3326
    %v3391 = vpack.c.b16 %v3331, %v3329
    %v3392 = vpack.c.b16 %v3332, %v3330
    %v3393 = vpack.c.b16 %v3335, %v3333
    %v3394 = vpack.c.b16 %v3336, %v3334
    %v3395 = vpack.c.b16 %v3339, %v3337
    %v3396 = vpack.c.b16 %v3340, %v3338
    %v3397 = vpack.c.b16 %v3343, %v3341
    %v3398 = vpack.c.b16 %v3344, %v3342
    %v3399 = vpack.c.b16 %v3347, %v3345
    %v3400 = vpack.c.b16 %v3348, %v3346
    %v3401 = vpack.c.b16 %v3351, %v3349
    %v3402 = vpack.c.b16 %v3352, %v3350
    %v3403 = vpack.c.b16 %v3355, %v3353
    %v3404 = vpack.c.b16 %v3356, %v3354
    %v3405 = vpack.c.b16 %v3359, %v3357
    %v3406 = vpack.c.b16 %v3360, %v3358
    %v3407 = vpack.c.b16 %v3363, %v3361
    %v3408 = vpack.c.b16 %v3364, %v3362
    %v3409 = vpack.c.b16 %v3367, %v3365
    %v3410 = vpack.c.b16 %v3368, %v3366
    %v3411 = vpack.c.b16 %v3371, %v3369
    %v3412 = vpack.c.b16 %v3372, %v3370
    %v3413 = vpack.c.b16 %v3375, %v3373
    %v3414 = vpack.c.b16 %v3376, %v3374
    %v3415 = vpack.c.b16 %v3379, %v3377
    %v3416 = vpack.c.b16 %v3380, %v3378
    %v3417 = vpack.c.b16 %v3383, %v3381
    %v3418 = vpack.c.b16 %v3384, %v3382
    %v3419 = vpack.c.b16 %v3387, %v3385
    %v3420 = vpack.c.b16 %v3388, %v3386
    %3453 = vmatprep.subr.bf16.mxu0 %v3390
    %3454 = vmatpush1.bf16.msra.mxu0 %v3389
    %3455 = vmatprep.subr.bf16.mxu0 %v3392
    %3456 = vmatpush1.bf16.msra.mxu0 %v3391
    %3457 = vmatprep.subr.bf16.mxu0 %v3394
    %3458 = vmatpush1.bf16.msra.mxu0 %v3393
    %3459 = vmatprep.subr.bf16.mxu0 %v3396
    %3460 = vmatpush1.bf16.msra.mxu0 %v3395
    %3461 = vmatprep.subr.bf16.mxu0 %v3398
    %3462 = vmatpush1.bf16.msra.mxu0 %v3397
    %3463 = vmatprep.subr.bf16.mxu0 %v3400
    %3464 = vmatpush1.bf16.msra.mxu0 %v3399
    %3465 = vmatprep.subr.bf16.mxu0 %v3402
    %3466 = vmatpush1.bf16.msra.mxu0 %v3401
    %3467 = vmatprep.subr.bf16.mxu0 %v3404
    %3468 = vmatpush1.bf16.msra.mxu0 %v3403
    %3469 = vmatprep.subr.bf16.mxu0 %v3406
    %3470 = vmatpush1.bf16.msra.mxu0 %v3405
    %3471 = vmatprep.subr.bf16.mxu0 %v3408
    %3472 = vmatpush1.bf16.msra.mxu0 %v3407
    %3473 = vmatprep.subr.bf16.mxu0 %v3410
    %3474 = vmatpush1.bf16.msra.mxu0 %v3409
    %3475 = vmatprep.subr.bf16.mxu0 %v3412
    %3476 = vmatpush1.bf16.msra.mxu0 %v3411
    %3477 = vmatprep.subr.bf16.mxu0 %v3414
    %3478 = vmatpush1.bf16.msra.mxu0 %v3413
    %3479 = vmatprep.subr.bf16.mxu0 %v3416
    %3480 = vmatpush1.bf16.msra.mxu0 %v3415
    %3481 = vmatprep.subr.bf16.mxu0 %v3418
    %3482 = vmatpush1.bf16.msra.mxu0 %v3417
    %3483 = vmatprep.subr.bf16.mxu0 %v3420
    %3484 = vmatpush1.bf16.msra.mxu0 %v3419
    %3485 = vmatprep.mubr.bf16.mxu0 %v3259
    %3486 = vmatmul.mubr.bf16.gmra.mrb[0].mxu0 %v3258
    %v3487 = vpop.f32.mrb[0].mxu0
    %v3488 = vadd.f32 0.0, %v3487
    %v3489 = vpop.f32.mrb[0].mxu0
    %v3490 = vadd.f32 0.0, %v3489
    %v3491 = vpop.f32.mrb[0].mxu0
    %v3492 = vadd.f32 0.0, %v3491
    %v3493 = vpop.f32.mrb[0].mxu0
    %v3494 = vadd.f32 0.0, %v3493
    %3495 = vdwg.mxu0
    %3497 = vrot.lane.b32.xlu0 %v3488, 64
    %v3498 = vpop.permute.xlu0 %3497
    %v3499 = vsel %vm397, %v3488, 0
    %v3501 = vsel %vm397, %v3498, 0
    %3503 = vmatprep.subr.mxu0 0.0
    %3504 = vmatpush1.xpose.msra.mxu0 %v3501
    %3505 = vmatprep.subr.mxu0 0.0
    %3506 = vmatpush1.xpose.msra.mxu0 0.0
    %3507 = vmatprep.subr.mxu0 0.0
    %3508 = vmatpush1.xpose.msra.mxu0 0.0
    %3509 = vmatprep.subr.mxu0 0.0
    %3510 = vmatpush1.xpose.msra.mxu0 0.0
    %3511 = vmatprep.subr.mxu0 0.0
    %3512 = vmatpush1.xpose.msra.mxu0 0.0
    %3513 = vmatprep.subr.mxu0 0.0
    %3514 = vmatpush1.xpose.msra.mxu0 0.0
    %3515 = vmatprep.subr.mxu0 0.0
    %3516 = vmatpush1.xpose.msra.mxu0 0.0
    %3517 = vmatprep.subr.mxu0 0.0
    %3518 = vmatpush1.xpose.msra.mxu0 0.0
    %3519 = vmatprep.subr.mxu0 0.0
    %3520 = vmatpush1.xpose.msra.mxu0 0.0
    %3521 = vmatprep.subr.mxu0 0.0
    %3522 = vmatpush1.xpose.msra.mxu0 0.0
    %3523 = vmatprep.subr.mxu0 0.0
    %3524 = vmatpush1.xpose.msra.mxu0 0.0
    %3525 = vmatprep.subr.mxu0 0.0
    %3526 = vmatpush1.xpose.msra.mxu0 0.0
    %3527 = vmatprep.subr.mxu0 0.0
    %3528 = vmatpush1.xpose.msra.mxu0 0.0
    %3529 = vmatprep.subr.mxu0 0.0
    %3530 = vmatpush1.xpose.msra.mxu0 0.0
    %3531 = vmatprep.subr.mxu0 0.0
    %3532 = vmatpush1.xpose.msra.mxu0 0.0
    %3533 = vmatprep.subr.mxu0 0.0
    %3534 = vmatpush1.xpose.msra.mxu0 0.0
    %3535 = vmatprep.subr.mxu0 0.0
    %3536 = vmatpush1.xpose.msra.mxu0 0.0
    %3537 = vmatprep.subr.mxu0 0.0
    %3538 = vmatpush1.xpose.msra.mxu0 0.0
    %3539 = vmatprep.subr.mxu0 0.0
    %3540 = vmatpush1.xpose.msra.mxu0 0.0
    %3541 = vmatprep.subr.mxu0 0.0
    %3542 = vmatpush1.xpose.msra.mxu0 0.0
    %3543 = vmatprep.subr.mxu0 0.0
    %3544 = vmatpush1.xpose.msra.mxu0 0.0
    %3545 = vmatprep.subr.mxu0 0.0
    %3546 = vmatpush1.xpose.msra.mxu0 0.0
    %3547 = vmatprep.subr.mxu0 0.0
    %3548 = vmatpush1.xpose.msra.mxu0 0.0
    %3549 = vmatprep.subr.mxu0 0.0
    %3550 = vmatpush1.xpose.msra.mxu0 0.0
    %3551 = vmatprep.subr.mxu0 0.0
    %3552 = vmatpush1.xpose.msra.mxu0 0.0
    %3553 = vmatprep.subr.mxu0 0.0
    %3554 = vmatpush1.xpose.msra.mxu0 0.0
    %3555 = vmatprep.subr.mxu0 0.0
    %3556 = vmatpush1.xpose.msra.mxu0 0.0
    %3557 = vmatprep.subr.mxu0 0.0
    %3558 = vmatpush1.xpose.msra.mxu0 0.0
    %3559 = vmatprep.subr.mxu0 0.0
    %3560 = vmatpush1.xpose.msra.mxu0 0.0
    %3561 = vmatprep.subr.mxu0 0.0
    %3562 = vmatpush1.xpose.msra.mxu0 0.0
    %3563 = vmatprep.subr.mxu0 0.0
    %3564 = vmatpush1.xpose.msra.mxu0 0.0
    %3565 = vmatprep.subr.mxu0 0.0
    %3566 = vmatpush1.xpose.msra.mxu0 0.0
    %3567 = vmatprep.mubr.f32.mxu0 0.0
    %3568 = vmatmul.mubr.f32.gmra.mrb[0].mxu0 %v3499
    %v3569 = vpop.f32.mrb[0].mxu0
    %v3570 = vadd.f32 0.0, %v3569
    %v3571 = vpop.f32.mrb[0].mxu0
    %3572 = vdwg.mxu0
    %3573 = vrot.lane.b32.xlu0 %v3488, 112
    %v3574 = vpop.permute.xlu0 %3573
    %3575 = vrot.lane.b32.xlu0 %v3488, 48
    %v3576 = vpop.permute.xlu0 %3575
    %v3577 = vsel %vm397, %v3574, 0
    %v3579 = vsel %vm397, %v3576, 0
    %3581 = vmatprep.subr.mxu0 0.0
    %3582 = vmatpush1.xpose.msra.mxu0 %v3579
    %3583 = vmatprep.subr.mxu0 0.0
    %3584 = vmatpush1.xpose.msra.mxu0 0.0
    %3585 = vmatprep.subr.mxu0 0.0
    %3586 = vmatpush1.xpose.msra.mxu0 0.0
    %3587 = vmatprep.subr.mxu0 0.0
    %3588 = vmatpush1.xpose.msra.mxu0 0.0
    %3589 = vmatprep.subr.mxu0 0.0
    %3590 = vmatpush1.xpose.msra.mxu0 0.0
    %3591 = vmatprep.subr.mxu0 0.0
    %3592 = vmatpush1.xpose.msra.mxu0 0.0
    %3593 = vmatprep.subr.mxu0 0.0
    %3594 = vmatpush1.xpose.msra.mxu0 0.0
    %3595 = vmatprep.subr.mxu0 0.0
    %3596 = vmatpush1.xpose.msra.mxu0 0.0
    %3597 = vmatprep.subr.mxu0 0.0
    %3598 = vmatpush1.xpose.msra.mxu0 0.0
    %3599 = vmatprep.subr.mxu0 0.0
    %3600 = vmatpush1.xpose.msra.mxu0 0.0
    %3601 = vmatprep.subr.mxu0 0.0
    %3602 = vmatpush1.xpose.msra.mxu0 0.0
    %3603 = vmatprep.subr.mxu0 0.0
    %3604 = vmatpush1.xpose.msra.mxu0 0.0
    %3605 = vmatprep.subr.mxu0 0.0
    %3606 = vmatpush1.xpose.msra.mxu0 0.0
    %3607 = vmatprep.subr.mxu0 0.0
    %3608 = vmatpush1.xpose.msra.mxu0 0.0
    %3609 = vmatprep.subr.mxu0 0.0
    %3610 = vmatpush1.xpose.msra.mxu0 0.0
    %3611 = vmatprep.subr.mxu0 0.0
    %3612 = vmatpush1.xpose.msra.mxu0 0.0
    %3613 = vmatprep.subr.mxu0 0.0
    %3614 = vmatpush1.xpose.msra.mxu0 0.0
    %3615 = vmatprep.subr.mxu0 0.0
    %3616 = vmatpush1.xpose.msra.mxu0 0.0
    %3617 = vmatprep.subr.mxu0 0.0
    %3618 = vmatpush1.xpose.msra.mxu0 0.0
    %3619 = vmatprep.subr.mxu0 0.0
    %3620 = vmatpush1.xpose.msra.mxu0 0.0
    %3621 = vmatprep.subr.mxu0 0.0
    %3622 = vmatpush1.xpose.msra.mxu0 0.0
    %3623 = vmatprep.subr.mxu0 0.0
    %3624 = vmatpush1.xpose.msra.mxu0 0.0
    %3625 = vmatprep.subr.mxu0 0.0
    %3626 = vmatpush1.xpose.msra.mxu0 0.0
    %3627 = vmatprep.subr.mxu0 0.0
    %3628 = vmatpush1.xpose.msra.mxu0 0.0
    %3629 = vmatprep.subr.mxu0 0.0
    %3630 = vmatpush1.xpose.msra.mxu0 0.0
    %3631 = vmatprep.subr.mxu0 0.0
    %3632 = vmatpush1.xpose.msra.mxu0 0.0
    %3633 = vmatprep.subr.mxu0 0.0
    %3634 = vmatpush1.xpose.msra.mxu0 0.0
    %3635 = vmatprep.subr.mxu0 0.0
    %3636 = vmatpush1.xpose.msra.mxu0 0.0
    %3637 = vmatprep.subr.mxu0 0.0
    %3638 = vmatpush1.xpose.msra.mxu0 0.0
    %3639 = vmatprep.subr.mxu0 0.0
    %3640 = vmatpush1.xpose.msra.mxu0 0.0
    %3641 = vmatprep.subr.mxu0 0.0
    %3642 = vmatpush1.xpose.msra.mxu0 0.0
    %3643 = vmatprep.subr.mxu0 0.0
    %3644 = vmatpush1.xpose.msra.mxu0 0.0
    %3645 = vmatprep.mubr.f32.mxu0 0.0
    %3646 = vmatmul.mubr.f32.gmra.mrb[0].mxu0 %v3577
    %v3647 = vpop.f32.mrb[0].mxu0
    %v3648 = vadd.f32 0.0, %v3647
    %v3649 = vpop.f32.mrb[0].mxu0
    %3650 = vdwg.mxu0
    %3651 = vrot.lane.b32.xlu0 %v3488, 96
    %v3652 = vpop.permute.xlu0 %3651
    %3653 = vrot.lane.b32.xlu0 %v3488, 32
    %v3654 = vpop.permute.xlu0 %3653
    %v3655 = vsel %vm397, %v3652, 0
    %v3657 = vsel %vm397, %v3654, 0
    %3659 = vmatprep.subr.mxu0 0.0
    %3660 = vmatpush1.xpose.msra.mxu0 %v3657
    %3661 = vmatprep.subr.mxu0 0.0
    %3662 = vmatpush1.xpose.msra.mxu0 0.0
    %3663 = vmatprep.subr.mxu0 0.0
    %3664 = vmatpush1.xpose.msra.mxu0 0.0
    %3665 = vmatprep.subr.mxu0 0.0
    %3666 = vmatpush1.xpose.msra.mxu0 0.0
    %3667 = vmatprep.subr.mxu0 0.0
    %3668 = vmatpush1.xpose.msra.mxu0 0.0
    %3669 = vmatprep.subr.mxu0 0.0
    %3670 = vmatpush1.xpose.msra.mxu0 0.0
    %3671 = vmatprep.subr.mxu0 0.0
    %3672 = vmatpush1.xpose.msra.mxu0 0.0
    %3673 = vmatprep.subr.mxu0 0.0
    %3674 = vmatpush1.xpose.msra.mxu0 0.0
    %3675 = vmatprep.subr.mxu0 0.0
    %3676 = vmatpush1.xpose.msra.mxu0 0.0
    %3677 = vmatprep.subr.mxu0 0.0
    %3678 = vmatpush1.xpose.msra.mxu0 0.0
    %3679 = vmatprep.subr.mxu0 0.0
    %3680 = vmatpush1.xpose.msra.mxu0 0.0
    %3681 = vmatprep.subr.mxu0 0.0
    %3682 = vmatpush1.xpose.msra.mxu0 0.0
    %3683 = vmatprep.subr.mxu0 0.0
    %3684 = vmatpush1.xpose.msra.mxu0 0.0
    %3685 = vmatprep.subr.mxu0 0.0
    %3686 = vmatpush1.xpose.msra.mxu0 0.0
    %3687 = vmatprep.subr.mxu0 0.0
    %3688 = vmatpush1.xpose.msra.mxu0 0.0
    %3689 = vmatprep.subr.mxu0 0.0
    %3690 = vmatpush1.xpose.msra.mxu0 0.0
    %3691 = vmatprep.subr.mxu0 0.0
    %3692 = vmatpush1.xpose.msra.mxu0 0.0
    %3693 = vmatprep.subr.mxu0 0.0
    %3694 = vmatpush1.xpose.msra.mxu0 0.0
    %3695 = vmatprep.subr.mxu0 0.0
    %3696 = vmatpush1.xpose.msra.mxu0 0.0
    %3697 = vmatprep.subr.mxu0 0.0
    %3698 = vmatpush1.xpose.msra.mxu0 0.0
    %3699 = vmatprep.subr.mxu0 0.0
    %3700 = vmatpush1.xpose.msra.mxu0 0.0
    %3701 = vmatprep.subr.mxu0 0.0
    %3702 = vmatpush1.xpose.msra.mxu0 0.0
    %3703 = vmatprep.subr.mxu0 0.0
    %3704 = vmatpush1.xpose.msra.mxu0 0.0
    %3705 = vmatprep.subr.mxu0 0.0
    %3706 = vmatpush1.xpose.msra.mxu0 0.0
    %3707 = vmatprep.subr.mxu0 0.0
    %3708 = vmatpush1.xpose.msra.mxu0 0.0
    %3709 = vmatprep.subr.mxu0 0.0
    %3710 = vmatpush1.xpose.msra.mxu0 0.0
    %3711 = vmatprep.subr.mxu0 0.0
    %3712 = vmatpush1.xpose.msra.mxu0 0.0
    %3713 = vmatprep.subr.mxu0 0.0
    %3714 = vmatpush1.xpose.msra.mxu0 0.0
    %3715 = vmatprep.subr.mxu0 0.0
    %3716 = vmatpush1.xpose.msra.mxu0 0.0
    %3717 = vmatprep.subr.mxu0 0.0
    %3718 = vmatpush1.xpose.msra.mxu0 0.0
    %3719 = vmatprep.subr.mxu0 0.0
    %3720 = vmatpush1.xpose.msra.mxu0 0.0
    %3721 = vmatprep.subr.mxu0 0.0
    %3722 = vmatpush1.xpose.msra.mxu0 0.0
    %3723 = vmatprep.mubr.f32.mxu0 0.0
    %3724 = vmatmul.mubr.f32.gmra.mrb[0].mxu0 %v3655
    %v3725 = vpop.f32.mrb[0].mxu0
    %v3726 = vadd.f32 0.0, %v3725
    %v3727 = vpop.f32.mrb[0].mxu0
    %3728 = vdwg.mxu0
    %3729 = vrot.lane.b32.xlu0 %v3488, 80
    %v3730 = vpop.permute.xlu0 %3729
    %3731 = vrot.lane.b32.xlu0 %v3488, 16
    %v3732 = vpop.permute.xlu0 %3731
    %v3733 = vsel %vm397, %v3730, 0
    %v3735 = vsel %vm397, %v3732, 0
    %3737 = vmatprep.subr.mxu0 0.0
    %3738 = vmatpush1.xpose.msra.mxu0 %v3735
    %3739 = vmatprep.subr.mxu0 0.0
    %3740 = vmatpush1.xpose.msra.mxu0 0.0
    %3741 = vmatprep.subr.mxu0 0.0
    %3742 = vmatpush1.xpose.msra.mxu0 0.0
    %3743 = vmatprep.subr.mxu0 0.0
    %3744 = vmatpush1.xpose.msra.mxu0 0.0
    %3745 = vmatprep.subr.mxu0 0.0
    %3746 = vmatpush1.xpose.msra.mxu0 0.0
    %3747 = vmatprep.subr.mxu0 0.0
    %3748 = vmatpush1.xpose.msra.mxu0 0.0
    %3749 = vmatprep.subr.mxu0 0.0
    %3750 = vmatpush1.xpose.msra.mxu0 0.0
    %3751 = vmatprep.subr.mxu0 0.0
    %3752 = vmatpush1.xpose.msra.mxu0 0.0
    %3753 = vmatprep.subr.mxu0 0.0
    %3754 = vmatpush1.xpose.msra.mxu0 0.0
    %3755 = vmatprep.subr.mxu0 0.0
    %3756 = vmatpush1.xpose.msra.mxu0 0.0
    %3757 = vmatprep.subr.mxu0 0.0
    %3758 = vmatpush1.xpose.msra.mxu0 0.0
    %3759 = vmatprep.subr.mxu0 0.0
    %3760 = vmatpush1.xpose.msra.mxu0 0.0
    %3761 = vmatprep.subr.mxu0 0.0
    %3762 = vmatpush1.xpose.msra.mxu0 0.0
    %3763 = vmatprep.subr.mxu0 0.0
    %3764 = vmatpush1.xpose.msra.mxu0 0.0
    %3765 = vmatprep.subr.mxu0 0.0
    %3766 = vmatpush1.xpose.msra.mxu0 0.0
    %3767 = vmatprep.subr.mxu0 0.0
    %3768 = vmatpush1.xpose.msra.mxu0 0.0
    %3769 = vmatprep.subr.mxu0 0.0
    %3770 = vmatpush1.xpose.msra.mxu0 0.0
    %3771 = vmatprep.subr.mxu0 0.0
    %3772 = vmatpush1.xpose.msra.mxu0 0.0
    %3773 = vmatprep.subr.mxu0 0.0
    %3774 = vmatpush1.xpose.msra.mxu0 0.0
    %3775 = vmatprep.subr.mxu0 0.0
    %3776 = vmatpush1.xpose.msra.mxu0 0.0
    %3777 = vmatprep.subr.mxu0 0.0
    %3778 = vmatpush1.xpose.msra.mxu0 0.0
    %3779 = vmatprep.subr.mxu0 0.0
    %3780 = vmatpush1.xpose.msra.mxu0 0.0
    %3781 = vmatprep.subr.mxu0 0.0
    %3782 = vmatpush1.xpose.msra.mxu0 0.0
    %3783 = vmatprep.subr.mxu0 0.0
    %3784 = vmatpush1.xpose.msra.mxu0 0.0
    %3785 = vmatprep.subr.mxu0 0.0
    %3786 = vmatpush1.xpose.msra.mxu0 0.0
    %3787 = vmatprep.subr.mxu0 0.0
    %3788 = vmatpush1.xpose.msra.mxu0 0.0
    %3789 = vmatprep.subr.mxu0 0.0
    %3790 = vmatpush1.xpose.msra.mxu0 0.0
    %3791 = vmatprep.subr.mxu0 0.0
    %3792 = vmatpush1.xpose.msra.mxu0 0.0
    %3793 = vmatprep.subr.mxu0 0.0
    %3794 = vmatpush1.xpose.msra.mxu0 0.0
    %3795 = vmatprep.subr.mxu0 0.0
    %3796 = vmatpush1.xpose.msra.mxu0 0.0
    %3797 = vmatprep.subr.mxu0 0.0
    %3798 = vmatpush1.xpose.msra.mxu0 0.0
    %3799 = vmatprep.subr.mxu0 0.0
    %3800 = vmatpush1.xpose.msra.mxu0 0.0
    %3801 = vmatprep.mubr.f32.mxu0 0.0
    %3802 = vmatmul.mubr.f32.gmra.mrb[0].mxu0 %v3733
    %v3803 = vpop.f32.mrb[0].mxu0
    %v3804 = vadd.f32 0.0, %v3803
    %v3805 = vpop.f32.mrb[0].mxu0
    %3806 = vdwg.mxu0
    %3808 = vrot.lane.b32.xlu0 %v3492, 64
    %v3809 = vpop.permute.xlu0 %3808
    %v3810 = vsel %vm397, %v3492, 0
    %v3812 = vsel %vm397, %v3809, 0
    %3814 = vmatprep.subr.mxu0 0.0
    %3815 = vmatpush1.xpose.msra.mxu0 %v3812
    %3816 = vmatprep.subr.mxu0 0.0
    %3817 = vmatpush1.xpose.msra.mxu0 0.0
    %3818 = vmatprep.subr.mxu0 0.0
    %3819 = vmatpush1.xpose.msra.mxu0 0.0
    %3820 = vmatprep.subr.mxu0 0.0
    %3821 = vmatpush1.xpose.msra.mxu0 0.0
    %3822 = vmatprep.subr.mxu0 0.0
    %3823 = vmatpush1.xpose.msra.mxu0 0.0
    %3824 = vmatprep.subr.mxu0 0.0
    %3825 = vmatpush1.xpose.msra.mxu0 0.0
    %3826 = vmatprep.subr.mxu0 0.0
    %3827 = vmatpush1.xpose.msra.mxu0 0.0
    %3828 = vmatprep.subr.mxu0 0.0
    %3829 = vmatpush1.xpose.msra.mxu0 0.0
    %3830 = vmatprep.subr.mxu0 0.0
    %3831 = vmatpush1.xpose.msra.mxu0 0.0
    %3832 = vmatprep.subr.mxu0 0.0
    %3833 = vmatpush1.xpose.msra.mxu0 0.0
    %3834 = vmatprep.subr.mxu0 0.0
    %3835 = vmatpush1.xpose.msra.mxu0 0.0
    %3836 = vmatprep.subr.mxu0 0.0
    %3837 = vmatpush1.xpose.msra.mxu0 0.0
    %3838 = vmatprep.subr.mxu0 0.0
    %3839 = vmatpush1.xpose.msra.mxu0 0.0
    %3840 = vmatprep.subr.mxu0 0.0
    %3841 = vmatpush1.xpose.msra.mxu0 0.0
    %3842 = vmatprep.subr.mxu0 0.0
    %3843 = vmatpush1.xpose.msra.mxu0 0.0
    %3844 = vmatprep.subr.mxu0 0.0
    %3845 = vmatpush1.xpose.msra.mxu0 0.0
    %3846 = vmatprep.subr.mxu0 0.0
    %3847 = vmatpush1.xpose.msra.mxu0 0.0
    %3848 = vmatprep.subr.mxu0 0.0
    %3849 = vmatpush1.xpose.msra.mxu0 0.0
    %3850 = vmatprep.subr.mxu0 0.0
    %3851 = vmatpush1.xpose.msra.mxu0 0.0
    %3852 = vmatprep.subr.mxu0 0.0
    %3853 = vmatpush1.xpose.msra.mxu0 0.0
    %3854 = vmatprep.subr.mxu0 0.0
    %3855 = vmatpush1.xpose.msra.mxu0 0.0
    %3856 = vmatprep.subr.mxu0 0.0
    %3857 = vmatpush1.xpose.msra.mxu0 0.0
    %3858 = vmatprep.subr.mxu0 0.0
    %3859 = vmatpush1.xpose.msra.mxu0 0.0
    %3860 = vmatprep.subr.mxu0 0.0
    %3861 = vmatpush1.xpose.msra.mxu0 0.0
    %3862 = vmatprep.subr.mxu0 0.0
    %3863 = vmatpush1.xpose.msra.mxu0 0.0
    %3864 = vmatprep.subr.mxu0 0.0
    %3865 = vmatpush1.xpose.msra.mxu0 0.0
    %3866 = vmatprep.subr.mxu0 0.0
    %3867 = vmatpush1.xpose.msra.mxu0 0.0
    %3868 = vmatprep.subr.mxu0 0.0
    %3869 = vmatpush1.xpose.msra.mxu0 0.0
    %3870 = vmatprep.subr.mxu0 0.0
    %3871 = vmatpush1.xpose.msra.mxu0 0.0
    %3872 = vmatprep.subr.mxu0 0.0
    %3873 = vmatpush1.xpose.msra.mxu0 0.0
    %3874 = vmatprep.subr.mxu0 0.0
    %3875 = vmatpush1.xpose.msra.mxu0 0.0
    %3876 = vmatprep.subr.mxu0 0.0
    %3877 = vmatpush1.xpose.msra.mxu0 0.0
    %3878 = vmatprep.mubr.f32.mxu0 0.0
    %3879 = vmatmul.mubr.f32.gmra.mrb[0].mxu0 %v3810
    %v3880 = vpop.f32.mrb[0].mxu0
    %v3881 = vadd.f32 0.0, %v3880
    %v3882 = vpop.f32.mrb[0].mxu0
    %3883 = vdwg.mxu0
    %3884 = vrot.lane.b32.xlu0 %v3492, 112
    %v3885 = vpop.permute.xlu0 %3884
    %3886 = vrot.lane.b32.xlu0 %v3492, 48
    %v3887 = vpop.permute.xlu0 %3886
    %v3888 = vsel %vm397, %v3885, 0
    %v3890 = vsel %vm397, %v3887, 0
    %3892 = vmatprep.subr.mxu0 0.0
    %3893 = vmatpush1.xpose.msra.mxu0 %v3890
    %3894 = vmatprep.subr.mxu0 0.0
    %3895 = vmatpush1.xpose.msra.mxu0 0.0
    %3896 = vmatprep.subr.mxu0 0.0
    %3897 = vmatpush1.xpose.msra.mxu0 0.0
    %3898 = vmatprep.subr.mxu0 0.0
    %3899 = vmatpush1.xpose.msra.mxu0 0.0
    %3900 = vmatprep.subr.mxu0 0.0
    %3901 = vmatpush1.xpose.msra.mxu0 0.0
    %3902 = vmatprep.subr.mxu0 0.0
    %3903 = vmatpush1.xpose.msra.mxu0 0.0
    %3904 = vmatprep.subr.mxu0 0.0
    %3905 = vmatpush1.xpose.msra.mxu0 0.0
    %3906 = vmatprep.subr.mxu0 0.0
    %3907 = vmatpush1.xpose.msra.mxu0 0.0
    %3908 = vmatprep.subr.mxu0 0.0
    %3909 = vmatpush1.xpose.msra.mxu0 0.0
    %3910 = vmatprep.subr.mxu0 0.0
    %3911 = vmatpush1.xpose.msra.mxu0 0.0
    %3912 = vmatprep.subr.mxu0 0.0
    %3913 = vmatpush1.xpose.msra.mxu0 0.0
    %3914 = vmatprep.subr.mxu0 0.0
    %3915 = vmatpush1.xpose.msra.mxu0 0.0
    %3916 = vmatprep.subr.mxu0 0.0
    %3917 = vmatpush1.xpose.msra.mxu0 0.0
    %3918 = vmatprep.subr.mxu0 0.0
    %3919 = vmatpush1.xpose.msra.mxu0 0.0
    %3920 = vmatprep.subr.mxu0 0.0
    %3921 = vmatpush1.xpose.msra.mxu0 0.0
    %3922 = vmatprep.subr.mxu0 0.0
    %3923 = vmatpush1.xpose.msra.mxu0 0.0
    %3924 = vmatprep.subr.mxu0 0.0
    %3925 = vmatpush1.xpose.msra.mxu0 0.0
    %3926 = vmatprep.subr.mxu0 0.0
    %3927 = vmatpush1.xpose.msra.mxu0 0.0
    %3928 = vmatprep.subr.mxu0 0.0
    %3929 = vmatpush1.xpose.msra.mxu0 0.0
    %3930 = vmatprep.subr.mxu0 0.0
    %3931 = vmatpush1.xpose.msra.mxu0 0.0
    %3932 = vmatprep.subr.mxu0 0.0
    %3933 = vmatpush1.xpose.msra.mxu0 0.0
    %3934 = vmatprep.subr.mxu0 0.0
    %3935 = vmatpush1.xpose.msra.mxu0 0.0
    %3936 = vmatprep.subr.mxu0 0.0
    %3937 = vmatpush1.xpose.msra.mxu0 0.0
    %3938 = vmatprep.subr.mxu0 0.0
    %3939 = vmatpush1.xpose.msra.mxu0 0.0
    %3940 = vmatprep.subr.mxu0 0.0
    %3941 = vmatpush1.xpose.msra.mxu0 0.0
    %3942 = vmatprep.subr.mxu0 0.0
    %3943 = vmatpush1.xpose.msra.mxu0 0.0
    %3944 = vmatprep.subr.mxu0 0.0
    %3945 = vmatpush1.xpose.msra.mxu0 0.0
    %3946 = vmatprep.subr.mxu0 0.0
    %3947 = vmatpush1.xpose.msra.mxu0 0.0
    %3948 = vmatprep.subr.mxu0 0.0
    %3949 = vmatpush1.xpose.msra.mxu0 0.0
    %3950 = vmatprep.subr.mxu0 0.0
    %3951 = vmatpush1.xpose.msra.mxu0 0.0
    %3952 = vmatprep.subr.mxu0 0.0
    %3953 = vmatpush1.xpose.msra.mxu0 0.0
    %3954 = vmatprep.subr.mxu0 0.0
    %3955 = vmatpush1.xpose.msra.mxu0 0.0
    %3956 = vmatprep.mubr.f32.mxu0 0.0
    %3957 = vmatmul.mubr.f32.gmra.mrb[0].mxu0 %v3888
    %v3958 = vpop.f32.mrb[0].mxu0
    %v3959 = vadd.f32 0.0, %v3958
    %v3960 = vpop.f32.mrb[0].mxu0
    %3961 = vdwg.mxu0
    %3962 = vrot.lane.b32.xlu0 %v3492, 96
    %v3963 = vpop.permute.xlu0 %3962
    %3964 = vrot.lane.b32.xlu0 %v3492, 32
    %v3965 = vpop.permute.xlu0 %3964
    %v3966 = vsel %vm397, %v3963, 0
    %v3968 = vsel %vm397, %v3965, 0
    %3970 = vmatprep.subr.mxu0 0.0
    %3971 = vmatpush1.xpose.msra.mxu0 %v3968
    %3972 = vmatprep.subr.mxu0 0.0
    %3973 = vmatpush1.xpose.msra.mxu0 0.0
    %3974 = vmatprep.subr.mxu0 0.0
    %3975 = vmatpush1.xpose.msra.mxu0 0.0
    %3976 = vmatprep.subr.mxu0 0.0
    %3977 = vmatpush1.xpose.msra.mxu0 0.0
    %3978 = vmatprep.subr.mxu0 0.0
    %3979 = vmatpush1.xpose.msra.mxu0 0.0
    %3980 = vmatprep.subr.mxu0 0.0
    %3981 = vmatpush1.xpose.msra.mxu0 0.0
    %3982 = vmatprep.subr.mxu0 0.0
    %3983 = vmatpush1.xpose.msra.mxu0 0.0
    %3984 = vmatprep.subr.mxu0 0.0
    %3985 = vmatpush1.xpose.msra.mxu0 0.0
    %3986 = vmatprep.subr.mxu0 0.0
    %3987 = vmatpush1.xpose.msra.mxu0 0.0
    %3988 = vmatprep.subr.mxu0 0.0
    %3989 = vmatpush1.xpose.msra.mxu0 0.0
    %3990 = vmatprep.subr.mxu0 0.0
    %3991 = vmatpush1.xpose.msra.mxu0 0.0
    %3992 = vmatprep.subr.mxu0 0.0
    %3993 = vmatpush1.xpose.msra.mxu0 0.0
    %3994 = vmatprep.subr.mxu0 0.0
    %3995 = vmatpush1.xpose.msra.mxu0 0.0
    %3996 = vmatprep.subr.mxu0 0.0
    %3997 = vmatpush1.xpose.msra.mxu0 0.0
    %3998 = vmatprep.subr.mxu0 0.0
    %3999 = vmatpush1.xpose.msra.mxu0 0.0
    %4000 = vmatprep.subr.mxu0 0.0
    %4001 = vmatpush1.xpose.msra.mxu0 0.0
    %4002 = vmatprep.subr.mxu0 0.0
    %4003 = vmatpush1.xpose.msra.mxu0 0.0
    %4004 = vmatprep.subr.mxu0 0.0
    %4005 = vmatpush1.xpose.msra.mxu0 0.0
    %4006 = vmatprep.subr.mxu0 0.0
    %4007 = vmatpush1.xpose.msra.mxu0 0.0
    %4008 = vmatprep.subr.mxu0 0.0
    %4009 = vmatpush1.xpose.msra.mxu0 0.0
    %4010 = vmatprep.subr.mxu0 0.0
    %4011 = vmatpush1.xpose.msra.mxu0 0.0
    %4012 = vmatprep.subr.mxu0 0.0
    %4013 = vmatpush1.xpose.msra.mxu0 0.0
    %4014 = vmatprep.subr.mxu0 0.0
    %4015 = vmatpush1.xpose.msra.mxu0 0.0
    %4016 = vmatprep.subr.mxu0 0.0
    %4017 = vmatpush1.xpose.msra.mxu0 0.0
    %4018 = vmatprep.subr.mxu0 0.0
    %4019 = vmatpush1.xpose.msra.mxu0 0.0
    %4020 = vmatprep.subr.mxu0 0.0
    %4021 = vmatpush1.xpose.msra.mxu0 0.0
    %4022 = vmatprep.subr.mxu0 0.0
    %4023 = vmatpush1.xpose.msra.mxu0 0.0
    %4024 = vmatprep.subr.mxu0 0.0
    %4025 = vmatpush1.xpose.msra.mxu0 0.0
    %4026 = vmatprep.subr.mxu0 0.0
    %4027 = vmatpush1.xpose.msra.mxu0 0.0
    %4028 = vmatprep.subr.mxu0 0.0
    %4029 = vmatpush1.xpose.msra.mxu0 0.0
    %4030 = vmatprep.subr.mxu0 0.0
    %4031 = vmatpush1.xpose.msra.mxu0 0.0
    %4032 = vmatprep.subr.mxu0 0.0
    %4033 = vmatpush1.xpose.msra.mxu0 0.0
    %4034 = vmatprep.mubr.f32.mxu0 0.0
    %4035 = vmatmul.mubr.f32.gmra.mrb[0].mxu0 %v3966
    %v4036 = vpop.f32.mrb[0].mxu0
    %v4037 = vadd.f32 0.0, %v4036
    %v4038 = vpop.f32.mrb[0].mxu0
    %4039 = vdwg.mxu0
    %4040 = vrot.lane.b32.xlu0 %v3492, 80
    %v4041 = vpop.permute.xlu0 %4040
    %4042 = vrot.lane.b32.xlu0 %v3492, 16
    %v4043 = vpop.permute.xlu0 %4042
    %v4044 = vsel %vm397, %v4041, 0
    %v4046 = vsel %vm397, %v4043, 0
    %4048 = vmatprep.subr.mxu0 0.0
    %4049 = vmatpush1.xpose.msra.mxu0 %v4046
    %4050 = vmatprep.subr.mxu0 0.0
    %4051 = vmatpush1.xpose.msra.mxu0 0.0
    %4052 = vmatprep.subr.mxu0 0.0
    %4053 = vmatpush1.xpose.msra.mxu0 0.0
    %4054 = vmatprep.subr.mxu0 0.0
    %4055 = vmatpush1.xpose.msra.mxu0 0.0
    %4056 = vmatprep.subr.mxu0 0.0
    %4057 = vmatpush1.xpose.msra.mxu0 0.0
    %4058 = vmatprep.subr.mxu0 0.0
    %4059 = vmatpush1.xpose.msra.mxu0 0.0
    %4060 = vmatprep.subr.mxu0 0.0
    %4061 = vmatpush1.xpose.msra.mxu0 0.0
    %4062 = vmatprep.subr.mxu0 0.0
    %4063 = vmatpush1.xpose.msra.mxu0 0.0
    %4064 = vmatprep.subr.mxu0 0.0
    %4065 = vmatpush1.xpose.msra.mxu0 0.0
    %4066 = vmatprep.subr.mxu0 0.0
    %4067 = vmatpush1.xpose.msra.mxu0 0.0
    %4068 = vmatprep.subr.mxu0 0.0
    %4069 = vmatpush1.xpose.msra.mxu0 0.0
    %4070 = vmatprep.subr.mxu0 0.0
    %4071 = vmatpush1.xpose.msra.mxu0 0.0
    %4072 = vmatprep.subr.mxu0 0.0
    %4073 = vmatpush1.xpose.msra.mxu0 0.0
    %4074 = vmatprep.subr.mxu0 0.0
    %4075 = vmatpush1.xpose.msra.mxu0 0.0
    %4076 = vmatprep.subr.mxu0 0.0
    %4077 = vmatpush1.xpose.msra.mxu0 0.0
    %4078 = vmatprep.subr.mxu0 0.0
    %4079 = vmatpush1.xpose.msra.mxu0 0.0
    %4080 = vmatprep.subr.mxu0 0.0
    %4081 = vmatpush1.xpose.msra.mxu0 0.0
    %4082 = vmatprep.subr.mxu0 0.0
    %4083 = vmatpush1.xpose.msra.mxu0 0.0
    %4084 = vmatprep.subr.mxu0 0.0
    %4085 = vmatpush1.xpose.msra.mxu0 0.0
    %4086 = vmatprep.subr.mxu0 0.0
    %4087 = vmatpush1.xpose.msra.mxu0 0.0
    %4088 = vmatprep.subr.mxu0 0.0
    %4089 = vmatpush1.xpose.msra.mxu0 0.0
    %4090 = vmatprep.subr.mxu0 0.0
    %4091 = vmatpush1.xpose.msra.mxu0 0.0
    %4092 = vmatprep.subr.mxu0 0.0
    %4093 = vmatpush1.xpose.msra.mxu0 0.0
    %4094 = vmatprep.subr.mxu0 0.0
    %4095 = vmatpush1.xpose.msra.mxu0 0.0
    %4096 = vmatprep.subr.mxu0 0.0
    %4097 = vmatpush1.xpose.msra.mxu0 0.0
    %4098 = vmatprep.subr.mxu0 0.0
    %4099 = vmatpush1.xpose.msra.mxu0 0.0
    %4100 = vmatprep.subr.mxu0 0.0
    %4101 = vmatpush1.xpose.msra.mxu0 0.0
    %4102 = vmatprep.subr.mxu0 0.0
    %4103 = vmatpush1.xpose.msra.mxu0 0.0
    %4104 = vmatprep.subr.mxu0 0.0
    %4105 = vmatpush1.xpose.msra.mxu0 0.0
    %4106 = vmatprep.subr.mxu0 0.0
    %4107 = vmatpush1.xpose.msra.mxu0 0.0
    %4108 = vmatprep.subr.mxu0 0.0
    %4109 = vmatpush1.xpose.msra.mxu0 0.0
    %4110 = vmatprep.subr.mxu0 0.0
    %4111 = vmatpush1.xpose.msra.mxu0 0.0
    %4112 = vmatprep.mubr.f32.mxu0 0.0
    %4113 = vmatmul.mubr.f32.gmra.mrb[0].mxu0 %v4044
    %v4114 = vpop.f32.mrb[0].mxu0
    %v4115 = vadd.f32 0.0, %v4114
    %v4116 = vpop.f32.mrb[0].mxu0
    %4117 = vdwg.mxu0
    %v4118 = vsel %vm1017, %v3570, -inf
    %4119 = vmax.xlane.f32.xlu0 %v4118
    %v4120 = vpop.xlane.xlu0 %4119
    %v4121 = vsel %vm1017, %v3648, -inf
    %4122 = vmax.xlane.f32.xlu0 %v4121
    %v4123 = vpop.xlane.xlu0 %4122
    %v4124 = vsel %vm1017, %v3726, -inf
    %4125 = vmax.xlane.f32.xlu0 %v4124
    %v4126 = vpop.xlane.xlu0 %4125
    %v4127 = vsel %vm1017, %v3804, -inf
    %4128 = vmax.xlane.f32.xlu0 %v4127
    %v4129 = vpop.xlane.xlu0 %4128
    %v4130 = vsel %vm1017, %v3881, -inf
    %4131 = vmax.xlane.f32.xlu0 %v4130
    %v4132 = vpop.xlane.xlu0 %4131
    %v4133 = vsel %vm1017, %v3959, -inf
    %4134 = vmax.xlane.f32.xlu0 %v4133
    %v4135 = vpop.xlane.xlu0 %4134
    %v4136 = vsel %vm1017, %v4037, -inf
    %4137 = vmax.xlane.f32.xlu0 %v4136
    %v4138 = vpop.xlane.xlu0 %4137
    %v4139 = vsel %vm1017, %v4115, -inf
    %4140 = vmax.xlane.f32.xlu0 %v4139
    %v4141 = vpop.xlane.xlu0 %4140
    %v4142 = vsub.f32 %v3570, %v4120
    %v4143 = vsub.f32 %v3648, %v4123
    %v4144 = vsub.f32 %v3726, %v4126
    %v4145 = vsub.f32 %v3804, %v4129
    %v4146 = vsub.f32 %v3881, %v4132
    %v4147 = vsub.f32 %v3959, %v4135
    %v4148 = vsub.f32 %v4037, %v4138
    %v4149 = vsub.f32 %v4115, %v4141
    %v4150 = vmul.f32 %v4142, 1.442695
    %v4151 = vpow.pop %v4150
    %v4152 = vmul.f32 %v4143, 1.442695
    %v4153 = vpow.pop %v4152
    %v4154 = vmul.f32 %v4144, 1.442695
    %v4155 = vpow.pop %v4154
    %v4156 = vmul.f32 %v4145, 1.442695
    %v4157 = vpow.pop %v4156
    %v4158 = vmul.f32 %v4146, 1.442695
    %v4159 = vpow.pop %v4158
    %v4160 = vmul.f32 %v4147, 1.442695
    %v4161 = vpow.pop %v4160
    %v4162 = vmul.f32 %v4148, 1.442695
    %v4163 = vpow.pop %v4162
    %v4164 = vmul.f32 %v4149, 1.442695
    %v4165 = vpow.pop %v4164
    %v4166 = vsel %vm1017, %v4151, 0.0
    %4167 = vadd.xlane.f32.xlu0 %v4166
    %v4168 = vpop.xlane.xlu0 %4167
    %v4169 = vsel %vm1017, %v4153, 0.0
    %4170 = vadd.xlane.f32.xlu0 %v4169
    %v4171 = vpop.xlane.xlu0 %4170
    %v4172 = vsel %vm1017, %v4155, 0.0
    %4173 = vadd.xlane.f32.xlu0 %v4172
    %v4174 = vpop.xlane.xlu0 %4173
    %v4175 = vsel %vm1017, %v4157, 0.0
    %4176 = vadd.xlane.f32.xlu0 %v4175
    %v4177 = vpop.xlane.xlu0 %4176
    %v4178 = vsel %vm1017, %v4159, 0.0
    %4179 = vadd.xlane.f32.xlu0 %v4178
    %v4180 = vpop.xlane.xlu0 %4179
    %v4181 = vsel %vm1017, %v4161, 0.0
    %4182 = vadd.xlane.f32.xlu0 %v4181
    %v4183 = vpop.xlane.xlu0 %4182
    %v4184 = vsel %vm1017, %v4163, 0.0
    %4185 = vadd.xlane.f32.xlu0 %v4184
    %v4186 = vpop.xlane.xlu0 %4185
    %v4187 = vsel %vm1017, %v4165, 0.0
    %4188 = vadd.xlane.f32.xlu0 %v4187
    %v4189 = vpop.xlane.xlu0 %4188
    %v4190 = vrcp.pop %v4168
    %v4191 = vrcp.pop %v4171
    %v4192 = vrcp.pop %v4174
    %v4193 = vrcp.pop %v4177
    %v4194 = vrcp.pop %v4180
    %v4195 = vrcp.pop %v4183
    %v4196 = vrcp.pop %v4186
    %v4197 = vrcp.pop %v4189
    %v4198 = vmul.f32 %v4151, %v4190
    %v4199 = vmul.f32 %v4153, %v4191
    %v4200 = vmul.f32 %v4155, %v4192
    %v4201 = vmul.f32 %v4157, %v4193
    %v4202 = vmul.f32 %v4159, %v4194
    %v4203 = vmul.f32 %v4161, %v4195
    %v4204 = vmul.f32 %v4163, %v4196
    %v4205 = vmul.f32 %v4165, %v4197
    %v4207 = vsel %vm1017, %v4198, 0
    %4209 = vmatprep.subr.mxu0 0.0
    %4210 = vmatpush1.msra.mxu0 %v3490
    %4211 = vmatprep.subr.mxu0 0.0
    %4212 = vmatpush1.msra.mxu0 0.0
    %4213 = vmatprep.subr.mxu0 0.0
    %4214 = vmatpush1.msra.mxu0 0.0
    %4215 = vmatprep.subr.mxu0 0.0
    %4216 = vmatpush1.msra.mxu0 0.0
    %4217 = vmatprep.subr.mxu0 0.0
    %4218 = vmatpush1.msra.mxu0 0.0
    %4219 = vmatprep.subr.mxu0 0.0
    %4220 = vmatpush1.msra.mxu0 0.0
    %4221 = vmatprep.subr.mxu0 0.0
    %4222 = vmatpush1.msra.mxu0 0.0
    %4223 = vmatprep.subr.mxu0 0.0
    %4224 = vmatpush1.msra.mxu0 0.0
    %4225 = vmatprep.subr.mxu0 0.0
    %4226 = vmatpush1.msra.mxu0 0.0
    %4227 = vmatprep.subr.mxu0 0.0
    %4228 = vmatpush1.msra.mxu0 0.0
    %4229 = vmatprep.subr.mxu0 0.0
    %4230 = vmatpush1.msra.mxu0 0.0
    %4231 = vmatprep.subr.mxu0 0.0
    %4232 = vmatpush1.msra.mxu0 0.0
    %4233 = vmatprep.subr.mxu0 0.0
    %4234 = vmatpush1.msra.mxu0 0.0
    %4235 = vmatprep.subr.mxu0 0.0
    %4236 = vmatpush1.msra.mxu0 0.0
    %4237 = vmatprep.subr.mxu0 0.0
    %4238 = vmatpush1.msra.mxu0 0.0
    %4239 = vmatprep.subr.mxu0 0.0
    %4240 = vmatpush1.msra.mxu0 0.0
    %4241 = vmatprep.subr.mxu0 0.0
    %4242 = vmatpush1.msra.mxu0 0.0
    %4243 = vmatprep.subr.mxu0 0.0
    %4244 = vmatpush1.msra.mxu0 0.0
    %4245 = vmatprep.subr.mxu0 0.0
    %4246 = vmatpush1.msra.mxu0 0.0
    %4247 = vmatprep.subr.mxu0 0.0
    %4248 = vmatpush1.msra.mxu0 0.0
    %4249 = vmatprep.subr.mxu0 0.0
    %4250 = vmatpush1.msra.mxu0 0.0
    %4251 = vmatprep.subr.mxu0 0.0
    %4252 = vmatpush1.msra.mxu0 0.0
    %4253 = vmatprep.subr.mxu0 0.0
    %4254 = vmatpush1.msra.mxu0 0.0
    %4255 = vmatprep.subr.mxu0 0.0
    %4256 = vmatpush1.msra.mxu0 0.0
    %4257 = vmatprep.subr.mxu0 0.0
    %4258 = vmatpush1.msra.mxu0 0.0
    %4259 = vmatprep.subr.mxu0 0.0
    %4260 = vmatpush1.msra.mxu0 0.0
    %4261 = vmatprep.subr.mxu0 0.0
    %4262 = vmatpush1.msra.mxu0 0.0
    %4263 = vmatprep.subr.mxu0 0.0
    %4264 = vmatpush1.msra.mxu0 0.0
    %4265 = vmatprep.subr.mxu0 0.0
    %4266 = vmatpush1.msra.mxu0 0.0
    %4267 = vmatprep.subr.mxu0 0.0
    %4268 = vmatpush1.msra.mxu0 0.0
    %4269 = vmatprep.subr.mxu0 0.0
    %4270 = vmatpush1.msra.mxu0 0.0
    %4271 = vmatprep.subr.mxu0 0.0
    %4272 = vmatpush1.msra.mxu0 0.0
    %4273 = vmatprep.mubr.f32.mxu0 0.0
    %4274 = vmatmul.mubr.f32.gmra.mrb[0].mxu0 %v4207
    %v4275 = vpop.f32.mrb[0].mxu0
    %v4276 = vadd.f32 0.0, %v4275
    %v4277 = vpop.f32.mrb[0].mxu0
    %4278 = vdwg.mxu0
    %s4279 = scalar_lea.vmem %s5, 64
    %v4280 = vld [vmem:[%s4279] sm:$0xff]
    %v4281 = vld [vmem:[%s4279 + $0x8] sm:$0xff]
    %v4282 = vpack.c.bf16 %v4276, %v4276
    %4284 = vrot.lane.b32.xlu0 %v3490, 112
    %v4285 = vpop.permute.xlu0 %4284
    %v4288 = vsel %vm1017, %v4199, 0
    %4290 = vmatprep.subr.mxu0 0.0
    %4291 = vmatpush1.msra.mxu0 %v4285
    %4292 = vmatprep.subr.mxu0 0.0
    %4293 = vmatpush1.msra.mxu0 0.0
    %4294 = vmatprep.subr.mxu0 0.0
    %4295 = vmatpush1.msra.mxu0 0.0
    %4296 = vmatprep.subr.mxu0 0.0
    %4297 = vmatpush1.msra.mxu0 0.0
    %4298 = vmatprep.subr.mxu0 0.0
    %4299 = vmatpush1.msra.mxu0 0.0
    %4300 = vmatprep.subr.mxu0 0.0
    %4301 = vmatpush1.msra.mxu0 0.0
    %4302 = vmatprep.subr.mxu0 0.0
    %4303 = vmatpush1.msra.mxu0 0.0
    %4304 = vmatprep.subr.mxu0 0.0
    %4305 = vmatpush1.msra.mxu0 0.0
    %4306 = vmatprep.subr.mxu0 0.0
    %4307 = vmatpush1.msra.mxu0 0.0
    %4308 = vmatprep.subr.mxu0 0.0
    %4309 = vmatpush1.msra.mxu0 0.0
    %4310 = vmatprep.subr.mxu0 0.0
    %4311 = vmatpush1.msra.mxu0 0.0
    %4312 = vmatprep.subr.mxu0 0.0
    %4313 = vmatpush1.msra.mxu0 0.0
    %4314 = vmatprep.subr.mxu0 0.0
    %4315 = vmatpush1.msra.mxu0 0.0
    %4316 = vmatprep.subr.mxu0 0.0
    %4317 = vmatpush1.msra.mxu0 0.0
    %4318 = vmatprep.subr.mxu0 0.0
    %4319 = vmatpush1.msra.mxu0 0.0
    %4320 = vmatprep.subr.mxu0 0.0
    %4321 = vmatpush1.msra.mxu0 0.0
    %4322 = vmatprep.subr.mxu0 0.0
    %4323 = vmatpush1.msra.mxu0 0.0
    %4324 = vmatprep.subr.mxu0 0.0
    %4325 = vmatpush1.msra.mxu0 0.0
    %4326 = vmatprep.subr.mxu0 0.0
    %4327 = vmatpush1.msra.mxu0 0.0
    %4328 = vmatprep.subr.mxu0 0.0
    %4329 = vmatpush1.msra.mxu0 0.0
    %4330 = vmatprep.subr.mxu0 0.0
    %4331 = vmatpush1.msra.mxu0 0.0
    %4332 = vmatprep.subr.mxu0 0.0
    %4333 = vmatpush1.msra.mxu0 0.0
    %4334 = vmatprep.subr.mxu0 0.0
    %4335 = vmatpush1.msra.mxu0 0.0
    %4336 = vmatprep.subr.mxu0 0.0
    %4337 = vmatpush1.msra.mxu0 0.0
    %4338 = vmatprep.subr.mxu0 0.0
    %4339 = vmatpush1.msra.mxu0 0.0
    %4340 = vmatprep.subr.mxu0 0.0
    %4341 = vmatpush1.msra.mxu0 0.0
    %4342 = vmatprep.subr.mxu0 0.0
    %4343 = vmatpush1.msra.mxu0 0.0
    %4344 = vmatprep.subr.mxu0 0.0
    %4345 = vmatpush1.msra.mxu0 0.0
    %4346 = vmatprep.subr.mxu0 0.0
    %4347 = vmatpush1.msra.mxu0 0.0
    %4348 = vmatprep.subr.mxu0 0.0
    %4349 = vmatpush1.msra.mxu0 0.0
    %4350 = vmatprep.subr.mxu0 0.0
    %4351 = vmatpush1.msra.mxu0 0.0
    %4352 = vmatprep.subr.mxu0 0.0
    %4353 = vmatpush1.msra.mxu0 0.0
    %4354 = vmatprep.mubr.f32.mxu0 0.0
    %4355 = vmatmul.mubr.f32.gmra.mrb[0].mxu0 %v4288
    %v4356 = vpop.f32.mrb[0].mxu0
    %v4357 = vadd.f32 0.0, %v4356
    %v4358 = vpop.f32.mrb[0].mxu0
    %4359 = vdwg.mxu0
    %v4360 = vld [vmem:[%s4279 + $0x10] sm:$0xff]
    %v4361 = vld [vmem:[%s4279 + $0x18] sm:$0xff]
    %v4362 = vpack.c.bf16 %v4357, %v4357
    %v4365 = vunpack.c.l.b16 %v4360
    %v4366 = vunpack.c.h.b16 %v4360
    %v4367 = vunpack.c.l.b16 %v4361
    %v4368 = vunpack.c.h.b16 %v4361
    %v4369 = vpack.c.b16 %v4367, %v4365
    %v4370 = vpack.c.b16 %v4368, %v4366
    %v4374 = vsel %vm397, %v4362, 0
    %4376 = vmatprep.subr.bf16.mxu0 %v4370
    %4377 = vmatpush1.bf16.msra.mxu0 %v4369
    %4378 = vmatprep.subr.bf16.mxu0 0
    %4379 = vmatpush1.bf16.msra.mxu0 0
    %4380 = vmatprep.subr.bf16.mxu0 0
    %4381 = vmatpush1.bf16.msra.mxu0 0
    %4382 = vmatprep.subr.bf16.mxu0 0
    %4383 = vmatpush1.bf16.msra.mxu0 0
    %4384 = vmatprep.subr.bf16.mxu0 0
    %4385 = vmatpush1.bf16.msra.mxu0 0
    %4386 = vmatprep.subr.bf16.mxu0 0
    %4387 = vmatpush1.bf16.msra.mxu0 0
    %4388 = vmatprep.subr.bf16.mxu0 0
    %4389 = vmatpush1.bf16.msra.mxu0 0
    %4390 = vmatprep.subr.bf16.mxu0 0
    %4391 = vmatpush1.bf16.msra.mxu0 0
    %4392 = vmatprep.subr.bf16.mxu0 0
    %4393 = vmatpush1.bf16.msra.mxu0 0
    %4394 = vmatprep.subr.bf16.mxu0 0
    %4395 = vmatpush1.bf16.msra.mxu0 0
    %4396 = vmatprep.subr.bf16.mxu0 0
    %4397 = vmatpush1.bf16.msra.mxu0 0
    %4398 = vmatprep.subr.bf16.mxu0 0
    %4399 = vmatpush1.bf16.msra.mxu0 0
    %4400 = vmatprep.subr.bf16.mxu0 0
    %4401 = vmatpush1.bf16.msra.mxu0 0
    %4402 = vmatprep.subr.bf16.mxu0 0
    %4403 = vmatpush1.bf16.msra.mxu0 0
    %4404 = vmatprep.subr.bf16.mxu0 0
    %4405 = vmatpush1.bf16.msra.mxu0 0
    %4406 = vmatprep.subr.bf16.mxu0 0
    %4407 = vmatpush1.bf16.msra.mxu0 0
    %4408 = vmatprep.mubr.bf16.mxu0 0
    %4409 = vmatmul.mubr.bf16.gmra.mrb[0].mxu0 %v4374
    %v4410 = vpop.f32.mrb[0].mxu0
    %v4411 = vadd.f32 0.0, %v4410
    %v4412 = vpop.f32.mrb[0].mxu0
    %v4413 = vadd.f32 0.0, %v4412
    %v4414 = vpop.f32.mrb[0].mxu0
    %v4415 = vpop.f32.mrb[0].mxu0
    %4416 = vdwg.mxu0
    %v4419 = vunpack.c.l.b16 %v4280
    %v4420 = vunpack.c.h.b16 %v4280
    %v4421 = vunpack.c.l.b16 %v4281
    %v4422 = vunpack.c.h.b16 %v4281
    %v4423 = vpack.c.b16 %v4421, %v4419
    %v4424 = vpack.c.b16 %v4422, %v4420
    %v4428 = vsel %vm397, %v4282, 0
    %4430 = vmatprep.subr.bf16.mxu0 %v4424
    %4431 = vmatpush1.bf16.msra.mxu0 %v4423
    %4432 = vmatprep.subr.bf16.mxu0 0
    %4433 = vmatpush1.bf16.msra.mxu0 0
    %4434 = vmatprep.subr.bf16.mxu0 0
    %4435 = vmatpush1.bf16.msra.mxu0 0
    %4436 = vmatprep.subr.bf16.mxu0 0
    %4437 = vmatpush1.bf16.msra.mxu0 0
    %4438 = vmatprep.subr.bf16.mxu0 0
    %4439 = vmatpush1.bf16.msra.mxu0 0
    %4440 = vmatprep.subr.bf16.mxu0 0
    %4441 = vmatpush1.bf16.msra.mxu0 0
    %4442 = vmatprep.subr.bf16.mxu0 0
    %4443 = vmatpush1.bf16.msra.mxu0 0
    %4444 = vmatprep.subr.bf16.mxu0 0
    %4445 = vmatpush1.bf16.msra.mxu0 0
    %4446 = vmatprep.subr.bf16.mxu0 0
    %4447 = vmatpush1.bf16.msra.mxu0 0
    %4448 = vmatprep.subr.bf16.mxu0 0
    %4449 = vmatpush1.bf16.msra.mxu0 0
    %4450 = vmatprep.subr.bf16.mxu0 0
    %4451 = vmatpush1.bf16.msra.mxu0 0
    %4452 = vmatprep.subr.bf16.mxu0 0
    %4453 = vmatpush1.bf16.msra.mxu0 0
    %4454 = vmatprep.subr.bf16.mxu0 0
    %4455 = vmatpush1.bf16.msra.mxu0 0
    %4456 = vmatprep.subr.bf16.mxu0 0
    %4457 = vmatpush1.bf16.msra.mxu0 0
    %4458 = vmatprep.subr.bf16.mxu0 0
    %4459 = vmatpush1.bf16.msra.mxu0 0
    %4460 = vmatprep.subr.bf16.mxu0 0
    %4461 = vmatpush1.bf16.msra.mxu0 0
    %4462 = vmatprep.mubr.bf16.mxu0 0
    %4463 = vmatmul.mubr.bf16.gmra.mrb[0].mxu0 %v4428
    %v4464 = vpop.f32.mrb[0].mxu0
    %v4465 = vadd.f32 %v4411, %v4464
    %v4466 = vpop.f32.mrb[0].mxu0
    %v4467 = vadd.f32 %v4413, %v4466
    %v4468 = vpop.f32.mrb[0].mxu0
    %v4469 = vpop.f32.mrb[0].mxu0
    %4470 = vdwg.mxu0
    %4471 = vrot.lane.b32.xlu0 %v3490, 96
    %v4472 = vpop.permute.xlu0 %4471
    %v4475 = vsel %vm1017, %v4200, 0
    %4477 = vmatprep.subr.mxu0 0.0
    %4478 = vmatpush1.msra.mxu0 %v4472
    %4479 = vmatprep.subr.mxu0 0.0
    %4480 = vmatpush1.msra.mxu0 0.0
    %4481 = vmatprep.subr.mxu0 0.0
    %4482 = vmatpush1.msra.mxu0 0.0
    %4483 = vmatprep.subr.mxu0 0.0
    %4484 = vmatpush1.msra.mxu0 0.0
    %4485 = vmatprep.subr.mxu0 0.0
    %4486 = vmatpush1.msra.mxu0 0.0
    %4487 = vmatprep.subr.mxu0 0.0
    %4488 = vmatpush1.msra.mxu0 0.0
    %4489 = vmatprep.subr.mxu0 0.0
    %4490 = vmatpush1.msra.mxu0 0.0
    %4491 = vmatprep.subr.mxu0 0.0
    %4492 = vmatpush1.msra.mxu0 0.0
    %4493 = vmatprep.subr.mxu0 0.0
    %4494 = vmatpush1.msra.mxu0 0.0
    %4495 = vmatprep.subr.mxu0 0.0
    %4496 = vmatpush1.msra.mxu0 0.0
    %4497 = vmatprep.subr.mxu0 0.0
    %4498 = vmatpush1.msra.mxu0 0.0
    %4499 = vmatprep.subr.mxu0 0.0
    %4500 = vmatpush1.msra.mxu0 0.0
    %4501 = vmatprep.subr.mxu0 0.0
    %4502 = vmatpush1.msra.mxu0 0.0
    %4503 = vmatprep.subr.mxu0 0.0
    %4504 = vmatpush1.msra.mxu0 0.0
    %4505 = vmatprep.subr.mxu0 0.0
    %4506 = vmatpush1.msra.mxu0 0.0
    %4507 = vmatprep.subr.mxu0 0.0
    %4508 = vmatpush1.msra.mxu0 0.0
    %4509 = vmatprep.subr.mxu0 0.0
    %4510 = vmatpush1.msra.mxu0 0.0
    %4511 = vmatprep.subr.mxu0 0.0
    %4512 = vmatpush1.msra.mxu0 0.0
    %4513 = vmatprep.subr.mxu0 0.0
    %4514 = vmatpush1.msra.mxu0 0.0
    %4515 = vmatprep.subr.mxu0 0.0
    %4516 = vmatpush1.msra.mxu0 0.0
    %4517 = vmatprep.subr.mxu0 0.0
    %4518 = vmatpush1.msra.mxu0 0.0
    %4519 = vmatprep.subr.mxu0 0.0
    %4520 = vmatpush1.msra.mxu0 0.0
    %4521 = vmatprep.subr.mxu0 0.0
    %4522 = vmatpush1.msra.mxu0 0.0
    %4523 = vmatprep.subr.mxu0 0.0
    %4524 = vmatpush1.msra.mxu0 0.0
    %4525 = vmatprep.subr.mxu0 0.0
    %4526 = vmatpush1.msra.mxu0 0.0
    %4527 = vmatprep.subr.mxu0 0.0
    %4528 = vmatpush1.msra.mxu0 0.0
    %4529 = vmatprep.subr.mxu0 0.0
    %4530 = vmatpush1.msra.mxu0 0.0
    %4531 = vmatprep.subr.mxu0 0.0
    %4532 = vmatpush1.msra.mxu0 0.0
    %4533 = vmatprep.subr.mxu0 0.0
    %4534 = vmatpush1.msra.mxu0 0.0
    %4535 = vmatprep.subr.mxu0 0.0
    %4536 = vmatpush1.msra.mxu0 0.0
    %4537 = vmatprep.subr.mxu0 0.0
    %4538 = vmatpush1.msra.mxu0 0.0
    %4539 = vmatprep.subr.mxu0 0.0
    %4540 = vmatpush1.msra.mxu0 0.0
    %4541 = vmatprep.mubr.f32.mxu0 0.0
    %4542 = vmatmul.mubr.f32.gmra.mrb[0].mxu0 %v4475
    %v4543 = vpop.f32.mrb[0].mxu0
    %v4544 = vadd.f32 0.0, %v4543
    %v4545 = vpop.f32.mrb[0].mxu0
    %4546 = vdwg.mxu0
    %v4547 = vld [vmem:[%s4279 + $0x20] sm:$0xff]
    %v4548 = vld [vmem:[%s4279 + $0x28] sm:$0xff]
    %v4549 = vpack.c.bf16 %v4544, %v4544
    %v4552 = vunpack.c.l.b16 %v4547
    %v4553 = vunpack.c.h.b16 %v4547
    %v4554 = vunpack.c.l.b16 %v4548
    %v4555 = vunpack.c.h.b16 %v4548
    %v4556 = vpack.c.b16 %v4554, %v4552
    %v4557 = vpack.c.b16 %v4555, %v4553
    %v4561 = vsel %vm397, %v4549, 0
    %4563 = vmatprep.subr.bf16.mxu0 %v4557
    %4564 = vmatpush1.bf16.msra.mxu0 %v4556
    %4565 = vmatprep.subr.bf16.mxu0 0
    %4566 = vmatpush1.bf16.msra.mxu0 0
    %4567 = vmatprep.subr.bf16.mxu0 0
    %4568 = vmatpush1.bf16.msra.mxu0 0
    %4569 = vmatprep.subr.bf16.mxu0 0
    %4570 = vmatpush1.bf16.msra.mxu0 0
    %4571 = vmatprep.subr.bf16.mxu0 0
    %4572 = vmatpush1.bf16.msra.mxu0 0
    %4573 = vmatprep.subr.bf16.mxu0 0
    %4574 = vmatpush1.bf16.msra.mxu0 0
    %4575 = vmatprep.subr.bf16.mxu0 0
    %4576 = vmatpush1.bf16.msra.mxu0 0
    %4577 = vmatprep.subr.bf16.mxu0 0
    %4578 = vmatpush1.bf16.msra.mxu0 0
    %4579 = vmatprep.subr.bf16.mxu0 0
    %4580 = vmatpush1.bf16.msra.mxu0 0
    %4581 = vmatprep.subr.bf16.mxu0 0
    %4582 = vmatpush1.bf16.msra.mxu0 0
    %4583 = vmatprep.subr.bf16.mxu0 0
    %4584 = vmatpush1.bf16.msra.mxu0 0
    %4585 = vmatprep.subr.bf16.mxu0 0
    %4586 = vmatpush1.bf16.msra.mxu0 0
    %4587 = vmatprep.subr.bf16.mxu0 0
    %4588 = vmatpush1.bf16.msra.mxu0 0
    %4589 = vmatprep.subr.bf16.mxu0 0
    %4590 = vmatpush1.bf16.msra.mxu0 0
    %4591 = vmatprep.subr.bf16.mxu0 0
    %4592 = vmatpush1.bf16.msra.mxu0 0
    %4593 = vmatprep.subr.bf16.mxu0 0
    %4594 = vmatpush1.bf16.msra.mxu0 0
    %4595 = vmatprep.mubr.bf16.mxu0 0
    %4596 = vmatmul.mubr.bf16.gmra.mrb[0].mxu0 %v4561
    %v4597 = vpop.f32.mrb[0].mxu0
    %v4598 = vadd.f32 0.0, %v4597
    %v4599 = vpop.f32.mrb[0].mxu0
    %v4600 = vadd.f32 0.0, %v4599
    %v4601 = vpop.f32.mrb[0].mxu0
    %v4602 = vpop.f32.mrb[0].mxu0
    %4603 = vdwg.mxu0
    %v4604 = vadd.f32 %v4465, %v4598
    %v4605 = vadd.f32 %v4467, %v4600
    %4606 = vrot.lane.b32.xlu0 %v3490, 80
    %v4607 = vpop.permute.xlu0 %4606
    %v4610 = vsel %vm1017, %v4201, 0
    %4612 = vmatprep.subr.mxu0 0.0
    %4613 = vmatpush1.msra.mxu0 %v4607
    %4614 = vmatprep.subr.mxu0 0.0
    %4615 = vmatpush1.msra.mxu0 0.0
    %4616 = vmatprep.subr.mxu0 0.0
    %4617 = vmatpush1.msra.mxu0 0.0
    %4618 = vmatprep.subr.mxu0 0.0
    %4619 = vmatpush1.msra.mxu0 0.0
    %4620 = vmatprep.subr.mxu0 0.0
    %4621 = vmatpush1.msra.mxu0 0.0
    %4622 = vmatprep.subr.mxu0 0.0
    %4623 = vmatpush1.msra.mxu0 0.0
    %4624 = vmatprep.subr.mxu0 0.0
    %4625 = vmatpush1.msra.mxu0 0.0
    %4626 = vmatprep.subr.mxu0 0.0
    %4627 = vmatpush1.msra.mxu0 0.0
    %4628 = vmatprep.subr.mxu0 0.0
    %4629 = vmatpush1.msra.mxu0 0.0
    %4630 = vmatprep.subr.mxu0 0.0
    %4631 = vmatpush1.msra.mxu0 0.0
    %4632 = vmatprep.subr.mxu0 0.0
    %4633 = vmatpush1.msra.mxu0 0.0
    %4634 = vmatprep.subr.mxu0 0.0
    %4635 = vmatpush1.msra.mxu0 0.0
    %4636 = vmatprep.subr.mxu0 0.0
    %4637 = vmatpush1.msra.mxu0 0.0
    %4638 = vmatprep.subr.mxu0 0.0
    %4639 = vmatpush1.msra.mxu0 0.0
    %4640 = vmatprep.subr.mxu0 0.0
    %4641 = vmatpush1.msra.mxu0 0.0
    %4642 = vmatprep.subr.mxu0 0.0
    %4643 = vmatpush1.msra.mxu0 0.0
    %4644 = vmatprep.subr.mxu0 0.0
    %4645 = vmatpush1.msra.mxu0 0.0
    %4646 = vmatprep.subr.mxu0 0.0
    %4647 = vmatpush1.msra.mxu0 0.0
    %4648 = vmatprep.subr.mxu0 0.0
    %4649 = vmatpush1.msra.mxu0 0.0
    %4650 = vmatprep.subr.mxu0 0.0
    %4651 = vmatpush1.msra.mxu0 0.0
    %4652 = vmatprep.subr.mxu0 0.0
    %4653 = vmatpush1.msra.mxu0 0.0
    %4654 = vmatprep.subr.mxu0 0.0
    %4655 = vmatpush1.msra.mxu0 0.0
    %4656 = vmatprep.subr.mxu0 0.0
    %4657 = vmatpush1.msra.mxu0 0.0
    %4658 = vmatprep.subr.mxu0 0.0
    %4659 = vmatpush1.msra.mxu0 0.0
    %4660 = vmatprep.subr.mxu0 0.0
    %4661 = vmatpush1.msra.mxu0 0.0
    %4662 = vmatprep.subr.mxu0 0.0
    %4663 = vmatpush1.msra.mxu0 0.0
    %4664 = vmatprep.subr.mxu0 0.0
    %4665 = vmatpush1.msra.mxu0 0.0
    %4666 = vmatprep.subr.mxu0 0.0
    %4667 = vmatpush1.msra.mxu0 0.0
    %4668 = vmatprep.subr.mxu0 0.0
    %4669 = vmatpush1.msra.mxu0 0.0
    %4670 = vmatprep.subr.mxu0 0.0
    %4671 = vmatpush1.msra.mxu0 0.0
    %4672 = vmatprep.subr.mxu0 0.0
    %4673 = vmatpush1.msra.mxu0 0.0
    %4674 = vmatprep.subr.mxu0 0.0
    %4675 = vmatpush1.msra.mxu0 0.0
    %4676 = vmatprep.mubr.f32.mxu0 0.0
    %4677 = vmatmul.mubr.f32.gmra.mrb[0].mxu0 %v4610
    %v4678 = vpop.f32.mrb[0].mxu0
    %v4679 = vadd.f32 0.0, %v4678
    %v4680 = vpop.f32.mrb[0].mxu0
    %4681 = vdwg.mxu0
    %v4682 = vld [vmem:[%s4279 + $0x30] sm:$0xff]
    %v4683 = vld [vmem:[%s4279 + $0x38] sm:$0xff]
    %v4684 = vpack.c.bf16 %v4679, %v4679
    %v4687 = vunpack.c.l.b16 %v4682
    %v4688 = vunpack.c.h.b16 %v4682
    %v4689 = vunpack.c.l.b16 %v4683
    %v4690 = vunpack.c.h.b16 %v4683
    %v4691 = vpack.c.b16 %v4689, %v4687
    %v4692 = vpack.c.b16 %v4690, %v4688
    %v4696 = vsel %vm397, %v4684, 0
    %4698 = vmatprep.subr.bf16.mxu0 %v4692
    %4699 = vmatpush1.bf16.msra.mxu0 %v4691
    %4700 = vmatprep.subr.bf16.mxu0 0
    %4701 = vmatpush1.bf16.msra.mxu0 0
    %4702 = vmatprep.subr.bf16.mxu0 0
    %4703 = vmatpush1.bf16.msra.mxu0 0
    %4704 = vmatprep.subr.bf16.mxu0 0
    %4705 = vmatpush1.bf16.msra.mxu0 0
    %4706 = vmatprep.subr.bf16.mxu0 0
    %4707 = vmatpush1.bf16.msra.mxu0 0
    %4708 = vmatprep.subr.bf16.mxu0 0
    %4709 = vmatpush1.bf16.msra.mxu0 0
    %4710 = vmatprep.subr.bf16.mxu0 0
    %4711 = vmatpush1.bf16.msra.mxu0 0
    %4712 = vmatprep.subr.bf16.mxu0 0
    %4713 = vmatpush1.bf16.msra.mxu0 0
    %4714 = vmatprep.subr.bf16.mxu0 0
    %4715 = vmatpush1.bf16.msra.mxu0 0
    %4716 = vmatprep.subr.bf16.mxu0 0
    %4717 = vmatpush1.bf16.msra.mxu0 0
    %4718 = vmatprep.subr.bf16.mxu0 0
    %4719 = vmatpush1.bf16.msra.mxu0 0
    %4720 = vmatprep.subr.bf16.mxu0 0
    %4721 = vmatpush1.bf16.msra.mxu0 0
    %4722 = vmatprep.subr.bf16.mxu0 0
    %4723 = vmatpush1.bf16.msra.mxu0 0
    %4724 = vmatprep.subr.bf16.mxu0 0
    %4725 = vmatpush1.bf16.msra.mxu0 0
    %4726 = vmatprep.subr.bf16.mxu0 0
    %4727 = vmatpush1.bf16.msra.mxu0 0
    %4728 = vmatprep.subr.bf16.mxu0 0
    %4729 = vmatpush1.bf16.msra.mxu0 0
    %4730 = vmatprep.mubr.bf16.mxu0 0
    %4731 = vmatmul.mubr.bf16.gmra.mrb[0].mxu0 %v4696
    %v4732 = vpop.f32.mrb[0].mxu0
    %v4733 = vadd.f32 0.0, %v4732
    %v4734 = vpop.f32.mrb[0].mxu0
    %v4735 = vadd.f32 0.0, %v4734
    %v4736 = vpop.f32.mrb[0].mxu0
    %v4737 = vpop.f32.mrb[0].mxu0
    %4738 = vdwg.mxu0
    %v4739 = vadd.f32 %v4604, %v4733
    %v4740 = vadd.f32 %v4605, %v4735
    %v4742 = vsel %vm1017, %v4202, 0
    %4744 = vmatprep.subr.mxu0 0.0
    %4745 = vmatpush1.msra.mxu0 %v3494
    %4746 = vmatprep.subr.mxu0 0.0
    %4747 = vmatpush1.msra.mxu0 0.0
    %4748 = vmatprep.subr.mxu0 0.0
    %4749 = vmatpush1.msra.mxu0 0.0
    %4750 = vmatprep.subr.mxu0 0.0
    %4751 = vmatpush1.msra.mxu0 0.0
    %4752 = vmatprep.subr.mxu0 0.0
    %4753 = vmatpush1.msra.mxu0 0.0
    %4754 = vmatprep.subr.mxu0 0.0
    %4755 = vmatpush1.msra.mxu0 0.0
    %4756 = vmatprep.subr.mxu0 0.0
    %4757 = vmatpush1.msra.mxu0 0.0
    %4758 = vmatprep.subr.mxu0 0.0
    %4759 = vmatpush1.msra.mxu0 0.0
    %4760 = vmatprep.subr.mxu0 0.0
    %4761 = vmatpush1.msra.mxu0 0.0
    %4762 = vmatprep.subr.mxu0 0.0
    %4763 = vmatpush1.msra.mxu0 0.0
    %4764 = vmatprep.subr.mxu0 0.0
    %4765 = vmatpush1.msra.mxu0 0.0
    %4766 = vmatprep.subr.mxu0 0.0
    %4767 = vmatpush1.msra.mxu0 0.0
    %4768 = vmatprep.subr.mxu0 0.0
    %4769 = vmatpush1.msra.mxu0 0.0
    %4770 = vmatprep.subr.mxu0 0.0
    %4771 = vmatpush1.msra.mxu0 0.0
    %4772 = vmatprep.subr.mxu0 0.0
    %4773 = vmatpush1.msra.mxu0 0.0
    %4774 = vmatprep.subr.mxu0 0.0
    %4775 = vmatpush1.msra.mxu0 0.0
    %4776 = vmatprep.subr.mxu0 0.0
    %4777 = vmatpush1.msra.mxu0 0.0
    %4778 = vmatprep.subr.mxu0 0.0
    %4779 = vmatpush1.msra.mxu0 0.0
    %4780 = vmatprep.subr.mxu0 0.0
    %4781 = vmatpush1.msra.mxu0 0.0
    %4782 = vmatprep.subr.mxu0 0.0
    %4783 = vmatpush1.msra.mxu0 0.0
    %4784 = vmatprep.subr.mxu0 0.0
    %4785 = vmatpush1.msra.mxu0 0.0
    %4786 = vmatprep.subr.mxu0 0.0
    %4787 = vmatpush1.msra.mxu0 0.0
    %4788 = vmatprep.subr.mxu0 0.0
    %4789 = vmatpush1.msra.mxu0 0.0
    %4790 = vmatprep.subr.mxu0 0.0
    %4791 = vmatpush1.msra.mxu0 0.0
    %4792 = vmatprep.subr.mxu0 0.0
    %4793 = vmatpush1.msra.mxu0 0.0
    %4794 = vmatprep.subr.mxu0 0.0
    %4795 = vmatpush1.msra.mxu0 0.0
    %4796 = vmatprep.subr.mxu0 0.0
    %4797 = vmatpush1.msra.mxu0 0.0
    %4798 = vmatprep.subr.mxu0 0.0
    %4799 = vmatpush1.msra.mxu0 0.0
    %4800 = vmatprep.subr.mxu0 0.0
    %4801 = vmatpush1.msra.mxu0 0.0
    %4802 = vmatprep.subr.mxu0 0.0
    %4803 = vmatpush1.msra.mxu0 0.0
    %4804 = vmatprep.subr.mxu0 0.0
    %4805 = vmatpush1.msra.mxu0 0.0
    %4806 = vmatprep.subr.mxu0 0.0
    %4807 = vmatpush1.msra.mxu0 0.0
    %4808 = vmatprep.mubr.f32.mxu0 0.0
    %4809 = vmatmul.mubr.f32.gmra.mrb[0].mxu0 %v4742
    %v4810 = vpop.f32.mrb[0].mxu0
    %v4811 = vadd.f32 0.0, %v4810
    %v4812 = vpop.f32.mrb[0].mxu0
    %4813 = vdwg.mxu0
    %v4814 = vpack.c.bf16 %v4811, %v4811
    %4816 = vrot.lane.b32.xlu0 %v3494, 112
    %v4817 = vpop.permute.xlu0 %4816
    %v4820 = vsel %vm1017, %v4203, 0
    %4822 = vmatprep.subr.mxu0 0.0
    %4823 = vmatpush1.msra.mxu0 %v4817
    %4824 = vmatprep.subr.mxu0 0.0
    %4825 = vmatpush1.msra.mxu0 0.0
    %4826 = vmatprep.subr.mxu0 0.0
    %4827 = vmatpush1.msra.mxu0 0.0
    %4828 = vmatprep.subr.mxu0 0.0
    %4829 = vmatpush1.msra.mxu0 0.0
    %4830 = vmatprep.subr.mxu0 0.0
    %4831 = vmatpush1.msra.mxu0 0.0
    %4832 = vmatprep.subr.mxu0 0.0
    %4833 = vmatpush1.msra.mxu0 0.0
    %4834 = vmatprep.subr.mxu0 0.0
    %4835 = vmatpush1.msra.mxu0 0.0
    %4836 = vmatprep.subr.mxu0 0.0
    %4837 = vmatpush1.msra.mxu0 0.0
    %4838 = vmatprep.subr.mxu0 0.0
    %4839 = vmatpush1.msra.mxu0 0.0
    %4840 = vmatprep.subr.mxu0 0.0
    %4841 = vmatpush1.msra.mxu0 0.0
    %4842 = vmatprep.subr.mxu0 0.0
    %4843 = vmatpush1.msra.mxu0 0.0
    %4844 = vmatprep.subr.mxu0 0.0
    %4845 = vmatpush1.msra.mxu0 0.0
    %4846 = vmatprep.subr.mxu0 0.0
    %4847 = vmatpush1.msra.mxu0 0.0
    %4848 = vmatprep.subr.mxu0 0.0
    %4849 = vmatpush1.msra.mxu0 0.0
    %4850 = vmatprep.subr.mxu0 0.0
    %4851 = vmatpush1.msra.mxu0 0.0
    %4852 = vmatprep.subr.mxu0 0.0
    %4853 = vmatpush1.msra.mxu0 0.0
    %4854 = vmatprep.subr.mxu0 0.0
    %4855 = vmatpush1.msra.mxu0 0.0
    %4856 = vmatprep.subr.mxu0 0.0
    %4857 = vmatpush1.msra.mxu0 0.0
    %4858 = vmatprep.subr.mxu0 0.0
    %4859 = vmatpush1.msra.mxu0 0.0
    %4860 = vmatprep.subr.mxu0 0.0
    %4861 = vmatpush1.msra.mxu0 0.0
    %4862 = vmatprep.subr.mxu0 0.0
    %4863 = vmatpush1.msra.mxu0 0.0
    %4864 = vmatprep.subr.mxu0 0.0
    %4865 = vmatpush1.msra.mxu0 0.0
    %4866 = vmatprep.subr.mxu0 0.0
    %4867 = vmatpush1.msra.mxu0 0.0
    %4868 = vmatprep.subr.mxu0 0.0
    %4869 = vmatpush1.msra.mxu0 0.0
    %4870 = vmatprep.subr.mxu0 0.0
    %4871 = vmatpush1.msra.mxu0 0.0
    %4872 = vmatprep.subr.mxu0 0.0
    %4873 = vmatpush1.msra.mxu0 0.0
    %4874 = vmatprep.subr.mxu0 0.0
    %4875 = vmatpush1.msra.mxu0 0.0
    %4876 = vmatprep.subr.mxu0 0.0
    %4877 = vmatpush1.msra.mxu0 0.0
    %4878 = vmatprep.subr.mxu0 0.0
    %4879 = vmatpush1.msra.mxu0 0.0
    %4880 = vmatprep.subr.mxu0 0.0
    %4881 = vmatpush1.msra.mxu0 0.0
    %4882 = vmatprep.subr.mxu0 0.0
    %4883 = vmatpush1.msra.mxu0 0.0
    %4884 = vmatprep.subr.mxu0 0.0
    %4885 = vmatpush1.msra.mxu0 0.0
    %4886 = vmatprep.mubr.f32.mxu0 0.0
    %4887 = vmatmul.mubr.f32.gmra.mrb[0].mxu0 %v4820
    %v4888 = vpop.f32.mrb[0].mxu0
    %v4889 = vadd.f32 0.0, %v4888
    %v4890 = vpop.f32.mrb[0].mxu0
    %4891 = vdwg.mxu0
    %v4892 = vpack.c.bf16 %v4889, %v4889
    %v4894 = vsel %vm397, %v4892, 0
    %4896 = vmatprep.subr.bf16.mxu0 %v4370
    %4897 = vmatpush1.bf16.msra.mxu0 %v4369
    %4898 = vmatprep.subr.bf16.mxu0 0
    %4899 = vmatpush1.bf16.msra.mxu0 0
    %4900 = vmatprep.subr.bf16.mxu0 0
    %4901 = vmatpush1.bf16.msra.mxu0 0
    %4902 = vmatprep.subr.bf16.mxu0 0
    %4903 = vmatpush1.bf16.msra.mxu0 0
    %4904 = vmatprep.subr.bf16.mxu0 0
    %4905 = vmatpush1.bf16.msra.mxu0 0
    %4906 = vmatprep.subr.bf16.mxu0 0
    %4907 = vmatpush1.bf16.msra.mxu0 0
    %4908 = vmatprep.subr.bf16.mxu0 0
    %4909 = vmatpush1.bf16.msra.mxu0 0
    %4910 = vmatprep.subr.bf16.mxu0 0
    %4911 = vmatpush1.bf16.msra.mxu0 0
    %4912 = vmatprep.subr.bf16.mxu0 0
    %4913 = vmatpush1.bf16.msra.mxu0 0
    %4914 = vmatprep.subr.bf16.mxu0 0
    %4915 = vmatpush1.bf16.msra.mxu0 0
    %4916 = vmatprep.subr.bf16.mxu0 0
    %4917 = vmatpush1.bf16.msra.mxu0 0
    %4918 = vmatprep.subr.bf16.mxu0 0
    %4919 = vmatpush1.bf16.msra.mxu0 0
    %4920 = vmatprep.subr.bf16.mxu0 0
    %4921 = vmatpush1.bf16.msra.mxu0 0
    %4922 = vmatprep.subr.bf16.mxu0 0
    %4923 = vmatpush1.bf16.msra.mxu0 0
    %4924 = vmatprep.subr.bf16.mxu0 0
    %4925 = vmatpush1.bf16.msra.mxu0 0
    %4926 = vmatprep.subr.bf16.mxu0 0
    %4927 = vmatpush1.bf16.msra.mxu0 0
    %4928 = vmatprep.mubr.bf16.mxu0 0
    %4929 = vmatmul.mubr.bf16.gmra.mrb[0].mxu0 %v4894
    %v4930 = vpop.f32.mrb[0].mxu0
    %v4931 = vadd.f32 0.0, %v4930
    %v4932 = vpop.f32.mrb[0].mxu0
    %v4933 = vadd.f32 0.0, %v4932
    %v4934 = vpop.f32.mrb[0].mxu0
    %v4935 = vpop.f32.mrb[0].mxu0
    %4936 = vdwg.mxu0
    %v4938 = vsel %vm397, %v4814, 0
    %4940 = vmatprep.subr.bf16.mxu0 %v4424
    %4941 = vmatpush1.bf16.msra.mxu0 %v4423
    %4942 = vmatprep.subr.bf16.mxu0 0
    %4943 = vmatpush1.bf16.msra.mxu0 0
    %4944 = vmatprep.subr.bf16.mxu0 0
    %4945 = vmatpush1.bf16.msra.mxu0 0
    %4946 = vmatprep.subr.bf16.mxu0 0
    %4947 = vmatpush1.bf16.msra.mxu0 0
    %4948 = vmatprep.subr.bf16.mxu0 0
    %4949 = vmatpush1.bf16.msra.mxu0 0
    %4950 = vmatprep.subr.bf16.mxu0 0
    %4951 = vmatpush1.bf16.msra.mxu0 0
    %4952 = vmatprep.subr.bf16.mxu0 0
    %4953 = vmatpush1.bf16.msra.mxu0 0
    %4954 = vmatprep.subr.bf16.mxu0 0
    %4955 = vmatpush1.bf16.msra.mxu0 0
    %4956 = vmatprep.subr.bf16.mxu0 0
    %4957 = vmatpush1.bf16.msra.mxu0 0
    %4958 = vmatprep.subr.bf16.mxu0 0
    %4959 = vmatpush1.bf16.msra.mxu0 0
    %4960 = vmatprep.subr.bf16.mxu0 0
    %4961 = vmatpush1.bf16.msra.mxu0 0
    %4962 = vmatprep.subr.bf16.mxu0 0
    %4963 = vmatpush1.bf16.msra.mxu0 0
    %4964 = vmatprep.subr.bf16.mxu0 0
    %4965 = vmatpush1.bf16.msra.mxu0 0
    %4966 = vmatprep.subr.bf16.mxu0 0
    %4967 = vmatpush1.bf16.msra.mxu0 0
    %4968 = vmatprep.subr.bf16.mxu0 0
    %4969 = vmatpush1.bf16.msra.mxu0 0
    %4970 = vmatprep.subr.bf16.mxu0 0
    %4971 = vmatpush1.bf16.msra.mxu0 0
    %4972 = vmatprep.mubr.bf16.mxu0 0
    %4973 = vmatmul.mubr.bf16.gmra.mrb[0].mxu0 %v4938
    %v4974 = vpop.f32.mrb[0].mxu0
    %v4975 = vadd.f32 %v4931, %v4974
    %v4976 = vpop.f32.mrb[0].mxu0
    %v4977 = vadd.f32 %v4933, %v4976
    %v4978 = vpop.f32.mrb[0].mxu0
    %v4979 = vpop.f32.mrb[0].mxu0
    %4980 = vdwg.mxu0
    %4981 = vrot.lane.b32.xlu0 %v3494, 96
    %v4982 = vpop.permute.xlu0 %4981
    %v4985 = vsel %vm1017, %v4204, 0
    %4987 = vmatprep.subr.mxu0 0.0
    %4988 = vmatpush1.msra.mxu0 %v4982
    %4989 = vmatprep.subr.mxu0 0.0
    %4990 = vmatpush1.msra.mxu0 0.0
    %4991 = vmatprep.subr.mxu0 0.0
    %4992 = vmatpush1.msra.mxu0 0.0
    %4993 = vmatprep.subr.mxu0 0.0
    %4994 = vmatpush1.msra.mxu0 0.0
    %4995 = vmatprep.subr.mxu0 0.0
    %4996 = vmatpush1.msra.mxu0 0.0
    %4997 = vmatprep.subr.mxu0 0.0
    %4998 = vmatpush1.msra.mxu0 0.0
    %4999 = vmatprep.subr.mxu0 0.0
    %5000 = vmatpush1.msra.mxu0 0.0
    %5001 = vmatprep.subr.mxu0 0.0
    %5002 = vmatpush1.msra.mxu0 0.0
    %5003 = vmatprep.subr.mxu0 0.0
    %5004 = vmatpush1.msra.mxu0 0.0
    %5005 = vmatprep.subr.mxu0 0.0
    %5006 = vmatpush1.msra.mxu0 0.0
    %5007 = vmatprep.subr.mxu0 0.0
    %5008 = vmatpush1.msra.mxu0 0.0
    %5009 = vmatprep.subr.mxu0 0.0
    %5010 = vmatpush1.msra.mxu0 0.0
    %5011 = vmatprep.subr.mxu0 0.0
    %5012 = vmatpush1.msra.mxu0 0.0
    %5013 = vmatprep.subr.mxu0 0.0
    %5014 = vmatpush1.msra.mxu0 0.0
    %5015 = vmatprep.subr.mxu0 0.0
    %5016 = vmatpush1.msra.mxu0 0.0
    %5017 = vmatprep.subr.mxu0 0.0
    %5018 = vmatpush1.msra.mxu0 0.0
    %5019 = vmatprep.subr.mxu0 0.0
    %5020 = vmatpush1.msra.mxu0 0.0
    %5021 = vmatprep.subr.mxu0 0.0
    %5022 = vmatpush1.msra.mxu0 0.0
    %5023 = vmatprep.subr.mxu0 0.0
    %5024 = vmatpush1.msra.mxu0 0.0
    %5025 = vmatprep.subr.mxu0 0.0
    %5026 = vmatpush1.msra.mxu0 0.0
    %5027 = vmatprep.subr.mxu0 0.0
    %5028 = vmatpush1.msra.mxu0 0.0
    %5029 = vmatprep.subr.mxu0 0.0
    %5030 = vmatpush1.msra.mxu0 0.0
    %5031 = vmatprep.subr.mxu0 0.0
    %5032 = vmatpush1.msra.mxu0 0.0
    %5033 = vmatprep.subr.mxu0 0.0
    %5034 = vmatpush1.msra.mxu0 0.0
    %5035 = vmatprep.subr.mxu0 0.0
    %5036 = vmatpush1.msra.mxu0 0.0
    %5037 = vmatprep.subr.mxu0 0.0
    %5038 = vmatpush1.msra.mxu0 0.0
    %5039 = vmatprep.subr.mxu0 0.0
    %5040 = vmatpush1.msra.mxu0 0.0
    %5041 = vmatprep.subr.mxu0 0.0
    %5042 = vmatpush1.msra.mxu0 0.0
    %5043 = vmatprep.subr.mxu0 0.0
    %5044 = vmatpush1.msra.mxu0 0.0
    %5045 = vmatprep.subr.mxu0 0.0
    %5046 = vmatpush1.msra.mxu0 0.0
    %5047 = vmatprep.subr.mxu0 0.0
    %5048 = vmatpush1.msra.mxu0 0.0
    %5049 = vmatprep.subr.mxu0 0.0
    %5050 = vmatpush1.msra.mxu0 0.0
    %5051 = vmatprep.mubr.f32.mxu0 0.0
    %5052 = vmatmul.mubr.f32.gmra.mrb[0].mxu0 %v4985
    %v5053 = vpop.f32.mrb[0].mxu0
    %v5054 = vadd.f32 0.0, %v5053
    %v5055 = vpop.f32.mrb[0].mxu0
    %5056 = vdwg.mxu0
    %v5057 = vpack.c.bf16 %v5054, %v5054
    %v5059 = vsel %vm397, %v5057, 0
    %5061 = vmatprep.subr.bf16.mxu0 %v4557
    %5062 = vmatpush1.bf16.msra.mxu0 %v4556
    %5063 = vmatprep.subr.bf16.mxu0 0
    %5064 = vmatpush1.bf16.msra.mxu0 0
    %5065 = vmatprep.subr.bf16.mxu0 0
    %5066 = vmatpush1.bf16.msra.mxu0 0
    %5067 = vmatprep.subr.bf16.mxu0 0
    %5068 = vmatpush1.bf16.msra.mxu0 0
    %5069 = vmatprep.subr.bf16.mxu0 0
    %5070 = vmatpush1.bf16.msra.mxu0 0
    %5071 = vmatprep.subr.bf16.mxu0 0
    %5072 = vmatpush1.bf16.msra.mxu0 0
    %5073 = vmatprep.subr.bf16.mxu0 0
    %5074 = vmatpush1.bf16.msra.mxu0 0
    %5075 = vmatprep.subr.bf16.mxu0 0
    %5076 = vmatpush1.bf16.msra.mxu0 0
    %5077 = vmatprep.subr.bf16.mxu0 0
    %5078 = vmatpush1.bf16.msra.mxu0 0
    %5079 = vmatprep.subr.bf16.mxu0 0
    %5080 = vmatpush1.bf16.msra.mxu0 0
    %5081 = vmatprep.subr.bf16.mxu0 0
    %5082 = vmatpush1.bf16.msra.mxu0 0
    %5083 = vmatprep.subr.bf16.mxu0 0
    %5084 = vmatpush1.bf16.msra.mxu0 0
    %5085 = vmatprep.subr.bf16.mxu0 0
    %5086 = vmatpush1.bf16.msra.mxu0 0
    %5087 = vmatprep.subr.bf16.mxu0 0
    %5088 = vmatpush1.bf16.msra.mxu0 0
    %5089 = vmatprep.subr.bf16.mxu0 0
    %5090 = vmatpush1.bf16.msra.mxu0 0
    %5091 = vmatprep.subr.bf16.mxu0 0
    %5092 = vmatpush1.bf16.msra.mxu0 0
    %5093 = vmatprep.mubr.bf16.mxu0 0
    %5094 = vmatmul.mubr.bf16.gmra.mrb[0].mxu0 %v5059
    %v5095 = vpop.f32.mrb[0].mxu0
    %v5096 = vadd.f32 0.0, %v5095
    %v5097 = vpop.f32.mrb[0].mxu0
    %v5098 = vadd.f32 0.0, %v5097
    %v5099 = vpop.f32.mrb[0].mxu0
    %v5100 = vpop.f32.mrb[0].mxu0
    %5101 = vdwg.mxu0
    %v5102 = vadd.f32 %v4975, %v5096
    %v5103 = vadd.f32 %v4977, %v5098
    %5104 = vrot.lane.b32.xlu0 %v3494, 80
    %v5105 = vpop.permute.xlu0 %5104
    %v5108 = vsel %vm1017, %v4205, 0
    %5110 = vmatprep.subr.mxu0 0.0
    %5111 = vmatpush1.msra.mxu0 %v5105
    %5112 = vmatprep.subr.mxu0 0.0
    %5113 = vmatpush1.msra.mxu0 0.0
    %5114 = vmatprep.subr.mxu0 0.0
    %5115 = vmatpush1.msra.mxu0 0.0
    %5116 = vmatprep.subr.mxu0 0.0
    %5117 = vmatpush1.msra.mxu0 0.0
    %5118 = vmatprep.subr.mxu0 0.0
    %5119 = vmatpush1.msra.mxu0 0.0
    %5120 = vmatprep.subr.mxu0 0.0
    %5121 = vmatpush1.msra.mxu0 0.0
    %5122 = vmatprep.subr.mxu0 0.0
    %5123 = vmatpush1.msra.mxu0 0.0
    %5124 = vmatprep.subr.mxu0 0.0
    %5125 = vmatpush1.msra.mxu0 0.0
    %5126 = vmatprep.subr.mxu0 0.0
    %5127 = vmatpush1.msra.mxu0 0.0
    %5128 = vmatprep.subr.mxu0 0.0
    %5129 = vmatpush1.msra.mxu0 0.0
    %5130 = vmatprep.subr.mxu0 0.0
    %5131 = vmatpush1.msra.mxu0 0.0
    %5132 = vmatprep.subr.mxu0 0.0
    %5133 = vmatpush1.msra.mxu0 0.0
    %5134 = vmatprep.subr.mxu0 0.0
    %5135 = vmatpush1.msra.mxu0 0.0
    %5136 = vmatprep.subr.mxu0 0.0
    %5137 = vmatpush1.msra.mxu0 0.0
    %5138 = vmatprep.subr.mxu0 0.0
    %5139 = vmatpush1.msra.mxu0 0.0
    %5140 = vmatprep.subr.mxu0 0.0
    %5141 = vmatpush1.msra.mxu0 0.0
    %5142 = vmatprep.subr.mxu0 0.0
    %5143 = vmatpush1.msra.mxu0 0.0
    %5144 = vmatprep.subr.mxu0 0.0
    %5145 = vmatpush1.msra.mxu0 0.0
    %5146 = vmatprep.subr.mxu0 0.0
    %5147 = vmatpush1.msra.mxu0 0.0
    %5148 = vmatprep.subr.mxu0 0.0
    %5149 = vmatpush1.msra.mxu0 0.0
    %5150 = vmatprep.subr.mxu0 0.0
    %5151 = vmatpush1.msra.mxu0 0.0
    %5152 = vmatprep.subr.mxu0 0.0
    %5153 = vmatpush1.msra.mxu0 0.0
    %5154 = vmatprep.subr.mxu0 0.0
    %5155 = vmatpush1.msra.mxu0 0.0
    %5156 = vmatprep.subr.mxu0 0.0
    %5157 = vmatpush1.msra.mxu0 0.0
    %5158 = vmatprep.subr.mxu0 0.0
    %5159 = vmatpush1.msra.mxu0 0.0
    %5160 = vmatprep.subr.mxu0 0.0
    %5161 = vmatpush1.msra.mxu0 0.0
    %5162 = vmatprep.subr.mxu0 0.0
    %5163 = vmatpush1.msra.mxu0 0.0
    %5164 = vmatprep.subr.mxu0 0.0
    %5165 = vmatpush1.msra.mxu0 0.0
    %5166 = vmatprep.subr.mxu0 0.0
    %5167 = vmatpush1.msra.mxu0 0.0
    %5168 = vmatprep.subr.mxu0 0.0
    %5169 = vmatpush1.msra.mxu0 0.0
    %5170 = vmatprep.subr.mxu0 0.0
    %5171 = vmatpush1.msra.mxu0 0.0
    %5172 = vmatprep.subr.mxu0 0.0
    %5173 = vmatpush1.msra.mxu0 0.0
    %5174 = vmatprep.mubr.f32.mxu0 0.0
    %5175 = vmatmul.mubr.f32.gmra.mrb[0].mxu0 %v5108
    %v5176 = vpop.f32.mrb[0].mxu0
    %v5177 = vadd.f32 0.0, %v5176
    %v5178 = vpop.f32.mrb[0].mxu0
    %5179 = vdwg.mxu0
    %v5180 = vpack.c.bf16 %v5177, %v5177
    %v5182 = vsel %vm397, %v5180, 0
    %5184 = vmatprep.subr.bf16.mxu0 %v4692
    %5185 = vmatpush1.bf16.msra.mxu0 %v4691
    %5186 = vmatprep.subr.bf16.mxu0 0
    %5187 = vmatpush1.bf16.msra.mxu0 0
    %5188 = vmatprep.subr.bf16.mxu0 0
    %5189 = vmatpush1.bf16.msra.mxu0 0
    %5190 = vmatprep.subr.bf16.mxu0 0
    %5191 = vmatpush1.bf16.msra.mxu0 0
    %5192 = vmatprep.subr.bf16.mxu0 0
    %5193 = vmatpush1.bf16.msra.mxu0 0
    %5194 = vmatprep.subr.bf16.mxu0 0
    %5195 = vmatpush1.bf16.msra.mxu0 0
    %5196 = vmatprep.subr.bf16.mxu0 0
    %5197 = vmatpush1.bf16.msra.mxu0 0
    %5198 = vmatprep.subr.bf16.mxu0 0
    %5199 = vmatpush1.bf16.msra.mxu0 0
    %5200 = vmatprep.subr.bf16.mxu0 0
    %5201 = vmatpush1.bf16.msra.mxu0 0
    %5202 = vmatprep.subr.bf16.mxu0 0
    %5203 = vmatpush1.bf16.msra.mxu0 0
    %5204 = vmatprep.subr.bf16.mxu0 0
    %5205 = vmatpush1.bf16.msra.mxu0 0
    %5206 = vmatprep.subr.bf16.mxu0 0
    %5207 = vmatpush1.bf16.msra.mxu0 0
    %5208 = vmatprep.subr.bf16.mxu0 0
    %5209 = vmatpush1.bf16.msra.mxu0 0
    %5210 = vmatprep.subr.bf16.mxu0 0
    %5211 = vmatpush1.bf16.msra.mxu0 0
    %5212 = vmatprep.subr.bf16.mxu0 0
    %5213 = vmatpush1.bf16.msra.mxu0 0
    %5214 = vmatprep.subr.bf16.mxu0 0
    %5215 = vmatpush1.bf16.msra.mxu0 0
    %5216 = vmatprep.mubr.bf16.mxu0 0
    %5217 = vmatmul.mubr.bf16.gmra.mrb[0].mxu0 %v5182
    %v5218 = vpop.f32.mrb[0].mxu0
    %v5219 = vadd.f32 0.0, %v5218
    %v5220 = vpop.f32.mrb[0].mxu0
    %v5221 = vadd.f32 0.0, %v5220
    %v5222 = vpop.f32.mrb[0].mxu0
    %v5223 = vpop.f32.mrb[0].mxu0
    %5224 = vdwg.mxu0
    %v5225 = vadd.f32 %v5102, %v5219
    %v5226 = vadd.f32 %v5103, %v5221
    %v5227 = vadd.f32 %v4739, %v3254
    %v5228 = vadd.f32 %v4740, %v3255
    %v5229 = vadd.f32 %v5225, %v3256
    %v5230 = vadd.f32 %v5226, %v3257
    %s5231 = scalar_lea.vmem %s6, 2
    %v5232 = vld [vmem:[%s5231] sm:$0x3]
    %s5233 = scalar_lea.vmem %s7, 2
    %v5234 = vld [vmem:[%s5233] sm:$0x3]
    %v5235 = vadd.f32 %v5227, %v5228
    %5236 = vadd.xlane.f32.xlu0 %v5235
    %v5237 = vpop.xlane.xlu0 %5236
    %v5238 = vadd.f32 %v5229, %v5230
    %5239 = vadd.xlane.f32.xlu0 %v5238
    %v5240 = vpop.xlane.xlu0 %5239
    %v5241 = vmul.f32 %v5227, %v5227
    %v5242 = vmul.f32 %v5228, %v5228
    %v5243 = vmul.f32 %v5229, %v5229
    %v5244 = vmul.f32 %v5230, %v5230
    %v5245 = vadd.f32 %v5241, %v5242
    %5246 = vadd.xlane.f32.xlu0 %v5245
    %v5247 = vpop.xlane.xlu0 %5246
    %v5248 = vadd.f32 %v5243, %v5244
    %5249 = vadd.xlane.f32.xlu0 %v5248
    %v5250 = vpop.xlane.xlu0 %5249
    %v5251 = vmul.f32 %v5237, 0.004347826
    %v5252 = vmul.f32 %v5240, 0.004347826
    %v5253 = vmul.f32 %v5247, 0.004347826
    %v5254 = vmul.f32 %v5250, 0.004347826
    %v5255 = vmul.f32 %v5251, %v5251
    %v5256 = vmul.f32 %v5252, %v5252
    %v5257 = vsub.f32 %v5253, %v5255
    %v5258 = vsub.f32 %v5254, %v5256
    %v5259 = vsub.f32 %v5227, %v5251
    %v5260 = vsub.f32 %v5228, %v5251
    %v5261 = vsub.f32 %v5229, %v5252
    %v5262 = vsub.f32 %v5230, %v5252
    %v5263 = vadd.f32 %v5257, 1e-06
    %v5264 = vadd.f32 %v5258, 1e-06
    %v5265 = vrsqrt.pop %v5263
    %v5266 = vrsqrt.pop %v5264
    %v5267 = vmul.f32 %v5259, %v5265
    %v5268 = vmul.f32 %v5260, %v5265
    %v5269 = vmul.f32 %v5261, %v5266
    %v5270 = vmul.f32 %v5262, %v5266
    %v5272 = vlaneseq
    %v5273 = vshrl.u32 %v5272, 7
    %v5274 = vsub.s32 0, %v5273
    %v5275 = vrot.slane %v5232, %v5274
    %v5276 = vlaneseq
    %v5277 = vshrl.u32 %v5276, 7
    %v5278 = vsub.s32 1, %v5277
    %v5279 = vrot.slane %v5232, %v5278
    %v5282 = vmul.f32 %v5267, %v5275
    %v5283 = vmul.f32 %v5268, %v5279
    %v5284 = vmul.f32 %v5269, %v5275
    %v5285 = vmul.f32 %v5270, %v5279
    %v5287 = vlaneseq
    %v5288 = vshrl.u32 %v5287, 7
    %v5289 = vsub.s32 0, %v5288
    %v5290 = vrot.slane %v5234, %v5289
    %v5291 = vlaneseq
    %v5292 = vshrl.u32 %v5291, 7
    %v5293 = vsub.s32 1, %v5292
    %v5294 = vrot.slane %v5234, %v5293
    %v5297 = vadd.f32 %v5282, %v5290
    %v5298 = vadd.f32 %v5283, %v5294
    %v5299 = vadd.f32 %v5284, %v5290
    %v5300 = vadd.f32 %v5285, %v5294
    %v5301 = vpack.c.bf16 %v5299, %v5297
    %v5302 = vpack.c.bf16 %v5300, %v5298
    %s5303 = scalar_lea.vmem [#allocation2], 512
    %v5304 = vld [vmem:[%s5303] sm:$0xff]
    %v5305 = vld [vmem:[%s5303 + $0x8] sm:$0xff]
    %v5306 = vld [vmem:[%s5303 + $0x10] sm:$0xff]
    %v5307 = vld [vmem:[%s5303 + $0x18] sm:$0xff]
    %v5308 = vld [vmem:[%s5303 + $0x20] sm:$0xff]
    %v5309 = vld [vmem:[%s5303 + $0x28] sm:$0xff]
    %v5310 = vld [vmem:[%s5303 + $0x30] sm:$0xff]
    %v5311 = vld [vmem:[%s5303 + $0x38] sm:$0xff]
    %v5312 = vld [vmem:[%s5303 + $0x40] sm:$0xff]
    %v5313 = vld [vmem:[%s5303 + $0x48] sm:$0xff]
    %v5314 = vld [vmem:[%s5303 + $0x50] sm:$0xff]
    %v5315 = vld [vmem:[%s5303 + $0x58] sm:$0xff]
    %v5316 = vld [vmem:[%s5303 + $0x60] sm:$0xff]
    %v5317 = vld [vmem:[%s5303 + $0x68] sm:$0xff]
    %v5318 = vld [vmem:[%s5303 + $0x70] sm:$0xff]
    %v5319 = vld [vmem:[%s5303 + $0x78] sm:$0xff]
    %v5320 = vld [vmem:[%s5303 + $0x80] sm:$0xff]
    %v5321 = vld [vmem:[%s5303 + $0x88] sm:$0xff]
    %v5322 = vld [vmem:[%s5303 + $0x90] sm:$0xff]
    %v5323 = vld [vmem:[%s5303 + $0x98] sm:$0xff]
    %v5324 = vld [vmem:[%s5303 + $0xa0] sm:$0xff]
    %v5325 = vld [vmem:[%s5303 + $0xa8] sm:$0xff]
    %v5326 = vld [vmem:[%s5303 + $0xb0] sm:$0xff]
    %v5327 = vld [vmem:[%s5303 + $0xb8] sm:$0xff]
    %v5328 = vld [vmem:[%s5303 + $0xc0] sm:$0xff]
    %v5329 = vld [vmem:[%s5303 + $0xc8] sm:$0xff]
    %v5330 = vld [vmem:[%s5303 + $0xd0] sm:$0xff]
    %v5331 = vld [vmem:[%s5303 + $0xd8] sm:$0xff]
    %v5332 = vld [vmem:[%s5303 + $0xe0] sm:$0xff]
    %v5333 = vld [vmem:[%s5303 + $0xe8] sm:$0xff]
    %v5334 = vld [vmem:[%s5303 + $0xf0] sm:$0xff]
    %v5335 = vld [vmem:[%s5303 + $0xf8] sm:$0xff]
    %v5336 = vld [vmem:[%s5303 + $0x100] sm:$0xff]
    %v5337 = vld [vmem:[%s5303 + $0x108] sm:$0xff]
    %v5338 = vld [vmem:[%s5303 + $0x110] sm:$0xff]
    %v5339 = vld [vmem:[%s5303 + $0x118] sm:$0xff]
    %v5340 = vld [vmem:[%s5303 + $0x120] sm:$0xff]
    %v5341 = vld [vmem:[%s5303 + $0x128] sm:$0xff]
    %v5342 = vld [vmem:[%s5303 + $0x130] sm:$0xff]
    %v5343 = vld [vmem:[%s5303 + $0x138] sm:$0xff]
    %v5344 = vld [vmem:[%s5303 + $0x140] sm:$0xff]
    %v5345 = vld [vmem:[%s5303 + $0x148] sm:$0xff]
    %v5346 = vld [vmem:[%s5303 + $0x150] sm:$0xff]
    %v5347 = vld [vmem:[%s5303 + $0x158] sm:$0xff]
    %v5348 = vld [vmem:[%s5303 + $0x160] sm:$0xff]
    %v5349 = vld [vmem:[%s5303 + $0x168] sm:$0xff]
    %v5350 = vld [vmem:[%s5303 + $0x170] sm:$0xff]
    %v5351 = vld [vmem:[%s5303 + $0x178] sm:$0xff]
    %v5352 = vld [vmem:[%s5303 + $0x180] sm:$0xff]
    %v5353 = vld [vmem:[%s5303 + $0x188] sm:$0xff]
    %v5354 = vld [vmem:[%s5303 + $0x190] sm:$0xff]
    %v5355 = vld [vmem:[%s5303 + $0x198] sm:$0xff]
    %v5356 = vld [vmem:[%s5303 + $0x1a0] sm:$0xff]
    %v5357 = vld [vmem:[%s5303 + $0x1a8] sm:$0xff]
    %v5358 = vld [vmem:[%s5303 + $0x1b0] sm:$0xff]
    %v5359 = vld [vmem:[%s5303 + $0x1b8] sm:$0xff]
    %v5360 = vld [vmem:[%s5303 + $0x1c0] sm:$0xff]
    %v5361 = vld [vmem:[%s5303 + $0x1c8] sm:$0xff]
    %v5362 = vld [vmem:[%s5303 + $0x1d0] sm:$0xff]
    %v5363 = vld [vmem:[%s5303 + $0x1d8] sm:$0xff]
    %v5364 = vld [vmem:[%s5303 + $0x1e0] sm:$0xff]
    %v5365 = vld [vmem:[%s5303 + $0x1e8] sm:$0xff]
    %v5366 = vld [vmem:[%s5303 + $0x1f0] sm:$0xff]
    %v5367 = vld [vmem:[%s5303 + $0x1f8] sm:$0xff]
    %s5368 = scalar_lea.vmem %s9, 4
    %v5369 = vld [vmem:[%s5368] sm:$0xf]
    %v5371 = vlaneseq
    %v5372 = vshrl.u32 %v5371, 7
    %v5373 = vsub.s32 0, %v5372
    %v5374 = vrot.slane %v5369, %v5373
    %v5375 = vlaneseq
    %v5376 = vshrl.u32 %v5375, 7
    %v5377 = vsub.s32 1, %v5376
    %v5378 = vrot.slane %v5369, %v5377
    %v5379 = vlaneseq
    %v5380 = vshrl.u32 %v5379, 7
    %v5381 = vsub.s32 2, %v5380
    %v5382 = vrot.slane %v5369, %v5381
    %v5383 = vlaneseq
    %v5384 = vshrl.u32 %v5383, 7
    %v5385 = vsub.s32 3, %v5384
    %v5386 = vrot.slane %v5369, %v5385
    %v5455 = vunpack.c.l.b16 %v5304
    %v5456 = vunpack.c.h.b16 %v5304
    %v5457 = vunpack.c.l.b16 %v5305
    %v5458 = vunpack.c.h.b16 %v5305
    %v5459 = vunpack.c.l.b16 %v5306
    %v5460 = vunpack.c.h.b16 %v5306
    %v5461 = vunpack.c.l.b16 %v5307
    %v5462 = vunpack.c.h.b16 %v5307
    %v5463 = vunpack.c.l.b16 %v5308
    %v5464 = vunpack.c.h.b16 %v5308
    %v5465 = vunpack.c.l.b16 %v5309
    %v5466 = vunpack.c.h.b16 %v5309
    %v5467 = vunpack.c.l.b16 %v5310
    %v5468 = vunpack.c.h.b16 %v5310
    %v5469 = vunpack.c.l.b16 %v5311
    %v5470 = vunpack.c.h.b16 %v5311
    %v5471 = vunpack.c.l.b16 %v5312
    %v5472 = vunpack.c.h.b16 %v5312
    %v5473 = vunpack.c.l.b16 %v5313
    %v5474 = vunpack.c.h.b16 %v5313
    %v5475 = vunpack.c.l.b16 %v5314
    %v5476 = vunpack.c.h.b16 %v5314
    %v5477 = vunpack.c.l.b16 %v5315
    %v5478 = vunpack.c.h.b16 %v5315
    %v5479 = vunpack.c.l.b16 %v5316
    %v5480 = vunpack.c.h.b16 %v5316
    %v5481 = vunpack.c.l.b16 %v5317
    %v5482 = vunpack.c.h.b16 %v5317
    %v5483 = vunpack.c.l.b16 %v5318
    %v5484 = vunpack.c.h.b16 %v5318
    %v5485 = vunpack.c.l.b16 %v5319
    %v5486 = vunpack.c.h.b16 %v5319
    %v5487 = vunpack.c.l.b16 %v5320
    %v5488 = vunpack.c.h.b16 %v5320
    %v5489 = vunpack.c.l.b16 %v5321
    %v5490 = vunpack.c.h.b16 %v5321
    %v5491 = vunpack.c.l.b16 %v5322
    %v5492 = vunpack.c.h.b16 %v5322
    %v5493 = vunpack.c.l.b16 %v5323
    %v5494 = vunpack.c.h.b16 %v5323
    %v5495 = vunpack.c.l.b16 %v5324
    %v5496 = vunpack.c.h.b16 %v5324
    %v5497 = vunpack.c.l.b16 %v5325
    %v5498 = vunpack.c.h.b16 %v5325
    %v5499 = vunpack.c.l.b16 %v5326
    %v5500 = vunpack.c.h.b16 %v5326
    %v5501 = vunpack.c.l.b16 %v5327
    %v5502 = vunpack.c.h.b16 %v5327
    %v5503 = vunpack.c.l.b16 %v5328
    %v5504 = vunpack.c.h.b16 %v5328
    %v5505 = vunpack.c.l.b16 %v5329
    %v5506 = vunpack.c.h.b16 %v5329
    %v5507 = vunpack.c.l.b16 %v5330
    %v5508 = vunpack.c.h.b16 %v5330
    %v5509 = vunpack.c.l.b16 %v5331
    %v5510 = vunpack.c.h.b16 %v5331
    %v5511 = vunpack.c.l.b16 %v5332
    %v5512 = vunpack.c.h.b16 %v5332
    %v5513 = vunpack.c.l.b16 %v5333
    %v5514 = vunpack.c.h.b16 %v5333
    %v5515 = vunpack.c.l.b16 %v5334
    %v5516 = vunpack.c.h.b16 %v5334
    %v5517 = vunpack.c.l.b16 %v5335
    %v5518 = vunpack.c.h.b16 %v5335
    %v5519 = vunpack.c.l.b16 %v5336
    %v5520 = vunpack.c.h.b16 %v5336
    %v5521 = vunpack.c.l.b16 %v5337
    %v5522 = vunpack.c.h.b16 %v5337
    %v5523 = vunpack.c.l.b16 %v5338
    %v5524 = vunpack.c.h.b16 %v5338
    %v5525 = vunpack.c.l.b16 %v5339
    %v5526 = vunpack.c.h.b16 %v5339
    %v5527 = vunpack.c.l.b16 %v5340
    %v5528 = vunpack.c.h.b16 %v5340
    %v5529 = vunpack.c.l.b16 %v5341
    %v5530 = vunpack.c.h.b16 %v5341
    %v5531 = vunpack.c.l.b16 %v5342
    %v5532 = vunpack.c.h.b16 %v5342
    %v5533 = vunpack.c.l.b16 %v5343
    %v5534 = vunpack.c.h.b16 %v5343
    %v5535 = vunpack.c.l.b16 %v5344
    %v5536 = vunpack.c.h.b16 %v5344
    %v5537 = vunpack.c.l.b16 %v5345
    %v5538 = vunpack.c.h.b16 %v5345
    %v5539 = vunpack.c.l.b16 %v5346
    %v5540 = vunpack.c.h.b16 %v5346
    %v5541 = vunpack.c.l.b16 %v5347
    %v5542 = vunpack.c.h.b16 %v5347
    %v5543 = vunpack.c.l.b16 %v5348
    %v5544 = vunpack.c.h.b16 %v5348
    %v5545 = vunpack.c.l.b16 %v5349
    %v5546 = vunpack.c.h.b16 %v5349
    %v5547 = vunpack.c.l.b16 %v5350
    %v5548 = vunpack.c.h.b16 %v5350
    %v5549 = vunpack.c.l.b16 %v5351
    %v5550 = vunpack.c.h.b16 %v5351
    %v5551 = vunpack.c.l.b16 %v5352
    %v5552 = vunpack.c.h.b16 %v5352
    %v5553 = vunpack.c.l.b16 %v5353
    %v5554 = vunpack.c.h.b16 %v5353
    %v5555 = vunpack.c.l.b16 %v5354
    %v5556 = vunpack.c.h.b16 %v5354
    %v5557 = vunpack.c.l.b16 %v5355
    %v5558 = vunpack.c.h.b16 %v5355
    %v5559 = vunpack.c.l.b16 %v5356
    %v5560 = vunpack.c.h.b16 %v5356
    %v5561 = vunpack.c.l.b16 %v5357
    %v5562 = vunpack.c.h.b16 %v5357
    %v5563 = vunpack.c.l.b16 %v5358
    %v5564 = vunpack.c.h.b16 %v5358
    %v5565 = vunpack.c.l.b16 %v5359
    %v5566 = vunpack.c.h.b16 %v5359
    %v5567 = vunpack.c.l.b16 %v5360
    %v5568 = vunpack.c.h.b16 %v5360
    %v5569 = vunpack.c.l.b16 %v5361
    %v5570 = vunpack.c.h.b16 %v5361
    %v5571 = vunpack.c.l.b16 %v5362
    %v5572 = vunpack.c.h.b16 %v5362
    %v5573 = vunpack.c.l.b16 %v5363
    %v5574 = vunpack.c.h.b16 %v5363
    %v5575 = vunpack.c.l.b16 %v5364
    %v5576 = vunpack.c.h.b16 %v5364
    %v5577 = vunpack.c.l.b16 %v5365
    %v5578 = vunpack.c.h.b16 %v5365
    %v5579 = vunpack.c.l.b16 %v5366
    %v5580 = vunpack.c.h.b16 %v5366
    %v5581 = vunpack.c.l.b16 %v5367
    %v5582 = vunpack.c.h.b16 %v5367
    %v5583 = vpack.c.b16 %v5459, %v5455
    %v5584 = vpack.c.b16 %v5460, %v5456
    %v5585 = vpack.c.b16 %v5461, %v5457
    %v5586 = vpack.c.b16 %v5462, %v5458
    %v5587 = vpack.c.b16 %v5467, %v5463
    %v5588 = vpack.c.b16 %v5468, %v5464
    %v5589 = vpack.c.b16 %v5469, %v5465
    %v5590 = vpack.c.b16 %v5470, %v5466
    %v5591 = vpack.c.b16 %v5475, %v5471
    %v5592 = vpack.c.b16 %v5476, %v5472
    %v5593 = vpack.c.b16 %v5477, %v5473
    %v5594 = vpack.c.b16 %v5478, %v5474
    %v5595 = vpack.c.b16 %v5483, %v5479
    %v5596 = vpack.c.b16 %v5484, %v5480
    %v5597 = vpack.c.b16 %v5485, %v5481
    %v5598 = vpack.c.b16 %v5486, %v5482
    %v5599 = vpack.c.b16 %v5491, %v5487
    %v5600 = vpack.c.b16 %v5492, %v5488
    %v5601 = vpack.c.b16 %v5493, %v5489
    %v5602 = vpack.c.b16 %v5494, %v5490
    %v5603 = vpack.c.b16 %v5499, %v5495
    %v5604 = vpack.c.b16 %v5500, %v5496
    %v5605 = vpack.c.b16 %v5501, %v5497
    %v5606 = vpack.c.b16 %v5502, %v5498
    %v5607 = vpack.c.b16 %v5507, %v5503
    %v5608 = vpack.c.b16 %v5508, %v5504
    %v5609 = vpack.c.b16 %v5509, %v5505
    %v5610 = vpack.c.b16 %v5510, %v5506
    %v5611 = vpack.c.b16 %v5515, %v5511
    %v5612 = vpack.c.b16 %v5516, %v5512
    %v5613 = vpack.c.b16 %v5517, %v5513
    %v5614 = vpack.c.b16 %v5518, %v5514
    %v5615 = vpack.c.b16 %v5523, %v5519
    %v5616 = vpack.c.b16 %v5524, %v5520
    %v5617 = vpack.c.b16 %v5525, %v5521
    %v5618 = vpack.c.b16 %v5526, %v5522
    %v5619 = vpack.c.b16 %v5531, %v5527
    %v5620 = vpack.c.b16 %v5532, %v5528
    %v5621 = vpack.c.b16 %v5533, %v5529
    %v5622 = vpack.c.b16 %v5534, %v5530
    %v5623 = vpack.c.b16 %v5539, %v5535
    %v5624 = vpack.c.b16 %v5540, %v5536
    %v5625 = vpack.c.b16 %v5541, %v5537
    %v5626 = vpack.c.b16 %v5542, %v5538
    %v5627 = vpack.c.b16 %v5547, %v5543
    %v5628 = vpack.c.b16 %v5548, %v5544
    %v5629 = vpack.c.b16 %v5549, %v5545
    %v5630 = vpack.c.b16 %v5550, %v5546
    %v5631 = vpack.c.b16 %v5555, %v5551
    %v5632 = vpack.c.b16 %v5556, %v5552
    %v5633 = vpack.c.b16 %v5557, %v5553
    %v5634 = vpack.c.b16 %v5558, %v5554
    %v5635 = vpack.c.b16 %v5563, %v5559
    %v5636 = vpack.c.b16 %v5564, %v5560
    %v5637 = vpack.c.b16 %v5565, %v5561
    %v5638 = vpack.c.b16 %v5566, %v5562
    %v5639 = vpack.c.b16 %v5571, %v5567
    %v5640 = vpack.c.b16 %v5572, %v5568
    %v5641 = vpack.c.b16 %v5573, %v5569
    %v5642 = vpack.c.b16 %v5574, %v5570
    %v5643 = vpack.c.b16 %v5579, %v5575
    %v5644 = vpack.c.b16 %v5580, %v5576
    %v5645 = vpack.c.b16 %v5581, %v5577
    %v5646 = vpack.c.b16 %v5582, %v5578
    %5711 = vmatprep.subr.bf16.mxu0 %v5584
    %5712 = vmatpush1.bf16.msra.mxu0 %v5583
    %5713 = vmatprep.subr.bf16.mxu0 %v5588
    %5714 = vmatpush1.bf16.msra.mxu0 %v5587
    %5715 = vmatprep.subr.bf16.mxu0 %v5592
    %5716 = vmatpush1.bf16.msra.mxu0 %v5591
    %5717 = vmatprep.subr.bf16.mxu0 %v5596
    %5718 = vmatpush1.bf16.msra.mxu0 %v5595
    %5719 = vmatprep.subr.bf16.mxu0 %v5600
    %5720 = vmatpush1.bf16.msra.mxu0 %v5599
    %5721 = vmatprep.subr.bf16.mxu0 %v5604
    %5722 = vmatpush1.bf16.msra.mxu0 %v5603
    %5723 = vmatprep.subr.bf16.mxu0 %v5608
    %5724 = vmatpush1.bf16.msra.mxu0 %v5607
    %5725 = vmatprep.subr.bf16.mxu0 %v5612
    %5726 = vmatpush1.bf16.msra.mxu0 %v5611
    %5727 = vmatprep.subr.bf16.mxu0 %v5616
    %5728 = vmatpush1.bf16.msra.mxu0 %v5615
    %5729 = vmatprep.subr.bf16.mxu0 %v5620
    %5730 = vmatpush1.bf16.msra.mxu0 %v5619
    %5731 = vmatprep.subr.bf16.mxu0 %v5624
    %5732 = vmatpush1.bf16.msra.mxu0 %v5623
    %5733 = vmatprep.subr.bf16.mxu0 %v5628
    %5734 = vmatpush1.bf16.msra.mxu0 %v5627
    %5735 = vmatprep.subr.bf16.mxu0 %v5632
    %5736 = vmatpush1.bf16.msra.mxu0 %v5631
    %5737 = vmatprep.subr.bf16.mxu0 %v5636
    %5738 = vmatpush1.bf16.msra.mxu0 %v5635
    %5739 = vmatprep.subr.bf16.mxu0 %v5640
    %5740 = vmatpush1.bf16.msra.mxu0 %v5639
    %5741 = vmatprep.subr.bf16.mxu0 %v5644
    %5742 = vmatpush1.bf16.msra.mxu0 %v5643
    %5743 = vmatprep.mubr.bf16.mxu0 %v5302
    %5744 = vmatmul.mubr.bf16.gmra.mrb[0].mxu0 %v5301
    %v5745 = vpop.f32.mrb[0].mxu0
    %v5746 = vadd.f32 %v5374, %v5745
    %v5747 = vpop.f32.mrb[0].mxu0
    %v5748 = vadd.f32 %v5378, %v5747
    %v5749 = vpop.f32.mrb[0].mxu0
    %v5750 = vadd.f32 %v5374, %v5749
    %v5751 = vpop.f32.mrb[0].mxu0
    %v5752 = vadd.f32 %v5378, %v5751
    %5753 = vdwg.mxu0
    %5754 = vmatprep.subr.bf16.mxu0 %v5586
    %5755 = vmatpush1.bf16.msra.mxu0 %v5585
    %5756 = vmatprep.subr.bf16.mxu0 %v5590
    %5757 = vmatpush1.bf16.msra.mxu0 %v5589
    %5758 = vmatprep.subr.bf16.mxu0 %v5594
    %5759 = vmatpush1.bf16.msra.mxu0 %v5593
    %5760 = vmatprep.subr.bf16.mxu0 %v5598
    %5761 = vmatpush1.bf16.msra.mxu0 %v5597
    %5762 = vmatprep.subr.bf16.mxu0 %v5602
    %5763 = vmatpush1.bf16.msra.mxu0 %v5601
    %5764 = vmatprep.subr.bf16.mxu0 %v5606
    %5765 = vmatpush1.bf16.msra.mxu0 %v5605
    %5766 = vmatprep.subr.bf16.mxu0 %v5610
    %5767 = vmatpush1.bf16.msra.mxu0 %v5609
    %5768 = vmatprep.subr.bf16.mxu0 %v5614
    %5769 = vmatpush1.bf16.msra.mxu0 %v5613
    %5770 = vmatprep.subr.bf16.mxu0 %v5618
    %5771 = vmatpush1.bf16.msra.mxu0 %v5617
    %5772 = vmatprep.subr.bf16.mxu0 %v5622
    %5773 = vmatpush1.bf16.msra.mxu0 %v5621
    %5774 = vmatprep.subr.bf16.mxu0 %v5626
    %5775 = vmatpush1.bf16.msra.mxu0 %v5625
    %5776 = vmatprep.subr.bf16.mxu0 %v5630
    %5777 = vmatpush1.bf16.msra.mxu0 %v5629
    %5778 = vmatprep.subr.bf16.mxu0 %v5634
    %5779 = vmatpush1.bf16.msra.mxu0 %v5633
    %5780 = vmatprep.subr.bf16.mxu0 %v5638
    %5781 = vmatpush1.bf16.msra.mxu0 %v5637
    %5782 = vmatprep.subr.bf16.mxu0 %v5642
    %5783 = vmatpush1.bf16.msra.mxu0 %v5641
    %5784 = vmatprep.subr.bf16.mxu0 %v5646
    %5785 = vmatpush1.bf16.msra.mxu0 %v5645
    %5786 = vmatprep.mubr.bf16.mxu0 %v5302
    %5787 = vmatmul.mubr.bf16.gmra.mrb[0].mxu0 %v5301
    %v5788 = vpop.f32.mrb[0].mxu0
    %v5789 = vadd.f32 %v5382, %v5788
    %v5790 = vpop.f32.mrb[0].mxu0
    %v5791 = vadd.f32 %v5386, %v5790
    %v5792 = vpop.f32.mrb[0].mxu0
    %v5793 = vadd.f32 %v5382, %v5792
    %v5794 = vpop.f32.mrb[0].mxu0
    %v5795 = vadd.f32 %v5386, %v5794
    %5796 = vdwg.mxu0
    %v5797 = vmax.f32 %v5746, 0.0
    %v5798 = vmax.f32 %v5748, 0.0
    %v5799 = vmax.f32 %v5789, 0.0
    %v5800 = vmax.f32 %v5791, 0.0
    %v5801 = vmax.f32 %v5750, 0.0
    %v5802 = vmax.f32 %v5752, 0.0
    %v5803 = vmax.f32 %v5793, 0.0
    %v5804 = vmax.f32 %v5795, 0.0
    %v5805 = vpack.c.bf16 %v5801, %v5797
    %v5806 = vpack.c.bf16 %v5802, %v5798
    %v5807 = vpack.c.bf16 %v5803, %v5799
    %v5808 = vpack.c.bf16 %v5804, %v5800
    %s5809 = scalar_lea.vmem [#allocation5], 512
    %v5810 = vld [vmem:[%s5809] sm:$0xff]
    %v5811 = vld [vmem:[%s5809 + $0x8] sm:$0xff]
    %v5812 = vld [vmem:[%s5809 + $0x10] sm:$0xff]
    %v5813 = vld [vmem:[%s5809 + $0x18] sm:$0xff]
    %v5814 = vld [vmem:[%s5809 + $0x20] sm:$0xff]
    %v5815 = vld [vmem:[%s5809 + $0x28] sm:$0xff]
    %v5816 = vld [vmem:[%s5809 + $0x30] sm:$0xff]
    %v5817 = vld [vmem:[%s5809 + $0x38] sm:$0xff]
    %v5818 = vld [vmem:[%s5809 + $0x40] sm:$0xff]
    %v5819 = vld [vmem:[%s5809 + $0x48] sm:$0xff]
    %v5820 = vld [vmem:[%s5809 + $0x50] sm:$0xff]
    %v5821 = vld [vmem:[%s5809 + $0x58] sm:$0xff]
    %v5822 = vld [vmem:[%s5809 + $0x60] sm:$0xff]
    %v5823 = vld [vmem:[%s5809 + $0x68] sm:$0xff]
    %v5824 = vld [vmem:[%s5809 + $0x70] sm:$0xff]
    %v5825 = vld [vmem:[%s5809 + $0x78] sm:$0xff]
    %v5826 = vld [vmem:[%s5809 + $0x80] sm:$0xff]
    %v5827 = vld [vmem:[%s5809 + $0x88] sm:$0xff]
    %v5828 = vld [vmem:[%s5809 + $0x90] sm:$0xff]
    %v5829 = vld [vmem:[%s5809 + $0x98] sm:$0xff]
    %v5830 = vld [vmem:[%s5809 + $0xa0] sm:$0xff]
    %v5831 = vld [vmem:[%s5809 + $0xa8] sm:$0xff]
    %v5832 = vld [vmem:[%s5809 + $0xb0] sm:$0xff]
    %v5833 = vld [vmem:[%s5809 + $0xb8] sm:$0xff]
    %v5834 = vld [vmem:[%s5809 + $0xc0] sm:$0xff]
    %v5835 = vld [vmem:[%s5809 + $0xc8] sm:$0xff]
    %v5836 = vld [vmem:[%s5809 + $0xd0] sm:$0xff]
    %v5837 = vld [vmem:[%s5809 + $0xd8] sm:$0xff]
    %v5838 = vld [vmem:[%s5809 + $0xe0] sm:$0xff]
    %v5839 = vld [vmem:[%s5809 + $0xe8] sm:$0xff]
    %v5840 = vld [vmem:[%s5809 + $0xf0] sm:$0xff]
    %v5841 = vld [vmem:[%s5809 + $0xf8] sm:$0xff]
    %v5842 = vld [vmem:[%s5809 + $0x100] sm:$0xff]
    %v5843 = vld [vmem:[%s5809 + $0x108] sm:$0xff]
    %v5844 = vld [vmem:[%s5809 + $0x110] sm:$0xff]
    %v5845 = vld [vmem:[%s5809 + $0x118] sm:$0xff]
    %v5846 = vld [vmem:[%s5809 + $0x120] sm:$0xff]
    %v5847 = vld [vmem:[%s5809 + $0x128] sm:$0xff]
    %v5848 = vld [vmem:[%s5809 + $0x130] sm:$0xff]
    %v5849 = vld [vmem:[%s5809 + $0x138] sm:$0xff]
    %v5850 = vld [vmem:[%s5809 + $0x140] sm:$0xff]
    %v5851 = vld [vmem:[%s5809 + $0x148] sm:$0xff]
    %v5852 = vld [vmem:[%s5809 + $0x150] sm:$0xff]
    %v5853 = vld [vmem:[%s5809 + $0x158] sm:$0xff]
    %v5854 = vld [vmem:[%s5809 + $0x160] sm:$0xff]
    %v5855 = vld [vmem:[%s5809 + $0x168] sm:$0xff]
    %v5856 = vld [vmem:[%s5809 + $0x170] sm:$0xff]
    %v5857 = vld [vmem:[%s5809 + $0x178] sm:$0xff]
    %v5858 = vld [vmem:[%s5809 + $0x180] sm:$0xff]
    %v5859 = vld [vmem:[%s5809 + $0x188] sm:$0xff]
    %v5860 = vld [vmem:[%s5809 + $0x190] sm:$0xff]
    %v5861 = vld [vmem:[%s5809 + $0x198] sm:$0xff]
    %v5862 = vld [vmem:[%s5809 + $0x1a0] sm:$0xff]
    %v5863 = vld [vmem:[%s5809 + $0x1a8] sm:$0xff]
    %v5864 = vld [vmem:[%s5809 + $0x1b0] sm:$0xff]
    %v5865 = vld [vmem:[%s5809 + $0x1b8] sm:$0xff]
    %v5866 = vld [vmem:[%s5809 + $0x1c0] sm:$0xff]
    %v5867 = vld [vmem:[%s5809 + $0x1c8] sm:$0xff]
    %v5868 = vld [vmem:[%s5809 + $0x1d0] sm:$0xff]
    %v5869 = vld [vmem:[%s5809 + $0x1d8] sm:$0xff]
    %v5870 = vld [vmem:[%s5809 + $0x1e0] sm:$0xff]
    %v5871 = vld [vmem:[%s5809 + $0x1e8] sm:$0xff]
    %v5872 = vld [vmem:[%s5809 + $0x1f0] sm:$0xff]
    %v5873 = vld [vmem:[%s5809 + $0x1f8] sm:$0xff]
    %s5874 = scalar_lea.vmem %s11, 2
    %v5875 = vld [vmem:[%s5874] sm:$0x3]
    %v5877 = vlaneseq
    %v5878 = vshrl.u32 %v5877, 7
    %v5879 = vsub.s32 0, %v5878
    %v5880 = vrot.slane %v5875, %v5879
    %v5881 = vlaneseq
    %v5882 = vshrl.u32 %v5881, 7
    %v5883 = vsub.s32 1, %v5882
    %v5884 = vrot.slane %v5875, %v5883
    %v5951 = vunpack.c.l.b16 %v5810
    %v5952 = vunpack.c.h.b16 %v5810
    %v5953 = vunpack.c.l.b16 %v5811
    %v5954 = vunpack.c.h.b16 %v5811
    %v5955 = vunpack.c.l.b16 %v5812
    %v5956 = vunpack.c.h.b16 %v5812
    %v5957 = vunpack.c.l.b16 %v5813
    %v5958 = vunpack.c.h.b16 %v5813
    %v5959 = vunpack.c.l.b16 %v5814
    %v5960 = vunpack.c.h.b16 %v5814
    %v5961 = vunpack.c.l.b16 %v5815
    %v5962 = vunpack.c.h.b16 %v5815
    %v5963 = vunpack.c.l.b16 %v5816
    %v5964 = vunpack.c.h.b16 %v5816
    %v5965 = vunpack.c.l.b16 %v5817
    %v5966 = vunpack.c.h.b16 %v5817
    %v5967 = vunpack.c.l.b16 %v5818
    %v5968 = vunpack.c.h.b16 %v5818
    %v5969 = vunpack.c.l.b16 %v5819
    %v5970 = vunpack.c.h.b16 %v5819
    %v5971 = vunpack.c.l.b16 %v5820
    %v5972 = vunpack.c.h.b16 %v5820
    %v5973 = vunpack.c.l.b16 %v5821
    %v5974 = vunpack.c.h.b16 %v5821
    %v5975 = vunpack.c.l.b16 %v5822
    %v5976 = vunpack.c.h.b16 %v5822
    %v5977 = vunpack.c.l.b16 %v5823
    %v5978 = vunpack.c.h.b16 %v5823
    %v5979 = vunpack.c.l.b16 %v5824
    %v5980 = vunpack.c.h.b16 %v5824
    %v5981 = vunpack.c.l.b16 %v5825
    %v5982 = vunpack.c.h.b16 %v5825
    %v5983 = vunpack.c.l.b16 %v5826
    %v5984 = vunpack.c.h.b16 %v5826
    %v5985 = vunpack.c.l.b16 %v5827
    %v5986 = vunpack.c.h.b16 %v5827
    %v5987 = vunpack.c.l.b16 %v5828
    %v5988 = vunpack.c.h.b16 %v5828
    %v5989 = vunpack.c.l.b16 %v5829
    %v5990 = vunpack.c.h.b16 %v5829
    %v5991 = vunpack.c.l.b16 %v5830
    %v5992 = vunpack.c.h.b16 %v5830
    %v5993 = vunpack.c.l.b16 %v5831
    %v5994 = vunpack.c.h.b16 %v5831
    %v5995 = vunpack.c.l.b16 %v5832
    %v5996 = vunpack.c.h.b16 %v5832
    %v5997 = vunpack.c.l.b16 %v5833
    %v5998 = vunpack.c.h.b16 %v5833
    %v5999 = vunpack.c.l.b16 %v5834
    %v6000 = vunpack.c.h.b16 %v5834
    %v6001 = vunpack.c.l.b16 %v5835
    %v6002 = vunpack.c.h.b16 %v5835
    %v6003 = vunpack.c.l.b16 %v5836
    %v6004 = vunpack.c.h.b16 %v5836
    %v6005 = vunpack.c.l.b16 %v5837
    %v6006 = vunpack.c.h.b16 %v5837
    %v6007 = vunpack.c.l.b16 %v5838
    %v6008 = vunpack.c.h.b16 %v5838
    %v6009 = vunpack.c.l.b16 %v5839
    %v6010 = vunpack.c.h.b16 %v5839
    %v6011 = vunpack.c.l.b16 %v5840
    %v6012 = vunpack.c.h.b16 %v5840
    %v6013 = vunpack.c.l.b16 %v5841
    %v6014 = vunpack.c.h.b16 %v5841
    %v6015 = vunpack.c.l.b16 %v5842
    %v6016 = vunpack.c.h.b16 %v5842
    %v6017 = vunpack.c.l.b16 %v5843
    %v6018 = vunpack.c.h.b16 %v5843
    %v6019 = vunpack.c.l.b16 %v5844
    %v6020 = vunpack.c.h.b16 %v5844
    %v6021 = vunpack.c.l.b16 %v5845
    %v6022 = vunpack.c.h.b16 %v5845
    %v6023 = vunpack.c.l.b16 %v5846
    %v6024 = vunpack.c.h.b16 %v5846
    %v6025 = vunpack.c.l.b16 %v5847
    %v6026 = vunpack.c.h.b16 %v5847
    %v6027 = vunpack.c.l.b16 %v5848
    %v6028 = vunpack.c.h.b16 %v5848
    %v6029 = vunpack.c.l.b16 %v5849
    %v6030 = vunpack.c.h.b16 %v5849
    %v6031 = vunpack.c.l.b16 %v5850
    %v6032 = vunpack.c.h.b16 %v5850
    %v6033 = vunpack.c.l.b16 %v5851
    %v6034 = vunpack.c.h.b16 %v5851
    %v6035 = vunpack.c.l.b16 %v5852
    %v6036 = vunpack.c.h.b16 %v5852
    %v6037 = vunpack.c.l.b16 %v5853
    %v6038 = vunpack.c.h.b16 %v5853
    %v6039 = vunpack.c.l.b16 %v5854
    %v6040 = vunpack.c.h.b16 %v5854
    %v6041 = vunpack.c.l.b16 %v5855
    %v6042 = vunpack.c.h.b16 %v5855
    %v6043 = vunpack.c.l.b16 %v5856
    %v6044 = vunpack.c.h.b16 %v5856
    %v6045 = vunpack.c.l.b16 %v5857
    %v6046 = vunpack.c.h.b16 %v5857
    %v6047 = vunpack.c.l.b16 %v5858
    %v6048 = vunpack.c.h.b16 %v5858
    %v6049 = vunpack.c.l.b16 %v5859
    %v6050 = vunpack.c.h.b16 %v5859
    %v6051 = vunpack.c.l.b16 %v5860
    %v6052 = vunpack.c.h.b16 %v5860
    %v6053 = vunpack.c.l.b16 %v5861
    %v6054 = vunpack.c.h.b16 %v5861
    %v6055 = vunpack.c.l.b16 %v5862
    %v6056 = vunpack.c.h.b16 %v5862
    %v6057 = vunpack.c.l.b16 %v5863
    %v6058 = vunpack.c.h.b16 %v5863
    %v6059 = vunpack.c.l.b16 %v5864
    %v6060 = vunpack.c.h.b16 %v5864
    %v6061 = vunpack.c.l.b16 %v5865
    %v6062 = vunpack.c.h.b16 %v5865
    %v6063 = vunpack.c.l.b16 %v5866
    %v6064 = vunpack.c.h.b16 %v5866
    %v6065 = vunpack.c.l.b16 %v5867
    %v6066 = vunpack.c.h.b16 %v5867
    %v6067 = vunpack.c.l.b16 %v5868
    %v6068 = vunpack.c.h.b16 %v5868
    %v6069 = vunpack.c.l.b16 %v5869
    %v6070 = vunpack.c.h.b16 %v5869
    %v6071 = vunpack.c.l.b16 %v5870
    %v6072 = vunpack.c.h.b16 %v5870
    %v6073 = vunpack.c.l.b16 %v5871
    %v6074 = vunpack.c.h.b16 %v5871
    %v6075 = vunpack.c.l.b16 %v5872
    %v6076 = vunpack.c.h.b16 %v5872
    %v6077 = vunpack.c.l.b16 %v5873
    %v6078 = vunpack.c.h.b16 %v5873
    %v6079 = vpack.c.b16 %v5953, %v5951
    %v6080 = vpack.c.b16 %v5954, %v5952
    %v6081 = vpack.c.b16 %v5957, %v5955
    %v6082 = vpack.c.b16 %v5958, %v5956
    %v6083 = vpack.c.b16 %v5961, %v5959
    %v6084 = vpack.c.b16 %v5962, %v5960
    %v6085 = vpack.c.b16 %v5965, %v5963
    %v6086 = vpack.c.b16 %v5966, %v5964
    %v6087 = vpack.c.b16 %v5969, %v5967
    %v6088 = vpack.c.b16 %v5970, %v5968
    %v6089 = vpack.c.b16 %v5973, %v5971
    %v6090 = vpack.c.b16 %v5974, %v5972
    %v6091 = vpack.c.b16 %v5977, %v5975
    %v6092 = vpack.c.b16 %v5978, %v5976
    %v6093 = vpack.c.b16 %v5981, %v5979
    %v6094 = vpack.c.b16 %v5982, %v5980
    %v6095 = vpack.c.b16 %v5985, %v5983
    %v6096 = vpack.c.b16 %v5986, %v5984
    %v6097 = vpack.c.b16 %v5989, %v5987
    %v6098 = vpack.c.b16 %v5990, %v5988
    %v6099 = vpack.c.b16 %v5993, %v5991
    %v6100 = vpack.c.b16 %v5994, %v5992
    %v6101 = vpack.c.b16 %v5997, %v5995
    %v6102 = vpack.c.b16 %v5998, %v5996
    %v6103 = vpack.c.b16 %v6001, %v5999
    %v6104 = vpack.c.b16 %v6002, %v6000
    %v6105 = vpack.c.b16 %v6005, %v6003
    %v6106 = vpack.c.b16 %v6006, %v6004
    %v6107 = vpack.c.b16 %v6009, %v6007
    %v6108 = vpack.c.b16 %v6010, %v6008
    %v6109 = vpack.c.b16 %v6013, %v6011
    %v6110 = vpack.c.b16 %v6014, %v6012
    %v6111 = vpack.c.b16 %v6017, %v6015
    %v6112 = vpack.c.b16 %v6018, %v6016
    %v6113 = vpack.c.b16 %v6021, %v6019
    %v6114 = vpack.c.b16 %v6022, %v6020
    %v6115 = vpack.c.b16 %v6025, %v6023
    %v6116 = vpack.c.b16 %v6026, %v6024
    %v6117 = vpack.c.b16 %v6029, %v6027
    %v6118 = vpack.c.b16 %v6030, %v6028
    %v6119 = vpack.c.b16 %v6033, %v6031
    %v6120 = vpack.c.b16 %v6034, %v6032
    %v6121 = vpack.c.b16 %v6037, %v6035
    %v6122 = vpack.c.b16 %v6038, %v6036
    %v6123 = vpack.c.b16 %v6041, %v6039
    %v6124 = vpack.c.b16 %v6042, %v6040
    %v6125 = vpack.c.b16 %v6045, %v6043
    %v6126 = vpack.c.b16 %v6046, %v6044
    %v6127 = vpack.c.b16 %v6049, %v6047
    %v6128 = vpack.c.b16 %v6050, %v6048
    %v6129 = vpack.c.b16 %v6053, %v6051
    %v6130 = vpack.c.b16 %v6054, %v6052
    %v6131 = vpack.c.b16 %v6057, %v6055
    %v6132 = vpack.c.b16 %v6058, %v6056
    %v6133 = vpack.c.b16 %v6061, %v6059
    %v6134 = vpack.c.b16 %v6062, %v6060
    %v6135 = vpack.c.b16 %v6065, %v6063
    %v6136 = vpack.c.b16 %v6066, %v6064
    %v6137 = vpack.c.b16 %v6069, %v6067
    %v6138 = vpack.c.b16 %v6070, %v6068
    %v6139 = vpack.c.b16 %v6073, %v6071
    %v6140 = vpack.c.b16 %v6074, %v6072
    %v6141 = vpack.c.b16 %v6077, %v6075
    %v6142 = vpack.c.b16 %v6078, %v6076
    %6207 = vmatprep.subr.bf16.mxu0 %v6080
    %6208 = vmatpush1.bf16.msra.mxu0 %v6079
    %6209 = vmatprep.subr.bf16.mxu0 %v6082
    %6210 = vmatpush1.bf16.msra.mxu0 %v6081
    %6211 = vmatprep.subr.bf16.mxu0 %v6084
    %6212 = vmatpush1.bf16.msra.mxu0 %v6083
    %6213 = vmatprep.subr.bf16.mxu0 %v6086
    %6214 = vmatpush1.bf16.msra.mxu0 %v6085
    %6215 = vmatprep.subr.bf16.mxu0 %v6088
    %6216 = vmatpush1.bf16.msra.mxu0 %v6087
    %6217 = vmatprep.subr.bf16.mxu0 %v6090
    %6218 = vmatpush1.bf16.msra.mxu0 %v6089
    %6219 = vmatprep.subr.bf16.mxu0 %v6092
    %6220 = vmatpush1.bf16.msra.mxu0 %v6091
    %6221 = vmatprep.subr.bf16.mxu0 %v6094
    %6222 = vmatpush1.bf16.msra.mxu0 %v6093
    %6223 = vmatprep.subr.bf16.mxu0 %v6096
    %6224 = vmatpush1.bf16.msra.mxu0 %v6095
    %6225 = vmatprep.subr.bf16.mxu0 %v6098
    %6226 = vmatpush1.bf16.msra.mxu0 %v6097
    %6227 = vmatprep.subr.bf16.mxu0 %v6100
    %6228 = vmatpush1.bf16.msra.mxu0 %v6099
    %6229 = vmatprep.subr.bf16.mxu0 %v6102
    %6230 = vmatpush1.bf16.msra.mxu0 %v6101
    %6231 = vmatprep.subr.bf16.mxu0 %v6104
    %6232 = vmatpush1.bf16.msra.mxu0 %v6103
    %6233 = vmatprep.subr.bf16.mxu0 %v6106
    %6234 = vmatpush1.bf16.msra.mxu0 %v6105
    %6235 = vmatprep.subr.bf16.mxu0 %v6108
    %6236 = vmatpush1.bf16.msra.mxu0 %v6107
    %6237 = vmatprep.subr.bf16.mxu0 %v6110
    %6238 = vmatpush1.bf16.msra.mxu0 %v6109
    %6239 = vmatprep.mubr.bf16.mxu0 %v5806
    %6240 = vmatmul.mubr.bf16.gmra.mrb[0].mxu0 %v5805
    %v6241 = vpop.f32.mrb[0].mxu0
    %v6242 = vadd.f32 %v5880, %v6241
    %v6243 = vpop.f32.mrb[0].mxu0
    %v6244 = vadd.f32 %v5884, %v6243
    %v6245 = vpop.f32.mrb[0].mxu0
    %v6246 = vadd.f32 %v5880, %v6245
    %v6247 = vpop.f32.mrb[0].mxu0
    %v6248 = vadd.f32 %v5884, %v6247
    %6249 = vdwg.mxu0
    %6250 = vmatprep.subr.bf16.mxu0 %v6112
    %6251 = vmatpush1.bf16.msra.mxu0 %v6111
    %6252 = vmatprep.subr.bf16.mxu0 %v6114
    %6253 = vmatpush1.bf16.msra.mxu0 %v6113
    %6254 = vmatprep.subr.bf16.mxu0 %v6116
    %6255 = vmatpush1.bf16.msra.mxu0 %v6115
    %6256 = vmatprep.subr.bf16.mxu0 %v6118
    %6257 = vmatpush1.bf16.msra.mxu0 %v6117
    %6258 = vmatprep.subr.bf16.mxu0 %v6120
    %6259 = vmatpush1.bf16.msra.mxu0 %v6119
    %6260 = vmatprep.subr.bf16.mxu0 %v6122
    %6261 = vmatpush1.bf16.msra.mxu0 %v6121
    %6262 = vmatprep.subr.bf16.mxu0 %v6124
    %6263 = vmatpush1.bf16.msra.mxu0 %v6123
    %6264 = vmatprep.subr.bf16.mxu0 %v6126
    %6265 = vmatpush1.bf16.msra.mxu0 %v6125
    %6266 = vmatprep.subr.bf16.mxu0 %v6128
    %6267 = vmatpush1.bf16.msra.mxu0 %v6127
    %6268 = vmatprep.subr.bf16.mxu0 %v6130
    %6269 = vmatpush1.bf16.msra.mxu0 %v6129
    %6270 = vmatprep.subr.bf16.mxu0 %v6132
    %6271 = vmatpush1.bf16.msra.mxu0 %v6131
    %6272 = vmatprep.subr.bf16.mxu0 %v6134
    %6273 = vmatpush1.bf16.msra.mxu0 %v6133
    %6274 = vmatprep.subr.bf16.mxu0 %v6136
    %6275 = vmatpush1.bf16.msra.mxu0 %v6135
    %6276 = vmatprep.subr.bf16.mxu0 %v6138
    %6277 = vmatpush1.bf16.msra.mxu0 %v6137
    %6278 = vmatprep.subr.bf16.mxu0 %v6140
    %6279 = vmatpush1.bf16.msra.mxu0 %v6139
    %6280 = vmatprep.subr.bf16.mxu0 %v6142
    %6281 = vmatpush1.bf16.msra.mxu0 %v6141
    %6282 = vmatprep.mubr.bf16.mxu0 %v5808
    %6283 = vmatmul.mubr.bf16.gmra.mrb[0].mxu0 %v5807
    %v6284 = vpop.f32.mrb[0].mxu0
    %v6285 = vadd.f32 %v6242, %v6284
    %v6286 = vpop.f32.mrb[0].mxu0
    %v6287 = vadd.f32 %v6244, %v6286
    %v6288 = vpop.f32.mrb[0].mxu0
    %v6289 = vadd.f32 %v6246, %v6288
    %v6290 = vpop.f32.mrb[0].mxu0
    %v6291 = vadd.f32 %v6248, %v6290
    %6292 = vdwg.mxu0
    %v6293 = vadd.f32 %v6285, %v5297
    %v6294 = vadd.f32 %v6287, %v5298
    %v6295 = vadd.f32 %v6289, %v5299
    %v6296 = vadd.f32 %v6291, %v5300
    %s6297 = scalar_lea.vmem %s12, 2
    %v6298 = vld [vmem:[%s6297] sm:$0x3]
    %s6299 = scalar_lea.vmem %s13, 2
    %v6300 = vld [vmem:[%s6299] sm:$0x3]
    %v6301 = vadd.f32 %v6293, %v6294
    %6302 = vadd.xlane.f32.xlu0 %v6301
    %v6303 = vpop.xlane.xlu0 %6302
    %v6304 = vadd.f32 %v6295, %v6296
    %6305 = vadd.xlane.f32.xlu0 %v6304
    %v6306 = vpop.xlane.xlu0 %6305
    %v6307 = vmul.f32 %v6293, %v6293
    %v6308 = vmul.f32 %v6294, %v6294
    %v6309 = vmul.f32 %v6295, %v6295
    %v6310 = vmul.f32 %v6296, %v6296
    %v6311 = vadd.f32 %v6307, %v6308
    %6312 = vadd.xlane.f32.xlu0 %v6311
    %v6313 = vpop.xlane.xlu0 %6312
    %v6314 = vadd.f32 %v6309, %v6310
    %6315 = vadd.xlane.f32.xlu0 %v6314
    %v6316 = vpop.xlane.xlu0 %6315
    %v6317 = vmul.f32 %v6303, 0.004347826
    %v6318 = vmul.f32 %v6306, 0.004347826
    %v6319 = vmul.f32 %v6313, 0.004347826
    %v6320 = vmul.f32 %v6316, 0.004347826
    %v6321 = vmul.f32 %v6317, %v6317
    %v6322 = vmul.f32 %v6318, %v6318
    %v6323 = vsub.f32 %v6319, %v6321
    %v6324 = vsub.f32 %v6320, %v6322
    %v6325 = vsub.f32 %v6293, %v6317
    %v6326 = vsub.f32 %v6294, %v6317
    %v6327 = vsub.f32 %v6295, %v6318
    %v6328 = vsub.f32 %v6296, %v6318
    %v6329 = vadd.f32 %v6323, 1e-06
    %v6330 = vadd.f32 %v6324, 1e-06
    %v6331 = vrsqrt.pop %v6329
    %v6332 = vrsqrt.pop %v6330
    %v6333 = vmul.f32 %v6325, %v6331
    %v6334 = vmul.f32 %v6326, %v6331
    %v6335 = vmul.f32 %v6327, %v6332
    %v6336 = vmul.f32 %v6328, %v6332
    %v6338 = vlaneseq
    %v6339 = vshrl.u32 %v6338, 7
    %v6340 = vsub.s32 0, %v6339
    %v6341 = vrot.slane %v6298, %v6340
    %v6342 = vlaneseq
    %v6343 = vshrl.u32 %v6342, 7
    %v6344 = vsub.s32 1, %v6343
    %v6345 = vrot.slane %v6298, %v6344
    %v6348 = vmul.f32 %v6333, %v6341
    %v6349 = vmul.f32 %v6334, %v6345
    %v6350 = vmul.f32 %v6335, %v6341
    %v6351 = vmul.f32 %v6336, %v6345
    %v6353 = vlaneseq
    %v6354 = vshrl.u32 %v6353, 7
    %v6355 = vsub.s32 0, %v6354
    %v6356 = vrot.slane %v6300, %v6355
    %v6357 = vlaneseq
    %v6358 = vshrl.u32 %v6357, 7
    %v6359 = vsub.s32 1, %v6358
    %v6360 = vrot.slane %v6300, %v6359
    %v6363 = vadd.f32 %v6348, %v6356
    %v6364 = vadd.f32 %v6349, %v6360
    %v6365 = vadd.f32 %v6350, %v6356
    %v6366 = vadd.f32 %v6351, %v6360
    %6367 = vst [vmem:[#allocation7] sm:$0xff] %v6363
    %6368 = vst [vmem:[#allocation7 + $0x8] sm:$0xff] %v6364
    %6369 = vst [vmem:[#allocation7 + $0x10] sm:$0xff] %v6365
    %6370 = vst [vmem:[#allocation7 + $0x18] sm:$0xff] %v6366
    // Predicated region
    $region66: #{tpu_custom_call.1} parent=1 // pred_check
      _
    $region67: #{tpu_custom_call.1} parent=1 // pred_check_branch
      %6372 = sbr.rel (0) target = $region69
    $region68: #{tpu_custom_call.1} parent=1 // pred_region
      %s6374 = ssub.s32 512, 512
      %6375 = vsyncadd [#allocation4], %s6374
      %s6376 = sshll.u32 [#allocation7], 4
      %s6377 = int_to_ptr.vmem [resolvable:$true] %s6376
      %6382 = dma.vmem_to_hbm [thread:$0]  %s6377, 512, %s14, [#allocation4], 256, 256, 16
    $region69: #{tpu_custom_call.1} parent=1 // pred_fallthru
      _
    // Predicated region
    $region70: #{tpu_custom_call.1} parent=1 // pred_check
      _
    $region71: #{tpu_custom_call.1} parent=1 // pred_check_branch
      %6384 = sbr.rel (0) target = $region73
    $region72: #{tpu_custom_call.1} parent=1 // pred_region
      %6385 = dma.done [#allocation4], 512
    $region73: #{tpu_custom_call.1} parent=1 // pred_fallthru
      _
    %6386 = vsyncpa [#allocation3], 1
    %6387 = vsyncpa [#allocation6], 1
    %6388 = vsyncpa [#allocation4], 1

</llo_original>
